<compile_context>
chip_gen: v7x
topology: tpu7x:2x2x1
jax: 0.10.0
libtpu: 0.0.40
codegen_flags: <defaults>
</compile_context>

<pallas_src>
import jax
import jax.numpy as jnp
from jax.experimental import pallas as pl
from jax.experimental.pallas import tpu as pltpu

# ----------------------- static architecture dimensions ---------------------
H_IN, W_IN = 64, 48            # implied by fc1 in_features = 16*13*9
KH, KW = 5, 5
C1_OUT, C2_OUT = 6, 16
OH1, OW1 = H_IN - 4, W_IN - 4  # 60, 44   (conv1 VALID)
P1H, P1W = OH1 // 2, OW1 // 2  # 30, 22   (pool1)
OH2, OW2 = P1H - 4, P1W - 4    # 26, 18   (conv2 VALID)
P2H, P2W = OH2 // 2, OW2 // 2  # 13, 9    (pool2)
FLAT = C2_OUT * P2H * P2W      # 1872
N1P, N2P = 128, 128            # fc1/fc2 widths padded to a full lane group
N3 = 36
NB_MAX = 8                     # images processed per grid step


# ------------------------------ Pallas kernel --------------------------------

def _lenet_kernel(x_ref, w1b_ref, b1_ref, pv1_ref, ph1_ref,
                  w2b_ref, b2_ref, pv2_ref, ph2_ref,
                  fw1_ref, fb1_ref, fw2_ref, fb2_ref, fw3_ref, fb3_ref,
                  o_ref, p1_ref):
    """Whole LeNet-5 forward for a block of NB images, entirely in VMEM."""
    f32 = jnp.float32
    nb = x_ref.shape[0]

    p2_imgs = []
    for n in range(nb):                     # unrolled per-image conv pipeline
        # conv1: banded horizontal fold -> 5 full-width matmuls (no lane-offset
        # slices; only 8-row-window sublane slices of the input).
        acc1 = jnp.zeros((OH1, OW1 * C1_OUT), f32)
        for i in range(KH):
            acc1 = acc1 + jnp.dot(x_ref[n, i:i + OH1, :], w1b_ref[i],
                                  preferred_element_type=f32)
        y1 = jnp.tanh(acc1 + b1_ref[...])                       # (60, 264)

        # pool1: 2x2 avg = two 0/1 matmuls + 0.25 scale -> (30, 132)
        p1_ref[...] = 0.25 * jnp.dot(
            pv1_ref[...],
            jnp.dot(y1, ph1_ref[...], preferred_element_type=f32),
            preferred_element_type=f32)

        # conv2: banded horizontal fold -> 5 matmuls (26,132)@(132,288)
        acc2 = jnp.zeros((OH2, OW2 * C2_OUT), f32)
        for i in range(KH):
            acc2 = acc2 + jnp.dot(p1_ref[i:i + OH2, :], w2b_ref[i],
                                  preferred_element_type=f32)
        y2 = jnp.tanh(acc2 + b2_ref[...])                       # (26, 288)

        # pool2 -> (13, 144), kept live in vregs/VMEM for the fused FC tail
        p2_imgs.append(0.25 * jnp.dot(
            pv2_ref[...],
            jnp.dot(y2, ph2_ref[...], preferred_element_type=f32),
            preferred_element_type=f32))

    # fc1 as a contraction over the 13 pooled rows (fc1 weights pre-permuted so
    # torch's NCHW flatten order is respected); avoids any in-kernel
    # (13,144) -> (1,1872) lane relayout.  LHS per step = row h of every image
    # in the block stacked along sublanes.
    acc = jnp.zeros((nb, N1P), f32)
    for h in range(P2H):
        lhs = jnp.concatenate([p2_imgs[n][h:h + 1, :] for n in range(nb)],
                              axis=0)                            # (NB, 144)
        acc = acc + jnp.dot(lhs, fw1_ref[h], preferred_element_type=f32)
    h1 = jnp.tanh(acc + fb1_ref[...])                            # (NB, 128)
    h2 = jnp.tanh(jnp.dot(h1, fw2_ref[...], preferred_element_type=f32)
                  + fb2_ref[...])                                # (NB, 128)
    o_ref[0] = (jnp.dot(h2, fw3_ref[...], preferred_element_type=f32)
                + fb3_ref[...])                                  # (NB, 36)


# ------------------------------ kernel wrapper -------------------------------

def lenet5_forward(fp, x_nchw):
    """x: (B, 1, 64, 48) f32 -> (B, 36). Single fused pallas_call."""
    B, C, H, W = x_nchw.shape
    assert (C, H, W) == (1, H_IN, W_IN)
    NB = min(B, NB_MAX)
    nblk = -(-B // NB)
    Bp = nblk * NB
    x2d = x_nchw.reshape(B, H_IN, W_IN)                  # C=1: free squeeze
    if Bp != B:
        x2d = jnp.pad(x2d, ((0, Bp - B), (0, 0), (0, 0)))

    # Advisory cost estimate (per-image MACs as actually implemented).
    macs = (KH * OH1 * W_IN * (OW1 * C1_OUT)
            + OH1 * (OW1 * C1_OUT) * (P1W * C1_OUT)
            + P1H * OH1 * (P1W * C1_OUT)
            + KH * OH2 * (P1W * C1_OUT) * (OW2 * C2_OUT)
            + OH2 * (OW2 * C2_OUT) * (P2W * C2_OUT)
            + P2H * OH2 * (P2W * C2_OUT)
            + P2H * (P2W * C2_OUT) * N1P + N1P * N2P + N2P * N3)
    trans = OH1 * OW1 * C1_OUT + OH2 * OW2 * C2_OUT + N1P + N2P
    w_bytes = sum(int(v.size) * v.dtype.itemsize for v in fp.values())
    cost = pl.CostEstimate(
        flops=2 * macs * Bp,
        transcendentals=trans * Bp,
        bytes_accessed=Bp * (H_IN * W_IN + N3) * 4 + w_bytes)

    out = pl.pallas_call(
        _lenet_kernel,
        out_shape=jax.ShapeDtypeStruct((nblk, NB, N3), jnp.float32),
        grid=(nblk,),
        in_specs=[
            pl.BlockSpec((NB, H_IN, W_IN), lambda b: (b, 0, 0)),
            pl.BlockSpec((KH, W_IN, OW1 * C1_OUT), lambda b: (0, 0, 0)),
            pl.BlockSpec((1, OW1 * C1_OUT), lambda b: (0, 0)),
            pl.BlockSpec((P1H, OH1), lambda b: (0, 0)),
            pl.BlockSpec((OW1 * C1_OUT, P1W * C1_OUT), lambda b: (0, 0)),
            pl.BlockSpec((KH, P1W * C1_OUT, OW2 * C2_OUT), lambda b: (0, 0, 0)),
            pl.BlockSpec((1, OW2 * C2_OUT), lambda b: (0, 0)),
            pl.BlockSpec((P2H, OH2), lambda b: (0, 0)),
            pl.BlockSpec((OW2 * C2_OUT, P2W * C2_OUT), lambda b: (0, 0)),
            pl.BlockSpec((P2H, P2W * C2_OUT, N1P), lambda b: (0, 0, 0)),
            pl.BlockSpec((1, N1P), lambda b: (0, 0)),
            pl.BlockSpec((N1P, N2P), lambda b: (0, 0)),
            pl.BlockSpec((1, N2P), lambda b: (0, 0)),
            pl.BlockSpec((N2P, N3), lambda b: (0, 0)),
            pl.BlockSpec((1, N3), lambda b: (0, 0)),
        ],
        out_specs=pl.BlockSpec((1, NB, N3), lambda b: (b, 0, 0)),
        scratch_shapes=[pltpu.VMEM((P1H, P1W * C1_OUT), jnp.float32)],
        compiler_params=pltpu.CompilerParams(
            dimension_semantics=("parallel",),
            vmem_limit_bytes=32 * 1024 * 1024),
        cost_estimate=cost,
    )(x2d, fp["W1b"], fp["b1e"], fp["Pv1"], fp["Ph1"],
      fp["W2b"], fp["b2e"], fp["Pv2"], fp["Ph2"],
      fp["W1r"], fp["b1p"], fp["w2p"], fp["b2p"], fp["w3p"], fp["b3p"])
    return out.reshape(Bp, N3)[:B]


# ------------------------ parameter init & repacking -------------------------

def init_params(key):
    """Torch-layout params, init mimicking torch's U(-1/sqrt(fan_in), +)."""
    def uniform(k, shape, fan_in):
        bound = 1.0 / (fan_in ** 0.5)
        return jax.random.uniform(k, shape, jnp.float32, -bound, bound)

    ks = jax.random.split(key, 10)
    p = {}
    p["conv1_w"] = uniform(ks[0], (6, 1, 5, 5), 1 * 25)
    p["conv1_b"] = uniform(ks[1], (6,), 1 * 25)
    p["conv2_w"] = uniform(ks[2], (16, 6, 5, 5), 6 * 25)
    p["conv2_b"] = uniform(ks[3], (16,), 6 * 25)
    p["fc1_w"] = uniform(ks[4], (120, FLAT), FLAT)
    p["fc1_b"] = uniform(ks[5], (120,), FLAT)
    p["fc2_w"] = uniform(ks[6], (84, 120), 120)
    p["fc2_b"] = uniform(ks[7], (84,), 120)
    p["fc3_w"] = uniform(ks[8], (36, 84), 84)
    p["fc3_b"] = uniform(ks[9], (36,), 84)
    return p


def prepare_params(params):
    """One-time repack of torch-layout params into kernel operands.

    Done once outside the hot path: banded conv weights (horizontal taps
    folded), 0/1 pooling matrices, fc1 weights reshaped/permuted for the
    per-pooled-row contraction, fc2/fc3 pre-transposed and lane-padded.
    """
    f32 = jnp.float32

    # conv1 banded weights W1b[i]: (W_IN, OW1*C1_OUT);
    # W1b[i, iw, ow*6+oc] = conv1_w[oc, 0, i, iw-ow] for 0 <= iw-ow < 5.
    w1_taps = jnp.transpose(params["conv1_w"], (2, 3, 1, 0))[:, :, 0, :]
    iw = jnp.arange(W_IN)[:, None]
    ow = jnp.arange(OW1)[None, :]
    j = iw - ow
    band1 = (w1_taps[:, jnp.clip(j, 0, KW - 1), :]
             * ((j >= 0) & (j < KW)).astype(f32)[None, :, :, None])
    W1b = band1.reshape(KH, W_IN, OW1 * C1_OUT)
    b1e = jnp.tile(params["conv1_b"], OW1).reshape(1, OW1 * C1_OUT)

    # 2x2 average pools as 0/1 matmuls (0.25 applied in-kernel).
    Pv1 = (jnp.arange(OH1)[None, :] // 2 ==
           jnp.arange(P1H)[:, None]).astype(f32)                 # (30, 60)
    Ph1 = jnp.einsum(
        "wb,co->wcbo",
        (jnp.arange(OW1)[:, None] // 2 ==
         jnp.arange(P1W)[None, :]).astype(f32),
        jnp.eye(C1_OUT, dtype=f32)).reshape(OW1 * C1_OUT, P1W * C1_OUT)

    # conv2 banded weights W2b[i]: (P1W*C1_OUT, OW2*C2_OUT);
    # W2b[i, iw*6+c, ow*16+oc] = conv2_w[oc, c, i, iw-ow] for 0 <= iw-ow < 5.
    w2_taps = jnp.transpose(params["conv2_w"], (2, 3, 1, 0))     # (kh,kw,c,oc)
    iw2 = jnp.arange(P1W)[:, None]
    ow2 = jnp.arange(OW2)[None, :]
    j2 = iw2 - ow2
    band2 = (w2_taps[:, jnp.clip(j2, 0, KW - 1), :, :]
             * ((j2 >= 0) & (j2 < KW)).astype(f32)[None, :, :, None, None])
    W2b = jnp.transpose(band2, (0, 1, 3, 2, 4)).reshape(
        KH, P1W * C1_OUT, OW2 * C2_OUT)
    b2e = jnp.tile(params["conv2_b"], OW2).reshape(1, OW2 * C2_OUT)

    Pv2 = (jnp.arange(OH2)[None, :] // 2 ==
           jnp.arange(P2H)[:, None]).astype(f32)                 # (13, 26)
    Ph2 = jnp.einsum(
        "wb,co->wcbo",
        (jnp.arange(OW2)[:, None] // 2 ==
         jnp.arange(P2W)[None, :]).astype(f32),
        jnp.eye(C2_OUT, dtype=f32)).reshape(OW2 * C2_OUT, P2W * C2_OUT)

    # fc1 reshaped for the per-row contraction:
    # W1r[h, pw*16+c, m] = fc1_w[m, c*(13*9) + h*9 + pw]  (torch NCHW flatten),
    # output lanes padded 120 -> 128.
    h_idx = jnp.arange(P2H)[:, None, None]
    w_idx = jnp.arange(P2W)[None, :, None]
    c_idx = jnp.arange(C2_OUT)[None, None, :]
    torch_idx = c_idx * (P2H * P2W) + h_idx * P2W + w_idx        # (13, 9, 16)
    W1r = jnp.transpose(params["fc1_w"][:, torch_idx], (1, 2, 3, 0)).reshape(
        P2H, P2W * C2_OUT, 120)
    W1r = jnp.pad(W1r, ((0, 0), (0, 0), (0, N1P - 120)))         # (13, 144, 128)
    b1p = jnp.pad(params["fc1_b"], (0, N1P - 120)).reshape(1, N1P)
    w2p = jnp.pad(params["fc2_w"].T,
                  ((0, N1P - 120), (0, N2P - 84)))               # (128, 128)
    b2p = jnp.pad(params["fc2_b"], (0, N2P - 84)).reshape(1, N2P)
    w3p = jnp.pad(params["fc3_w"].T, ((0, N2P - 84), (0, 0)))    # (128, 36)
    b3p = params["fc3_b"].reshape(1, N3)

    return dict(W1b=W1b, b1e=b1e, Pv1=Pv1, Ph1=Ph1,
                W2b=W2b, b2e=b2e, Pv2=Pv2, Ph2=Ph2,
                W1r=W1r, b1p=b1p, w2p=w2p, b2p=b2p, w3p=w3p, b3p=b3p)


# --------------------------------- reference ---------------------------------

def lenet5_reference(params, x_nchw):
    """Pure-JAX reference (matches the PyTorch forward) for validation."""
    dn = ("NCHW", "OIHW", "NCHW")
    x = jax.lax.conv_general_dilated(x_nchw, params["conv1_w"], (1, 1),
                                     "VALID", dimension_numbers=dn)
    x = jnp.tanh(x + params["conv1_b"][None, :, None, None])
    x = jax.lax.reduce_window(x, 0.0, jax.lax.add,
                              (1, 1, 2, 2), (1, 1, 2, 2), "VALID") / 4.0
    x = jax.lax.conv_general_dilated(x, params["conv2_w"], (1, 1),
                                     "VALID", dimension_numbers=dn)
    x = jnp.tanh(x + params["conv2_b"][None, :, None, None])
    x = jax.lax.reduce_window(x, 0.0, jax.lax.add,
                              (1, 1, 2, 2), (1, 1, 2, 2), "VALID") / 4.0
    x = x.reshape(x.shape[0], -1)
    x = jnp.tanh(x @ params["fc1_w"].T + params["fc1_b"])
    x = jnp.tanh(x @ params["fc2_w"].T + params["fc2_b"])
    x = x @ params["fc3_w"].T + params["fc3_b"]
    return x


if __name__ == "__main__":
    key = jax.random.PRNGKey(0)
    pkey, xkey = jax.random.split(key)
    params = init_params(pkey)
    fwd_params = prepare_params(params)      # one-time weight repack

    # fc1 expects 16*13*9 features => input spatial 64x48 (1 channel), batch=2.
    x = jax.random.normal(xkey, (2, 1, H_IN, W_IN), jnp.float32)

    fwd = jax.jit(lenet5_forward)
    out = jax.block_until_ready(fwd(fwd_params, x))

    ref = lenet5_reference(params, x)
    assert out.shape == (2, N3), out.shape
    err = float(jnp.max(jnp.abs(out - ref)))
    assert err < 2e-4, err

    print("KERNEL_OK")
</pallas_src>

<mosaic_0001>
module attributes {stable_mosaic.version = 11 : i64} {
  func.func @_lenet_kernel(%arg0: i32, %arg1: memref<2x64x48xf32, #tpu.memory_space<vmem>>, %arg2: memref<5x48x264xf32, #tpu.memory_space<vmem>>, %arg3: memref<1x264xf32, #tpu.memory_space<vmem>>, %arg4: memref<30x60xf32, #tpu.memory_space<vmem>>, %arg5: memref<264x132xf32, #tpu.memory_space<vmem>>, %arg6: memref<5x132x288xf32, #tpu.memory_space<vmem>>, %arg7: memref<1x288xf32, #tpu.memory_space<vmem>>, %arg8: memref<13x26xf32, #tpu.memory_space<vmem>>, %arg9: memref<288x144xf32, #tpu.memory_space<vmem>>, %arg10: memref<13x144x128xf32, #tpu.memory_space<vmem>>, %arg11: memref<1x128xf32, #tpu.memory_space<vmem>>, %arg12: memref<128x128xf32, #tpu.memory_space<vmem>>, %arg13: memref<1x128xf32, #tpu.memory_space<vmem>>, %arg14: memref<128x36xf32, #tpu.memory_space<vmem>>, %arg15: memref<1x36xf32, #tpu.memory_space<vmem>>, %arg16: memref<1x2x36xf32, #tpu.memory_space<vmem>>, %arg17: memref<30x132xf32, #tpu.memory_space<vmem>>) attributes {dimension_semantics = [#tpu.dimension_semantics<parallel>], iteration_bounds = array<i64: 1>, scalar_prefetch = 0 : i64, scratch_operands = 1 : i64, tpu.core_type = #tpu.core_type<tc>, window_params = [{transform_indices = @transform_0, window_bounds = array<i64: 2, 64, 48>}, {pipeline_mode = #tpu.pipeline_mode<synchronous>, transform_indices = @transform_1, window_bounds = array<i64: 5, 48, 264>}, {pipeline_mode = #tpu.pipeline_mode<synchronous>, transform_indices = @transform_2, window_bounds = array<i64: 1, 264>}, {pipeline_mode = #tpu.pipeline_mode<synchronous>, transform_indices = @transform_3, window_bounds = array<i64: 30, 60>}, {pipeline_mode = #tpu.pipeline_mode<synchronous>, transform_indices = @transform_4, window_bounds = array<i64: 264, 132>}, {pipeline_mode = #tpu.pipeline_mode<synchronous>, transform_indices = @transform_5, window_bounds = array<i64: 5, 132, 288>}, {pipeline_mode = #tpu.pipeline_mode<synchronous>, transform_indices = @transform_6, window_bounds = array<i64: 1, 288>}, {pipeline_mode = #tpu.pipeline_mode<synchronous>, transform_indices = @transform_7, window_bounds = array<i64: 13, 26>}, {pipeline_mode = #tpu.pipeline_mode<synchronous>, transform_indices = @transform_8, window_bounds = array<i64: 288, 144>}, {pipeline_mode = #tpu.pipeline_mode<synchronous>, transform_indices = @transform_9, window_bounds = array<i64: 13, 144, 128>}, {pipeline_mode = #tpu.pipeline_mode<synchronous>, transform_indices = @transform_10, window_bounds = array<i64: 1, 128>}, {pipeline_mode = #tpu.pipeline_mode<synchronous>, transform_indices = @transform_11, window_bounds = array<i64: 128, 128>}, {pipeline_mode = #tpu.pipeline_mode<synchronous>, transform_indices = @transform_12, window_bounds = array<i64: 1, 128>}, {pipeline_mode = #tpu.pipeline_mode<synchronous>, transform_indices = @transform_13, window_bounds = array<i64: 128, 36>}, {pipeline_mode = #tpu.pipeline_mode<synchronous>, transform_indices = @transform_14, window_bounds = array<i64: 1, 36>}, {transform_indices = @transform_15, window_bounds = array<i64: 1, 2, 36>}]} {
    %cst = arith.constant 0.000000e+00 : f32
    %0 = vector.broadcast %cst : f32 to vector<60x264xf32>
    %c0 = arith.constant 0 : index
    %c0_0 = arith.constant 0 : index
    %c0_1 = arith.constant 0 : index
    %1 = vector.load %arg1[%c0, %c0_0, %c0_1] : memref<2x64x48xf32, #tpu.memory_space<vmem>>, vector<1x60x48xf32>
    %2 = vector.shape_cast %1 : vector<1x60x48xf32> to vector<60x48xf32>
    %c0_2 = arith.constant 0 : index
    %c0_3 = arith.constant 0 : index
    %c0_4 = arith.constant 0 : index
    %3 = vector.load %arg2[%c0_2, %c0_3, %c0_4] : memref<5x48x264xf32, #tpu.memory_space<vmem>>, vector<1x48x264xf32>
    %4 = vector.shape_cast %3 : vector<1x48x264xf32> to vector<48x264xf32>
    %cst_5 = arith.constant dense<0.000000e+00> : vector<60x264xf32>
    %5 = tpu.matmul %2, %4, %cst_5 {dimension_numbers = #tpu.dot_dimension_numbers<[1], [0], [0], [1], [0, 0, 1, 1], [], []>} : vector<60x48xf32>, vector<48x264xf32>, vector<60x264xf32> -> vector<60x264xf32>
    %6 = arith.addf %0, %5 : vector<60x264xf32>
    %c0_6 = arith.constant 0 : index
    %c1 = arith.constant 1 : index
    %c0_7 = arith.constant 0 : index
    %7 = vector.load %arg1[%c0_6, %c1, %c0_7] : memref<2x64x48xf32, #tpu.memory_space<vmem>>, vector<1x60x48xf32>
    %8 = vector.shape_cast %7 : vector<1x60x48xf32> to vector<60x48xf32>
    %c1_8 = arith.constant 1 : index
    %c0_9 = arith.constant 0 : index
    %c0_10 = arith.constant 0 : index
    %9 = vector.load %arg2[%c1_8, %c0_9, %c0_10] : memref<5x48x264xf32, #tpu.memory_space<vmem>>, vector<1x48x264xf32>
    %10 = vector.shape_cast %9 : vector<1x48x264xf32> to vector<48x264xf32>
    %cst_11 = arith.constant dense<0.000000e+00> : vector<60x264xf32>
    %11 = tpu.matmul %8, %10, %cst_11 {dimension_numbers = #tpu.dot_dimension_numbers<[1], [0], [0], [1], [0, 0, 1, 1], [], []>} : vector<60x48xf32>, vector<48x264xf32>, vector<60x264xf32> -> vector<60x264xf32>
    %12 = arith.addf %6, %11 : vector<60x264xf32>
    %c0_12 = arith.constant 0 : index
    %c2 = arith.constant 2 : index
    %c0_13 = arith.constant 0 : index
    %13 = vector.load %arg1[%c0_12, %c2, %c0_13] : memref<2x64x48xf32, #tpu.memory_space<vmem>>, vector<1x60x48xf32>
    %14 = vector.shape_cast %13 : vector<1x60x48xf32> to vector<60x48xf32>
    %c2_14 = arith.constant 2 : index
    %c0_15 = arith.constant 0 : index
    %c0_16 = arith.constant 0 : index
    %15 = vector.load %arg2[%c2_14, %c0_15, %c0_16] : memref<5x48x264xf32, #tpu.memory_space<vmem>>, vector<1x48x264xf32>
    %16 = vector.shape_cast %15 : vector<1x48x264xf32> to vector<48x264xf32>
    %cst_17 = arith.constant dense<0.000000e+00> : vector<60x264xf32>
    %17 = tpu.matmul %14, %16, %cst_17 {dimension_numbers = #tpu.dot_dimension_numbers<[1], [0], [0], [1], [0, 0, 1, 1], [], []>} : vector<60x48xf32>, vector<48x264xf32>, vector<60x264xf32> -> vector<60x264xf32>
    %18 = arith.addf %12, %17 : vector<60x264xf32>
    %c0_18 = arith.constant 0 : index
    %c3 = arith.constant 3 : index
    %c0_19 = arith.constant 0 : index
    %19 = vector.load %arg1[%c0_18, %c3, %c0_19] : memref<2x64x48xf32, #tpu.memory_space<vmem>>, vector<1x60x48xf32>
    %20 = vector.shape_cast %19 : vector<1x60x48xf32> to vector<60x48xf32>
    %c3_20 = arith.constant 3 : index
    %c0_21 = arith.constant 0 : index
    %c0_22 = arith.constant 0 : index
    %21 = vector.load %arg2[%c3_20, %c0_21, %c0_22] : memref<5x48x264xf32, #tpu.memory_space<vmem>>, vector<1x48x264xf32>
    %22 = vector.shape_cast %21 : vector<1x48x264xf32> to vector<48x264xf32>
    %cst_23 = arith.constant dense<0.000000e+00> : vector<60x264xf32>
    %23 = tpu.matmul %20, %22, %cst_23 {dimension_numbers = #tpu.dot_dimension_numbers<[1], [0], [0], [1], [0, 0, 1, 1], [], []>} : vector<60x48xf32>, vector<48x264xf32>, vector<60x264xf32> -> vector<60x264xf32>
    %24 = arith.addf %18, %23 : vector<60x264xf32>
    %c0_24 = arith.constant 0 : index
    %c4 = arith.constant 4 : index
    %c0_25 = arith.constant 0 : index
    %25 = vector.load %arg1[%c0_24, %c4, %c0_25] : memref<2x64x48xf32, #tpu.memory_space<vmem>>, vector<1x60x48xf32>
    %26 = vector.shape_cast %25 : vector<1x60x48xf32> to vector<60x48xf32>
    %c4_26 = arith.constant 4 : index
    %c0_27 = arith.constant 0 : index
    %c0_28 = arith.constant 0 : index
    %27 = vector.load %arg2[%c4_26, %c0_27, %c0_28] : memref<5x48x264xf32, #tpu.memory_space<vmem>>, vector<1x48x264xf32>
    %28 = vector.shape_cast %27 : vector<1x48x264xf32> to vector<48x264xf32>
    %cst_29 = arith.constant dense<0.000000e+00> : vector<60x264xf32>
    %29 = tpu.matmul %26, %28, %cst_29 {dimension_numbers = #tpu.dot_dimension_numbers<[1], [0], [0], [1], [0, 0, 1, 1], [], []>} : vector<60x48xf32>, vector<48x264xf32>, vector<60x264xf32> -> vector<60x264xf32>
    %30 = arith.addf %24, %29 : vector<60x264xf32>
    %c0_30 = arith.constant 0 : index
    %c0_31 = arith.constant 0 : index
    %31 = vector.load %arg3[%c0_30, %c0_31] : memref<1x264xf32, #tpu.memory_space<vmem>>, vector<1x264xf32>
    %32 = vector.broadcast %31 : vector<1x264xf32> to vector<60x264xf32>
    %33 = arith.addf %30, %32 : vector<60x264xf32>
    %34 = math.tanh %33 : vector<60x264xf32>
    %c0_32 = arith.constant 0 : index
    %c0_33 = arith.constant 0 : index
    %35 = vector.load %arg4[%c0_32, %c0_33] : memref<30x60xf32, #tpu.memory_space<vmem>>, vector<30x60xf32>
    %c0_34 = arith.constant 0 : index
    %c0_35 = arith.constant 0 : index
    %36 = vector.load %arg5[%c0_34, %c0_35] : memref<264x132xf32, #tpu.memory_space<vmem>>, vector<264x132xf32>
    %cst_36 = arith.constant dense<0.000000e+00> : vector<60x132xf32>
    %37 = tpu.matmul %34, %36, %cst_36 {dimension_numbers = #tpu.dot_dimension_numbers<[1], [0], [0], [1], [0, 0, 1, 1], [], []>} : vector<60x264xf32>, vector<264x132xf32>, vector<60x132xf32> -> vector<60x132xf32>
    %cst_37 = arith.constant dense<0.000000e+00> : vector<30x132xf32>
    %38 = tpu.matmul %35, %37, %cst_37 {dimension_numbers = #tpu.dot_dimension_numbers<[1], [0], [0], [1], [0, 0, 1, 1], [], []>} : vector<30x60xf32>, vector<60x132xf32>, vector<30x132xf32> -> vector<30x132xf32>
    %cst_38 = arith.constant 2.500000e-01 : f32
    %39 = vector.broadcast %cst_38 : f32 to vector<30x132xf32>
    %40 = arith.mulf %39, %38 : vector<30x132xf32>
    %c0_39 = arith.constant 0 : index
    %c0_40 = arith.constant 0 : index
    %41 = vector.load %arg17[%c0_39, %c0_40] : memref<30x132xf32, #tpu.memory_space<vmem>>, vector<30x132xf32>
    tpu.vector_store %arg17[%c0_39, %c0_40], %40 {strides = array<i32>} : memref<30x132xf32, #tpu.memory_space<vmem>>, vector<30x132xf32>,
    %cst_41 = arith.constant 0.000000e+00 : f32
    %42 = vector.broadcast %cst_41 : f32 to vector<26x288xf32>
    %c0_42 = arith.constant 0 : index
    %c0_43 = arith.constant 0 : index
    %43 = vector.load %arg17[%c0_42, %c0_43] : memref<30x132xf32, #tpu.memory_space<vmem>>, vector<26x132xf32>
    %c0_44 = arith.constant 0 : index
    %c0_45 = arith.constant 0 : index
    %c0_46 = arith.constant 0 : index
    %44 = vector.load %arg6[%c0_44, %c0_45, %c0_46] : memref<5x132x288xf32, #tpu.memory_space<vmem>>, vector<1x132x288xf32>
    %45 = vector.shape_cast %44 : vector<1x132x288xf32> to vector<132x288xf32>
    %cst_47 = arith.constant dense<0.000000e+00> : vector<26x288xf32>
    %46 = tpu.matmul %43, %45, %cst_47 {dimension_numbers = #tpu.dot_dimension_numbers<[1], [0], [0], [1], [0, 0, 1, 1], [], []>} : vector<26x132xf32>, vector<132x288xf32>, vector<26x288xf32> -> vector<26x288xf32>
    %47 = arith.addf %42, %46 : vector<26x288xf32>
    %c1_48 = arith.constant 1 : index
    %c0_49 = arith.constant 0 : index
    %48 = vector.load %arg17[%c1_48, %c0_49] : memref<30x132xf32, #tpu.memory_space<vmem>>, vector<26x132xf32>
    %c1_50 = arith.constant 1 : index
    %c0_51 = arith.constant 0 : index
    %c0_52 = arith.constant 0 : index
    %49 = vector.load %arg6[%c1_50, %c0_51, %c0_52] : memref<5x132x288xf32, #tpu.memory_space<vmem>>, vector<1x132x288xf32>
    %50 = vector.shape_cast %49 : vector<1x132x288xf32> to vector<132x288xf32>
    %cst_53 = arith.constant dense<0.000000e+00> : vector<26x288xf32>
    %51 = tpu.matmul %48, %50, %cst_53 {dimension_numbers = #tpu.dot_dimension_numbers<[1], [0], [0], [1], [0, 0, 1, 1], [], []>} : vector<26x132xf32>, vector<132x288xf32>, vector<26x288xf32> -> vector<26x288xf32>
    %52 = arith.addf %47, %51 : vector<26x288xf32>
    %c2_54 = arith.constant 2 : index
    %c0_55 = arith.constant 0 : index
    %53 = vector.load %arg17[%c2_54, %c0_55] : memref<30x132xf32, #tpu.memory_space<vmem>>, vector<26x132xf32>
    %c2_56 = arith.constant 2 : index
    %c0_57 = arith.constant 0 : index
    %c0_58 = arith.constant 0 : index
    %54 = vector.load %arg6[%c2_56, %c0_57, %c0_58] : memref<5x132x288xf32, #tpu.memory_space<vmem>>, vector<1x132x288xf32>
    %55 = vector.shape_cast %54 : vector<1x132x288xf32> to vector<132x288xf32>
    %cst_59 = arith.constant dense<0.000000e+00> : vector<26x288xf32>
    %56 = tpu.matmul %53, %55, %cst_59 {dimension_numbers = #tpu.dot_dimension_numbers<[1], [0], [0], [1], [0, 0, 1, 1], [], []>} : vector<26x132xf32>, vector<132x288xf32>, vector<26x288xf32> -> vector<26x288xf32>
    %57 = arith.addf %52, %56 : vector<26x288xf32>
    %c3_60 = arith.constant 3 : index
    %c0_61 = arith.constant 0 : index
    %58 = vector.load %arg17[%c3_60, %c0_61] : memref<30x132xf32, #tpu.memory_space<vmem>>, vector<26x132xf32>
    %c3_62 = arith.constant 3 : index
    %c0_63 = arith.constant 0 : index
    %c0_64 = arith.constant 0 : index
    %59 = vector.load %arg6[%c3_62, %c0_63, %c0_64] : memref<5x132x288xf32, #tpu.memory_space<vmem>>, vector<1x132x288xf32>
    %60 = vector.shape_cast %59 : vector<1x132x288xf32> to vector<132x288xf32>
    %cst_65 = arith.constant dense<0.000000e+00> : vector<26x288xf32>
    %61 = tpu.matmul %58, %60, %cst_65 {dimension_numbers = #tpu.dot_dimension_numbers<[1], [0], [0], [1], [0, 0, 1, 1], [], []>} : vector<26x132xf32>, vector<132x288xf32>, vector<26x288xf32> -> vector<26x288xf32>
    %62 = arith.addf %57, %61 : vector<26x288xf32>
    %c4_66 = arith.constant 4 : index
    %c0_67 = arith.constant 0 : index
    %63 = vector.load %arg17[%c4_66, %c0_67] : memref<30x132xf32, #tpu.memory_space<vmem>>, vector<26x132xf32>
    %c4_68 = arith.constant 4 : index
    %c0_69 = arith.constant 0 : index
    %c0_70 = arith.constant 0 : index
    %64 = vector.load %arg6[%c4_68, %c0_69, %c0_70] : memref<5x132x288xf32, #tpu.memory_space<vmem>>, vector<1x132x288xf32>
    %65 = vector.shape_cast %64 : vector<1x132x288xf32> to vector<132x288xf32>
    %cst_71 = arith.constant dense<0.000000e+00> : vector<26x288xf32>
    %66 = tpu.matmul %63, %65, %cst_71 {dimension_numbers = #tpu.dot_dimension_numbers<[1], [0], [0], [1], [0, 0, 1, 1], [], []>} : vector<26x132xf32>, vector<132x288xf32>, vector<26x288xf32> -> vector<26x288xf32>
    %67 = arith.addf %62, %66 : vector<26x288xf32>
    %c0_72 = arith.constant 0 : index
    %c0_73 = arith.constant 0 : index
    %68 = vector.load %arg7[%c0_72, %c0_73] : memref<1x288xf32, #tpu.memory_space<vmem>>, vector<1x288xf32>
    %69 = vector.broadcast %68 : vector<1x288xf32> to vector<26x288xf32>
    %70 = arith.addf %67, %69 : vector<26x288xf32>
    %71 = math.tanh %70 : vector<26x288xf32>
    %c0_74 = arith.constant 0 : index
    %c0_75 = arith.constant 0 : index
    %72 = vector.load %arg8[%c0_74, %c0_75] : memref<13x26xf32, #tpu.memory_space<vmem>>, vector<13x26xf32>
    %c0_76 = arith.constant 0 : index
    %c0_77 = arith.constant 0 : index
    %73 = vector.load %arg9[%c0_76, %c0_77] : memref<288x144xf32, #tpu.memory_space<vmem>>, vector<288x144xf32>
    %cst_78 = arith.constant dense<0.000000e+00> : vector<26x144xf32>
    %74 = tpu.matmul %71, %73, %cst_78 {dimension_numbers = #tpu.dot_dimension_numbers<[1], [0], [0], [1], [0, 0, 1, 1], [], []>} : vector<26x288xf32>, vector<288x144xf32>, vector<26x144xf32> -> vector<26x144xf32>
    %cst_79 = arith.constant dense<0.000000e+00> : vector<13x144xf32>
    %75 = tpu.matmul %72, %74, %cst_79 {dimension_numbers = #tpu.dot_dimension_numbers<[1], [0], [0], [1], [0, 0, 1, 1], [], []>} : vector<13x26xf32>, vector<26x144xf32>, vector<13x144xf32> -> vector<13x144xf32>
    %cst_80 = arith.constant 2.500000e-01 : f32
    %76 = vector.broadcast %cst_80 : f32 to vector<13x144xf32>
    %77 = arith.mulf %76, %75 : vector<13x144xf32>
    %cst_81 = arith.constant 0.000000e+00 : f32
    %78 = vector.broadcast %cst_81 : f32 to vector<60x264xf32>
    %c1_82 = arith.constant 1 : index
    %c0_83 = arith.constant 0 : index
    %c0_84 = arith.constant 0 : index
    %79 = vector.load %arg1[%c1_82, %c0_83, %c0_84] : memref<2x64x48xf32, #tpu.memory_space<vmem>>, vector<1x60x48xf32>
    %80 = vector.shape_cast %79 : vector<1x60x48xf32> to vector<60x48xf32>
    %c0_85 = arith.constant 0 : index
    %c0_86 = arith.constant 0 : index
    %c0_87 = arith.constant 0 : index
    %81 = vector.load %arg2[%c0_85, %c0_86, %c0_87] : memref<5x48x264xf32, #tpu.memory_space<vmem>>, vector<1x48x264xf32>
    %82 = vector.shape_cast %81 : vector<1x48x264xf32> to vector<48x264xf32>
    %cst_88 = arith.constant dense<0.000000e+00> : vector<60x264xf32>
    %83 = tpu.matmul %80, %82, %cst_88 {dimension_numbers = #tpu.dot_dimension_numbers<[1], [0], [0], [1], [0, 0, 1, 1], [], []>} : vector<60x48xf32>, vector<48x264xf32>, vector<60x264xf32> -> vector<60x264xf32>
    %84 = arith.addf %78, %83 : vector<60x264xf32>
    %c1_89 = arith.constant 1 : index
    %c1_90 = arith.constant 1 : index
    %c0_91 = arith.constant 0 : index
    %85 = vector.load %arg1[%c1_89, %c1_90, %c0_91] : memref<2x64x48xf32, #tpu.memory_space<vmem>>, vector<1x60x48xf32>
    %86 = vector.shape_cast %85 : vector<1x60x48xf32> to vector<60x48xf32>
    %c1_92 = arith.constant 1 : index
    %c0_93 = arith.constant 0 : index
    %c0_94 = arith.constant 0 : index
    %87 = vector.load %arg2[%c1_92, %c0_93, %c0_94] : memref<5x48x264xf32, #tpu.memory_space<vmem>>, vector<1x48x264xf32>
    %88 = vector.shape_cast %87 : vector<1x48x264xf32> to vector<48x264xf32>
    %cst_95 = arith.constant dense<0.000000e+00> : vector<60x264xf32>
    %89 = tpu.matmul %86, %88, %cst_95 {dimension_numbers = #tpu.dot_dimension_numbers<[1], [0], [0], [1], [0, 0, 1, 1], [], []>} : vector<60x48xf32>, vector<48x264xf32>, vector<60x264xf32> -> vector<60x264xf32>
    %90 = arith.addf %84, %89 : vector<60x264xf32>
    %c1_96 = arith.constant 1 : index
    %c2_97 = arith.constant 2 : index
    %c0_98 = arith.constant 0 : index
    %91 = vector.load %arg1[%c1_96, %c2_97, %c0_98] : memref<2x64x48xf32, #tpu.memory_space<vmem>>, vector<1x60x48xf32>
    %92 = vector.shape_cast %91 : vector<1x60x48xf32> to vector<60x48xf32>
    %c2_99 = arith.constant 2 : index
    %c0_100 = arith.constant 0 : index
    %c0_101 = arith.constant 0 : index
    %93 = vector.load %arg2[%c2_99, %c0_100, %c0_101] : memref<5x48x264xf32, #tpu.memory_space<vmem>>, vector<1x48x264xf32>
    %94 = vector.shape_cast %93 : vector<1x48x264xf32> to vector<48x264xf32>
    %cst_102 = arith.constant dense<0.000000e+00> : vector<60x264xf32>
    %95 = tpu.matmul %92, %94, %cst_102 {dimension_numbers = #tpu.dot_dimension_numbers<[1], [0], [0], [1], [0, 0, 1, 1], [], []>} : vector<60x48xf32>, vector<48x264xf32>, vector<60x264xf32> -> vector<60x264xf32>
    %96 = arith.addf %90, %95 : vector<60x264xf32>
    %c1_103 = arith.constant 1 : index
    %c3_104 = arith.constant 3 : index
    %c0_105 = arith.constant 0 : index
    %97 = vector.load %arg1[%c1_103, %c3_104, %c0_105] : memref<2x64x48xf32, #tpu.memory_space<vmem>>, vector<1x60x48xf32>
    %98 = vector.shape_cast %97 : vector<1x60x48xf32> to vector<60x48xf32>
    %c3_106 = arith.constant 3 : index
    %c0_107 = arith.constant 0 : index
    %c0_108 = arith.constant 0 : index
    %99 = vector.load %arg2[%c3_106, %c0_107, %c0_108] : memref<5x48x264xf32, #tpu.memory_space<vmem>>, vector<1x48x264xf32>
    %100 = vector.shape_cast %99 : vector<1x48x264xf32> to vector<48x264xf32>
    %cst_109 = arith.constant dense<0.000000e+00> : vector<60x264xf32>
    %101 = tpu.matmul %98, %100, %cst_109 {dimension_numbers = #tpu.dot_dimension_numbers<[1], [0], [0], [1], [0, 0, 1, 1], [], []>} : vector<60x48xf32>, vector<48x264xf32>, vector<60x264xf32> -> vector<60x264xf32>
    %102 = arith.addf %96, %101 : vector<60x264xf32>
    %c1_110 = arith.constant 1 : index
    %c4_111 = arith.constant 4 : index
    %c0_112 = arith.constant 0 : index
    %103 = vector.load %arg1[%c1_110, %c4_111, %c0_112] : memref<2x64x48xf32, #tpu.memory_space<vmem>>, vector<1x60x48xf32>
    %104 = vector.shape_cast %103 : vector<1x60x48xf32> to vector<60x48xf32>
    %c4_113 = arith.constant 4 : index
    %c0_114 = arith.constant 0 : index
    %c0_115 = arith.constant 0 : index
    %105 = vector.load %arg2[%c4_113, %c0_114, %c0_115] : memref<5x48x264xf32, #tpu.memory_space<vmem>>, vector<1x48x264xf32>
    %106 = vector.shape_cast %105 : vector<1x48x264xf32> to vector<48x264xf32>
    %cst_116 = arith.constant dense<0.000000e+00> : vector<60x264xf32>
    %107 = tpu.matmul %104, %106, %cst_116 {dimension_numbers = #tpu.dot_dimension_numbers<[1], [0], [0], [1], [0, 0, 1, 1], [], []>} : vector<60x48xf32>, vector<48x264xf32>, vector<60x264xf32> -> vector<60x264xf32>
    %108 = arith.addf %102, %107 : vector<60x264xf32>
    %c0_117 = arith.constant 0 : index
    %c0_118 = arith.constant 0 : index
    %109 = vector.load %arg3[%c0_117, %c0_118] : memref<1x264xf32, #tpu.memory_space<vmem>>, vector<1x264xf32>
    %110 = vector.broadcast %109 : vector<1x264xf32> to vector<60x264xf32>
    %111 = arith.addf %108, %110 : vector<60x264xf32>
    %112 = math.tanh %111 : vector<60x264xf32>
    %c0_119 = arith.constant 0 : index
    %c0_120 = arith.constant 0 : index
    %113 = vector.load %arg4[%c0_119, %c0_120] : memref<30x60xf32, #tpu.memory_space<vmem>>, vector<30x60xf32>
    %c0_121 = arith.constant 0 : index
    %c0_122 = arith.constant 0 : index
    %114 = vector.load %arg5[%c0_121, %c0_122] : memref<264x132xf32, #tpu.memory_space<vmem>>, vector<264x132xf32>
    %cst_123 = arith.constant dense<0.000000e+00> : vector<60x132xf32>
    %115 = tpu.matmul %112, %114, %cst_123 {dimension_numbers = #tpu.dot_dimension_numbers<[1], [0], [0], [1], [0, 0, 1, 1], [], []>} : vector<60x264xf32>, vector<264x132xf32>, vector<60x132xf32> -> vector<60x132xf32>
    %cst_124 = arith.constant dense<0.000000e+00> : vector<30x132xf32>
    %116 = tpu.matmul %113, %115, %cst_124 {dimension_numbers = #tpu.dot_dimension_numbers<[1], [0], [0], [1], [0, 0, 1, 1], [], []>} : vector<30x60xf32>, vector<60x132xf32>, vector<30x132xf32> -> vector<30x132xf32>
    %cst_125 = arith.constant 2.500000e-01 : f32
    %117 = vector.broadcast %cst_125 : f32 to vector<30x132xf32>
    %118 = arith.mulf %117, %116 : vector<30x132xf32>
    %c0_126 = arith.constant 0 : index
    %c0_127 = arith.constant 0 : index
    %119 = vector.load %arg17[%c0_126, %c0_127] : memref<30x132xf32, #tpu.memory_space<vmem>>, vector<30x132xf32>
    tpu.vector_store %arg17[%c0_126, %c0_127], %118 {strides = array<i32>} : memref<30x132xf32, #tpu.memory_space<vmem>>, vector<30x132xf32>,
    %cst_128 = arith.constant 0.000000e+00 : f32
    %120 = vector.broadcast %cst_128 : f32 to vector<26x288xf32>
    %c0_129 = arith.constant 0 : index
    %c0_130 = arith.constant 0 : index
    %121 = vector.load %arg17[%c0_129, %c0_130] : memref<30x132xf32, #tpu.memory_space<vmem>>, vector<26x132xf32>
    %c0_131 = arith.constant 0 : index
    %c0_132 = arith.constant 0 : index
    %c0_133 = arith.constant 0 : index
    %122 = vector.load %arg6[%c0_131, %c0_132, %c0_133] : memref<5x132x288xf32, #tpu.memory_space<vmem>>, vector<1x132x288xf32>
    %123 = vector.shape_cast %122 : vector<1x132x288xf32> to vector<132x288xf32>
    %cst_134 = arith.constant dense<0.000000e+00> : vector<26x288xf32>
    %124 = tpu.matmul %121, %123, %cst_134 {dimension_numbers = #tpu.dot_dimension_numbers<[1], [0], [0], [1], [0, 0, 1, 1], [], []>} : vector<26x132xf32>, vector<132x288xf32>, vector<26x288xf32> -> vector<26x288xf32>
    %125 = arith.addf %120, %124 : vector<26x288xf32>
    %c1_135 = arith.constant 1 : index
    %c0_136 = arith.constant 0 : index
    %126 = vector.load %arg17[%c1_135, %c0_136] : memref<30x132xf32, #tpu.memory_space<vmem>>, vector<26x132xf32>
    %c1_137 = arith.constant 1 : index
    %c0_138 = arith.constant 0 : index
    %c0_139 = arith.constant 0 : index
    %127 = vector.load %arg6[%c1_137, %c0_138, %c0_139] : memref<5x132x288xf32, #tpu.memory_space<vmem>>, vector<1x132x288xf32>
    %128 = vector.shape_cast %127 : vector<1x132x288xf32> to vector<132x288xf32>
    %cst_140 = arith.constant dense<0.000000e+00> : vector<26x288xf32>
    %129 = tpu.matmul %126, %128, %cst_140 {dimension_numbers = #tpu.dot_dimension_numbers<[1], [0], [0], [1], [0, 0, 1, 1], [], []>} : vector<26x132xf32>, vector<132x288xf32>, vector<26x288xf32> -> vector<26x288xf32>
    %130 = arith.addf %125, %129 : vector<26x288xf32>
    %c2_141 = arith.constant 2 : index
    %c0_142 = arith.constant 0 : index
    %131 = vector.load %arg17[%c2_141, %c0_142] : memref<30x132xf32, #tpu.memory_space<vmem>>, vector<26x132xf32>
    %c2_143 = arith.constant 2 : index
    %c0_144 = arith.constant 0 : index
    %c0_145 = arith.constant 0 : index
    %132 = vector.load %arg6[%c2_143, %c0_144, %c0_145] : memref<5x132x288xf32, #tpu.memory_space<vmem>>, vector<1x132x288xf32>
    %133 = vector.shape_cast %132 : vector<1x132x288xf32> to vector<132x288xf32>
    %cst_146 = arith.constant dense<0.000000e+00> : vector<26x288xf32>
    %134 = tpu.matmul %131, %133, %cst_146 {dimension_numbers = #tpu.dot_dimension_numbers<[1], [0], [0], [1], [0, 0, 1, 1], [], []>} : vector<26x132xf32>, vector<132x288xf32>, vector<26x288xf32> -> vector<26x288xf32>
    %135 = arith.addf %130, %134 : vector<26x288xf32>
    %c3_147 = arith.constant 3 : index
    %c0_148 = arith.constant 0 : index
    %136 = vector.load %arg17[%c3_147, %c0_148] : memref<30x132xf32, #tpu.memory_space<vmem>>, vector<26x132xf32>
    %c3_149 = arith.constant 3 : index
    %c0_150 = arith.constant 0 : index
    %c0_151 = arith.constant 0 : index
    %137 = vector.load %arg6[%c3_149, %c0_150, %c0_151] : memref<5x132x288xf32, #tpu.memory_space<vmem>>, vector<1x132x288xf32>
    %138 = vector.shape_cast %137 : vector<1x132x288xf32> to vector<132x288xf32>
    %cst_152 = arith.constant dense<0.000000e+00> : vector<26x288xf32>
    %139 = tpu.matmul %136, %138, %cst_152 {dimension_numbers = #tpu.dot_dimension_numbers<[1], [0], [0], [1], [0, 0, 1, 1], [], []>} : vector<26x132xf32>, vector<132x288xf32>, vector<26x288xf32> -> vector<26x288xf32>
    %140 = arith.addf %135, %139 : vector<26x288xf32>
    %c4_153 = arith.constant 4 : index
    %c0_154 = arith.constant 0 : index
    %141 = vector.load %arg17[%c4_153, %c0_154] : memref<30x132xf32, #tpu.memory_space<vmem>>, vector<26x132xf32>
    %c4_155 = arith.constant 4 : index
    %c0_156 = arith.constant 0 : index
    %c0_157 = arith.constant 0 : index
    %142 = vector.load %arg6[%c4_155, %c0_156, %c0_157] : memref<5x132x288xf32, #tpu.memory_space<vmem>>, vector<1x132x288xf32>
    %143 = vector.shape_cast %142 : vector<1x132x288xf32> to vector<132x288xf32>
    %cst_158 = arith.constant dense<0.000000e+00> : vector<26x288xf32>
    %144 = tpu.matmul %141, %143, %cst_158 {dimension_numbers = #tpu.dot_dimension_numbers<[1], [0], [0], [1], [0, 0, 1, 1], [], []>} : vector<26x132xf32>, vector<132x288xf32>, vector<26x288xf32> -> vector<26x288xf32>
    %145 = arith.addf %140, %144 : vector<26x288xf32>
    %c0_159 = arith.constant 0 : index
    %c0_160 = arith.constant 0 : index
    %146 = vector.load %arg7[%c0_159, %c0_160] : memref<1x288xf32, #tpu.memory_space<vmem>>, vector<1x288xf32>
    %147 = vector.broadcast %146 : vector<1x288xf32> to vector<26x288xf32>
    %148 = arith.addf %145, %147 : vector<26x288xf32>
    %149 = math.tanh %148 : vector<26x288xf32>
    %c0_161 = arith.constant 0 : index
    %c0_162 = arith.constant 0 : index
    %150 = vector.load %arg8[%c0_161, %c0_162] : memref<13x26xf32, #tpu.memory_space<vmem>>, vector<13x26xf32>
    %c0_163 = arith.constant 0 : index
    %c0_164 = arith.constant 0 : index
    %151 = vector.load %arg9[%c0_163, %c0_164] : memref<288x144xf32, #tpu.memory_space<vmem>>, vector<288x144xf32>
    %cst_165 = arith.constant dense<0.000000e+00> : vector<26x144xf32>
    %152 = tpu.matmul %149, %151, %cst_165 {dimension_numbers = #tpu.dot_dimension_numbers<[1], [0], [0], [1], [0, 0, 1, 1], [], []>} : vector<26x288xf32>, vector<288x144xf32>, vector<26x144xf32> -> vector<26x144xf32>
    %cst_166 = arith.constant dense<0.000000e+00> : vector<13x144xf32>
    %153 = tpu.matmul %150, %152, %cst_166 {dimension_numbers = #tpu.dot_dimension_numbers<[1], [0], [0], [1], [0, 0, 1, 1], [], []>} : vector<13x26xf32>, vector<26x144xf32>, vector<13x144xf32> -> vector<13x144xf32>
    %cst_167 = arith.constant 2.500000e-01 : f32
    %154 = vector.broadcast %cst_167 : f32 to vector<13x144xf32>
    %155 = arith.mulf %154, %153 : vector<13x144xf32>
    %cst_168 = arith.constant 0.000000e+00 : f32
    %156 = vector.broadcast %cst_168 : f32 to vector<2x128xf32>
    %157 = vector.extract_strided_slice %77 {offsets = [0, 0], sizes = [1, 144], strides = [1, 1]} : vector<13x144xf32> to vector<1x144xf32>
    %158 = vector.extract_strided_slice %155 {offsets = [0, 0], sizes = [1, 144], strides = [1, 1]} : vector<13x144xf32> to vector<1x144xf32>
    %159 = tpu.concatenate %157, %158 in 0 : vector<1x144xf32>, vector<1x144xf32> -> vector<2x144xf32>
    %c0_169 = arith.constant 0 : index
    %c0_170 = arith.constant 0 : index
    %c0_171 = arith.constant 0 : index
    %160 = vector.load %arg10[%c0_169, %c0_170, %c0_171] : memref<13x144x128xf32, #tpu.memory_space<vmem>>, vector<1x144x128xf32>
    %161 = vector.shape_cast %160 : vector<1x144x128xf32> to vector<144x128xf32>
    %cst_172 = arith.constant dense<0.000000e+00> : vector<2x128xf32>
    %162 = tpu.matmul %159, %161, %cst_172 {dimension_numbers = #tpu.dot_dimension_numbers<[1], [0], [0], [1], [0, 0, 1, 1], [], []>} : vector<2x144xf32>, vector<144x128xf32>, vector<2x128xf32> -> vector<2x128xf32>
    %163 = arith.addf %156, %162 : vector<2x128xf32>
    %164 = vector.extract_strided_slice %77 {offsets = [1, 0], sizes = [1, 144], strides = [1, 1]} : vector<13x144xf32> to vector<1x144xf32>
    %165 = vector.extract_strided_slice %155 {offsets = [1, 0], sizes = [1, 144], strides = [1, 1]} : vector<13x144xf32> to vector<1x144xf32>
    %166 = tpu.concatenate %164, %165 in 0 : vector<1x144xf32>, vector<1x144xf32> -> vector<2x144xf32>
    %c1_173 = arith.constant 1 : index
    %c0_174 = arith.constant 0 : index
    %c0_175 = arith.constant 0 : index
    %167 = vector.load %arg10[%c1_173, %c0_174, %c0_175] : memref<13x144x128xf32, #tpu.memory_space<vmem>>, vector<1x144x128xf32>
    %168 = vector.shape_cast %167 : vector<1x144x128xf32> to vector<144x128xf32>
    %cst_176 = arith.constant dense<0.000000e+00> : vector<2x128xf32>
    %169 = tpu.matmul %166, %168, %cst_176 {dimension_numbers = #tpu.dot_dimension_numbers<[1], [0], [0], [1], [0, 0, 1, 1], [], []>} : vector<2x144xf32>, vector<144x128xf32>, vector<2x128xf32> -> vector<2x128xf32>
    %170 = arith.addf %163, %169 : vector<2x128xf32>
    %171 = vector.extract_strided_slice %77 {offsets = [2, 0], sizes = [1, 144], strides = [1, 1]} : vector<13x144xf32> to vector<1x144xf32>
    %172 = vector.extract_strided_slice %155 {offsets = [2, 0], sizes = [1, 144], strides = [1, 1]} : vector<13x144xf32> to vector<1x144xf32>
    %173 = tpu.concatenate %171, %172 in 0 : vector<1x144xf32>, vector<1x144xf32> -> vector<2x144xf32>
    %c2_177 = arith.constant 2 : index
    %c0_178 = arith.constant 0 : index
    %c0_179 = arith.constant 0 : index
    %174 = vector.load %arg10[%c2_177, %c0_178, %c0_179] : memref<13x144x128xf32, #tpu.memory_space<vmem>>, vector<1x144x128xf32>
    %175 = vector.shape_cast %174 : vector<1x144x128xf32> to vector<144x128xf32>
    %cst_180 = arith.constant dense<0.000000e+00> : vector<2x128xf32>
    %176 = tpu.matmul %173, %175, %cst_180 {dimension_numbers = #tpu.dot_dimension_numbers<[1], [0], [0], [1], [0, 0, 1, 1], [], []>} : vector<2x144xf32>, vector<144x128xf32>, vector<2x128xf32> -> vector<2x128xf32>
    %177 = arith.addf %170, %176 : vector<2x128xf32>
    %178 = vector.extract_strided_slice %77 {offsets = [3, 0], sizes = [1, 144], strides = [1, 1]} : vector<13x144xf32> to vector<1x144xf32>
    %179 = vector.extract_strided_slice %155 {offsets = [3, 0], sizes = [1, 144], strides = [1, 1]} : vector<13x144xf32> to vector<1x144xf32>
    %180 = tpu.concatenate %178, %179 in 0 : vector<1x144xf32>, vector<1x144xf32> -> vector<2x144xf32>
    %c3_181 = arith.constant 3 : index
    %c0_182 = arith.constant 0 : index
    %c0_183 = arith.constant 0 : index
    %181 = vector.load %arg10[%c3_181, %c0_182, %c0_183] : memref<13x144x128xf32, #tpu.memory_space<vmem>>, vector<1x144x128xf32>
    %182 = vector.shape_cast %181 : vector<1x144x128xf32> to vector<144x128xf32>
    %cst_184 = arith.constant dense<0.000000e+00> : vector<2x128xf32>
    %183 = tpu.matmul %180, %182, %cst_184 {dimension_numbers = #tpu.dot_dimension_numbers<[1], [0], [0], [1], [0, 0, 1, 1], [], []>} : vector<2x144xf32>, vector<144x128xf32>, vector<2x128xf32> -> vector<2x128xf32>
    %184 = arith.addf %177, %183 : vector<2x128xf32>
    %185 = vector.extract_strided_slice %77 {offsets = [4, 0], sizes = [1, 144], strides = [1, 1]} : vector<13x144xf32> to vector<1x144xf32>
    %186 = vector.extract_strided_slice %155 {offsets = [4, 0], sizes = [1, 144], strides = [1, 1]} : vector<13x144xf32> to vector<1x144xf32>
    %187 = tpu.concatenate %185, %186 in 0 : vector<1x144xf32>, vector<1x144xf32> -> vector<2x144xf32>
    %c4_185 = arith.constant 4 : index
    %c0_186 = arith.constant 0 : index
    %c0_187 = arith.constant 0 : index
    %188 = vector.load %arg10[%c4_185, %c0_186, %c0_187] : memref<13x144x128xf32, #tpu.memory_space<vmem>>, vector<1x144x128xf32>
    %189 = vector.shape_cast %188 : vector<1x144x128xf32> to vector<144x128xf32>
    %cst_188 = arith.constant dense<0.000000e+00> : vector<2x128xf32>
    %190 = tpu.matmul %187, %189, %cst_188 {dimension_numbers = #tpu.dot_dimension_numbers<[1], [0], [0], [1], [0, 0, 1, 1], [], []>} : vector<2x144xf32>, vector<144x128xf32>, vector<2x128xf32> -> vector<2x128xf32>
    %191 = arith.addf %184, %190 : vector<2x128xf32>
    %192 = vector.extract_strided_slice %77 {offsets = [5, 0], sizes = [1, 144], strides = [1, 1]} : vector<13x144xf32> to vector<1x144xf32>
    %193 = vector.extract_strided_slice %155 {offsets = [5, 0], sizes = [1, 144], strides = [1, 1]} : vector<13x144xf32> to vector<1x144xf32>
    %194 = tpu.concatenate %192, %193 in 0 : vector<1x144xf32>, vector<1x144xf32> -> vector<2x144xf32>
    %c5 = arith.constant 5 : index
    %c0_189 = arith.constant 0 : index
    %c0_190 = arith.constant 0 : index
    %195 = vector.load %arg10[%c5, %c0_189, %c0_190] : memref<13x144x128xf32, #tpu.memory_space<vmem>>, vector<1x144x128xf32>
    %196 = vector.shape_cast %195 : vector<1x144x128xf32> to vector<144x128xf32>
    %cst_191 = arith.constant dense<0.000000e+00> : vector<2x128xf32>
    %197 = tpu.matmul %194, %196, %cst_191 {dimension_numbers = #tpu.dot_dimension_numbers<[1], [0], [0], [1], [0, 0, 1, 1], [], []>} : vector<2x144xf32>, vector<144x128xf32>, vector<2x128xf32> -> vector<2x128xf32>
    %198 = arith.addf %191, %197 : vector<2x128xf32>
    %199 = vector.extract_strided_slice %77 {offsets = [6, 0], sizes = [1, 144], strides = [1, 1]} : vector<13x144xf32> to vector<1x144xf32>
    %200 = vector.extract_strided_slice %155 {offsets = [6, 0], sizes = [1, 144], strides = [1, 1]} : vector<13x144xf32> to vector<1x144xf32>
    %201 = tpu.concatenate %199, %200 in 0 : vector<1x144xf32>, vector<1x144xf32> -> vector<2x144xf32>
    %c6 = arith.constant 6 : index
    %c0_192 = arith.constant 0 : index
    %c0_193 = arith.constant 0 : index
    %202 = vector.load %arg10[%c6, %c0_192, %c0_193] : memref<13x144x128xf32, #tpu.memory_space<vmem>>, vector<1x144x128xf32>
    %203 = vector.shape_cast %202 : vector<1x144x128xf32> to vector<144x128xf32>
    %cst_194 = arith.constant dense<0.000000e+00> : vector<2x128xf32>
    %204 = tpu.matmul %201, %203, %cst_194 {dimension_numbers = #tpu.dot_dimension_numbers<[1], [0], [0], [1], [0, 0, 1, 1], [], []>} : vector<2x144xf32>, vector<144x128xf32>, vector<2x128xf32> -> vector<2x128xf32>
    %205 = arith.addf %198, %204 : vector<2x128xf32>
    %206 = vector.extract_strided_slice %77 {offsets = [7, 0], sizes = [1, 144], strides = [1, 1]} : vector<13x144xf32> to vector<1x144xf32>
    %207 = vector.extract_strided_slice %155 {offsets = [7, 0], sizes = [1, 144], strides = [1, 1]} : vector<13x144xf32> to vector<1x144xf32>
    %208 = tpu.concatenate %206, %207 in 0 : vector<1x144xf32>, vector<1x144xf32> -> vector<2x144xf32>
    %c7 = arith.constant 7 : index
    %c0_195 = arith.constant 0 : index
    %c0_196 = arith.constant 0 : index
    %209 = vector.load %arg10[%c7, %c0_195, %c0_196] : memref<13x144x128xf32, #tpu.memory_space<vmem>>, vector<1x144x128xf32>
    %210 = vector.shape_cast %209 : vector<1x144x128xf32> to vector<144x128xf32>
    %cst_197 = arith.constant dense<0.000000e+00> : vector<2x128xf32>
    %211 = tpu.matmul %208, %210, %cst_197 {dimension_numbers = #tpu.dot_dimension_numbers<[1], [0], [0], [1], [0, 0, 1, 1], [], []>} : vector<2x144xf32>, vector<144x128xf32>, vector<2x128xf32> -> vector<2x128xf32>
    %212 = arith.addf %205, %211 : vector<2x128xf32>
    %213 = vector.extract_strided_slice %77 {offsets = [8, 0], sizes = [1, 144], strides = [1, 1]} : vector<13x144xf32> to vector<1x144xf32>
    %214 = vector.extract_strided_slice %155 {offsets = [8, 0], sizes = [1, 144], strides = [1, 1]} : vector<13x144xf32> to vector<1x144xf32>
    %215 = tpu.concatenate %213, %214 in 0 : vector<1x144xf32>, vector<1x144xf32> -> vector<2x144xf32>
    %c8 = arith.constant 8 : index
    %c0_198 = arith.constant 0 : index
    %c0_199 = arith.constant 0 : index
    %216 = vector.load %arg10[%c8, %c0_198, %c0_199] : memref<13x144x128xf32, #tpu.memory_space<vmem>>, vector<1x144x128xf32>
    %217 = vector.shape_cast %216 : vector<1x144x128xf32> to vector<144x128xf32>
    %cst_200 = arith.constant dense<0.000000e+00> : vector<2x128xf32>
    %218 = tpu.matmul %215, %217, %cst_200 {dimension_numbers = #tpu.dot_dimension_numbers<[1], [0], [0], [1], [0, 0, 1, 1], [], []>} : vector<2x144xf32>, vector<144x128xf32>, vector<2x128xf32> -> vector<2x128xf32>
    %219 = arith.addf %212, %218 : vector<2x128xf32>
    %220 = vector.extract_strided_slice %77 {offsets = [9, 0], sizes = [1, 144], strides = [1, 1]} : vector<13x144xf32> to vector<1x144xf32>
    %221 = vector.extract_strided_slice %155 {offsets = [9, 0], sizes = [1, 144], strides = [1, 1]} : vector<13x144xf32> to vector<1x144xf32>
    %222 = tpu.concatenate %220, %221 in 0 : vector<1x144xf32>, vector<1x144xf32> -> vector<2x144xf32>
    %c9 = arith.constant 9 : index
    %c0_201 = arith.constant 0 : index
    %c0_202 = arith.constant 0 : index
    %223 = vector.load %arg10[%c9, %c0_201, %c0_202] : memref<13x144x128xf32, #tpu.memory_space<vmem>>, vector<1x144x128xf32>
    %224 = vector.shape_cast %223 : vector<1x144x128xf32> to vector<144x128xf32>
    %cst_203 = arith.constant dense<0.000000e+00> : vector<2x128xf32>
    %225 = tpu.matmul %222, %224, %cst_203 {dimension_numbers = #tpu.dot_dimension_numbers<[1], [0], [0], [1], [0, 0, 1, 1], [], []>} : vector<2x144xf32>, vector<144x128xf32>, vector<2x128xf32> -> vector<2x128xf32>
    %226 = arith.addf %219, %225 : vector<2x128xf32>
    %227 = vector.extract_strided_slice %77 {offsets = [10, 0], sizes = [1, 144], strides = [1, 1]} : vector<13x144xf32> to vector<1x144xf32>
    %228 = vector.extract_strided_slice %155 {offsets = [10, 0], sizes = [1, 144], strides = [1, 1]} : vector<13x144xf32> to vector<1x144xf32>
    %229 = tpu.concatenate %227, %228 in 0 : vector<1x144xf32>, vector<1x144xf32> -> vector<2x144xf32>
    %c10 = arith.constant 10 : index
    %c0_204 = arith.constant 0 : index
    %c0_205 = arith.constant 0 : index
    %230 = vector.load %arg10[%c10, %c0_204, %c0_205] : memref<13x144x128xf32, #tpu.memory_space<vmem>>, vector<1x144x128xf32>
    %231 = vector.shape_cast %230 : vector<1x144x128xf32> to vector<144x128xf32>
    %cst_206 = arith.constant dense<0.000000e+00> : vector<2x128xf32>
    %232 = tpu.matmul %229, %231, %cst_206 {dimension_numbers = #tpu.dot_dimension_numbers<[1], [0], [0], [1], [0, 0, 1, 1], [], []>} : vector<2x144xf32>, vector<144x128xf32>, vector<2x128xf32> -> vector<2x128xf32>
    %233 = arith.addf %226, %232 : vector<2x128xf32>
    %234 = vector.extract_strided_slice %77 {offsets = [11, 0], sizes = [1, 144], strides = [1, 1]} : vector<13x144xf32> to vector<1x144xf32>
    %235 = vector.extract_strided_slice %155 {offsets = [11, 0], sizes = [1, 144], strides = [1, 1]} : vector<13x144xf32> to vector<1x144xf32>
    %236 = tpu.concatenate %234, %235 in 0 : vector<1x144xf32>, vector<1x144xf32> -> vector<2x144xf32>
    %c11 = arith.constant 11 : index
    %c0_207 = arith.constant 0 : index
    %c0_208 = arith.constant 0 : index
    %237 = vector.load %arg10[%c11, %c0_207, %c0_208] : memref<13x144x128xf32, #tpu.memory_space<vmem>>, vector<1x144x128xf32>
    %238 = vector.shape_cast %237 : vector<1x144x128xf32> to vector<144x128xf32>
    %cst_209 = arith.constant dense<0.000000e+00> : vector<2x128xf32>
    %239 = tpu.matmul %236, %238, %cst_209 {dimension_numbers = #tpu.dot_dimension_numbers<[1], [0], [0], [1], [0, 0, 1, 1], [], []>} : vector<2x144xf32>, vector<144x128xf32>, vector<2x128xf32> -> vector<2x128xf32>
    %240 = arith.addf %233, %239 : vector<2x128xf32>
    %241 = vector.extract_strided_slice %77 {offsets = [12, 0], sizes = [1, 144], strides = [1, 1]} : vector<13x144xf32> to vector<1x144xf32>
    %242 = vector.extract_strided_slice %155 {offsets = [12, 0], sizes = [1, 144], strides = [1, 1]} : vector<13x144xf32> to vector<1x144xf32>
    %243 = tpu.concatenate %241, %242 in 0 : vector<1x144xf32>, vector<1x144xf32> -> vector<2x144xf32>
    %c12 = arith.constant 12 : index
    %c0_210 = arith.constant 0 : index
    %c0_211 = arith.constant 0 : index
    %244 = vector.load %arg10[%c12, %c0_210, %c0_211] : memref<13x144x128xf32, #tpu.memory_space<vmem>>, vector<1x144x128xf32>
    %245 = vector.shape_cast %244 : vector<1x144x128xf32> to vector<144x128xf32>
    %cst_212 = arith.constant dense<0.000000e+00> : vector<2x128xf32>
    %246 = tpu.matmul %243, %245, %cst_212 {dimension_numbers = #tpu.dot_dimension_numbers<[1], [0], [0], [1], [0, 0, 1, 1], [], []>} : vector<2x144xf32>, vector<144x128xf32>, vector<2x128xf32> -> vector<2x128xf32>
    %247 = arith.addf %240, %246 : vector<2x128xf32>
    %c0_213 = arith.constant 0 : index
    %c0_214 = arith.constant 0 : index
    %248 = vector.load %arg11[%c0_213, %c0_214] : memref<1x128xf32, #tpu.memory_space<vmem>>, vector<1x128xf32>
    %249 = vector.broadcast %248 : vector<1x128xf32> to vector<2x128xf32>
    %250 = arith.addf %247, %249 : vector<2x128xf32>
    %251 = math.tanh %250 : vector<2x128xf32>
    %c0_215 = arith.constant 0 : index
    %c0_216 = arith.constant 0 : index
    %252 = vector.load %arg12[%c0_215, %c0_216] : memref<128x128xf32, #tpu.memory_space<vmem>>, vector<128x128xf32>
    %cst_217 = arith.constant dense<0.000000e+00> : vector<2x128xf32>
    %253 = tpu.matmul %251, %252, %cst_217 {dimension_numbers = #tpu.dot_dimension_numbers<[1], [0], [0], [1], [0, 0, 1, 1], [], []>} : vector<2x128xf32>, vector<128x128xf32>, vector<2x128xf32> -> vector<2x128xf32>
    %c0_218 = arith.constant 0 : index
    %c0_219 = arith.constant 0 : index
    %254 = vector.load %arg13[%c0_218, %c0_219] : memref<1x128xf32, #tpu.memory_space<vmem>>, vector<1x128xf32>
    %255 = vector.broadcast %254 : vector<1x128xf32> to vector<2x128xf32>
    %256 = arith.addf %253, %255 : vector<2x128xf32>
    %257 = math.tanh %256 : vector<2x128xf32>
    %c0_220 = arith.constant 0 : index
    %c0_221 = arith.constant 0 : index
    %258 = vector.load %arg14[%c0_220, %c0_221] : memref<128x36xf32, #tpu.memory_space<vmem>>, vector<128x36xf32>
    %cst_222 = arith.constant dense<0.000000e+00> : vector<2x36xf32>
    %259 = tpu.matmul %257, %258, %cst_222 {dimension_numbers = #tpu.dot_dimension_numbers<[1], [0], [0], [1], [0, 0, 1, 1], [], []>} : vector<2x128xf32>, vector<128x36xf32>, vector<2x36xf32> -> vector<2x36xf32>
    %c0_223 = arith.constant 0 : index
    %c0_224 = arith.constant 0 : index
    %260 = vector.load %arg15[%c0_223, %c0_224] : memref<1x36xf32, #tpu.memory_space<vmem>>, vector<1x36xf32>
    %261 = vector.broadcast %260 : vector<1x36xf32> to vector<2x36xf32>
    %262 = arith.addf %259, %261 : vector<2x36xf32>
    %c0_225 = arith.constant 0 : index
    %c0_226 = arith.constant 0 : index
    %c0_227 = arith.constant 0 : index
    %263 = vector.load %arg16[%c0_225, %c0_226, %c0_227] : memref<1x2x36xf32, #tpu.memory_space<vmem>>, vector<1x2x36xf32>
    %264 = vector.shape_cast %263 : vector<1x2x36xf32> to vector<2x36xf32>
    %265 = vector.shape_cast %262 : vector<2x36xf32> to vector<1x2x36xf32>
    tpu.vector_store %arg16[%c0_225, %c0_226, %c0_227], %265 {strides = array<i32>} : memref<1x2x36xf32, #tpu.memory_space<vmem>>, vector<1x2x36xf32>,
    return
  }
  func.func @transform_0(%arg0: i32) -> (i32, i32, i32) {
    %c0_i32 = arith.constant 0 : i32
    %c0_i32_0 = arith.constant 0 : i32
    %c0_i32_1 = arith.constant 0 : i32
    return %arg0, %c0_i32, %c0_i32_0 : i32, i32, i32
  }
  func.func @transform_1(%arg0: i32) -> (i32, i32, i32) {
    %c0_i32 = arith.constant 0 : i32
    %c0_i32_0 = arith.constant 0 : i32
    %c0_i32_1 = arith.constant 0 : i32
    %c0_i32_2 = arith.constant 0 : i32
    return %c0_i32, %c0_i32_0, %c0_i32_1 : i32, i32, i32
  }
  func.func @transform_2(%arg0: i32) -> (i32, i32) {
    %c0_i32 = arith.constant 0 : i32
    %c0_i32_0 = arith.constant 0 : i32
    %c0_i32_1 = arith.constant 0 : i32
    return %c0_i32, %c0_i32_0 : i32, i32
  }
  func.func @transform_3(%arg0: i32) -> (i32, i32) {
    %c0_i32 = arith.constant 0 : i32
    %c0_i32_0 = arith.constant 0 : i32
    %c0_i32_1 = arith.constant 0 : i32
    return %c0_i32, %c0_i32_0 : i32, i32
  }
  func.func @transform_4(%arg0: i32) -> (i32, i32) {
    %c0_i32 = arith.constant 0 : i32
    %c0_i32_0 = arith.constant 0 : i32
    %c0_i32_1 = arith.constant 0 : i32
    return %c0_i32, %c0_i32_0 : i32, i32
  }
  func.func @transform_5(%arg0: i32) -> (i32, i32, i32) {
    %c0_i32 = arith.constant 0 : i32
    %c0_i32_0 = arith.constant 0 : i32
    %c0_i32_1 = arith.constant 0 : i32
    %c0_i32_2 = arith.constant 0 : i32
    return %c0_i32, %c0_i32_0, %c0_i32_1 : i32, i32, i32
  }
  func.func @transform_6(%arg0: i32) -> (i32, i32) {
    %c0_i32 = arith.constant 0 : i32
    %c0_i32_0 = arith.constant 0 : i32
    %c0_i32_1 = arith.constant 0 : i32
    return %c0_i32, %c0_i32_0 : i32, i32
  }
  func.func @transform_7(%arg0: i32) -> (i32, i32) {
    %c0_i32 = arith.constant 0 : i32
    %c0_i32_0 = arith.constant 0 : i32
    %c0_i32_1 = arith.constant 0 : i32
    return %c0_i32, %c0_i32_0 : i32, i32
  }
  func.func @transform_8(%arg0: i32) -> (i32, i32) {
    %c0_i32 = arith.constant 0 : i32
    %c0_i32_0 = arith.constant 0 : i32
    %c0_i32_1 = arith.constant 0 : i32
    return %c0_i32, %c0_i32_0 : i32, i32
  }
  func.func @transform_9(%arg0: i32) -> (i32, i32, i32) {
    %c0_i32 = arith.constant 0 : i32
    %c0_i32_0 = arith.constant 0 : i32
    %c0_i32_1 = arith.constant 0 : i32
    %c0_i32_2 = arith.constant 0 : i32
    return %c0_i32, %c0_i32_0, %c0_i32_1 : i32, i32, i32
  }
  func.func @transform_10(%arg0: i32) -> (i32, i32) {
    %c0_i32 = arith.constant 0 : i32
    %c0_i32_0 = arith.constant 0 : i32
    %c0_i32_1 = arith.constant 0 : i32
    return %c0_i32, %c0_i32_0 : i32, i32
  }
  func.func @transform_11(%arg0: i32) -> (i32, i32) {
    %c0_i32 = arith.constant 0 : i32
    %c0_i32_0 = arith.constant 0 : i32
    %c0_i32_1 = arith.constant 0 : i32
    return %c0_i32, %c0_i32_0 : i32, i32
  }
  func.func @transform_12(%arg0: i32) -> (i32, i32) {
    %c0_i32 = arith.constant 0 : i32
    %c0_i32_0 = arith.constant 0 : i32
    %c0_i32_1 = arith.constant 0 : i32
    return %c0_i32, %c0_i32_0 : i32, i32
  }
  func.func @transform_13(%arg0: i32) -> (i32, i32) {
    %c0_i32 = arith.constant 0 : i32
    %c0_i32_0 = arith.constant 0 : i32
    %c0_i32_1 = arith.constant 0 : i32
    return %c0_i32, %c0_i32_0 : i32, i32
  }
  func.func @transform_14(%arg0: i32) -> (i32, i32) {
    %c0_i32 = arith.constant 0 : i32
    %c0_i32_0 = arith.constant 0 : i32
    %c0_i32_1 = arith.constant 0 : i32
    return %c0_i32, %c0_i32_0 : i32, i32
  }
  func.func @transform_15(%arg0: i32) -> (i32, i32, i32) {
    %c0_i32 = arith.constant 0 : i32
    %c0_i32_0 = arith.constant 0 : i32
    %c0_i32_1 = arith.constant 0 : i32
    return %arg0, %c0_i32, %c0_i32_0 : i32, i32, i32
  }
}

</mosaic_0001>

<llo_original>
// kernel: lenet5_forward.1
$region0: #{lenet5_forward.1}
  #allocation0 [shape = 'u32[]', space=smem, size = 0x4, offset = 0x4, fixed_abs, tag = 'smem constant byte address 0x4 - core index']
  #allocation1 [shape = 'u32[144,128]{1,0:T(1,128)}', space=vmem, size = 0x12000, scoped, tag = 'internal scratch']
  #allocation2 [shape = 'f32[30,132]{1,0:T(8,128)}', space=vmem, size = 0x8000, scoped, tag = 'scratch operand']
  %s0 = inlined_call_operand.vmem [shape: f32[2,64,48], index: 0, kind: input, shape index: {}]
  %s1 = inlined_call_operand.hbm [shape: f32[5,48,264], index: 1, kind: input, shape index: {}]
  %s2 = inlined_call_operand.vmem [shape: f32[1,264], index: 2, kind: input, shape index: {}]
  %s3 = inlined_call_operand.vmem [shape: f32[30,60], index: 3, kind: input, shape index: {}]
  %s4 = inlined_call_operand.vmem [shape: f32[264,132], index: 4, kind: input, shape index: {}]
  %s5 = inlined_call_operand.vmem [shape: f32[5,132,288], index: 5, kind: input, shape index: {}]
  %s6 = inlined_call_operand.vmem [shape: f32[1,288], index: 6, kind: input, shape index: {}]
  %s7 = inlined_call_operand.vmem [shape: f32[13,26], index: 7, kind: input, shape index: {}]
  %s8 = inlined_call_operand.vmem [shape: f32[288,144], index: 8, kind: input, shape index: {}]
  %s9 = inlined_call_operand.hbm [shape: f32[13,144,128], index: 9, kind: input, shape index: {}]
  %s10 = inlined_call_operand.vmem [shape: f32[1,128], index: 10, kind: input, shape index: {}]
  %s11 = inlined_call_operand.vmem [shape: f32[128,128], index: 11, kind: input, shape index: {}]
  %s12 = inlined_call_operand.vmem [shape: f32[1,128], index: 12, kind: input, shape index: {}]
  %s13 = inlined_call_operand.vmem [shape: f32[128,36], index: 13, kind: input, shape index: {}]
  %s14 = inlined_call_operand.vmem [shape: f32[1,36], index: 14, kind: input, shape index: {}]
  %s15 = inlined_call_operand.hbm [shape: f32[1,2,36], index: 15, kind: output, shape index: {}]
  %s16 = sld [smem:[#allocation0]]
  $region78: #{lenet5_forward.1} parent=0
    _
  %s18 = ssub.s32 1, %s16
  %s19 = scalar_select 0, %s18, %s16
  $region1: #{lenet5_forward.1} parent=0
    #allocation3 [shape = 'u8[368640]{0}', space=vmem, size = 0x5a000, scoped, tag = 'input window, operand 1, single buffered']
    #allocation4 [shape = 's32[1]{0}', space=sflag, size = 0x4, scoped, tag = 'scoped memory for lenet5_forward.1']
    #allocation5 [shape = 's32[1]{0}', space=sflag, size = 0x4, scoped, tag = 'scoped memory for lenet5_forward.1']
    #allocation6 [shape = 'u8[958464]{0}', space=vmem, size = 0xea000, scoped, tag = 'input window, operand 9, single buffered']
    #allocation7 [shape = 's32[1]{0}', space=sflag, size = 0x4, scoped, tag = 'scoped memory for lenet5_forward.1']
    #allocation8 [shape = 'u8[1024]{0}', space=vmem, size = 0x400, scoped, tag = 'output window, operand 0, single buffered']
    %20 = vsyncpa [#allocation4], 0
    %21 = vsyncpa [#allocation7], 0
    %22 = vsyncpa [#allocation5], 0
    // Predicated region
    $region2: #{lenet5_forward.1} parent=1 // pred_check
      _
    $region3: #{lenet5_forward.1} parent=1 // pred_check_branch
      %24 = sbr.rel (0) target = $region5
    $region4: #{lenet5_forward.1} parent=1 // pred_region
      _
    $region5: #{lenet5_forward.1} parent=1 // pred_fallthru
      _
    // Predicated region
    $region6: #{lenet5_forward.1} parent=1 // pred_check
      _
    $region7: #{lenet5_forward.1} parent=1 // pred_check_branch
      %26 = sbr.rel (0) target = $region9
    $region8: #{lenet5_forward.1} parent=1 // pred_region
      %s28 = ssub.s32 11520, 11520
      %29 = vsyncadd [#allocation4], %s28
      %s30 = sshll.u32 [#allocation3], 4
      %s31 = int_to_ptr.vmem [resolvable:$true] %s30
      %36 = dma.hbm_to_vmem [thread:$0]  %s1, 11520, %s31, [#allocation4], 384, 384, 24
    $region9: #{lenet5_forward.1} parent=1 // pred_fallthru
      _
    // Predicated region
    $region10: #{lenet5_forward.1} parent=1 // pred_check
      _
    $region11: #{lenet5_forward.1} parent=1 // pred_check_branch
      %38 = sbr.rel (0) target = $region13
    $region12: #{lenet5_forward.1} parent=1 // pred_region
      _
    $region13: #{lenet5_forward.1} parent=1 // pred_fallthru
      _
    // Predicated region
    $region14: #{lenet5_forward.1} parent=1 // pred_check
      _
    $region15: #{lenet5_forward.1} parent=1 // pred_check_branch
      %40 = sbr.rel (0) target = $region17
    $region16: #{lenet5_forward.1} parent=1 // pred_region
      _
    $region17: #{lenet5_forward.1} parent=1 // pred_fallthru
      _
    // Predicated region
    $region18: #{lenet5_forward.1} parent=1 // pred_check
      _
    $region19: #{lenet5_forward.1} parent=1 // pred_check_branch
      %42 = sbr.rel (0) target = $region21
    $region20: #{lenet5_forward.1} parent=1 // pred_region
      _
    $region21: #{lenet5_forward.1} parent=1 // pred_fallthru
      _
    // Predicated region
    $region22: #{lenet5_forward.1} parent=1 // pred_check
      _
    $region23: #{lenet5_forward.1} parent=1 // pred_check_branch
      %44 = sbr.rel (0) target = $region25
    $region24: #{lenet5_forward.1} parent=1 // pred_region
      _
    $region25: #{lenet5_forward.1} parent=1 // pred_fallthru
      _
    // Predicated region
    $region26: #{lenet5_forward.1} parent=1 // pred_check
      _
    $region27: #{lenet5_forward.1} parent=1 // pred_check_branch
      %46 = sbr.rel (0) target = $region29
    $region28: #{lenet5_forward.1} parent=1 // pred_region
      _
    $region29: #{lenet5_forward.1} parent=1 // pred_fallthru
      _
    // Predicated region
    $region30: #{lenet5_forward.1} parent=1 // pred_check
      _
    $region31: #{lenet5_forward.1} parent=1 // pred_check_branch
      %48 = sbr.rel (0) target = $region33
    $region32: #{lenet5_forward.1} parent=1 // pred_region
      _
    $region33: #{lenet5_forward.1} parent=1 // pred_fallthru
      _
    // Predicated region
    $region34: #{lenet5_forward.1} parent=1 // pred_check
      _
    $region35: #{lenet5_forward.1} parent=1 // pred_check_branch
      %50 = sbr.rel (0) target = $region37
    $region36: #{lenet5_forward.1} parent=1 // pred_region
      _
    $region37: #{lenet5_forward.1} parent=1 // pred_fallthru
      _
    // Predicated region
    $region38: #{lenet5_forward.1} parent=1 // pred_check
      _
    $region39: #{lenet5_forward.1} parent=1 // pred_check_branch
      %52 = sbr.rel (0) target = $region41
    $region40: #{lenet5_forward.1} parent=1 // pred_region
      %s54 = ssub.s32 29952, 29952
      %55 = vsyncadd [#allocation7], %s54
      %s56 = sshll.u32 [#allocation6], 4
      %s57 = int_to_ptr.vmem [resolvable:$true] %s56
      %62 = dma.hbm_to_vmem [thread:$0]  %s9, 29952, %s57, [#allocation7], 128, 128, 8
    $region41: #{lenet5_forward.1} parent=1 // pred_fallthru
      _
    // Predicated region
    $region42: #{lenet5_forward.1} parent=1 // pred_check
      _
    $region43: #{lenet5_forward.1} parent=1 // pred_check_branch
      %64 = sbr.rel (0) target = $region45
    $region44: #{lenet5_forward.1} parent=1 // pred_region
      _
    $region45: #{lenet5_forward.1} parent=1 // pred_fallthru
      _
    // Predicated region
    $region46: #{lenet5_forward.1} parent=1 // pred_check
      _
    $region47: #{lenet5_forward.1} parent=1 // pred_check_branch
      %66 = sbr.rel (0) target = $region49
    $region48: #{lenet5_forward.1} parent=1 // pred_region
      _
    $region49: #{lenet5_forward.1} parent=1 // pred_fallthru
      _
    // Predicated region
    $region50: #{lenet5_forward.1} parent=1 // pred_check
      _
    $region51: #{lenet5_forward.1} parent=1 // pred_check_branch
      %68 = sbr.rel (0) target = $region53
    $region52: #{lenet5_forward.1} parent=1 // pred_region
      _
    $region53: #{lenet5_forward.1} parent=1 // pred_fallthru
      _
    // Predicated region
    $region54: #{lenet5_forward.1} parent=1 // pred_check
      _
    $region55: #{lenet5_forward.1} parent=1 // pred_check_branch
      %70 = sbr.rel (0) target = $region57
    $region56: #{lenet5_forward.1} parent=1 // pred_region
      _
    $region57: #{lenet5_forward.1} parent=1 // pred_fallthru
      _
    // Predicated region
    $region58: #{lenet5_forward.1} parent=1 // pred_check
      _
    $region59: #{lenet5_forward.1} parent=1 // pred_check_branch
      %72 = sbr.rel (0) target = $region61
    $region60: #{lenet5_forward.1} parent=1 // pred_region
      _
    $region61: #{lenet5_forward.1} parent=1 // pred_fallthru
      _
    // Predicated region
    $region62: #{lenet5_forward.1} parent=1 // pred_check
      _
    $region63: #{lenet5_forward.1} parent=1 // pred_check_branch
      %74 = sbr.rel (0) target = $region65
    $region64: #{lenet5_forward.1} parent=1 // pred_region
      %75 = dma.done [#allocation4], 11520
    $region65: #{lenet5_forward.1} parent=1 // pred_fallthru
      _
    // Predicated region
    $region66: #{lenet5_forward.1} parent=1 // pred_check
      _
    $region67: #{lenet5_forward.1} parent=1 // pred_check_branch
      %77 = sbr.rel (0) target = $region69
    $region68: #{lenet5_forward.1} parent=1 // pred_region
      %78 = dma.done [#allocation7], 29952
    $region69: #{lenet5_forward.1} parent=1 // pred_fallthru
      _
    %v79 = vld [vmem:[%s0] sm:$0xff]
    %v80 = vld [vmem:[%s0 + $0x8] sm:$0xff]
    %v81 = vld [vmem:[%s0 + $0x10] sm:$0xff]
    %v82 = vld [vmem:[%s0 + $0x18] sm:$0xff]
    %v83 = vld [vmem:[%s0 + $0x20] sm:$0xff]
    %v84 = vld [vmem:[%s0 + $0x28] sm:$0xff]
    %v85 = vld [vmem:[%s0 + $0x30] sm:$0xff]
    %v86 = vld [vmem:[%s0 + $0x38] sm:$0xf]
    %v87 = vld [vmem:[#allocation3] sm:$0xff]
    %v88 = vld [vmem:[#allocation3 + $0x8] sm:$0xff]
    %v89 = vld [vmem:[#allocation3 + $0x10] sm:$0xff]
    %v90 = vld [vmem:[#allocation3 + $0x18] sm:$0xff]
    %v91 = vld [vmem:[#allocation3 + $0x20] sm:$0xff]
    %v92 = vld [vmem:[#allocation3 + $0x28] sm:$0xff]
    %v93 = vld [vmem:[#allocation3 + $0x30] sm:$0xff]
    %v94 = vld [vmem:[#allocation3 + $0x38] sm:$0xff]
    %v95 = vld [vmem:[#allocation3 + $0x40] sm:$0xff]
    %v96 = vld [vmem:[#allocation3 + $0x48] sm:$0xff]
    %v97 = vld [vmem:[#allocation3 + $0x50] sm:$0xff]
    %v98 = vld [vmem:[#allocation3 + $0x58] sm:$0xff]
    %v99 = vld [vmem:[#allocation3 + $0x60] sm:$0xff]
    %v100 = vld [vmem:[#allocation3 + $0x68] sm:$0xff]
    %v101 = vld [vmem:[#allocation3 + $0x70] sm:$0xff]
    %v102 = vld [vmem:[#allocation3 + $0x78] sm:$0xff]
    %v103 = vld [vmem:[#allocation3 + $0x80] sm:$0xff]
    %v104 = vld [vmem:[#allocation3 + $0x88] sm:$0xff]
    %v105 = vld [vmem:[%s0 + $0x1] sm:$0xff]
    %v106 = vld [vmem:[%s0 + $0x9] sm:$0xff]
    %v107 = vld [vmem:[%s0 + $0x11] sm:$0xff]
    %v108 = vld [vmem:[%s0 + $0x19] sm:$0xff]
    %v109 = vld [vmem:[%s0 + $0x21] sm:$0xff]
    %v110 = vld [vmem:[%s0 + $0x29] sm:$0xff]
    %v111 = vld [vmem:[%s0 + $0x31] sm:$0xff]
    %v112 = vld [vmem:[%s0 + $0x39] sm:$0xf]
    %s113 = scalar_lea.vmem [#allocation3], 144
    %v114 = vld [vmem:[%s113] sm:$0xff]
    %v115 = vld [vmem:[%s113 + $0x8] sm:$0xff]
    %v116 = vld [vmem:[%s113 + $0x10] sm:$0xff]
    %v117 = vld [vmem:[%s113 + $0x18] sm:$0xff]
    %v118 = vld [vmem:[%s113 + $0x20] sm:$0xff]
    %v119 = vld [vmem:[%s113 + $0x28] sm:$0xff]
    %v120 = vld [vmem:[%s113 + $0x30] sm:$0xff]
    %v121 = vld [vmem:[%s113 + $0x38] sm:$0xff]
    %v122 = vld [vmem:[%s113 + $0x40] sm:$0xff]
    %v123 = vld [vmem:[%s113 + $0x48] sm:$0xff]
    %v124 = vld [vmem:[%s113 + $0x50] sm:$0xff]
    %v125 = vld [vmem:[%s113 + $0x58] sm:$0xff]
    %v126 = vld [vmem:[%s113 + $0x60] sm:$0xff]
    %v127 = vld [vmem:[%s113 + $0x68] sm:$0xff]
    %v128 = vld [vmem:[%s113 + $0x70] sm:$0xff]
    %v129 = vld [vmem:[%s113 + $0x78] sm:$0xff]
    %v130 = vld [vmem:[%s113 + $0x80] sm:$0xff]
    %v131 = vld [vmem:[%s113 + $0x88] sm:$0xff]
    %vm132 = vcmask 392192
    %v134 = vsel %vm132, %v105, 0
    %v137 = vsel %vm132, %v106, 0
    %v140 = vsel %vm132, %v107, 0
    %v143 = vsel %vm132, %v108, 0
    %v146 = vsel %vm132, %v109, 0
    %v149 = vsel %vm132, %v110, 0
    %v152 = vsel %vm132, %v111, 0
    %v155 = vsel %vm132, %v112, 0
    %157 = vmatprep.subr.mxu0 %v115
    %158 = vmatpush1.msra.mxu0 %v114
    %159 = vmatprep.subr.mxu0 %v118
    %160 = vmatpush1.msra.mxu0 %v117
    %161 = vmatprep.subr.mxu0 %v121
    %162 = vmatpush1.msra.mxu0 %v120
    %163 = vmatprep.subr.mxu0 %v124
    %164 = vmatpush1.msra.mxu0 %v123
    %165 = vmatprep.subr.mxu0 %v127
    %166 = vmatpush1.msra.mxu0 %v126
    %167 = vmatprep.subr.mxu0 %v130
    %168 = vmatpush1.msra.mxu0 %v129
    %169 = vmatprep.subr.mxu0 0.0
    %170 = vmatpush1.msra.mxu0 0.0
    %171 = vmatprep.subr.mxu0 0.0
    %172 = vmatpush1.msra.mxu0 0.0
    %173 = vmatprep.subr.mxu0 0.0
    %174 = vmatpush1.msra.mxu0 0.0
    %175 = vmatprep.subr.mxu0 0.0
    %176 = vmatpush1.msra.mxu0 0.0
    %177 = vmatprep.subr.mxu0 0.0
    %178 = vmatpush1.msra.mxu0 0.0
    %179 = vmatprep.subr.mxu0 0.0
    %180 = vmatpush1.msra.mxu0 0.0
    %181 = vmatprep.subr.mxu0 0.0
    %182 = vmatpush1.msra.mxu0 0.0
    %183 = vmatprep.subr.mxu0 0.0
    %184 = vmatpush1.msra.mxu0 0.0
    %185 = vmatprep.subr.mxu0 0.0
    %186 = vmatpush1.msra.mxu0 0.0
    %187 = vmatprep.subr.mxu0 0.0
    %188 = vmatpush1.msra.mxu0 0.0
    %189 = vmatprep.subr.mxu0 0.0
    %190 = vmatpush1.msra.mxu0 0.0
    %191 = vmatprep.subr.mxu0 0.0
    %192 = vmatpush1.msra.mxu0 0.0
    %193 = vmatprep.subr.mxu0 0.0
    %194 = vmatpush1.msra.mxu0 0.0
    %195 = vmatprep.subr.mxu0 0.0
    %196 = vmatpush1.msra.mxu0 0.0
    %197 = vmatprep.subr.mxu0 0.0
    %198 = vmatpush1.msra.mxu0 0.0
    %199 = vmatprep.subr.mxu0 0.0
    %200 = vmatpush1.msra.mxu0 0.0
    %201 = vmatprep.subr.mxu0 0.0
    %202 = vmatpush1.msra.mxu0 0.0
    %203 = vmatprep.subr.mxu0 0.0
    %204 = vmatpush1.msra.mxu0 0.0
    %205 = vmatprep.subr.mxu0 0.0
    %206 = vmatpush1.msra.mxu0 0.0
    %207 = vmatprep.subr.mxu0 0.0
    %208 = vmatpush1.msra.mxu0 0.0
    %209 = vmatprep.subr.mxu0 0.0
    %210 = vmatpush1.msra.mxu0 0.0
    %211 = vmatprep.subr.mxu0 0.0
    %212 = vmatpush1.msra.mxu0 0.0
    %213 = vmatprep.subr.mxu0 0.0
    %214 = vmatpush1.msra.mxu0 0.0
    %215 = vmatprep.subr.mxu0 0.0
    %216 = vmatpush1.msra.mxu0 0.0
    %217 = vmatprep.subr.mxu0 0.0
    %218 = vmatpush1.msra.mxu0 0.0
    %219 = vmatprep.subr.mxu0 0.0
    %220 = vmatpush1.msra.mxu0 0.0
    %221 = vmatprep.mubr.f32.mxu0 0.0
    %222 = vmatmul.mubr.f32.gmra.mrb[0].mxu0 %v134
    %v223 = vpop.f32.mrb[0].mxu0
    %v224 = vadd.f32 0.0, %v223
    %v225 = vpop.f32.mrb[0].mxu0
    %v226 = vadd.f32 0.0, %v225
    %227 = vmatprep.mubr.f32.mxu0 0.0
    %228 = vmatmul.mubr.f32.gmra.mrb[0].mxu0 %v137
    %v229 = vpop.f32.mrb[0].mxu0
    %v230 = vadd.f32 0.0, %v229
    %v231 = vpop.f32.mrb[0].mxu0
    %v232 = vadd.f32 0.0, %v231
    %233 = vmatprep.mubr.f32.mxu0 0.0
    %234 = vmatmul.mubr.f32.gmra.mrb[0].mxu0 %v140
    %v235 = vpop.f32.mrb[0].mxu0
    %v236 = vadd.f32 0.0, %v235
    %v237 = vpop.f32.mrb[0].mxu0
    %v238 = vadd.f32 0.0, %v237
    %239 = vmatprep.mubr.f32.mxu0 0.0
    %240 = vmatmul.mubr.f32.gmra.mrb[0].mxu0 %v143
    %v241 = vpop.f32.mrb[0].mxu0
    %v242 = vadd.f32 0.0, %v241
    %v243 = vpop.f32.mrb[0].mxu0
    %v244 = vadd.f32 0.0, %v243
    %245 = vmatprep.mubr.f32.mxu0 0.0
    %246 = vmatmul.mubr.f32.gmra.mrb[0].mxu0 %v146
    %v247 = vpop.f32.mrb[0].mxu0
    %v248 = vadd.f32 0.0, %v247
    %v249 = vpop.f32.mrb[0].mxu0
    %v250 = vadd.f32 0.0, %v249
    %251 = vmatprep.mubr.f32.mxu0 0.0
    %252 = vmatmul.mubr.f32.gmra.mrb[0].mxu0 %v149
    %v253 = vpop.f32.mrb[0].mxu0
    %v254 = vadd.f32 0.0, %v253
    %v255 = vpop.f32.mrb[0].mxu0
    %v256 = vadd.f32 0.0, %v255
    %257 = vmatprep.mubr.f32.mxu0 0.0
    %258 = vmatmul.mubr.f32.gmra.mrb[0].mxu0 %v152
    %v259 = vpop.f32.mrb[0].mxu0
    %v260 = vadd.f32 0.0, %v259
    %v261 = vpop.f32.mrb[0].mxu0
    %v262 = vadd.f32 0.0, %v261
    %263 = vmatprep.mubr.f32.mxu0 0.0
    %264 = vmatmul.mubr.f32.gmra.mrb[0].mxu0 %v155
    %v265 = vpop.f32.mrb[0].mxu0
    %v266 = vadd.f32 0.0, %v265
    %v267 = vpop.f32.mrb[0].mxu0
    %v268 = vadd.f32 0.0, %v267
    %269 = vdwg.mxu0
    %270 = vmatprep.subr.mxu0 0.0
    %271 = vmatpush1.msra.mxu0 %v116
    %272 = vmatprep.subr.mxu0 0.0
    %273 = vmatpush1.msra.mxu0 %v119
    %274 = vmatprep.subr.mxu0 0.0
    %275 = vmatpush1.msra.mxu0 %v122
    %276 = vmatprep.subr.mxu0 0.0
    %277 = vmatpush1.msra.mxu0 %v125
    %278 = vmatprep.subr.mxu0 0.0
    %279 = vmatpush1.msra.mxu0 %v128
    %280 = vmatprep.subr.mxu0 0.0
    %281 = vmatpush1.msra.mxu0 %v131
    %282 = vmatprep.subr.mxu0 0.0
    %283 = vmatpush1.msra.mxu0 0.0
    %284 = vmatprep.subr.mxu0 0.0
    %285 = vmatpush1.msra.mxu0 0.0
    %286 = vmatprep.subr.mxu0 0.0
    %287 = vmatpush1.msra.mxu0 0.0
    %288 = vmatprep.subr.mxu0 0.0
    %289 = vmatpush1.msra.mxu0 0.0
    %290 = vmatprep.subr.mxu0 0.0
    %291 = vmatpush1.msra.mxu0 0.0
    %292 = vmatprep.subr.mxu0 0.0
    %293 = vmatpush1.msra.mxu0 0.0
    %294 = vmatprep.subr.mxu0 0.0
    %295 = vmatpush1.msra.mxu0 0.0
    %296 = vmatprep.subr.mxu0 0.0
    %297 = vmatpush1.msra.mxu0 0.0
    %298 = vmatprep.subr.mxu0 0.0
    %299 = vmatpush1.msra.mxu0 0.0
    %300 = vmatprep.subr.mxu0 0.0
    %301 = vmatpush1.msra.mxu0 0.0
    %302 = vmatprep.subr.mxu0 0.0
    %303 = vmatpush1.msra.mxu0 0.0
    %304 = vmatprep.subr.mxu0 0.0
    %305 = vmatpush1.msra.mxu0 0.0
    %306 = vmatprep.subr.mxu0 0.0
    %307 = vmatpush1.msra.mxu0 0.0
    %308 = vmatprep.subr.mxu0 0.0
    %309 = vmatpush1.msra.mxu0 0.0
    %310 = vmatprep.subr.mxu0 0.0
    %311 = vmatpush1.msra.mxu0 0.0
    %312 = vmatprep.subr.mxu0 0.0
    %313 = vmatpush1.msra.mxu0 0.0
    %314 = vmatprep.subr.mxu0 0.0
    %315 = vmatpush1.msra.mxu0 0.0
    %316 = vmatprep.subr.mxu0 0.0
    %317 = vmatpush1.msra.mxu0 0.0
    %318 = vmatprep.subr.mxu0 0.0
    %319 = vmatpush1.msra.mxu0 0.0
    %320 = vmatprep.subr.mxu0 0.0
    %321 = vmatpush1.msra.mxu0 0.0
    %322 = vmatprep.subr.mxu0 0.0
    %323 = vmatpush1.msra.mxu0 0.0
    %324 = vmatprep.subr.mxu0 0.0
    %325 = vmatpush1.msra.mxu0 0.0
    %326 = vmatprep.subr.mxu0 0.0
    %327 = vmatpush1.msra.mxu0 0.0
    %328 = vmatprep.subr.mxu0 0.0
    %329 = vmatpush1.msra.mxu0 0.0
    %330 = vmatprep.subr.mxu0 0.0
    %331 = vmatpush1.msra.mxu0 0.0
    %332 = vmatprep.subr.mxu0 0.0
    %333 = vmatpush1.msra.mxu0 0.0
    %334 = vmatprep.mubr.f32.mxu0 0.0
    %335 = vmatmul.mubr.f32.gmra.mrb[0].mxu0 %v134
    %v336 = vpop.f32.mrb[0].mxu0
    %v337 = vadd.f32 0.0, %v336
    %v338 = vpop.f32.mrb[0].mxu0
    %339 = vmatprep.mubr.f32.mxu0 0.0
    %340 = vmatmul.mubr.f32.gmra.mrb[0].mxu0 %v137
    %v341 = vpop.f32.mrb[0].mxu0
    %v342 = vadd.f32 0.0, %v341
    %v343 = vpop.f32.mrb[0].mxu0
    %344 = vmatprep.mubr.f32.mxu0 0.0
    %345 = vmatmul.mubr.f32.gmra.mrb[0].mxu0 %v140
    %v346 = vpop.f32.mrb[0].mxu0
    %v347 = vadd.f32 0.0, %v346
    %v348 = vpop.f32.mrb[0].mxu0
    %349 = vmatprep.mubr.f32.mxu0 0.0
    %350 = vmatmul.mubr.f32.gmra.mrb[0].mxu0 %v143
    %v351 = vpop.f32.mrb[0].mxu0
    %v352 = vadd.f32 0.0, %v351
    %v353 = vpop.f32.mrb[0].mxu0
    %354 = vmatprep.mubr.f32.mxu0 0.0
    %355 = vmatmul.mubr.f32.gmra.mrb[0].mxu0 %v146
    %v356 = vpop.f32.mrb[0].mxu0
    %v357 = vadd.f32 0.0, %v356
    %v358 = vpop.f32.mrb[0].mxu0
    %359 = vmatprep.mubr.f32.mxu0 0.0
    %360 = vmatmul.mubr.f32.gmra.mrb[0].mxu0 %v149
    %v361 = vpop.f32.mrb[0].mxu0
    %v362 = vadd.f32 0.0, %v361
    %v363 = vpop.f32.mrb[0].mxu0
    %364 = vmatprep.mubr.f32.mxu0 0.0
    %365 = vmatmul.mubr.f32.gmra.mrb[0].mxu0 %v152
    %v366 = vpop.f32.mrb[0].mxu0
    %v367 = vadd.f32 0.0, %v366
    %v368 = vpop.f32.mrb[0].mxu0
    %369 = vmatprep.mubr.f32.mxu0 0.0
    %370 = vmatmul.mubr.f32.gmra.mrb[0].mxu0 %v155
    %v371 = vpop.f32.mrb[0].mxu0
    %v372 = vadd.f32 0.0, %v371
    %v373 = vpop.f32.mrb[0].mxu0
    %374 = vdwg.mxu0
    %v376 = vsel %vm132, %v79, 0
    %v379 = vsel %vm132, %v80, 0
    %v382 = vsel %vm132, %v81, 0
    %v385 = vsel %vm132, %v82, 0
    %v388 = vsel %vm132, %v83, 0
    %v391 = vsel %vm132, %v84, 0
    %v394 = vsel %vm132, %v85, 0
    %v397 = vsel %vm132, %v86, 0
    %399 = vmatprep.subr.mxu0 %v88
    %400 = vmatpush1.msra.mxu0 %v87
    %401 = vmatprep.subr.mxu0 %v91
    %402 = vmatpush1.msra.mxu0 %v90
    %403 = vmatprep.subr.mxu0 %v94
    %404 = vmatpush1.msra.mxu0 %v93
    %405 = vmatprep.subr.mxu0 %v97
    %406 = vmatpush1.msra.mxu0 %v96
    %407 = vmatprep.subr.mxu0 %v100
    %408 = vmatpush1.msra.mxu0 %v99
    %409 = vmatprep.subr.mxu0 %v103
    %410 = vmatpush1.msra.mxu0 %v102
    %411 = vmatprep.subr.mxu0 0.0
    %412 = vmatpush1.msra.mxu0 0.0
    %413 = vmatprep.subr.mxu0 0.0
    %414 = vmatpush1.msra.mxu0 0.0
    %415 = vmatprep.subr.mxu0 0.0
    %416 = vmatpush1.msra.mxu0 0.0
    %417 = vmatprep.subr.mxu0 0.0
    %418 = vmatpush1.msra.mxu0 0.0
    %419 = vmatprep.subr.mxu0 0.0
    %420 = vmatpush1.msra.mxu0 0.0
    %421 = vmatprep.subr.mxu0 0.0
    %422 = vmatpush1.msra.mxu0 0.0
    %423 = vmatprep.subr.mxu0 0.0
    %424 = vmatpush1.msra.mxu0 0.0
    %425 = vmatprep.subr.mxu0 0.0
    %426 = vmatpush1.msra.mxu0 0.0
    %427 = vmatprep.subr.mxu0 0.0
    %428 = vmatpush1.msra.mxu0 0.0
    %429 = vmatprep.subr.mxu0 0.0
    %430 = vmatpush1.msra.mxu0 0.0
    %431 = vmatprep.subr.mxu0 0.0
    %432 = vmatpush1.msra.mxu0 0.0
    %433 = vmatprep.subr.mxu0 0.0
    %434 = vmatpush1.msra.mxu0 0.0
    %435 = vmatprep.subr.mxu0 0.0
    %436 = vmatpush1.msra.mxu0 0.0
    %437 = vmatprep.subr.mxu0 0.0
    %438 = vmatpush1.msra.mxu0 0.0
    %439 = vmatprep.subr.mxu0 0.0
    %440 = vmatpush1.msra.mxu0 0.0
    %441 = vmatprep.subr.mxu0 0.0
    %442 = vmatpush1.msra.mxu0 0.0
    %443 = vmatprep.subr.mxu0 0.0
    %444 = vmatpush1.msra.mxu0 0.0
    %445 = vmatprep.subr.mxu0 0.0
    %446 = vmatpush1.msra.mxu0 0.0
    %447 = vmatprep.subr.mxu0 0.0
    %448 = vmatpush1.msra.mxu0 0.0
    %449 = vmatprep.subr.mxu0 0.0
    %450 = vmatpush1.msra.mxu0 0.0
    %451 = vmatprep.subr.mxu0 0.0
    %452 = vmatpush1.msra.mxu0 0.0
    %453 = vmatprep.subr.mxu0 0.0
    %454 = vmatpush1.msra.mxu0 0.0
    %455 = vmatprep.subr.mxu0 0.0
    %456 = vmatpush1.msra.mxu0 0.0
    %457 = vmatprep.subr.mxu0 0.0
    %458 = vmatpush1.msra.mxu0 0.0
    %459 = vmatprep.subr.mxu0 0.0
    %460 = vmatpush1.msra.mxu0 0.0
    %461 = vmatprep.subr.mxu0 0.0
    %462 = vmatpush1.msra.mxu0 0.0
    %463 = vmatprep.mubr.f32.mxu0 0.0
    %464 = vmatmul.mubr.f32.gmra.mrb[0].mxu0 %v376
    %v465 = vpop.f32.mrb[0].mxu0
    %v466 = vadd.f32 %v224, %v465
    %v467 = vpop.f32.mrb[0].mxu0
    %v468 = vadd.f32 %v226, %v467
    %469 = vmatprep.mubr.f32.mxu0 0.0
    %470 = vmatmul.mubr.f32.gmra.mrb[0].mxu0 %v379
    %v471 = vpop.f32.mrb[0].mxu0
    %v472 = vadd.f32 %v230, %v471
    %v473 = vpop.f32.mrb[0].mxu0
    %v474 = vadd.f32 %v232, %v473
    %475 = vmatprep.mubr.f32.mxu0 0.0
    %476 = vmatmul.mubr.f32.gmra.mrb[0].mxu0 %v382
    %v477 = vpop.f32.mrb[0].mxu0
    %v478 = vadd.f32 %v236, %v477
    %v479 = vpop.f32.mrb[0].mxu0
    %v480 = vadd.f32 %v238, %v479
    %481 = vmatprep.mubr.f32.mxu0 0.0
    %482 = vmatmul.mubr.f32.gmra.mrb[0].mxu0 %v385
    %v483 = vpop.f32.mrb[0].mxu0
    %v484 = vadd.f32 %v242, %v483
    %v485 = vpop.f32.mrb[0].mxu0
    %v486 = vadd.f32 %v244, %v485
    %487 = vmatprep.mubr.f32.mxu0 0.0
    %488 = vmatmul.mubr.f32.gmra.mrb[0].mxu0 %v388
    %v489 = vpop.f32.mrb[0].mxu0
    %v490 = vadd.f32 %v248, %v489
    %v491 = vpop.f32.mrb[0].mxu0
    %v492 = vadd.f32 %v250, %v491
    %493 = vmatprep.mubr.f32.mxu0 0.0
    %494 = vmatmul.mubr.f32.gmra.mrb[0].mxu0 %v391
    %v495 = vpop.f32.mrb[0].mxu0
    %v496 = vadd.f32 %v254, %v495
    %v497 = vpop.f32.mrb[0].mxu0
    %v498 = vadd.f32 %v256, %v497
    %499 = vmatprep.mubr.f32.mxu0 0.0
    %500 = vmatmul.mubr.f32.gmra.mrb[0].mxu0 %v394
    %v501 = vpop.f32.mrb[0].mxu0
    %v502 = vadd.f32 %v260, %v501
    %v503 = vpop.f32.mrb[0].mxu0
    %v504 = vadd.f32 %v262, %v503
    %505 = vmatprep.mubr.f32.mxu0 0.0
    %506 = vmatmul.mubr.f32.gmra.mrb[0].mxu0 %v397
    %v507 = vpop.f32.mrb[0].mxu0
    %v508 = vadd.f32 %v266, %v507
    %v509 = vpop.f32.mrb[0].mxu0
    %v510 = vadd.f32 %v268, %v509
    %511 = vdwg.mxu0
    %512 = vmatprep.subr.mxu0 0.0
    %513 = vmatpush1.msra.mxu0 %v89
    %514 = vmatprep.subr.mxu0 0.0
    %515 = vmatpush1.msra.mxu0 %v92
    %516 = vmatprep.subr.mxu0 0.0
    %517 = vmatpush1.msra.mxu0 %v95
    %518 = vmatprep.subr.mxu0 0.0
    %519 = vmatpush1.msra.mxu0 %v98
    %520 = vmatprep.subr.mxu0 0.0
    %521 = vmatpush1.msra.mxu0 %v101
    %522 = vmatprep.subr.mxu0 0.0
    %523 = vmatpush1.msra.mxu0 %v104
    %524 = vmatprep.subr.mxu0 0.0
    %525 = vmatpush1.msra.mxu0 0.0
    %526 = vmatprep.subr.mxu0 0.0
    %527 = vmatpush1.msra.mxu0 0.0
    %528 = vmatprep.subr.mxu0 0.0
    %529 = vmatpush1.msra.mxu0 0.0
    %530 = vmatprep.subr.mxu0 0.0
    %531 = vmatpush1.msra.mxu0 0.0
    %532 = vmatprep.subr.mxu0 0.0
    %533 = vmatpush1.msra.mxu0 0.0
    %534 = vmatprep.subr.mxu0 0.0
    %535 = vmatpush1.msra.mxu0 0.0
    %536 = vmatprep.subr.mxu0 0.0
    %537 = vmatpush1.msra.mxu0 0.0
    %538 = vmatprep.subr.mxu0 0.0
    %539 = vmatpush1.msra.mxu0 0.0
    %540 = vmatprep.subr.mxu0 0.0
    %541 = vmatpush1.msra.mxu0 0.0
    %542 = vmatprep.subr.mxu0 0.0
    %543 = vmatpush1.msra.mxu0 0.0
    %544 = vmatprep.subr.mxu0 0.0
    %545 = vmatpush1.msra.mxu0 0.0
    %546 = vmatprep.subr.mxu0 0.0
    %547 = vmatpush1.msra.mxu0 0.0
    %548 = vmatprep.subr.mxu0 0.0
    %549 = vmatpush1.msra.mxu0 0.0
    %550 = vmatprep.subr.mxu0 0.0
    %551 = vmatpush1.msra.mxu0 0.0
    %552 = vmatprep.subr.mxu0 0.0
    %553 = vmatpush1.msra.mxu0 0.0
    %554 = vmatprep.subr.mxu0 0.0
    %555 = vmatpush1.msra.mxu0 0.0
    %556 = vmatprep.subr.mxu0 0.0
    %557 = vmatpush1.msra.mxu0 0.0
    %558 = vmatprep.subr.mxu0 0.0
    %559 = vmatpush1.msra.mxu0 0.0
    %560 = vmatprep.subr.mxu0 0.0
    %561 = vmatpush1.msra.mxu0 0.0
    %562 = vmatprep.subr.mxu0 0.0
    %563 = vmatpush1.msra.mxu0 0.0
    %564 = vmatprep.subr.mxu0 0.0
    %565 = vmatpush1.msra.mxu0 0.0
    %566 = vmatprep.subr.mxu0 0.0
    %567 = vmatpush1.msra.mxu0 0.0
    %568 = vmatprep.subr.mxu0 0.0
    %569 = vmatpush1.msra.mxu0 0.0
    %570 = vmatprep.subr.mxu0 0.0
    %571 = vmatpush1.msra.mxu0 0.0
    %572 = vmatprep.subr.mxu0 0.0
    %573 = vmatpush1.msra.mxu0 0.0
    %574 = vmatprep.subr.mxu0 0.0
    %575 = vmatpush1.msra.mxu0 0.0
    %576 = vmatprep.mubr.f32.mxu0 0.0
    %577 = vmatmul.mubr.f32.gmra.mrb[0].mxu0 %v376
    %v578 = vpop.f32.mrb[0].mxu0
    %v579 = vadd.f32 %v337, %v578
    %v580 = vpop.f32.mrb[0].mxu0
    %581 = vmatprep.mubr.f32.mxu0 0.0
    %582 = vmatmul.mubr.f32.gmra.mrb[0].mxu0 %v379
    %v583 = vpop.f32.mrb[0].mxu0
    %v584 = vadd.f32 %v342, %v583
    %v585 = vpop.f32.mrb[0].mxu0
    %586 = vmatprep.mubr.f32.mxu0 0.0
    %587 = vmatmul.mubr.f32.gmra.mrb[0].mxu0 %v382
    %v588 = vpop.f32.mrb[0].mxu0
    %v589 = vadd.f32 %v347, %v588
    %v590 = vpop.f32.mrb[0].mxu0
    %591 = vmatprep.mubr.f32.mxu0 0.0
    %592 = vmatmul.mubr.f32.gmra.mrb[0].mxu0 %v385
    %v593 = vpop.f32.mrb[0].mxu0
    %v594 = vadd.f32 %v352, %v593
    %v595 = vpop.f32.mrb[0].mxu0
    %596 = vmatprep.mubr.f32.mxu0 0.0
    %597 = vmatmul.mubr.f32.gmra.mrb[0].mxu0 %v388
    %v598 = vpop.f32.mrb[0].mxu0
    %v599 = vadd.f32 %v357, %v598
    %v600 = vpop.f32.mrb[0].mxu0
    %601 = vmatprep.mubr.f32.mxu0 0.0
    %602 = vmatmul.mubr.f32.gmra.mrb[0].mxu0 %v391
    %v603 = vpop.f32.mrb[0].mxu0
    %v604 = vadd.f32 %v362, %v603
    %v605 = vpop.f32.mrb[0].mxu0
    %606 = vmatprep.mubr.f32.mxu0 0.0
    %607 = vmatmul.mubr.f32.gmra.mrb[0].mxu0 %v394
    %v608 = vpop.f32.mrb[0].mxu0
    %v609 = vadd.f32 %v367, %v608
    %v610 = vpop.f32.mrb[0].mxu0
    %611 = vmatprep.mubr.f32.mxu0 0.0
    %612 = vmatmul.mubr.f32.gmra.mrb[0].mxu0 %v397
    %v613 = vpop.f32.mrb[0].mxu0
    %v614 = vadd.f32 %v372, %v613
    %v615 = vpop.f32.mrb[0].mxu0
    %616 = vdwg.mxu0
    %v617 = vld [vmem:[%s0 + $0x2] sm:$0xff]
    %v618 = vld [vmem:[%s0 + $0xa] sm:$0xff]
    %v619 = vld [vmem:[%s0 + $0x12] sm:$0xff]
    %v620 = vld [vmem:[%s0 + $0x1a] sm:$0xff]
    %v621 = vld [vmem:[%s0 + $0x22] sm:$0xff]
    %v622 = vld [vmem:[%s0 + $0x2a] sm:$0xff]
    %v623 = vld [vmem:[%s0 + $0x32] sm:$0xff]
    %v624 = vld [vmem:[%s0 + $0x3a] sm:$0xf]
    %s625 = scalar_lea.vmem [#allocation3], 288
    %v626 = vld [vmem:[%s625] sm:$0xff]
    %v627 = vld [vmem:[%s625 + $0x8] sm:$0xff]
    %v628 = vld [vmem:[%s625 + $0x10] sm:$0xff]
    %v629 = vld [vmem:[%s625 + $0x18] sm:$0xff]
    %v630 = vld [vmem:[%s625 + $0x20] sm:$0xff]
    %v631 = vld [vmem:[%s625 + $0x28] sm:$0xff]
    %v632 = vld [vmem:[%s625 + $0x30] sm:$0xff]
    %v633 = vld [vmem:[%s625 + $0x38] sm:$0xff]
    %v634 = vld [vmem:[%s625 + $0x40] sm:$0xff]
    %v635 = vld [vmem:[%s625 + $0x48] sm:$0xff]
    %v636 = vld [vmem:[%s625 + $0x50] sm:$0xff]
    %v637 = vld [vmem:[%s625 + $0x58] sm:$0xff]
    %v638 = vld [vmem:[%s625 + $0x60] sm:$0xff]
    %v639 = vld [vmem:[%s625 + $0x68] sm:$0xff]
    %v640 = vld [vmem:[%s625 + $0x70] sm:$0xff]
    %v641 = vld [vmem:[%s625 + $0x78] sm:$0xff]
    %v642 = vld [vmem:[%s625 + $0x80] sm:$0xff]
    %v643 = vld [vmem:[%s625 + $0x88] sm:$0xff]
    %v645 = vsel %vm132, %v617, 0
    %v648 = vsel %vm132, %v618, 0
    %v651 = vsel %vm132, %v619, 0
    %v654 = vsel %vm132, %v620, 0
    %v657 = vsel %vm132, %v621, 0
    %v660 = vsel %vm132, %v622, 0
    %v663 = vsel %vm132, %v623, 0
    %v666 = vsel %vm132, %v624, 0
    %668 = vmatprep.subr.mxu0 %v627
    %669 = vmatpush1.msra.mxu0 %v626
    %670 = vmatprep.subr.mxu0 %v630
    %671 = vmatpush1.msra.mxu0 %v629
    %672 = vmatprep.subr.mxu0 %v633
    %673 = vmatpush1.msra.mxu0 %v632
    %674 = vmatprep.subr.mxu0 %v636
    %675 = vmatpush1.msra.mxu0 %v635
    %676 = vmatprep.subr.mxu0 %v639
    %677 = vmatpush1.msra.mxu0 %v638
    %678 = vmatprep.subr.mxu0 %v642
    %679 = vmatpush1.msra.mxu0 %v641
    %680 = vmatprep.subr.mxu0 0.0
    %681 = vmatpush1.msra.mxu0 0.0
    %682 = vmatprep.subr.mxu0 0.0
    %683 = vmatpush1.msra.mxu0 0.0
    %684 = vmatprep.subr.mxu0 0.0
    %685 = vmatpush1.msra.mxu0 0.0
    %686 = vmatprep.subr.mxu0 0.0
    %687 = vmatpush1.msra.mxu0 0.0
    %688 = vmatprep.subr.mxu0 0.0
    %689 = vmatpush1.msra.mxu0 0.0
    %690 = vmatprep.subr.mxu0 0.0
    %691 = vmatpush1.msra.mxu0 0.0
    %692 = vmatprep.subr.mxu0 0.0
    %693 = vmatpush1.msra.mxu0 0.0
    %694 = vmatprep.subr.mxu0 0.0
    %695 = vmatpush1.msra.mxu0 0.0
    %696 = vmatprep.subr.mxu0 0.0
    %697 = vmatpush1.msra.mxu0 0.0
    %698 = vmatprep.subr.mxu0 0.0
    %699 = vmatpush1.msra.mxu0 0.0
    %700 = vmatprep.subr.mxu0 0.0
    %701 = vmatpush1.msra.mxu0 0.0
    %702 = vmatprep.subr.mxu0 0.0
    %703 = vmatpush1.msra.mxu0 0.0
    %704 = vmatprep.subr.mxu0 0.0
    %705 = vmatpush1.msra.mxu0 0.0
    %706 = vmatprep.subr.mxu0 0.0
    %707 = vmatpush1.msra.mxu0 0.0
    %708 = vmatprep.subr.mxu0 0.0
    %709 = vmatpush1.msra.mxu0 0.0
    %710 = vmatprep.subr.mxu0 0.0
    %711 = vmatpush1.msra.mxu0 0.0
    %712 = vmatprep.subr.mxu0 0.0
    %713 = vmatpush1.msra.mxu0 0.0
    %714 = vmatprep.subr.mxu0 0.0
    %715 = vmatpush1.msra.mxu0 0.0
    %716 = vmatprep.subr.mxu0 0.0
    %717 = vmatpush1.msra.mxu0 0.0
    %718 = vmatprep.subr.mxu0 0.0
    %719 = vmatpush1.msra.mxu0 0.0
    %720 = vmatprep.subr.mxu0 0.0
    %721 = vmatpush1.msra.mxu0 0.0
    %722 = vmatprep.subr.mxu0 0.0
    %723 = vmatpush1.msra.mxu0 0.0
    %724 = vmatprep.subr.mxu0 0.0
    %725 = vmatpush1.msra.mxu0 0.0
    %726 = vmatprep.subr.mxu0 0.0
    %727 = vmatpush1.msra.mxu0 0.0
    %728 = vmatprep.subr.mxu0 0.0
    %729 = vmatpush1.msra.mxu0 0.0
    %730 = vmatprep.subr.mxu0 0.0
    %731 = vmatpush1.msra.mxu0 0.0
    %732 = vmatprep.mubr.f32.mxu0 0.0
    %733 = vmatmul.mubr.f32.gmra.mrb[0].mxu0 %v645
    %v734 = vpop.f32.mrb[0].mxu0
    %v735 = vadd.f32 0.0, %v734
    %v736 = vpop.f32.mrb[0].mxu0
    %v737 = vadd.f32 0.0, %v736
    %738 = vmatprep.mubr.f32.mxu0 0.0
    %739 = vmatmul.mubr.f32.gmra.mrb[0].mxu0 %v648
    %v740 = vpop.f32.mrb[0].mxu0
    %v741 = vadd.f32 0.0, %v740
    %v742 = vpop.f32.mrb[0].mxu0
    %v743 = vadd.f32 0.0, %v742
    %744 = vmatprep.mubr.f32.mxu0 0.0
    %745 = vmatmul.mubr.f32.gmra.mrb[0].mxu0 %v651
    %v746 = vpop.f32.mrb[0].mxu0
    %v747 = vadd.f32 0.0, %v746
    %v748 = vpop.f32.mrb[0].mxu0
    %v749 = vadd.f32 0.0, %v748
    %750 = vmatprep.mubr.f32.mxu0 0.0
    %751 = vmatmul.mubr.f32.gmra.mrb[0].mxu0 %v654
    %v752 = vpop.f32.mrb[0].mxu0
    %v753 = vadd.f32 0.0, %v752
    %v754 = vpop.f32.mrb[0].mxu0
    %v755 = vadd.f32 0.0, %v754
    %756 = vmatprep.mubr.f32.mxu0 0.0
    %757 = vmatmul.mubr.f32.gmra.mrb[0].mxu0 %v657
    %v758 = vpop.f32.mrb[0].mxu0
    %v759 = vadd.f32 0.0, %v758
    %v760 = vpop.f32.mrb[0].mxu0
    %v761 = vadd.f32 0.0, %v760
    %762 = vmatprep.mubr.f32.mxu0 0.0
    %763 = vmatmul.mubr.f32.gmra.mrb[0].mxu0 %v660
    %v764 = vpop.f32.mrb[0].mxu0
    %v765 = vadd.f32 0.0, %v764
    %v766 = vpop.f32.mrb[0].mxu0
    %v767 = vadd.f32 0.0, %v766
    %768 = vmatprep.mubr.f32.mxu0 0.0
    %769 = vmatmul.mubr.f32.gmra.mrb[0].mxu0 %v663
    %v770 = vpop.f32.mrb[0].mxu0
    %v771 = vadd.f32 0.0, %v770
    %v772 = vpop.f32.mrb[0].mxu0
    %v773 = vadd.f32 0.0, %v772
    %774 = vmatprep.mubr.f32.mxu0 0.0
    %775 = vmatmul.mubr.f32.gmra.mrb[0].mxu0 %v666
    %v776 = vpop.f32.mrb[0].mxu0
    %v777 = vadd.f32 0.0, %v776
    %v778 = vpop.f32.mrb[0].mxu0
    %v779 = vadd.f32 0.0, %v778
    %780 = vdwg.mxu0
    %781 = vmatprep.subr.mxu0 0.0
    %782 = vmatpush1.msra.mxu0 %v628
    %783 = vmatprep.subr.mxu0 0.0
    %784 = vmatpush1.msra.mxu0 %v631
    %785 = vmatprep.subr.mxu0 0.0
    %786 = vmatpush1.msra.mxu0 %v634
    %787 = vmatprep.subr.mxu0 0.0
    %788 = vmatpush1.msra.mxu0 %v637
    %789 = vmatprep.subr.mxu0 0.0
    %790 = vmatpush1.msra.mxu0 %v640
    %791 = vmatprep.subr.mxu0 0.0
    %792 = vmatpush1.msra.mxu0 %v643
    %793 = vmatprep.subr.mxu0 0.0
    %794 = vmatpush1.msra.mxu0 0.0
    %795 = vmatprep.subr.mxu0 0.0
    %796 = vmatpush1.msra.mxu0 0.0
    %797 = vmatprep.subr.mxu0 0.0
    %798 = vmatpush1.msra.mxu0 0.0
    %799 = vmatprep.subr.mxu0 0.0
    %800 = vmatpush1.msra.mxu0 0.0
    %801 = vmatprep.subr.mxu0 0.0
    %802 = vmatpush1.msra.mxu0 0.0
    %803 = vmatprep.subr.mxu0 0.0
    %804 = vmatpush1.msra.mxu0 0.0
    %805 = vmatprep.subr.mxu0 0.0
    %806 = vmatpush1.msra.mxu0 0.0
    %807 = vmatprep.subr.mxu0 0.0
    %808 = vmatpush1.msra.mxu0 0.0
    %809 = vmatprep.subr.mxu0 0.0
    %810 = vmatpush1.msra.mxu0 0.0
    %811 = vmatprep.subr.mxu0 0.0
    %812 = vmatpush1.msra.mxu0 0.0
    %813 = vmatprep.subr.mxu0 0.0
    %814 = vmatpush1.msra.mxu0 0.0
    %815 = vmatprep.subr.mxu0 0.0
    %816 = vmatpush1.msra.mxu0 0.0
    %817 = vmatprep.subr.mxu0 0.0
    %818 = vmatpush1.msra.mxu0 0.0
    %819 = vmatprep.subr.mxu0 0.0
    %820 = vmatpush1.msra.mxu0 0.0
    %821 = vmatprep.subr.mxu0 0.0
    %822 = vmatpush1.msra.mxu0 0.0
    %823 = vmatprep.subr.mxu0 0.0
    %824 = vmatpush1.msra.mxu0 0.0
    %825 = vmatprep.subr.mxu0 0.0
    %826 = vmatpush1.msra.mxu0 0.0
    %827 = vmatprep.subr.mxu0 0.0
    %828 = vmatpush1.msra.mxu0 0.0
    %829 = vmatprep.subr.mxu0 0.0
    %830 = vmatpush1.msra.mxu0 0.0
    %831 = vmatprep.subr.mxu0 0.0
    %832 = vmatpush1.msra.mxu0 0.0
    %833 = vmatprep.subr.mxu0 0.0
    %834 = vmatpush1.msra.mxu0 0.0
    %835 = vmatprep.subr.mxu0 0.0
    %836 = vmatpush1.msra.mxu0 0.0
    %837 = vmatprep.subr.mxu0 0.0
    %838 = vmatpush1.msra.mxu0 0.0
    %839 = vmatprep.subr.mxu0 0.0
    %840 = vmatpush1.msra.mxu0 0.0
    %841 = vmatprep.subr.mxu0 0.0
    %842 = vmatpush1.msra.mxu0 0.0
    %843 = vmatprep.subr.mxu0 0.0
    %844 = vmatpush1.msra.mxu0 0.0
    %845 = vmatprep.mubr.f32.mxu0 0.0
    %846 = vmatmul.mubr.f32.gmra.mrb[0].mxu0 %v645
    %v847 = vpop.f32.mrb[0].mxu0
    %v848 = vadd.f32 0.0, %v847
    %v849 = vpop.f32.mrb[0].mxu0
    %850 = vmatprep.mubr.f32.mxu0 0.0
    %851 = vmatmul.mubr.f32.gmra.mrb[0].mxu0 %v648
    %v852 = vpop.f32.mrb[0].mxu0
    %v853 = vadd.f32 0.0, %v852
    %v854 = vpop.f32.mrb[0].mxu0
    %855 = vmatprep.mubr.f32.mxu0 0.0
    %856 = vmatmul.mubr.f32.gmra.mrb[0].mxu0 %v651
    %v857 = vpop.f32.mrb[0].mxu0
    %v858 = vadd.f32 0.0, %v857
    %v859 = vpop.f32.mrb[0].mxu0
    %860 = vmatprep.mubr.f32.mxu0 0.0
    %861 = vmatmul.mubr.f32.gmra.mrb[0].mxu0 %v654
    %v862 = vpop.f32.mrb[0].mxu0
    %v863 = vadd.f32 0.0, %v862
    %v864 = vpop.f32.mrb[0].mxu0
    %865 = vmatprep.mubr.f32.mxu0 0.0
    %866 = vmatmul.mubr.f32.gmra.mrb[0].mxu0 %v657
    %v867 = vpop.f32.mrb[0].mxu0
    %v868 = vadd.f32 0.0, %v867
    %v869 = vpop.f32.mrb[0].mxu0
    %870 = vmatprep.mubr.f32.mxu0 0.0
    %871 = vmatmul.mubr.f32.gmra.mrb[0].mxu0 %v660
    %v872 = vpop.f32.mrb[0].mxu0
    %v873 = vadd.f32 0.0, %v872
    %v874 = vpop.f32.mrb[0].mxu0
    %875 = vmatprep.mubr.f32.mxu0 0.0
    %876 = vmatmul.mubr.f32.gmra.mrb[0].mxu0 %v663
    %v877 = vpop.f32.mrb[0].mxu0
    %v878 = vadd.f32 0.0, %v877
    %v879 = vpop.f32.mrb[0].mxu0
    %880 = vmatprep.mubr.f32.mxu0 0.0
    %881 = vmatmul.mubr.f32.gmra.mrb[0].mxu0 %v666
    %v882 = vpop.f32.mrb[0].mxu0
    %v883 = vadd.f32 0.0, %v882
    %v884 = vpop.f32.mrb[0].mxu0
    %885 = vdwg.mxu0
    %v886 = vadd.f32 %v466, %v735
    %v887 = vadd.f32 %v468, %v737
    %v888 = vadd.f32 %v579, %v848
    %v889 = vadd.f32 %v472, %v741
    %v890 = vadd.f32 %v474, %v743
    %v891 = vadd.f32 %v584, %v853
    %v892 = vadd.f32 %v478, %v747
    %v893 = vadd.f32 %v480, %v749
    %v894 = vadd.f32 %v589, %v858
    %v895 = vadd.f32 %v484, %v753
    %v896 = vadd.f32 %v486, %v755
    %v897 = vadd.f32 %v594, %v863
    %v898 = vadd.f32 %v490, %v759
    %v899 = vadd.f32 %v492, %v761
    %v900 = vadd.f32 %v599, %v868
    %v901 = vadd.f32 %v496, %v765
    %v902 = vadd.f32 %v498, %v767
    %v903 = vadd.f32 %v604, %v873
    %v904 = vadd.f32 %v502, %v771
    %v905 = vadd.f32 %v504, %v773
    %v906 = vadd.f32 %v609, %v878
    %v907 = vadd.f32 %v508, %v777
    %v908 = vadd.f32 %v510, %v779
    %v909 = vadd.f32 %v614, %v883
    %v910 = vld [vmem:[%s0 + $0x3] sm:$0xff]
    %v911 = vld [vmem:[%s0 + $0xb] sm:$0xff]
    %v912 = vld [vmem:[%s0 + $0x13] sm:$0xff]
    %v913 = vld [vmem:[%s0 + $0x1b] sm:$0xff]
    %v914 = vld [vmem:[%s0 + $0x23] sm:$0xff]
    %v915 = vld [vmem:[%s0 + $0x2b] sm:$0xff]
    %v916 = vld [vmem:[%s0 + $0x33] sm:$0xff]
    %v917 = vld [vmem:[%s0 + $0x3b] sm:$0xf]
    %s918 = scalar_lea.vmem [#allocation3], 432
    %v919 = vld [vmem:[%s918] sm:$0xff]
    %v920 = vld [vmem:[%s918 + $0x8] sm:$0xff]
    %v921 = vld [vmem:[%s918 + $0x10] sm:$0xff]
    %v922 = vld [vmem:[%s918 + $0x18] sm:$0xff]
    %v923 = vld [vmem:[%s918 + $0x20] sm:$0xff]
    %v924 = vld [vmem:[%s918 + $0x28] sm:$0xff]
    %v925 = vld [vmem:[%s918 + $0x30] sm:$0xff]
    %v926 = vld [vmem:[%s918 + $0x38] sm:$0xff]
    %v927 = vld [vmem:[%s918 + $0x40] sm:$0xff]
    %v928 = vld [vmem:[%s918 + $0x48] sm:$0xff]
    %v929 = vld [vmem:[%s918 + $0x50] sm:$0xff]
    %v930 = vld [vmem:[%s918 + $0x58] sm:$0xff]
    %v931 = vld [vmem:[%s918 + $0x60] sm:$0xff]
    %v932 = vld [vmem:[%s918 + $0x68] sm:$0xff]
    %v933 = vld [vmem:[%s918 + $0x70] sm:$0xff]
    %v934 = vld [vmem:[%s918 + $0x78] sm:$0xff]
    %v935 = vld [vmem:[%s918 + $0x80] sm:$0xff]
    %v936 = vld [vmem:[%s918 + $0x88] sm:$0xff]
    %v938 = vsel %vm132, %v910, 0
    %v941 = vsel %vm132, %v911, 0
    %v944 = vsel %vm132, %v912, 0
    %v947 = vsel %vm132, %v913, 0
    %v950 = vsel %vm132, %v914, 0
    %v953 = vsel %vm132, %v915, 0
    %v956 = vsel %vm132, %v916, 0
    %v959 = vsel %vm132, %v917, 0
    %961 = vmatprep.subr.mxu0 %v920
    %962 = vmatpush1.msra.mxu0 %v919
    %963 = vmatprep.subr.mxu0 %v923
    %964 = vmatpush1.msra.mxu0 %v922
    %965 = vmatprep.subr.mxu0 %v926
    %966 = vmatpush1.msra.mxu0 %v925
    %967 = vmatprep.subr.mxu0 %v929
    %968 = vmatpush1.msra.mxu0 %v928
    %969 = vmatprep.subr.mxu0 %v932
    %970 = vmatpush1.msra.mxu0 %v931
    %971 = vmatprep.subr.mxu0 %v935
    %972 = vmatpush1.msra.mxu0 %v934
    %973 = vmatprep.subr.mxu0 0.0
    %974 = vmatpush1.msra.mxu0 0.0
    %975 = vmatprep.subr.mxu0 0.0
    %976 = vmatpush1.msra.mxu0 0.0
    %977 = vmatprep.subr.mxu0 0.0
    %978 = vmatpush1.msra.mxu0 0.0
    %979 = vmatprep.subr.mxu0 0.0
    %980 = vmatpush1.msra.mxu0 0.0
    %981 = vmatprep.subr.mxu0 0.0
    %982 = vmatpush1.msra.mxu0 0.0
    %983 = vmatprep.subr.mxu0 0.0
    %984 = vmatpush1.msra.mxu0 0.0
    %985 = vmatprep.subr.mxu0 0.0
    %986 = vmatpush1.msra.mxu0 0.0
    %987 = vmatprep.subr.mxu0 0.0
    %988 = vmatpush1.msra.mxu0 0.0
    %989 = vmatprep.subr.mxu0 0.0
    %990 = vmatpush1.msra.mxu0 0.0
    %991 = vmatprep.subr.mxu0 0.0
    %992 = vmatpush1.msra.mxu0 0.0
    %993 = vmatprep.subr.mxu0 0.0
    %994 = vmatpush1.msra.mxu0 0.0
    %995 = vmatprep.subr.mxu0 0.0
    %996 = vmatpush1.msra.mxu0 0.0
    %997 = vmatprep.subr.mxu0 0.0
    %998 = vmatpush1.msra.mxu0 0.0
    %999 = vmatprep.subr.mxu0 0.0
    %1000 = vmatpush1.msra.mxu0 0.0
    %1001 = vmatprep.subr.mxu0 0.0
    %1002 = vmatpush1.msra.mxu0 0.0
    %1003 = vmatprep.subr.mxu0 0.0
    %1004 = vmatpush1.msra.mxu0 0.0
    %1005 = vmatprep.subr.mxu0 0.0
    %1006 = vmatpush1.msra.mxu0 0.0
    %1007 = vmatprep.subr.mxu0 0.0
    %1008 = vmatpush1.msra.mxu0 0.0
    %1009 = vmatprep.subr.mxu0 0.0
    %1010 = vmatpush1.msra.mxu0 0.0
    %1011 = vmatprep.subr.mxu0 0.0
    %1012 = vmatpush1.msra.mxu0 0.0
    %1013 = vmatprep.subr.mxu0 0.0
    %1014 = vmatpush1.msra.mxu0 0.0
    %1015 = vmatprep.subr.mxu0 0.0
    %1016 = vmatpush1.msra.mxu0 0.0
    %1017 = vmatprep.subr.mxu0 0.0
    %1018 = vmatpush1.msra.mxu0 0.0
    %1019 = vmatprep.subr.mxu0 0.0
    %1020 = vmatpush1.msra.mxu0 0.0
    %1021 = vmatprep.subr.mxu0 0.0
    %1022 = vmatpush1.msra.mxu0 0.0
    %1023 = vmatprep.subr.mxu0 0.0
    %1024 = vmatpush1.msra.mxu0 0.0
    %1025 = vmatprep.mubr.f32.mxu0 0.0
    %1026 = vmatmul.mubr.f32.gmra.mrb[0].mxu0 %v938
    %v1027 = vpop.f32.mrb[0].mxu0
    %v1028 = vadd.f32 0.0, %v1027
    %v1029 = vpop.f32.mrb[0].mxu0
    %v1030 = vadd.f32 0.0, %v1029
    %1031 = vmatprep.mubr.f32.mxu0 0.0
    %1032 = vmatmul.mubr.f32.gmra.mrb[0].mxu0 %v941
    %v1033 = vpop.f32.mrb[0].mxu0
    %v1034 = vadd.f32 0.0, %v1033
    %v1035 = vpop.f32.mrb[0].mxu0
    %v1036 = vadd.f32 0.0, %v1035
    %1037 = vmatprep.mubr.f32.mxu0 0.0
    %1038 = vmatmul.mubr.f32.gmra.mrb[0].mxu0 %v944
    %v1039 = vpop.f32.mrb[0].mxu0
    %v1040 = vadd.f32 0.0, %v1039
    %v1041 = vpop.f32.mrb[0].mxu0
    %v1042 = vadd.f32 0.0, %v1041
    %1043 = vmatprep.mubr.f32.mxu0 0.0
    %1044 = vmatmul.mubr.f32.gmra.mrb[0].mxu0 %v947
    %v1045 = vpop.f32.mrb[0].mxu0
    %v1046 = vadd.f32 0.0, %v1045
    %v1047 = vpop.f32.mrb[0].mxu0
    %v1048 = vadd.f32 0.0, %v1047
    %1049 = vmatprep.mubr.f32.mxu0 0.0
    %1050 = vmatmul.mubr.f32.gmra.mrb[0].mxu0 %v950
    %v1051 = vpop.f32.mrb[0].mxu0
    %v1052 = vadd.f32 0.0, %v1051
    %v1053 = vpop.f32.mrb[0].mxu0
    %v1054 = vadd.f32 0.0, %v1053
    %1055 = vmatprep.mubr.f32.mxu0 0.0
    %1056 = vmatmul.mubr.f32.gmra.mrb[0].mxu0 %v953
    %v1057 = vpop.f32.mrb[0].mxu0
    %v1058 = vadd.f32 0.0, %v1057
    %v1059 = vpop.f32.mrb[0].mxu0
    %v1060 = vadd.f32 0.0, %v1059
    %1061 = vmatprep.mubr.f32.mxu0 0.0
    %1062 = vmatmul.mubr.f32.gmra.mrb[0].mxu0 %v956
    %v1063 = vpop.f32.mrb[0].mxu0
    %v1064 = vadd.f32 0.0, %v1063
    %v1065 = vpop.f32.mrb[0].mxu0
    %v1066 = vadd.f32 0.0, %v1065
    %1067 = vmatprep.mubr.f32.mxu0 0.0
    %1068 = vmatmul.mubr.f32.gmra.mrb[0].mxu0 %v959
    %v1069 = vpop.f32.mrb[0].mxu0
    %v1070 = vadd.f32 0.0, %v1069
    %v1071 = vpop.f32.mrb[0].mxu0
    %v1072 = vadd.f32 0.0, %v1071
    %1073 = vdwg.mxu0
    %1074 = vmatprep.subr.mxu0 0.0
    %1075 = vmatpush1.msra.mxu0 %v921
    %1076 = vmatprep.subr.mxu0 0.0
    %1077 = vmatpush1.msra.mxu0 %v924
    %1078 = vmatprep.subr.mxu0 0.0
    %1079 = vmatpush1.msra.mxu0 %v927
    %1080 = vmatprep.subr.mxu0 0.0
    %1081 = vmatpush1.msra.mxu0 %v930
    %1082 = vmatprep.subr.mxu0 0.0
    %1083 = vmatpush1.msra.mxu0 %v933
    %1084 = vmatprep.subr.mxu0 0.0
    %1085 = vmatpush1.msra.mxu0 %v936
    %1086 = vmatprep.subr.mxu0 0.0
    %1087 = vmatpush1.msra.mxu0 0.0
    %1088 = vmatprep.subr.mxu0 0.0
    %1089 = vmatpush1.msra.mxu0 0.0
    %1090 = vmatprep.subr.mxu0 0.0
    %1091 = vmatpush1.msra.mxu0 0.0
    %1092 = vmatprep.subr.mxu0 0.0
    %1093 = vmatpush1.msra.mxu0 0.0
    %1094 = vmatprep.subr.mxu0 0.0
    %1095 = vmatpush1.msra.mxu0 0.0
    %1096 = vmatprep.subr.mxu0 0.0
    %1097 = vmatpush1.msra.mxu0 0.0
    %1098 = vmatprep.subr.mxu0 0.0
    %1099 = vmatpush1.msra.mxu0 0.0
    %1100 = vmatprep.subr.mxu0 0.0
    %1101 = vmatpush1.msra.mxu0 0.0
    %1102 = vmatprep.subr.mxu0 0.0
    %1103 = vmatpush1.msra.mxu0 0.0
    %1104 = vmatprep.subr.mxu0 0.0
    %1105 = vmatpush1.msra.mxu0 0.0
    %1106 = vmatprep.subr.mxu0 0.0
    %1107 = vmatpush1.msra.mxu0 0.0
    %1108 = vmatprep.subr.mxu0 0.0
    %1109 = vmatpush1.msra.mxu0 0.0
    %1110 = vmatprep.subr.mxu0 0.0
    %1111 = vmatpush1.msra.mxu0 0.0
    %1112 = vmatprep.subr.mxu0 0.0
    %1113 = vmatpush1.msra.mxu0 0.0
    %1114 = vmatprep.subr.mxu0 0.0
    %1115 = vmatpush1.msra.mxu0 0.0
    %1116 = vmatprep.subr.mxu0 0.0
    %1117 = vmatpush1.msra.mxu0 0.0
    %1118 = vmatprep.subr.mxu0 0.0
    %1119 = vmatpush1.msra.mxu0 0.0
    %1120 = vmatprep.subr.mxu0 0.0
    %1121 = vmatpush1.msra.mxu0 0.0
    %1122 = vmatprep.subr.mxu0 0.0
    %1123 = vmatpush1.msra.mxu0 0.0
    %1124 = vmatprep.subr.mxu0 0.0
    %1125 = vmatpush1.msra.mxu0 0.0
    %1126 = vmatprep.subr.mxu0 0.0
    %1127 = vmatpush1.msra.mxu0 0.0
    %1128 = vmatprep.subr.mxu0 0.0
    %1129 = vmatpush1.msra.mxu0 0.0
    %1130 = vmatprep.subr.mxu0 0.0
    %1131 = vmatpush1.msra.mxu0 0.0
    %1132 = vmatprep.subr.mxu0 0.0
    %1133 = vmatpush1.msra.mxu0 0.0
    %1134 = vmatprep.subr.mxu0 0.0
    %1135 = vmatpush1.msra.mxu0 0.0
    %1136 = vmatprep.subr.mxu0 0.0
    %1137 = vmatpush1.msra.mxu0 0.0
    %1138 = vmatprep.mubr.f32.mxu0 0.0
    %1139 = vmatmul.mubr.f32.gmra.mrb[0].mxu0 %v938
    %v1140 = vpop.f32.mrb[0].mxu0
    %v1141 = vadd.f32 0.0, %v1140
    %v1142 = vpop.f32.mrb[0].mxu0
    %1143 = vmatprep.mubr.f32.mxu0 0.0
    %1144 = vmatmul.mubr.f32.gmra.mrb[0].mxu0 %v941
    %v1145 = vpop.f32.mrb[0].mxu0
    %v1146 = vadd.f32 0.0, %v1145
    %v1147 = vpop.f32.mrb[0].mxu0
    %1148 = vmatprep.mubr.f32.mxu0 0.0
    %1149 = vmatmul.mubr.f32.gmra.mrb[0].mxu0 %v944
    %v1150 = vpop.f32.mrb[0].mxu0
    %v1151 = vadd.f32 0.0, %v1150
    %v1152 = vpop.f32.mrb[0].mxu0
    %1153 = vmatprep.mubr.f32.mxu0 0.0
    %1154 = vmatmul.mubr.f32.gmra.mrb[0].mxu0 %v947
    %v1155 = vpop.f32.mrb[0].mxu0
    %v1156 = vadd.f32 0.0, %v1155
    %v1157 = vpop.f32.mrb[0].mxu0
    %1158 = vmatprep.mubr.f32.mxu0 0.0
    %1159 = vmatmul.mubr.f32.gmra.mrb[0].mxu0 %v950
    %v1160 = vpop.f32.mrb[0].mxu0
    %v1161 = vadd.f32 0.0, %v1160
    %v1162 = vpop.f32.mrb[0].mxu0
    %1163 = vmatprep.mubr.f32.mxu0 0.0
    %1164 = vmatmul.mubr.f32.gmra.mrb[0].mxu0 %v953
    %v1165 = vpop.f32.mrb[0].mxu0
    %v1166 = vadd.f32 0.0, %v1165
    %v1167 = vpop.f32.mrb[0].mxu0
    %1168 = vmatprep.mubr.f32.mxu0 0.0
    %1169 = vmatmul.mubr.f32.gmra.mrb[0].mxu0 %v956
    %v1170 = vpop.f32.mrb[0].mxu0
    %v1171 = vadd.f32 0.0, %v1170
    %v1172 = vpop.f32.mrb[0].mxu0
    %1173 = vmatprep.mubr.f32.mxu0 0.0
    %1174 = vmatmul.mubr.f32.gmra.mrb[0].mxu0 %v959
    %v1175 = vpop.f32.mrb[0].mxu0
    %v1176 = vadd.f32 0.0, %v1175
    %v1177 = vpop.f32.mrb[0].mxu0
    %1178 = vdwg.mxu0
    %v1179 = vadd.f32 %v886, %v1028
    %v1180 = vadd.f32 %v887, %v1030
    %v1181 = vadd.f32 %v888, %v1141
    %v1182 = vadd.f32 %v889, %v1034
    %v1183 = vadd.f32 %v890, %v1036
    %v1184 = vadd.f32 %v891, %v1146
    %v1185 = vadd.f32 %v892, %v1040
    %v1186 = vadd.f32 %v893, %v1042
    %v1187 = vadd.f32 %v894, %v1151
    %v1188 = vadd.f32 %v895, %v1046
    %v1189 = vadd.f32 %v896, %v1048
    %v1190 = vadd.f32 %v897, %v1156
    %v1191 = vadd.f32 %v898, %v1052
    %v1192 = vadd.f32 %v899, %v1054
    %v1193 = vadd.f32 %v900, %v1161
    %v1194 = vadd.f32 %v901, %v1058
    %v1195 = vadd.f32 %v902, %v1060
    %v1196 = vadd.f32 %v903, %v1166
    %v1197 = vadd.f32 %v904, %v1064
    %v1198 = vadd.f32 %v905, %v1066
    %v1199 = vadd.f32 %v906, %v1171
    %v1200 = vadd.f32 %v907, %v1070
    %v1201 = vadd.f32 %v908, %v1072
    %v1202 = vadd.f32 %v909, %v1176
    %v1203 = vld [vmem:[%s0 + $0x4] sm:$0xff]
    %v1204 = vld [vmem:[%s0 + $0xc] sm:$0xff]
    %v1205 = vld [vmem:[%s0 + $0x14] sm:$0xff]
    %v1206 = vld [vmem:[%s0 + $0x1c] sm:$0xff]
    %v1207 = vld [vmem:[%s0 + $0x24] sm:$0xff]
    %v1208 = vld [vmem:[%s0 + $0x2c] sm:$0xff]
    %v1209 = vld [vmem:[%s0 + $0x34] sm:$0xff]
    %v1210 = vld [vmem:[%s0 + $0x3c] sm:$0xf]
    %s1211 = scalar_lea.vmem [#allocation3], 576
    %v1212 = vld [vmem:[%s1211] sm:$0xff]
    %v1213 = vld [vmem:[%s1211 + $0x8] sm:$0xff]
    %v1214 = vld [vmem:[%s1211 + $0x10] sm:$0xff]
    %v1215 = vld [vmem:[%s1211 + $0x18] sm:$0xff]
    %v1216 = vld [vmem:[%s1211 + $0x20] sm:$0xff]
    %v1217 = vld [vmem:[%s1211 + $0x28] sm:$0xff]
    %v1218 = vld [vmem:[%s1211 + $0x30] sm:$0xff]
    %v1219 = vld [vmem:[%s1211 + $0x38] sm:$0xff]
    %v1220 = vld [vmem:[%s1211 + $0x40] sm:$0xff]
    %v1221 = vld [vmem:[%s1211 + $0x48] sm:$0xff]
    %v1222 = vld [vmem:[%s1211 + $0x50] sm:$0xff]
    %v1223 = vld [vmem:[%s1211 + $0x58] sm:$0xff]
    %v1224 = vld [vmem:[%s1211 + $0x60] sm:$0xff]
    %v1225 = vld [vmem:[%s1211 + $0x68] sm:$0xff]
    %v1226 = vld [vmem:[%s1211 + $0x70] sm:$0xff]
    %v1227 = vld [vmem:[%s1211 + $0x78] sm:$0xff]
    %v1228 = vld [vmem:[%s1211 + $0x80] sm:$0xff]
    %v1229 = vld [vmem:[%s1211 + $0x88] sm:$0xff]
    %v1231 = vsel %vm132, %v1203, 0
    %v1234 = vsel %vm132, %v1204, 0
    %v1237 = vsel %vm132, %v1205, 0
    %v1240 = vsel %vm132, %v1206, 0
    %v1243 = vsel %vm132, %v1207, 0
    %v1246 = vsel %vm132, %v1208, 0
    %v1249 = vsel %vm132, %v1209, 0
    %v1252 = vsel %vm132, %v1210, 0
    %1254 = vmatprep.subr.mxu0 %v1213
    %1255 = vmatpush1.msra.mxu0 %v1212
    %1256 = vmatprep.subr.mxu0 %v1216
    %1257 = vmatpush1.msra.mxu0 %v1215
    %1258 = vmatprep.subr.mxu0 %v1219
    %1259 = vmatpush1.msra.mxu0 %v1218
    %1260 = vmatprep.subr.mxu0 %v1222
    %1261 = vmatpush1.msra.mxu0 %v1221
    %1262 = vmatprep.subr.mxu0 %v1225
    %1263 = vmatpush1.msra.mxu0 %v1224
    %1264 = vmatprep.subr.mxu0 %v1228
    %1265 = vmatpush1.msra.mxu0 %v1227
    %1266 = vmatprep.subr.mxu0 0.0
    %1267 = vmatpush1.msra.mxu0 0.0
    %1268 = vmatprep.subr.mxu0 0.0
    %1269 = vmatpush1.msra.mxu0 0.0
    %1270 = vmatprep.subr.mxu0 0.0
    %1271 = vmatpush1.msra.mxu0 0.0
    %1272 = vmatprep.subr.mxu0 0.0
    %1273 = vmatpush1.msra.mxu0 0.0
    %1274 = vmatprep.subr.mxu0 0.0
    %1275 = vmatpush1.msra.mxu0 0.0
    %1276 = vmatprep.subr.mxu0 0.0
    %1277 = vmatpush1.msra.mxu0 0.0
    %1278 = vmatprep.subr.mxu0 0.0
    %1279 = vmatpush1.msra.mxu0 0.0
    %1280 = vmatprep.subr.mxu0 0.0
    %1281 = vmatpush1.msra.mxu0 0.0
    %1282 = vmatprep.subr.mxu0 0.0
    %1283 = vmatpush1.msra.mxu0 0.0
    %1284 = vmatprep.subr.mxu0 0.0
    %1285 = vmatpush1.msra.mxu0 0.0
    %1286 = vmatprep.subr.mxu0 0.0
    %1287 = vmatpush1.msra.mxu0 0.0
    %1288 = vmatprep.subr.mxu0 0.0
    %1289 = vmatpush1.msra.mxu0 0.0
    %1290 = vmatprep.subr.mxu0 0.0
    %1291 = vmatpush1.msra.mxu0 0.0
    %1292 = vmatprep.subr.mxu0 0.0
    %1293 = vmatpush1.msra.mxu0 0.0
    %1294 = vmatprep.subr.mxu0 0.0
    %1295 = vmatpush1.msra.mxu0 0.0
    %1296 = vmatprep.subr.mxu0 0.0
    %1297 = vmatpush1.msra.mxu0 0.0
    %1298 = vmatprep.subr.mxu0 0.0
    %1299 = vmatpush1.msra.mxu0 0.0
    %1300 = vmatprep.subr.mxu0 0.0
    %1301 = vmatpush1.msra.mxu0 0.0
    %1302 = vmatprep.subr.mxu0 0.0
    %1303 = vmatpush1.msra.mxu0 0.0
    %1304 = vmatprep.subr.mxu0 0.0
    %1305 = vmatpush1.msra.mxu0 0.0
    %1306 = vmatprep.subr.mxu0 0.0
    %1307 = vmatpush1.msra.mxu0 0.0
    %1308 = vmatprep.subr.mxu0 0.0
    %1309 = vmatpush1.msra.mxu0 0.0
    %1310 = vmatprep.subr.mxu0 0.0
    %1311 = vmatpush1.msra.mxu0 0.0
    %1312 = vmatprep.subr.mxu0 0.0
    %1313 = vmatpush1.msra.mxu0 0.0
    %1314 = vmatprep.subr.mxu0 0.0
    %1315 = vmatpush1.msra.mxu0 0.0
    %1316 = vmatprep.subr.mxu0 0.0
    %1317 = vmatpush1.msra.mxu0 0.0
    %1318 = vmatprep.mubr.f32.mxu0 0.0
    %1319 = vmatmul.mubr.f32.gmra.mrb[0].mxu0 %v1231
    %v1320 = vpop.f32.mrb[0].mxu0
    %v1321 = vadd.f32 0.0, %v1320
    %v1322 = vpop.f32.mrb[0].mxu0
    %v1323 = vadd.f32 0.0, %v1322
    %1324 = vmatprep.mubr.f32.mxu0 0.0
    %1325 = vmatmul.mubr.f32.gmra.mrb[0].mxu0 %v1234
    %v1326 = vpop.f32.mrb[0].mxu0
    %v1327 = vadd.f32 0.0, %v1326
    %v1328 = vpop.f32.mrb[0].mxu0
    %v1329 = vadd.f32 0.0, %v1328
    %1330 = vmatprep.mubr.f32.mxu0 0.0
    %1331 = vmatmul.mubr.f32.gmra.mrb[0].mxu0 %v1237
    %v1332 = vpop.f32.mrb[0].mxu0
    %v1333 = vadd.f32 0.0, %v1332
    %v1334 = vpop.f32.mrb[0].mxu0
    %v1335 = vadd.f32 0.0, %v1334
    %1336 = vmatprep.mubr.f32.mxu0 0.0
    %1337 = vmatmul.mubr.f32.gmra.mrb[0].mxu0 %v1240
    %v1338 = vpop.f32.mrb[0].mxu0
    %v1339 = vadd.f32 0.0, %v1338
    %v1340 = vpop.f32.mrb[0].mxu0
    %v1341 = vadd.f32 0.0, %v1340
    %1342 = vmatprep.mubr.f32.mxu0 0.0
    %1343 = vmatmul.mubr.f32.gmra.mrb[0].mxu0 %v1243
    %v1344 = vpop.f32.mrb[0].mxu0
    %v1345 = vadd.f32 0.0, %v1344
    %v1346 = vpop.f32.mrb[0].mxu0
    %v1347 = vadd.f32 0.0, %v1346
    %1348 = vmatprep.mubr.f32.mxu0 0.0
    %1349 = vmatmul.mubr.f32.gmra.mrb[0].mxu0 %v1246
    %v1350 = vpop.f32.mrb[0].mxu0
    %v1351 = vadd.f32 0.0, %v1350
    %v1352 = vpop.f32.mrb[0].mxu0
    %v1353 = vadd.f32 0.0, %v1352
    %1354 = vmatprep.mubr.f32.mxu0 0.0
    %1355 = vmatmul.mubr.f32.gmra.mrb[0].mxu0 %v1249
    %v1356 = vpop.f32.mrb[0].mxu0
    %v1357 = vadd.f32 0.0, %v1356
    %v1358 = vpop.f32.mrb[0].mxu0
    %v1359 = vadd.f32 0.0, %v1358
    %1360 = vmatprep.mubr.f32.mxu0 0.0
    %1361 = vmatmul.mubr.f32.gmra.mrb[0].mxu0 %v1252
    %v1362 = vpop.f32.mrb[0].mxu0
    %v1363 = vadd.f32 0.0, %v1362
    %v1364 = vpop.f32.mrb[0].mxu0
    %v1365 = vadd.f32 0.0, %v1364
    %1366 = vdwg.mxu0
    %1367 = vmatprep.subr.mxu0 0.0
    %1368 = vmatpush1.msra.mxu0 %v1214
    %1369 = vmatprep.subr.mxu0 0.0
    %1370 = vmatpush1.msra.mxu0 %v1217
    %1371 = vmatprep.subr.mxu0 0.0
    %1372 = vmatpush1.msra.mxu0 %v1220
    %1373 = vmatprep.subr.mxu0 0.0
    %1374 = vmatpush1.msra.mxu0 %v1223
    %1375 = vmatprep.subr.mxu0 0.0
    %1376 = vmatpush1.msra.mxu0 %v1226
    %1377 = vmatprep.subr.mxu0 0.0
    %1378 = vmatpush1.msra.mxu0 %v1229
    %1379 = vmatprep.subr.mxu0 0.0
    %1380 = vmatpush1.msra.mxu0 0.0
    %1381 = vmatprep.subr.mxu0 0.0
    %1382 = vmatpush1.msra.mxu0 0.0
    %1383 = vmatprep.subr.mxu0 0.0
    %1384 = vmatpush1.msra.mxu0 0.0
    %1385 = vmatprep.subr.mxu0 0.0
    %1386 = vmatpush1.msra.mxu0 0.0
    %1387 = vmatprep.subr.mxu0 0.0
    %1388 = vmatpush1.msra.mxu0 0.0
    %1389 = vmatprep.subr.mxu0 0.0
    %1390 = vmatpush1.msra.mxu0 0.0
    %1391 = vmatprep.subr.mxu0 0.0
    %1392 = vmatpush1.msra.mxu0 0.0
    %1393 = vmatprep.subr.mxu0 0.0
    %1394 = vmatpush1.msra.mxu0 0.0
    %1395 = vmatprep.subr.mxu0 0.0
    %1396 = vmatpush1.msra.mxu0 0.0
    %1397 = vmatprep.subr.mxu0 0.0
    %1398 = vmatpush1.msra.mxu0 0.0
    %1399 = vmatprep.subr.mxu0 0.0
    %1400 = vmatpush1.msra.mxu0 0.0
    %1401 = vmatprep.subr.mxu0 0.0
    %1402 = vmatpush1.msra.mxu0 0.0
    %1403 = vmatprep.subr.mxu0 0.0
    %1404 = vmatpush1.msra.mxu0 0.0
    %1405 = vmatprep.subr.mxu0 0.0
    %1406 = vmatpush1.msra.mxu0 0.0
    %1407 = vmatprep.subr.mxu0 0.0
    %1408 = vmatpush1.msra.mxu0 0.0
    %1409 = vmatprep.subr.mxu0 0.0
    %1410 = vmatpush1.msra.mxu0 0.0
    %1411 = vmatprep.subr.mxu0 0.0
    %1412 = vmatpush1.msra.mxu0 0.0
    %1413 = vmatprep.subr.mxu0 0.0
    %1414 = vmatpush1.msra.mxu0 0.0
    %1415 = vmatprep.subr.mxu0 0.0
    %1416 = vmatpush1.msra.mxu0 0.0
    %1417 = vmatprep.subr.mxu0 0.0
    %1418 = vmatpush1.msra.mxu0 0.0
    %1419 = vmatprep.subr.mxu0 0.0
    %1420 = vmatpush1.msra.mxu0 0.0
    %1421 = vmatprep.subr.mxu0 0.0
    %1422 = vmatpush1.msra.mxu0 0.0
    %1423 = vmatprep.subr.mxu0 0.0
    %1424 = vmatpush1.msra.mxu0 0.0
    %1425 = vmatprep.subr.mxu0 0.0
    %1426 = vmatpush1.msra.mxu0 0.0
    %1427 = vmatprep.subr.mxu0 0.0
    %1428 = vmatpush1.msra.mxu0 0.0
    %1429 = vmatprep.subr.mxu0 0.0
    %1430 = vmatpush1.msra.mxu0 0.0
    %1431 = vmatprep.mubr.f32.mxu0 0.0
    %1432 = vmatmul.mubr.f32.gmra.mrb[0].mxu0 %v1231
    %v1433 = vpop.f32.mrb[0].mxu0
    %v1434 = vadd.f32 0.0, %v1433
    %v1435 = vpop.f32.mrb[0].mxu0
    %1436 = vmatprep.mubr.f32.mxu0 0.0
    %1437 = vmatmul.mubr.f32.gmra.mrb[0].mxu0 %v1234
    %v1438 = vpop.f32.mrb[0].mxu0
    %v1439 = vadd.f32 0.0, %v1438
    %v1440 = vpop.f32.mrb[0].mxu0
    %1441 = vmatprep.mubr.f32.mxu0 0.0
    %1442 = vmatmul.mubr.f32.gmra.mrb[0].mxu0 %v1237
    %v1443 = vpop.f32.mrb[0].mxu0
    %v1444 = vadd.f32 0.0, %v1443
    %v1445 = vpop.f32.mrb[0].mxu0
    %1446 = vmatprep.mubr.f32.mxu0 0.0
    %1447 = vmatmul.mubr.f32.gmra.mrb[0].mxu0 %v1240
    %v1448 = vpop.f32.mrb[0].mxu0
    %v1449 = vadd.f32 0.0, %v1448
    %v1450 = vpop.f32.mrb[0].mxu0
    %1451 = vmatprep.mubr.f32.mxu0 0.0
    %1452 = vmatmul.mubr.f32.gmra.mrb[0].mxu0 %v1243
    %v1453 = vpop.f32.mrb[0].mxu0
    %v1454 = vadd.f32 0.0, %v1453
    %v1455 = vpop.f32.mrb[0].mxu0
    %1456 = vmatprep.mubr.f32.mxu0 0.0
    %1457 = vmatmul.mubr.f32.gmra.mrb[0].mxu0 %v1246
    %v1458 = vpop.f32.mrb[0].mxu0
    %v1459 = vadd.f32 0.0, %v1458
    %v1460 = vpop.f32.mrb[0].mxu0
    %1461 = vmatprep.mubr.f32.mxu0 0.0
    %1462 = vmatmul.mubr.f32.gmra.mrb[0].mxu0 %v1249
    %v1463 = vpop.f32.mrb[0].mxu0
    %v1464 = vadd.f32 0.0, %v1463
    %v1465 = vpop.f32.mrb[0].mxu0
    %1466 = vmatprep.mubr.f32.mxu0 0.0
    %1467 = vmatmul.mubr.f32.gmra.mrb[0].mxu0 %v1252
    %v1468 = vpop.f32.mrb[0].mxu0
    %v1469 = vadd.f32 0.0, %v1468
    %v1470 = vpop.f32.mrb[0].mxu0
    %1471 = vdwg.mxu0
    %v1472 = vadd.f32 %v1179, %v1321
    %v1473 = vadd.f32 %v1180, %v1323
    %v1474 = vadd.f32 %v1181, %v1434
    %v1475 = vadd.f32 %v1182, %v1327
    %v1476 = vadd.f32 %v1183, %v1329
    %v1477 = vadd.f32 %v1184, %v1439
    %v1478 = vadd.f32 %v1185, %v1333
    %v1479 = vadd.f32 %v1186, %v1335
    %v1480 = vadd.f32 %v1187, %v1444
    %v1481 = vadd.f32 %v1188, %v1339
    %v1482 = vadd.f32 %v1189, %v1341
    %v1483 = vadd.f32 %v1190, %v1449
    %v1484 = vadd.f32 %v1191, %v1345
    %v1485 = vadd.f32 %v1192, %v1347
    %v1486 = vadd.f32 %v1193, %v1454
    %v1487 = vadd.f32 %v1194, %v1351
    %v1488 = vadd.f32 %v1195, %v1353
    %v1489 = vadd.f32 %v1196, %v1459
    %v1490 = vadd.f32 %v1197, %v1357
    %v1491 = vadd.f32 %v1198, %v1359
    %v1492 = vadd.f32 %v1199, %v1464
    %v1493 = vadd.f32 %v1200, %v1363
    %v1494 = vadd.f32 %v1201, %v1365
    %v1495 = vadd.f32 %v1202, %v1469
    %v1496 = vld [vmem:[%s2] sm:$0x7]
    %v1498 = vlaneseq
    %v1499 = vshrl.u32 %v1498, 7
    %v1500 = vsub.s32 0, %v1499
    %v1501 = vrot.slane %v1496, %v1500
    %v1502 = vlaneseq
    %v1503 = vshrl.u32 %v1502, 7
    %v1504 = vsub.s32 1, %v1503
    %v1505 = vrot.slane %v1496, %v1504
    %v1506 = vlaneseq
    %v1507 = vshrl.u32 %v1506, 7
    %v1508 = vsub.s32 2, %v1507
    %v1509 = vrot.slane %v1496, %v1508
    %v1513 = vadd.f32 %v1472, %v1501
    %v1514 = vadd.f32 %v1473, %v1505
    %v1515 = vadd.f32 %v1474, %v1509
    %v1516 = vadd.f32 %v1475, %v1501
    %v1517 = vadd.f32 %v1476, %v1505
    %v1518 = vadd.f32 %v1477, %v1509
    %v1519 = vadd.f32 %v1478, %v1501
    %v1520 = vadd.f32 %v1479, %v1505
    %v1521 = vadd.f32 %v1480, %v1509
    %v1522 = vadd.f32 %v1481, %v1501
    %v1523 = vadd.f32 %v1482, %v1505
    %v1524 = vadd.f32 %v1483, %v1509
    %v1525 = vadd.f32 %v1484, %v1501
    %v1526 = vadd.f32 %v1485, %v1505
    %v1527 = vadd.f32 %v1486, %v1509
    %v1528 = vadd.f32 %v1487, %v1501
    %v1529 = vadd.f32 %v1488, %v1505
    %v1530 = vadd.f32 %v1489, %v1509
    %v1531 = vadd.f32 %v1490, %v1501
    %v1532 = vadd.f32 %v1491, %v1505
    %v1533 = vadd.f32 %v1492, %v1509
    %v1534 = vadd.f32 %v1493, %v1501
    %v1535 = vadd.f32 %v1494, %v1505
    %v1536 = vadd.f32 %v1495, %v1509
    %v1537 = vtanh.pop %v1513
    %v1538 = vtanh.pop %v1514
    %v1539 = vtanh.pop %v1515
    %v1540 = vtanh.pop %v1516
    %v1541 = vtanh.pop %v1517
    %v1542 = vtanh.pop %v1518
    %v1543 = vtanh.pop %v1519
    %v1544 = vtanh.pop %v1520
    %v1545 = vtanh.pop %v1521
    %v1546 = vtanh.pop %v1522
    %v1547 = vtanh.pop %v1523
    %v1548 = vtanh.pop %v1524
    %v1549 = vtanh.pop %v1525
    %v1550 = vtanh.pop %v1526
    %v1551 = vtanh.pop %v1527
    %v1552 = vtanh.pop %v1528
    %v1553 = vtanh.pop %v1529
    %v1554 = vtanh.pop %v1530
    %v1555 = vtanh.pop %v1531
    %v1556 = vtanh.pop %v1532
    %v1557 = vtanh.pop %v1533
    %v1558 = vtanh.pop %v1534
    %v1559 = vtanh.pop %v1535
    %v1560 = vtanh.pop %v1536
    %v1561 = vld [vmem:[%s3] sm:$0xff]
    %v1562 = vld [vmem:[%s3 + $0x8] sm:$0xff]
    %v1563 = vld [vmem:[%s3 + $0x10] sm:$0xff]
    %v1564 = vld [vmem:[%s3 + $0x18] sm:$0x3f]
    %v1565 = vld [vmem:[%s4] sm:$0xff]
    %v1566 = vld [vmem:[%s4 + $0x8] sm:$0xff]
    %v1567 = vld [vmem:[%s4 + $0x10] sm:$0xff]
    %v1568 = vld [vmem:[%s4 + $0x18] sm:$0xff]
    %v1569 = vld [vmem:[%s4 + $0x20] sm:$0xff]
    %v1570 = vld [vmem:[%s4 + $0x28] sm:$0xff]
    %v1571 = vld [vmem:[%s4 + $0x30] sm:$0xff]
    %v1572 = vld [vmem:[%s4 + $0x38] sm:$0xff]
    %v1573 = vld [vmem:[%s4 + $0x40] sm:$0xff]
    %v1574 = vld [vmem:[%s4 + $0x48] sm:$0xff]
    %v1575 = vld [vmem:[%s4 + $0x50] sm:$0xff]
    %v1576 = vld [vmem:[%s4 + $0x58] sm:$0xff]
    %v1577 = vld [vmem:[%s4 + $0x60] sm:$0xff]
    %v1578 = vld [vmem:[%s4 + $0x68] sm:$0xff]
    %v1579 = vld [vmem:[%s4 + $0x70] sm:$0xff]
    %v1580 = vld [vmem:[%s4 + $0x78] sm:$0xff]
    %v1581 = vld [vmem:[%s4 + $0x80] sm:$0xff]
    %v1582 = vld [vmem:[%s4 + $0x88] sm:$0xff]
    %v1583 = vld [vmem:[%s4 + $0x90] sm:$0xff]
    %v1584 = vld [vmem:[%s4 + $0x98] sm:$0xff]
    %v1585 = vld [vmem:[%s4 + $0xa0] sm:$0xff]
    %v1586 = vld [vmem:[%s4 + $0xa8] sm:$0xff]
    %v1587 = vld [vmem:[%s4 + $0xb0] sm:$0xff]
    %v1588 = vld [vmem:[%s4 + $0xb8] sm:$0xff]
    %v1589 = vld [vmem:[%s4 + $0xc0] sm:$0xff]
    %v1590 = vld [vmem:[%s4 + $0xc8] sm:$0xff]
    %v1591 = vld [vmem:[%s4 + $0xd0] sm:$0xff]
    %v1592 = vld [vmem:[%s4 + $0xd8] sm:$0xff]
    %v1593 = vld [vmem:[%s4 + $0xe0] sm:$0xff]
    %v1594 = vld [vmem:[%s4 + $0xe8] sm:$0xff]
    %v1595 = vld [vmem:[%s4 + $0xf0] sm:$0xff]
    %v1596 = vld [vmem:[%s4 + $0xf8] sm:$0xff]
    %v1597 = vld [vmem:[%s4 + $0x100] sm:$0xff]
    %v1598 = vld [vmem:[%s4 + $0x108] sm:$0xff]
    %v1599 = vld [vmem:[%s4 + $0x110] sm:$0xff]
    %v1600 = vld [vmem:[%s4 + $0x118] sm:$0xff]
    %v1601 = vld [vmem:[%s4 + $0x120] sm:$0xff]
    %v1602 = vld [vmem:[%s4 + $0x128] sm:$0xff]
    %v1603 = vld [vmem:[%s4 + $0x130] sm:$0xff]
    %v1604 = vld [vmem:[%s4 + $0x138] sm:$0xff]
    %v1605 = vld [vmem:[%s4 + $0x140] sm:$0xff]
    %v1606 = vld [vmem:[%s4 + $0x148] sm:$0xff]
    %v1607 = vld [vmem:[%s4 + $0x150] sm:$0xff]
    %v1608 = vld [vmem:[%s4 + $0x158] sm:$0xff]
    %v1609 = vld [vmem:[%s4 + $0x160] sm:$0xff]
    %v1610 = vld [vmem:[%s4 + $0x168] sm:$0xff]
    %v1611 = vld [vmem:[%s4 + $0x170] sm:$0xff]
    %v1612 = vld [vmem:[%s4 + $0x178] sm:$0xff]
    %v1613 = vld [vmem:[%s4 + $0x180] sm:$0xff]
    %v1614 = vld [vmem:[%s4 + $0x188] sm:$0xff]
    %v1615 = vld [vmem:[%s4 + $0x190] sm:$0xff]
    %v1616 = vld [vmem:[%s4 + $0x198] sm:$0xff]
    %v1617 = vld [vmem:[%s4 + $0x1a0] sm:$0xff]
    %v1618 = vld [vmem:[%s4 + $0x1a8] sm:$0xff]
    %v1619 = vld [vmem:[%s4 + $0x1b0] sm:$0xff]
    %v1620 = vld [vmem:[%s4 + $0x1b8] sm:$0xff]
    %v1621 = vld [vmem:[%s4 + $0x1c0] sm:$0xff]
    %v1622 = vld [vmem:[%s4 + $0x1c8] sm:$0xff]
    %v1623 = vld [vmem:[%s4 + $0x1d0] sm:$0xff]
    %v1624 = vld [vmem:[%s4 + $0x1d8] sm:$0xff]
    %v1625 = vld [vmem:[%s4 + $0x1e0] sm:$0xff]
    %v1626 = vld [vmem:[%s4 + $0x1e8] sm:$0xff]
    %v1627 = vld [vmem:[%s4 + $0x1f0] sm:$0xff]
    %v1628 = vld [vmem:[%s4 + $0x1f8] sm:$0xff]
    %v1629 = vld [vmem:[%s4 + $0x200] sm:$0xff]
    %v1630 = vld [vmem:[%s4 + $0x208] sm:$0xff]
    %vm1631 = vcmask 64512
    %v1633 = vsel %vm1631, %v1539, 0
    %v1636 = vsel %vm1631, %v1542, 0
    %v1639 = vsel %vm1631, %v1545, 0
    %v1642 = vsel %vm1631, %v1548, 0
    %v1645 = vsel %vm1631, %v1551, 0
    %v1648 = vsel %vm1631, %v1554, 0
    %v1651 = vsel %vm1631, %v1557, 0
    %v1654 = vsel %vm1631, %v1560, 0
    %1656 = vmatprep.subr.mxu0 %v1566
    %1657 = vmatpush1.msra.mxu0 %v1565
    %1658 = vmatprep.subr.mxu0 %v1568
    %1659 = vmatpush1.msra.mxu0 %v1567
    %1660 = vmatprep.subr.mxu0 %v1570
    %1661 = vmatpush1.msra.mxu0 %v1569
    %1662 = vmatprep.subr.mxu0 %v1572
    %1663 = vmatpush1.msra.mxu0 %v1571
    %1664 = vmatprep.subr.mxu0 %v1574
    %1665 = vmatpush1.msra.mxu0 %v1573
    %1666 = vmatprep.subr.mxu0 %v1576
    %1667 = vmatpush1.msra.mxu0 %v1575
    %1668 = vmatprep.subr.mxu0 %v1578
    %1669 = vmatpush1.msra.mxu0 %v1577
    %1670 = vmatprep.subr.mxu0 %v1580
    %1671 = vmatpush1.msra.mxu0 %v1579
    %1672 = vmatprep.subr.mxu0 %v1582
    %1673 = vmatpush1.msra.mxu0 %v1581
    %1674 = vmatprep.subr.mxu0 %v1584
    %1675 = vmatpush1.msra.mxu0 %v1583
    %1676 = vmatprep.subr.mxu0 %v1586
    %1677 = vmatpush1.msra.mxu0 %v1585
    %1678 = vmatprep.subr.mxu0 %v1588
    %1679 = vmatpush1.msra.mxu0 %v1587
    %1680 = vmatprep.subr.mxu0 %v1590
    %1681 = vmatpush1.msra.mxu0 %v1589
    %1682 = vmatprep.subr.mxu0 %v1592
    %1683 = vmatpush1.msra.mxu0 %v1591
    %1684 = vmatprep.subr.mxu0 %v1594
    %1685 = vmatpush1.msra.mxu0 %v1593
    %1686 = vmatprep.subr.mxu0 %v1596
    %1687 = vmatpush1.msra.mxu0 %v1595
    %1688 = vmatprep.subr.mxu0 %v1598
    %1689 = vmatpush1.msra.mxu0 %v1597
    %1690 = vmatprep.subr.mxu0 %v1600
    %1691 = vmatpush1.msra.mxu0 %v1599
    %1692 = vmatprep.subr.mxu0 %v1602
    %1693 = vmatpush1.msra.mxu0 %v1601
    %1694 = vmatprep.subr.mxu0 %v1604
    %1695 = vmatpush1.msra.mxu0 %v1603
    %1696 = vmatprep.subr.mxu0 %v1606
    %1697 = vmatpush1.msra.mxu0 %v1605
    %1698 = vmatprep.subr.mxu0 %v1608
    %1699 = vmatpush1.msra.mxu0 %v1607
    %1700 = vmatprep.subr.mxu0 %v1610
    %1701 = vmatpush1.msra.mxu0 %v1609
    %1702 = vmatprep.subr.mxu0 %v1612
    %1703 = vmatpush1.msra.mxu0 %v1611
    %1704 = vmatprep.subr.mxu0 %v1614
    %1705 = vmatpush1.msra.mxu0 %v1613
    %1706 = vmatprep.subr.mxu0 %v1616
    %1707 = vmatpush1.msra.mxu0 %v1615
    %1708 = vmatprep.subr.mxu0 %v1618
    %1709 = vmatpush1.msra.mxu0 %v1617
    %1710 = vmatprep.subr.mxu0 %v1620
    %1711 = vmatpush1.msra.mxu0 %v1619
    %1712 = vmatprep.subr.mxu0 %v1622
    %1713 = vmatpush1.msra.mxu0 %v1621
    %1714 = vmatprep.subr.mxu0 %v1624
    %1715 = vmatpush1.msra.mxu0 %v1623
    %1716 = vmatprep.subr.mxu0 %v1626
    %1717 = vmatpush1.msra.mxu0 %v1625
    %1718 = vmatprep.subr.mxu0 %v1628
    %1719 = vmatpush1.msra.mxu0 %v1627
    %1720 = vmatprep.mubr.f32.mxu0 %v1538
    %1721 = vmatmul.mubr.f32.gmra.mrb[0].mxu0 %v1537
    %v1722 = vpop.f32.mrb[0].mxu0
    %v1723 = vadd.f32 0.0, %v1722
    %v1724 = vpop.f32.mrb[0].mxu0
    %v1725 = vadd.f32 0.0, %v1724
    %1726 = vmatprep.mubr.f32.mxu0 %v1541
    %1727 = vmatmul.mubr.f32.gmra.mrb[0].mxu0 %v1540
    %v1728 = vpop.f32.mrb[0].mxu0
    %v1729 = vadd.f32 0.0, %v1728
    %v1730 = vpop.f32.mrb[0].mxu0
    %v1731 = vadd.f32 0.0, %v1730
    %1732 = vmatprep.mubr.f32.mxu0 %v1544
    %1733 = vmatmul.mubr.f32.gmra.mrb[0].mxu0 %v1543
    %v1734 = vpop.f32.mrb[0].mxu0
    %v1735 = vadd.f32 0.0, %v1734
    %v1736 = vpop.f32.mrb[0].mxu0
    %v1737 = vadd.f32 0.0, %v1736
    %1738 = vmatprep.mubr.f32.mxu0 %v1547
    %1739 = vmatmul.mubr.f32.gmra.mrb[0].mxu0 %v1546
    %v1740 = vpop.f32.mrb[0].mxu0
    %v1741 = vadd.f32 0.0, %v1740
    %v1742 = vpop.f32.mrb[0].mxu0
    %v1743 = vadd.f32 0.0, %v1742
    %1744 = vmatprep.mubr.f32.mxu0 %v1550
    %1745 = vmatmul.mubr.f32.gmra.mrb[0].mxu0 %v1549
    %v1746 = vpop.f32.mrb[0].mxu0
    %v1747 = vadd.f32 0.0, %v1746
    %v1748 = vpop.f32.mrb[0].mxu0
    %v1749 = vadd.f32 0.0, %v1748
    %1750 = vmatprep.mubr.f32.mxu0 %v1553
    %1751 = vmatmul.mubr.f32.gmra.mrb[0].mxu0 %v1552
    %v1752 = vpop.f32.mrb[0].mxu0
    %v1753 = vadd.f32 0.0, %v1752
    %v1754 = vpop.f32.mrb[0].mxu0
    %v1755 = vadd.f32 0.0, %v1754
    %1756 = vmatprep.mubr.f32.mxu0 %v1556
    %1757 = vmatmul.mubr.f32.gmra.mrb[0].mxu0 %v1555
    %v1758 = vpop.f32.mrb[0].mxu0
    %v1759 = vadd.f32 0.0, %v1758
    %v1760 = vpop.f32.mrb[0].mxu0
    %v1761 = vadd.f32 0.0, %v1760
    %1762 = vmatprep.mubr.f32.mxu0 %v1559
    %1763 = vmatmul.mubr.f32.gmra.mrb[0].mxu0 %v1558
    %v1764 = vpop.f32.mrb[0].mxu0
    %v1765 = vadd.f32 0.0, %v1764
    %v1766 = vpop.f32.mrb[0].mxu0
    %v1767 = vadd.f32 0.0, %v1766
    %1768 = vdwg.mxu0
    %1769 = vmatprep.subr.mxu0 %v1630
    %1770 = vmatpush1.msra.mxu0 %v1629
    %1771 = vmatprep.subr.mxu0 0.0
    %1772 = vmatpush1.msra.mxu0 0.0
    %1773 = vmatprep.subr.mxu0 0.0
    %1774 = vmatpush1.msra.mxu0 0.0
    %1775 = vmatprep.subr.mxu0 0.0
    %1776 = vmatpush1.msra.mxu0 0.0
    %1777 = vmatprep.subr.mxu0 0.0
    %1778 = vmatpush1.msra.mxu0 0.0
    %1779 = vmatprep.subr.mxu0 0.0
    %1780 = vmatpush1.msra.mxu0 0.0
    %1781 = vmatprep.subr.mxu0 0.0
    %1782 = vmatpush1.msra.mxu0 0.0
    %1783 = vmatprep.subr.mxu0 0.0
    %1784 = vmatpush1.msra.mxu0 0.0
    %1785 = vmatprep.subr.mxu0 0.0
    %1786 = vmatpush1.msra.mxu0 0.0
    %1787 = vmatprep.subr.mxu0 0.0
    %1788 = vmatpush1.msra.mxu0 0.0
    %1789 = vmatprep.subr.mxu0 0.0
    %1790 = vmatpush1.msra.mxu0 0.0
    %1791 = vmatprep.subr.mxu0 0.0
    %1792 = vmatpush1.msra.mxu0 0.0
    %1793 = vmatprep.subr.mxu0 0.0
    %1794 = vmatpush1.msra.mxu0 0.0
    %1795 = vmatprep.subr.mxu0 0.0
    %1796 = vmatpush1.msra.mxu0 0.0
    %1797 = vmatprep.subr.mxu0 0.0
    %1798 = vmatpush1.msra.mxu0 0.0
    %1799 = vmatprep.subr.mxu0 0.0
    %1800 = vmatpush1.msra.mxu0 0.0
    %1801 = vmatprep.subr.mxu0 0.0
    %1802 = vmatpush1.msra.mxu0 0.0
    %1803 = vmatprep.subr.mxu0 0.0
    %1804 = vmatpush1.msra.mxu0 0.0
    %1805 = vmatprep.subr.mxu0 0.0
    %1806 = vmatpush1.msra.mxu0 0.0
    %1807 = vmatprep.subr.mxu0 0.0
    %1808 = vmatpush1.msra.mxu0 0.0
    %1809 = vmatprep.subr.mxu0 0.0
    %1810 = vmatpush1.msra.mxu0 0.0
    %1811 = vmatprep.subr.mxu0 0.0
    %1812 = vmatpush1.msra.mxu0 0.0
    %1813 = vmatprep.subr.mxu0 0.0
    %1814 = vmatpush1.msra.mxu0 0.0
    %1815 = vmatprep.subr.mxu0 0.0
    %1816 = vmatpush1.msra.mxu0 0.0
    %1817 = vmatprep.subr.mxu0 0.0
    %1818 = vmatpush1.msra.mxu0 0.0
    %1819 = vmatprep.subr.mxu0 0.0
    %1820 = vmatpush1.msra.mxu0 0.0
    %1821 = vmatprep.subr.mxu0 0.0
    %1822 = vmatpush1.msra.mxu0 0.0
    %1823 = vmatprep.subr.mxu0 0.0
    %1824 = vmatpush1.msra.mxu0 0.0
    %1825 = vmatprep.subr.mxu0 0.0
    %1826 = vmatpush1.msra.mxu0 0.0
    %1827 = vmatprep.subr.mxu0 0.0
    %1828 = vmatpush1.msra.mxu0 0.0
    %1829 = vmatprep.subr.mxu0 0.0
    %1830 = vmatpush1.msra.mxu0 0.0
    %1831 = vmatprep.subr.mxu0 0.0
    %1832 = vmatpush1.msra.mxu0 0.0
    %1833 = vmatprep.mubr.f32.mxu0 0.0
    %1834 = vmatmul.mubr.f32.gmra.mrb[0].mxu0 %v1633
    %v1835 = vpop.f32.mrb[0].mxu0
    %v1836 = vadd.f32 %v1723, %v1835
    %v1837 = vpop.f32.mrb[0].mxu0
    %v1838 = vadd.f32 %v1725, %v1837
    %1839 = vmatprep.mubr.f32.mxu0 0.0
    %1840 = vmatmul.mubr.f32.gmra.mrb[0].mxu0 %v1636
    %v1841 = vpop.f32.mrb[0].mxu0
    %v1842 = vadd.f32 %v1729, %v1841
    %v1843 = vpop.f32.mrb[0].mxu0
    %v1844 = vadd.f32 %v1731, %v1843
    %1845 = vmatprep.mubr.f32.mxu0 0.0
    %1846 = vmatmul.mubr.f32.gmra.mrb[0].mxu0 %v1639
    %v1847 = vpop.f32.mrb[0].mxu0
    %v1848 = vadd.f32 %v1735, %v1847
    %v1849 = vpop.f32.mrb[0].mxu0
    %v1850 = vadd.f32 %v1737, %v1849
    %1851 = vmatprep.mubr.f32.mxu0 0.0
    %1852 = vmatmul.mubr.f32.gmra.mrb[0].mxu0 %v1642
    %v1853 = vpop.f32.mrb[0].mxu0
    %v1854 = vadd.f32 %v1741, %v1853
    %v1855 = vpop.f32.mrb[0].mxu0
    %v1856 = vadd.f32 %v1743, %v1855
    %1857 = vmatprep.mubr.f32.mxu0 0.0
    %1858 = vmatmul.mubr.f32.gmra.mrb[0].mxu0 %v1645
    %v1859 = vpop.f32.mrb[0].mxu0
    %v1860 = vadd.f32 %v1747, %v1859
    %v1861 = vpop.f32.mrb[0].mxu0
    %v1862 = vadd.f32 %v1749, %v1861
    %1863 = vmatprep.mubr.f32.mxu0 0.0
    %1864 = vmatmul.mubr.f32.gmra.mrb[0].mxu0 %v1648
    %v1865 = vpop.f32.mrb[0].mxu0
    %v1866 = vadd.f32 %v1753, %v1865
    %v1867 = vpop.f32.mrb[0].mxu0
    %v1868 = vadd.f32 %v1755, %v1867
    %1869 = vmatprep.mubr.f32.mxu0 0.0
    %1870 = vmatmul.mubr.f32.gmra.mrb[0].mxu0 %v1651
    %v1871 = vpop.f32.mrb[0].mxu0
    %v1872 = vadd.f32 %v1759, %v1871
    %v1873 = vpop.f32.mrb[0].mxu0
    %v1874 = vadd.f32 %v1761, %v1873
    %1875 = vmatprep.mubr.f32.mxu0 0.0
    %1876 = vmatmul.mubr.f32.gmra.mrb[0].mxu0 %v1654
    %v1877 = vpop.f32.mrb[0].mxu0
    %v1878 = vadd.f32 %v1765, %v1877
    %v1879 = vpop.f32.mrb[0].mxu0
    %v1880 = vadd.f32 %v1767, %v1879
    %1881 = vdwg.mxu0
    %vm1882 = vcmask 490496
    %v1884 = vsel %vm1882, %v1561, 0
    %v1887 = vsel %vm1882, %v1562, 0
    %v1890 = vsel %vm1882, %v1563, 0
    %v1893 = vsel %vm1882, %v1564, 0
    %vm1895 = vcmask 1043456
    %v1897 = vsel %vm1895, %v1878, 0
    %v1900 = vsel %vm1895, %v1880, 0
    %1902 = vmatprep.subr.mxu0 %v1838
    %1903 = vmatpush1.msra.mxu0 %v1836
    %1904 = vmatprep.subr.mxu0 %v1844
    %1905 = vmatpush1.msra.mxu0 %v1842
    %1906 = vmatprep.subr.mxu0 %v1850
    %1907 = vmatpush1.msra.mxu0 %v1848
    %1908 = vmatprep.subr.mxu0 %v1856
    %1909 = vmatpush1.msra.mxu0 %v1854
    %1910 = vmatprep.subr.mxu0 %v1862
    %1911 = vmatpush1.msra.mxu0 %v1860
    %1912 = vmatprep.subr.mxu0 %v1868
    %1913 = vmatpush1.msra.mxu0 %v1866
    %1914 = vmatprep.subr.mxu0 %v1874
    %1915 = vmatpush1.msra.mxu0 %v1872
    %1916 = vmatprep.subr.mxu0 %v1900
    %1917 = vmatpush1.msra.mxu0 %v1897
    %1918 = vmatprep.subr.mxu0 0.0
    %1919 = vmatpush1.msra.mxu0 0.0
    %1920 = vmatprep.subr.mxu0 0.0
    %1921 = vmatpush1.msra.mxu0 0.0
    %1922 = vmatprep.subr.mxu0 0.0
    %1923 = vmatpush1.msra.mxu0 0.0
    %1924 = vmatprep.subr.mxu0 0.0
    %1925 = vmatpush1.msra.mxu0 0.0
    %1926 = vmatprep.subr.mxu0 0.0
    %1927 = vmatpush1.msra.mxu0 0.0
    %1928 = vmatprep.subr.mxu0 0.0
    %1929 = vmatpush1.msra.mxu0 0.0
    %1930 = vmatprep.subr.mxu0 0.0
    %1931 = vmatpush1.msra.mxu0 0.0
    %1932 = vmatprep.subr.mxu0 0.0
    %1933 = vmatpush1.msra.mxu0 0.0
    %1934 = vmatprep.subr.mxu0 0.0
    %1935 = vmatpush1.msra.mxu0 0.0
    %1936 = vmatprep.subr.mxu0 0.0
    %1937 = vmatpush1.msra.mxu0 0.0
    %1938 = vmatprep.subr.mxu0 0.0
    %1939 = vmatpush1.msra.mxu0 0.0
    %1940 = vmatprep.subr.mxu0 0.0
    %1941 = vmatpush1.msra.mxu0 0.0
    %1942 = vmatprep.subr.mxu0 0.0
    %1943 = vmatpush1.msra.mxu0 0.0
    %1944 = vmatprep.subr.mxu0 0.0
    %1945 = vmatpush1.msra.mxu0 0.0
    %1946 = vmatprep.subr.mxu0 0.0
    %1947 = vmatpush1.msra.mxu0 0.0
    %1948 = vmatprep.subr.mxu0 0.0
    %1949 = vmatpush1.msra.mxu0 0.0
    %1950 = vmatprep.subr.mxu0 0.0
    %1951 = vmatpush1.msra.mxu0 0.0
    %1952 = vmatprep.subr.mxu0 0.0
    %1953 = vmatpush1.msra.mxu0 0.0
    %1954 = vmatprep.subr.mxu0 0.0
    %1955 = vmatpush1.msra.mxu0 0.0
    %1956 = vmatprep.subr.mxu0 0.0
    %1957 = vmatpush1.msra.mxu0 0.0
    %1958 = vmatprep.subr.mxu0 0.0
    %1959 = vmatpush1.msra.mxu0 0.0
    %1960 = vmatprep.subr.mxu0 0.0
    %1961 = vmatpush1.msra.mxu0 0.0
    %1962 = vmatprep.subr.mxu0 0.0
    %1963 = vmatpush1.msra.mxu0 0.0
    %1964 = vmatprep.subr.mxu0 0.0
    %1965 = vmatpush1.msra.mxu0 0.0
    %1966 = vmatprep.mubr.f32.mxu0 0.0
    %1967 = vmatmul.mubr.f32.gmra.mrb[0].mxu0 %v1884
    %v1968 = vpop.f32.mrb[0].mxu0
    %v1969 = vadd.f32 0.0, %v1968
    %v1970 = vpop.f32.mrb[0].mxu0
    %v1971 = vadd.f32 0.0, %v1970
    %1972 = vmatprep.mubr.f32.mxu0 0.0
    %1973 = vmatmul.mubr.f32.gmra.mrb[0].mxu0 %v1887
    %v1974 = vpop.f32.mrb[0].mxu0
    %v1975 = vadd.f32 0.0, %v1974
    %v1976 = vpop.f32.mrb[0].mxu0
    %v1977 = vadd.f32 0.0, %v1976
    %1978 = vmatprep.mubr.f32.mxu0 0.0
    %1979 = vmatmul.mubr.f32.gmra.mrb[0].mxu0 %v1890
    %v1980 = vpop.f32.mrb[0].mxu0
    %v1981 = vadd.f32 0.0, %v1980
    %v1982 = vpop.f32.mrb[0].mxu0
    %v1983 = vadd.f32 0.0, %v1982
    %1984 = vmatprep.mubr.f32.mxu0 0.0
    %1985 = vmatmul.mubr.f32.gmra.mrb[0].mxu0 %v1893
    %v1986 = vpop.f32.mrb[0].mxu0
    %v1987 = vadd.f32 0.0, %v1986
    %v1988 = vpop.f32.mrb[0].mxu0
    %v1989 = vadd.f32 0.0, %v1988
    %1990 = vdwg.mxu0
    %v1991 = vmul.f32 %v1969, 0.25
    %v1992 = vmul.f32 %v1971, 0.25
    %v1993 = vmul.f32 %v1975, 0.25
    %v1994 = vmul.f32 %v1977, 0.25
    %v1995 = vmul.f32 %v1981, 0.25
    %v1996 = vmul.f32 %v1983, 0.25
    %v1997 = vmul.f32 %v1987, 0.25
    %v1998 = vmul.f32 %v1989, 0.25
    %1999 = vst [vmem:[#allocation2] sm:$0xff] %v1991
    %vm2000 = vcmask 31744
    %2001 = vst.msk [vmem:[#allocation2 + $0x8] sm:$0xff] %vm2000, %v1992
    %2002 = vst [vmem:[#allocation2 + $0x10] sm:$0xff] %v1993
    %2003 = vst.msk [vmem:[#allocation2 + $0x18] sm:$0xff] %vm2000, %v1994
    %2004 = vst [vmem:[#allocation2 + $0x20] sm:$0xff] %v1995
    %2005 = vst.msk [vmem:[#allocation2 + $0x28] sm:$0xff] %vm2000, %v1996
    %2006 = vst [vmem:[#allocation2 + $0x30] sm:$0x3f] %v1997
    %vm2007 = vcmask 29696
    %2008 = vst.msk [vmem:[#allocation2 + $0x38] sm:$0x3f] %vm2007, %v1998
    %v2009 = vld [vmem:[#allocation2] sm:$0xff]
    %v2010 = vld [vmem:[#allocation2 + $0x8] sm:$0xff]
    %v2011 = vld [vmem:[#allocation2 + $0x10] sm:$0xff]
    %v2012 = vld [vmem:[#allocation2 + $0x18] sm:$0xff]
    %v2013 = vld [vmem:[#allocation2 + $0x20] sm:$0xff]
    %v2014 = vld [vmem:[#allocation2 + $0x28] sm:$0xff]
    %v2015 = vld [vmem:[#allocation2 + $0x30] sm:$0x3]
    %v2016 = vld [vmem:[#allocation2 + $0x38] sm:$0x3]
    %v2017 = vld [vmem:[%s5] sm:$0xff]
    %v2018 = vld [vmem:[%s5 + $0x8] sm:$0xff]
    %v2019 = vld [vmem:[%s5 + $0x10] sm:$0xff]
    %v2020 = vld [vmem:[%s5 + $0x18] sm:$0xff]
    %v2021 = vld [vmem:[%s5 + $0x20] sm:$0xff]
    %v2022 = vld [vmem:[%s5 + $0x28] sm:$0xff]
    %v2023 = vld [vmem:[%s5 + $0x30] sm:$0xff]
    %v2024 = vld [vmem:[%s5 + $0x38] sm:$0xff]
    %v2025 = vld [vmem:[%s5 + $0x40] sm:$0xff]
    %v2026 = vld [vmem:[%s5 + $0x48] sm:$0xff]
    %v2027 = vld [vmem:[%s5 + $0x50] sm:$0xff]
    %v2028 = vld [vmem:[%s5 + $0x58] sm:$0xff]
    %v2029 = vld [vmem:[%s5 + $0x60] sm:$0xff]
    %v2030 = vld [vmem:[%s5 + $0x68] sm:$0xff]
    %v2031 = vld [vmem:[%s5 + $0x70] sm:$0xff]
    %v2032 = vld [vmem:[%s5 + $0x78] sm:$0xff]
    %v2033 = vld [vmem:[%s5 + $0x80] sm:$0xff]
    %v2034 = vld [vmem:[%s5 + $0x88] sm:$0xff]
    %v2035 = vld [vmem:[%s5 + $0x90] sm:$0xff]
    %v2036 = vld [vmem:[%s5 + $0x98] sm:$0xff]
    %v2037 = vld [vmem:[%s5 + $0xa0] sm:$0xff]
    %v2038 = vld [vmem:[%s5 + $0xa8] sm:$0xff]
    %v2039 = vld [vmem:[%s5 + $0xb0] sm:$0xff]
    %v2040 = vld [vmem:[%s5 + $0xb8] sm:$0xff]
    %v2041 = vld [vmem:[%s5 + $0xc0] sm:$0xff]
    %v2042 = vld [vmem:[%s5 + $0xc8] sm:$0xff]
    %v2043 = vld [vmem:[%s5 + $0xd0] sm:$0xff]
    %v2044 = vld [vmem:[%s5 + $0xd8] sm:$0xff]
    %v2045 = vld [vmem:[%s5 + $0xe0] sm:$0xff]
    %v2046 = vld [vmem:[%s5 + $0xe8] sm:$0xff]
    %v2047 = vld [vmem:[%s5 + $0xf0] sm:$0xff]
    %v2048 = vld [vmem:[%s5 + $0xf8] sm:$0xff]
    %v2049 = vld [vmem:[%s5 + $0x100] sm:$0xff]
    %v2050 = vld [vmem:[%s5 + $0x108] sm:$0xff]
    %v2051 = vld [vmem:[%s5 + $0x110] sm:$0xff]
    %v2052 = vld [vmem:[%s5 + $0x118] sm:$0xff]
    %v2053 = vld [vmem:[%s5 + $0x120] sm:$0xff]
    %v2054 = vld [vmem:[%s5 + $0x128] sm:$0xff]
    %v2055 = vld [vmem:[%s5 + $0x130] sm:$0xff]
    %v2056 = vld [vmem:[%s5 + $0x138] sm:$0xff]
    %v2057 = vld [vmem:[%s5 + $0x140] sm:$0xff]
    %v2058 = vld [vmem:[%s5 + $0x148] sm:$0xff]
    %v2059 = vld [vmem:[%s5 + $0x150] sm:$0xff]
    %v2060 = vld [vmem:[%s5 + $0x158] sm:$0xff]
    %v2061 = vld [vmem:[%s5 + $0x160] sm:$0xff]
    %v2062 = vld [vmem:[%s5 + $0x168] sm:$0xff]
    %v2063 = vld [vmem:[%s5 + $0x170] sm:$0xff]
    %v2064 = vld [vmem:[%s5 + $0x178] sm:$0xff]
    %v2065 = vld [vmem:[%s5 + $0x180] sm:$0xf]
    %v2066 = vld [vmem:[%s5 + $0x188] sm:$0xf]
    %v2067 = vld [vmem:[%s5 + $0x190] sm:$0xf]
    %v2068 = vld [vmem:[#allocation2] sm:$0xfe]
    %v2069 = vld [vmem:[#allocation2 + $0x8] sm:$0xfe]
    %v2070 = vld [vmem:[#allocation2 + $0x30] sm:$0x7]
    %v2071 = vld [vmem:[#allocation2 + $0x38] sm:$0x7]
    %s2072 = scalar_lea.vmem %s5, 408
    %v2073 = vld [vmem:[%s2072] sm:$0xff]
    %v2074 = vld [vmem:[%s2072 + $0x8] sm:$0xff]
    %v2075 = vld [vmem:[%s2072 + $0x10] sm:$0xff]
    %v2076 = vld [vmem:[%s2072 + $0x18] sm:$0xff]
    %v2077 = vld [vmem:[%s2072 + $0x20] sm:$0xff]
    %v2078 = vld [vmem:[%s2072 + $0x28] sm:$0xff]
    %v2079 = vld [vmem:[%s2072 + $0x30] sm:$0xff]
    %v2080 = vld [vmem:[%s2072 + $0x38] sm:$0xff]
    %v2081 = vld [vmem:[%s2072 + $0x40] sm:$0xff]
    %v2082 = vld [vmem:[%s2072 + $0x48] sm:$0xff]
    %v2083 = vld [vmem:[%s2072 + $0x50] sm:$0xff]
    %v2084 = vld [vmem:[%s2072 + $0x58] sm:$0xff]
    %v2085 = vld [vmem:[%s2072 + $0x60] sm:$0xff]
    %v2086 = vld [vmem:[%s2072 + $0x68] sm:$0xff]
    %v2087 = vld [vmem:[%s2072 + $0x70] sm:$0xff]
    %v2088 = vld [vmem:[%s2072 + $0x78] sm:$0xff]
    %v2089 = vld [vmem:[%s2072 + $0x80] sm:$0xff]
    %v2090 = vld [vmem:[%s2072 + $0x88] sm:$0xff]
    %v2091 = vld [vmem:[%s2072 + $0x90] sm:$0xff]
    %v2092 = vld [vmem:[%s2072 + $0x98] sm:$0xff]
    %v2093 = vld [vmem:[%s2072 + $0xa0] sm:$0xff]
    %v2094 = vld [vmem:[%s2072 + $0xa8] sm:$0xff]
    %v2095 = vld [vmem:[%s2072 + $0xb0] sm:$0xff]
    %v2096 = vld [vmem:[%s2072 + $0xb8] sm:$0xff]
    %v2097 = vld [vmem:[%s2072 + $0xc0] sm:$0xff]
    %v2098 = vld [vmem:[%s2072 + $0xc8] sm:$0xff]
    %v2099 = vld [vmem:[%s2072 + $0xd0] sm:$0xff]
    %v2100 = vld [vmem:[%s2072 + $0xd8] sm:$0xff]
    %v2101 = vld [vmem:[%s2072 + $0xe0] sm:$0xff]
    %v2102 = vld [vmem:[%s2072 + $0xe8] sm:$0xff]
    %v2103 = vld [vmem:[%s2072 + $0xf0] sm:$0xff]
    %v2104 = vld [vmem:[%s2072 + $0xf8] sm:$0xff]
    %v2105 = vld [vmem:[%s2072 + $0x100] sm:$0xff]
    %v2106 = vld [vmem:[%s2072 + $0x108] sm:$0xff]
    %v2107 = vld [vmem:[%s2072 + $0x110] sm:$0xff]
    %v2108 = vld [vmem:[%s2072 + $0x118] sm:$0xff]
    %v2109 = vld [vmem:[%s2072 + $0x120] sm:$0xff]
    %v2110 = vld [vmem:[%s2072 + $0x128] sm:$0xff]
    %v2111 = vld [vmem:[%s2072 + $0x130] sm:$0xff]
    %v2112 = vld [vmem:[%s2072 + $0x138] sm:$0xff]
    %v2113 = vld [vmem:[%s2072 + $0x140] sm:$0xff]
    %v2114 = vld [vmem:[%s2072 + $0x148] sm:$0xff]
    %v2115 = vld [vmem:[%s2072 + $0x150] sm:$0xff]
    %v2116 = vld [vmem:[%s2072 + $0x158] sm:$0xff]
    %v2117 = vld [vmem:[%s2072 + $0x160] sm:$0xff]
    %v2118 = vld [vmem:[%s2072 + $0x168] sm:$0xff]
    %v2119 = vld [vmem:[%s2072 + $0x170] sm:$0xff]
    %v2120 = vld [vmem:[%s2072 + $0x178] sm:$0xff]
    %v2121 = vld [vmem:[%s2072 + $0x180] sm:$0xf]
    %v2122 = vld [vmem:[%s2072 + $0x188] sm:$0xf]
    %v2123 = vld [vmem:[%s2072 + $0x190] sm:$0xf]
    %vm2132 = vcmask 1046528
    %v2133 = vrot.slane %v2068, 1
    %v2134 = vrot.slane %v2011, 1
    %v2135 = vsel %vm2132, %v2133, %v2134
    %v2136 = vrot.slane %v2069, 1
    %v2137 = vrot.slane %v2012, 1
    %v2138 = vsel %vm2132, %v2136, %v2137
    %v2139 = vrot.slane %v2013, 1
    %v2140 = vsel %vm2132, %v2134, %v2139
    %v2141 = vrot.slane %v2014, 1
    %v2142 = vsel %vm2132, %v2137, %v2141
    %v2143 = vrot.slane %v2070, 1
    %v2144 = vsel %vm2132, %v2139, %v2143
    %v2145 = vrot.slane %v2071, 1
    %v2146 = vsel %vm2132, %v2141, %v2145
    %v2151 = vsel %vm2000, %v2138, 0
    %v2153 = vsel %vm2000, %v2142, 0
    %v2155 = vsel %vm2000, %v2146, 0
    %v2157 = vsel %vm2000, %v2145, 0
    %v2160 = vsel %vm1895, %v2121, 0
    %v2163 = vsel %vm1895, %v2122, 0
    %v2166 = vsel %vm1895, %v2123, 0
    %2168 = vmatprep.subr.mxu0 %v2074
    %2169 = vmatpush1.msra.mxu0 %v2073
    %2170 = vmatprep.subr.mxu0 %v2077
    %2171 = vmatpush1.msra.mxu0 %v2076
    %2172 = vmatprep.subr.mxu0 %v2080
    %2173 = vmatpush1.msra.mxu0 %v2079
    %2174 = vmatprep.subr.mxu0 %v2083
    %2175 = vmatpush1.msra.mxu0 %v2082
    %2176 = vmatprep.subr.mxu0 %v2086
    %2177 = vmatpush1.msra.mxu0 %v2085
    %2178 = vmatprep.subr.mxu0 %v2089
    %2179 = vmatpush1.msra.mxu0 %v2088
    %2180 = vmatprep.subr.mxu0 %v2092
    %2181 = vmatpush1.msra.mxu0 %v2091
    %2182 = vmatprep.subr.mxu0 %v2095
    %2183 = vmatpush1.msra.mxu0 %v2094
    %2184 = vmatprep.subr.mxu0 %v2098
    %2185 = vmatpush1.msra.mxu0 %v2097
    %2186 = vmatprep.subr.mxu0 %v2101
    %2187 = vmatpush1.msra.mxu0 %v2100
    %2188 = vmatprep.subr.mxu0 %v2104
    %2189 = vmatpush1.msra.mxu0 %v2103
    %2190 = vmatprep.subr.mxu0 %v2107
    %2191 = vmatpush1.msra.mxu0 %v2106
    %2192 = vmatprep.subr.mxu0 %v2110
    %2193 = vmatpush1.msra.mxu0 %v2109
    %2194 = vmatprep.subr.mxu0 %v2113
    %2195 = vmatpush1.msra.mxu0 %v2112
    %2196 = vmatprep.subr.mxu0 %v2116
    %2197 = vmatpush1.msra.mxu0 %v2115
    %2198 = vmatprep.subr.mxu0 %v2119
    %2199 = vmatpush1.msra.mxu0 %v2118
    %2200 = vmatprep.subr.mxu0 %v2163
    %2201 = vmatpush1.msra.mxu0 %v2160
    %2202 = vmatprep.subr.mxu0 0.0
    %2203 = vmatpush1.msra.mxu0 0.0
    %2204 = vmatprep.subr.mxu0 0.0
    %2205 = vmatpush1.msra.mxu0 0.0
    %2206 = vmatprep.subr.mxu0 0.0
    %2207 = vmatpush1.msra.mxu0 0.0
    %2208 = vmatprep.subr.mxu0 0.0
    %2209 = vmatpush1.msra.mxu0 0.0
    %2210 = vmatprep.subr.mxu0 0.0
    %2211 = vmatpush1.msra.mxu0 0.0
    %2212 = vmatprep.subr.mxu0 0.0
    %2213 = vmatpush1.msra.mxu0 0.0
    %2214 = vmatprep.subr.mxu0 0.0
    %2215 = vmatpush1.msra.mxu0 0.0
    %2216 = vmatprep.subr.mxu0 0.0
    %2217 = vmatpush1.msra.mxu0 0.0
    %2218 = vmatprep.subr.mxu0 0.0
    %2219 = vmatpush1.msra.mxu0 0.0
    %2220 = vmatprep.subr.mxu0 0.0
    %2221 = vmatpush1.msra.mxu0 0.0
    %2222 = vmatprep.subr.mxu0 0.0
    %2223 = vmatpush1.msra.mxu0 0.0
    %2224 = vmatprep.subr.mxu0 0.0
    %2225 = vmatpush1.msra.mxu0 0.0
    %2226 = vmatprep.subr.mxu0 0.0
    %2227 = vmatpush1.msra.mxu0 0.0
    %2228 = vmatprep.subr.mxu0 0.0
    %2229 = vmatpush1.msra.mxu0 0.0
    %2230 = vmatprep.subr.mxu0 0.0
    %2231 = vmatpush1.msra.mxu0 0.0
    %2232 = vmatprep.mubr.f32.mxu0 %v2151
    %2233 = vmatmul.mubr.f32.gmra.mrb[0].mxu0 %v2135
    %v2234 = vpop.f32.mrb[0].mxu0
    %v2235 = vadd.f32 0.0, %v2234
    %v2236 = vpop.f32.mrb[0].mxu0
    %v2237 = vadd.f32 0.0, %v2236
    %2238 = vmatprep.mubr.f32.mxu0 %v2153
    %2239 = vmatmul.mubr.f32.gmra.mrb[0].mxu0 %v2140
    %v2240 = vpop.f32.mrb[0].mxu0
    %v2241 = vadd.f32 0.0, %v2240
    %v2242 = vpop.f32.mrb[0].mxu0
    %v2243 = vadd.f32 0.0, %v2242
    %2244 = vmatprep.mubr.f32.mxu0 %v2155
    %2245 = vmatmul.mubr.f32.gmra.mrb[0].mxu0 %v2144
    %v2246 = vpop.f32.mrb[0].mxu0
    %v2247 = vadd.f32 0.0, %v2246
    %v2248 = vpop.f32.mrb[0].mxu0
    %v2249 = vadd.f32 0.0, %v2248
    %2250 = vmatprep.mubr.f32.mxu0 %v2157
    %2251 = vmatmul.mubr.f32.gmra.mrb[0].mxu0 %v2143
    %v2252 = vpop.f32.mrb[0].mxu0
    %v2253 = vadd.f32 0.0, %v2252
    %v2254 = vpop.f32.mrb[0].mxu0
    %v2255 = vadd.f32 0.0, %v2254
    %2256 = vdwg.mxu0
    %2257 = vmatprep.subr.mxu0 0.0
    %2258 = vmatpush1.msra.mxu0 %v2075
    %2259 = vmatprep.subr.mxu0 0.0
    %2260 = vmatpush1.msra.mxu0 %v2078
    %2261 = vmatprep.subr.mxu0 0.0
    %2262 = vmatpush1.msra.mxu0 %v2081
    %2263 = vmatprep.subr.mxu0 0.0
    %2264 = vmatpush1.msra.mxu0 %v2084
    %2265 = vmatprep.subr.mxu0 0.0
    %2266 = vmatpush1.msra.mxu0 %v2087
    %2267 = vmatprep.subr.mxu0 0.0
    %2268 = vmatpush1.msra.mxu0 %v2090
    %2269 = vmatprep.subr.mxu0 0.0
    %2270 = vmatpush1.msra.mxu0 %v2093
    %2271 = vmatprep.subr.mxu0 0.0
    %2272 = vmatpush1.msra.mxu0 %v2096
    %2273 = vmatprep.subr.mxu0 0.0
    %2274 = vmatpush1.msra.mxu0 %v2099
    %2275 = vmatprep.subr.mxu0 0.0
    %2276 = vmatpush1.msra.mxu0 %v2102
    %2277 = vmatprep.subr.mxu0 0.0
    %2278 = vmatpush1.msra.mxu0 %v2105
    %2279 = vmatprep.subr.mxu0 0.0
    %2280 = vmatpush1.msra.mxu0 %v2108
    %2281 = vmatprep.subr.mxu0 0.0
    %2282 = vmatpush1.msra.mxu0 %v2111
    %2283 = vmatprep.subr.mxu0 0.0
    %2284 = vmatpush1.msra.mxu0 %v2114
    %2285 = vmatprep.subr.mxu0 0.0
    %2286 = vmatpush1.msra.mxu0 %v2117
    %2287 = vmatprep.subr.mxu0 0.0
    %2288 = vmatpush1.msra.mxu0 %v2120
    %2289 = vmatprep.subr.mxu0 0.0
    %2290 = vmatpush1.msra.mxu0 %v2166
    %2291 = vmatprep.subr.mxu0 0.0
    %2292 = vmatpush1.msra.mxu0 0.0
    %2293 = vmatprep.subr.mxu0 0.0
    %2294 = vmatpush1.msra.mxu0 0.0
    %2295 = vmatprep.subr.mxu0 0.0
    %2296 = vmatpush1.msra.mxu0 0.0
    %2297 = vmatprep.subr.mxu0 0.0
    %2298 = vmatpush1.msra.mxu0 0.0
    %2299 = vmatprep.subr.mxu0 0.0
    %2300 = vmatpush1.msra.mxu0 0.0
    %2301 = vmatprep.subr.mxu0 0.0
    %2302 = vmatpush1.msra.mxu0 0.0
    %2303 = vmatprep.subr.mxu0 0.0
    %2304 = vmatpush1.msra.mxu0 0.0
    %2305 = vmatprep.subr.mxu0 0.0
    %2306 = vmatpush1.msra.mxu0 0.0
    %2307 = vmatprep.subr.mxu0 0.0
    %2308 = vmatpush1.msra.mxu0 0.0
    %2309 = vmatprep.subr.mxu0 0.0
    %2310 = vmatpush1.msra.mxu0 0.0
    %2311 = vmatprep.subr.mxu0 0.0
    %2312 = vmatpush1.msra.mxu0 0.0
    %2313 = vmatprep.subr.mxu0 0.0
    %2314 = vmatpush1.msra.mxu0 0.0
    %2315 = vmatprep.subr.mxu0 0.0
    %2316 = vmatpush1.msra.mxu0 0.0
    %2317 = vmatprep.subr.mxu0 0.0
    %2318 = vmatpush1.msra.mxu0 0.0
    %2319 = vmatprep.subr.mxu0 0.0
    %2320 = vmatpush1.msra.mxu0 0.0
    %2321 = vmatprep.mubr.f32.mxu0 %v2151
    %2322 = vmatmul.mubr.f32.gmra.mrb[0].mxu0 %v2135
    %v2323 = vpop.f32.mrb[0].mxu0
    %v2324 = vadd.f32 0.0, %v2323
    %v2325 = vpop.f32.mrb[0].mxu0
    %2326 = vmatprep.mubr.f32.mxu0 %v2153
    %2327 = vmatmul.mubr.f32.gmra.mrb[0].mxu0 %v2140
    %v2328 = vpop.f32.mrb[0].mxu0
    %v2329 = vadd.f32 0.0, %v2328
    %v2330 = vpop.f32.mrb[0].mxu0
    %2331 = vmatprep.mubr.f32.mxu0 %v2155
    %2332 = vmatmul.mubr.f32.gmra.mrb[0].mxu0 %v2144
    %v2333 = vpop.f32.mrb[0].mxu0
    %v2334 = vadd.f32 0.0, %v2333
    %v2335 = vpop.f32.mrb[0].mxu0
    %2336 = vmatprep.mubr.f32.mxu0 %v2157
    %2337 = vmatmul.mubr.f32.gmra.mrb[0].mxu0 %v2143
    %v2338 = vpop.f32.mrb[0].mxu0
    %v2339 = vadd.f32 0.0, %v2338
    %v2340 = vpop.f32.mrb[0].mxu0
    %2341 = vdwg.mxu0
    %v2343 = vsel %vm2000, %v2010, 0
    %v2345 = vsel %vm2000, %v2012, 0
    %v2347 = vsel %vm2000, %v2014, 0
    %v2350 = vsel %vm2000, %v2016, 0
    %v2353 = vsel %vm1895, %v2065, 0
    %v2356 = vsel %vm1895, %v2066, 0
    %v2359 = vsel %vm1895, %v2067, 0
    %2361 = vmatprep.subr.mxu0 %v2018
    %2362 = vmatpush1.msra.mxu0 %v2017
    %2363 = vmatprep.subr.mxu0 %v2021
    %2364 = vmatpush1.msra.mxu0 %v2020
    %2365 = vmatprep.subr.mxu0 %v2024
    %2366 = vmatpush1.msra.mxu0 %v2023
    %2367 = vmatprep.subr.mxu0 %v2027
    %2368 = vmatpush1.msra.mxu0 %v2026
    %2369 = vmatprep.subr.mxu0 %v2030
    %2370 = vmatpush1.msra.mxu0 %v2029
    %2371 = vmatprep.subr.mxu0 %v2033
    %2372 = vmatpush1.msra.mxu0 %v2032
    %2373 = vmatprep.subr.mxu0 %v2036
    %2374 = vmatpush1.msra.mxu0 %v2035
    %2375 = vmatprep.subr.mxu0 %v2039
    %2376 = vmatpush1.msra.mxu0 %v2038
    %2377 = vmatprep.subr.mxu0 %v2042
    %2378 = vmatpush1.msra.mxu0 %v2041
    %2379 = vmatprep.subr.mxu0 %v2045
    %2380 = vmatpush1.msra.mxu0 %v2044
    %2381 = vmatprep.subr.mxu0 %v2048
    %2382 = vmatpush1.msra.mxu0 %v2047
    %2383 = vmatprep.subr.mxu0 %v2051
    %2384 = vmatpush1.msra.mxu0 %v2050
    %2385 = vmatprep.subr.mxu0 %v2054
    %2386 = vmatpush1.msra.mxu0 %v2053
    %2387 = vmatprep.subr.mxu0 %v2057
    %2388 = vmatpush1.msra.mxu0 %v2056
    %2389 = vmatprep.subr.mxu0 %v2060
    %2390 = vmatpush1.msra.mxu0 %v2059
    %2391 = vmatprep.subr.mxu0 %v2063
    %2392 = vmatpush1.msra.mxu0 %v2062
    %2393 = vmatprep.subr.mxu0 %v2356
    %2394 = vmatpush1.msra.mxu0 %v2353
    %2395 = vmatprep.subr.mxu0 0.0
    %2396 = vmatpush1.msra.mxu0 0.0
    %2397 = vmatprep.subr.mxu0 0.0
    %2398 = vmatpush1.msra.mxu0 0.0
    %2399 = vmatprep.subr.mxu0 0.0
    %2400 = vmatpush1.msra.mxu0 0.0
    %2401 = vmatprep.subr.mxu0 0.0
    %2402 = vmatpush1.msra.mxu0 0.0
    %2403 = vmatprep.subr.mxu0 0.0
    %2404 = vmatpush1.msra.mxu0 0.0
    %2405 = vmatprep.subr.mxu0 0.0
    %2406 = vmatpush1.msra.mxu0 0.0
    %2407 = vmatprep.subr.mxu0 0.0
    %2408 = vmatpush1.msra.mxu0 0.0
    %2409 = vmatprep.subr.mxu0 0.0
    %2410 = vmatpush1.msra.mxu0 0.0
    %2411 = vmatprep.subr.mxu0 0.0
    %2412 = vmatpush1.msra.mxu0 0.0
    %2413 = vmatprep.subr.mxu0 0.0
    %2414 = vmatpush1.msra.mxu0 0.0
    %2415 = vmatprep.subr.mxu0 0.0
    %2416 = vmatpush1.msra.mxu0 0.0
    %2417 = vmatprep.subr.mxu0 0.0
    %2418 = vmatpush1.msra.mxu0 0.0
    %2419 = vmatprep.subr.mxu0 0.0
    %2420 = vmatpush1.msra.mxu0 0.0
    %2421 = vmatprep.subr.mxu0 0.0
    %2422 = vmatpush1.msra.mxu0 0.0
    %2423 = vmatprep.subr.mxu0 0.0
    %2424 = vmatpush1.msra.mxu0 0.0
    %2425 = vmatprep.mubr.f32.mxu0 %v2343
    %2426 = vmatmul.mubr.f32.gmra.mrb[0].mxu0 %v2009
    %v2427 = vpop.f32.mrb[0].mxu0
    %v2428 = vadd.f32 %v2235, %v2427
    %v2429 = vpop.f32.mrb[0].mxu0
    %v2430 = vadd.f32 %v2237, %v2429
    %2431 = vmatprep.mubr.f32.mxu0 %v2345
    %2432 = vmatmul.mubr.f32.gmra.mrb[0].mxu0 %v2011
    %v2433 = vpop.f32.mrb[0].mxu0
    %v2434 = vadd.f32 %v2241, %v2433
    %v2435 = vpop.f32.mrb[0].mxu0
    %v2436 = vadd.f32 %v2243, %v2435
    %2437 = vmatprep.mubr.f32.mxu0 %v2347
    %2438 = vmatmul.mubr.f32.gmra.mrb[0].mxu0 %v2013
    %v2439 = vpop.f32.mrb[0].mxu0
    %v2440 = vadd.f32 %v2247, %v2439
    %v2441 = vpop.f32.mrb[0].mxu0
    %v2442 = vadd.f32 %v2249, %v2441
    %2443 = vmatprep.mubr.f32.mxu0 %v2350
    %2444 = vmatmul.mubr.f32.gmra.mrb[0].mxu0 %v2015
    %v2445 = vpop.f32.mrb[0].mxu0
    %v2446 = vadd.f32 %v2253, %v2445
    %v2447 = vpop.f32.mrb[0].mxu0
    %v2448 = vadd.f32 %v2255, %v2447
    %2449 = vdwg.mxu0
    %2450 = vmatprep.subr.mxu0 0.0
    %2451 = vmatpush1.msra.mxu0 %v2019
    %2452 = vmatprep.subr.mxu0 0.0
    %2453 = vmatpush1.msra.mxu0 %v2022
    %2454 = vmatprep.subr.mxu0 0.0
    %2455 = vmatpush1.msra.mxu0 %v2025
    %2456 = vmatprep.subr.mxu0 0.0
    %2457 = vmatpush1.msra.mxu0 %v2028
    %2458 = vmatprep.subr.mxu0 0.0
    %2459 = vmatpush1.msra.mxu0 %v2031
    %2460 = vmatprep.subr.mxu0 0.0
    %2461 = vmatpush1.msra.mxu0 %v2034
    %2462 = vmatprep.subr.mxu0 0.0
    %2463 = vmatpush1.msra.mxu0 %v2037
    %2464 = vmatprep.subr.mxu0 0.0
    %2465 = vmatpush1.msra.mxu0 %v2040
    %2466 = vmatprep.subr.mxu0 0.0
    %2467 = vmatpush1.msra.mxu0 %v2043
    %2468 = vmatprep.subr.mxu0 0.0
    %2469 = vmatpush1.msra.mxu0 %v2046
    %2470 = vmatprep.subr.mxu0 0.0
    %2471 = vmatpush1.msra.mxu0 %v2049
    %2472 = vmatprep.subr.mxu0 0.0
    %2473 = vmatpush1.msra.mxu0 %v2052
    %2474 = vmatprep.subr.mxu0 0.0
    %2475 = vmatpush1.msra.mxu0 %v2055
    %2476 = vmatprep.subr.mxu0 0.0
    %2477 = vmatpush1.msra.mxu0 %v2058
    %2478 = vmatprep.subr.mxu0 0.0
    %2479 = vmatpush1.msra.mxu0 %v2061
    %2480 = vmatprep.subr.mxu0 0.0
    %2481 = vmatpush1.msra.mxu0 %v2064
    %2482 = vmatprep.subr.mxu0 0.0
    %2483 = vmatpush1.msra.mxu0 %v2359
    %2484 = vmatprep.subr.mxu0 0.0
    %2485 = vmatpush1.msra.mxu0 0.0
    %2486 = vmatprep.subr.mxu0 0.0
    %2487 = vmatpush1.msra.mxu0 0.0
    %2488 = vmatprep.subr.mxu0 0.0
    %2489 = vmatpush1.msra.mxu0 0.0
    %2490 = vmatprep.subr.mxu0 0.0
    %2491 = vmatpush1.msra.mxu0 0.0
    %2492 = vmatprep.subr.mxu0 0.0
    %2493 = vmatpush1.msra.mxu0 0.0
    %2494 = vmatprep.subr.mxu0 0.0
    %2495 = vmatpush1.msra.mxu0 0.0
    %2496 = vmatprep.subr.mxu0 0.0
    %2497 = vmatpush1.msra.mxu0 0.0
    %2498 = vmatprep.subr.mxu0 0.0
    %2499 = vmatpush1.msra.mxu0 0.0
    %2500 = vmatprep.subr.mxu0 0.0
    %2501 = vmatpush1.msra.mxu0 0.0
    %2502 = vmatprep.subr.mxu0 0.0
    %2503 = vmatpush1.msra.mxu0 0.0
    %2504 = vmatprep.subr.mxu0 0.0
    %2505 = vmatpush1.msra.mxu0 0.0
    %2506 = vmatprep.subr.mxu0 0.0
    %2507 = vmatpush1.msra.mxu0 0.0
    %2508 = vmatprep.subr.mxu0 0.0
    %2509 = vmatpush1.msra.mxu0 0.0
    %2510 = vmatprep.subr.mxu0 0.0
    %2511 = vmatpush1.msra.mxu0 0.0
    %2512 = vmatprep.subr.mxu0 0.0
    %2513 = vmatpush1.msra.mxu0 0.0
    %2514 = vmatprep.mubr.f32.mxu0 %v2343
    %2515 = vmatmul.mubr.f32.gmra.mrb[0].mxu0 %v2009
    %v2516 = vpop.f32.mrb[0].mxu0
    %v2517 = vadd.f32 %v2324, %v2516
    %v2518 = vpop.f32.mrb[0].mxu0
    %2519 = vmatprep.mubr.f32.mxu0 %v2345
    %2520 = vmatmul.mubr.f32.gmra.mrb[0].mxu0 %v2011
    %v2521 = vpop.f32.mrb[0].mxu0
    %v2522 = vadd.f32 %v2329, %v2521
    %v2523 = vpop.f32.mrb[0].mxu0
    %2524 = vmatprep.mubr.f32.mxu0 %v2347
    %2525 = vmatmul.mubr.f32.gmra.mrb[0].mxu0 %v2013
    %v2526 = vpop.f32.mrb[0].mxu0
    %v2527 = vadd.f32 %v2334, %v2526
    %v2528 = vpop.f32.mrb[0].mxu0
    %2529 = vmatprep.mubr.f32.mxu0 %v2350
    %2530 = vmatmul.mubr.f32.gmra.mrb[0].mxu0 %v2015
    %v2531 = vpop.f32.mrb[0].mxu0
    %v2532 = vadd.f32 %v2339, %v2531
    %v2533 = vpop.f32.mrb[0].mxu0
    %2534 = vdwg.mxu0
    %v2535 = vld [vmem:[#allocation2] sm:$0xfc]
    %v2536 = vld [vmem:[#allocation2 + $0x8] sm:$0xfc]
    %v2537 = vld [vmem:[#allocation2 + $0x30] sm:$0xf]
    %v2538 = vld [vmem:[#allocation2 + $0x38] sm:$0xf]
    %s2539 = scalar_lea.vmem %s5, 816
    %v2540 = vld [vmem:[%s2539] sm:$0xff]
    %v2541 = vld [vmem:[%s2539 + $0x8] sm:$0xff]
    %v2542 = vld [vmem:[%s2539 + $0x10] sm:$0xff]
    %v2543 = vld [vmem:[%s2539 + $0x18] sm:$0xff]
    %v2544 = vld [vmem:[%s2539 + $0x20] sm:$0xff]
    %v2545 = vld [vmem:[%s2539 + $0x28] sm:$0xff]
    %v2546 = vld [vmem:[%s2539 + $0x30] sm:$0xff]
    %v2547 = vld [vmem:[%s2539 + $0x38] sm:$0xff]
    %v2548 = vld [vmem:[%s2539 + $0x40] sm:$0xff]
    %v2549 = vld [vmem:[%s2539 + $0x48] sm:$0xff]
    %v2550 = vld [vmem:[%s2539 + $0x50] sm:$0xff]
    %v2551 = vld [vmem:[%s2539 + $0x58] sm:$0xff]
    %v2552 = vld [vmem:[%s2539 + $0x60] sm:$0xff]
    %v2553 = vld [vmem:[%s2539 + $0x68] sm:$0xff]
    %v2554 = vld [vmem:[%s2539 + $0x70] sm:$0xff]
    %v2555 = vld [vmem:[%s2539 + $0x78] sm:$0xff]
    %v2556 = vld [vmem:[%s2539 + $0x80] sm:$0xff]
    %v2557 = vld [vmem:[%s2539 + $0x88] sm:$0xff]
    %v2558 = vld [vmem:[%s2539 + $0x90] sm:$0xff]
    %v2559 = vld [vmem:[%s2539 + $0x98] sm:$0xff]
    %v2560 = vld [vmem:[%s2539 + $0xa0] sm:$0xff]
    %v2561 = vld [vmem:[%s2539 + $0xa8] sm:$0xff]
    %v2562 = vld [vmem:[%s2539 + $0xb0] sm:$0xff]
    %v2563 = vld [vmem:[%s2539 + $0xb8] sm:$0xff]
    %v2564 = vld [vmem:[%s2539 + $0xc0] sm:$0xff]
    %v2565 = vld [vmem:[%s2539 + $0xc8] sm:$0xff]
    %v2566 = vld [vmem:[%s2539 + $0xd0] sm:$0xff]
    %v2567 = vld [vmem:[%s2539 + $0xd8] sm:$0xff]
    %v2568 = vld [vmem:[%s2539 + $0xe0] sm:$0xff]
    %v2569 = vld [vmem:[%s2539 + $0xe8] sm:$0xff]
    %v2570 = vld [vmem:[%s2539 + $0xf0] sm:$0xff]
    %v2571 = vld [vmem:[%s2539 + $0xf8] sm:$0xff]
    %v2572 = vld [vmem:[%s2539 + $0x100] sm:$0xff]
    %v2573 = vld [vmem:[%s2539 + $0x108] sm:$0xff]
    %v2574 = vld [vmem:[%s2539 + $0x110] sm:$0xff]
    %v2575 = vld [vmem:[%s2539 + $0x118] sm:$0xff]
    %v2576 = vld [vmem:[%s2539 + $0x120] sm:$0xff]
    %v2577 = vld [vmem:[%s2539 + $0x128] sm:$0xff]
    %v2578 = vld [vmem:[%s2539 + $0x130] sm:$0xff]
    %v2579 = vld [vmem:[%s2539 + $0x138] sm:$0xff]
    %v2580 = vld [vmem:[%s2539 + $0x140] sm:$0xff]
    %v2581 = vld [vmem:[%s2539 + $0x148] sm:$0xff]
    %v2582 = vld [vmem:[%s2539 + $0x150] sm:$0xff]
    %v2583 = vld [vmem:[%s2539 + $0x158] sm:$0xff]
    %v2584 = vld [vmem:[%s2539 + $0x160] sm:$0xff]
    %v2585 = vld [vmem:[%s2539 + $0x168] sm:$0xff]
    %v2586 = vld [vmem:[%s2539 + $0x170] sm:$0xff]
    %v2587 = vld [vmem:[%s2539 + $0x178] sm:$0xff]
    %v2588 = vld [vmem:[%s2539 + $0x180] sm:$0xf]
    %v2589 = vld [vmem:[%s2539 + $0x188] sm:$0xf]
    %v2590 = vld [vmem:[%s2539 + $0x190] sm:$0xf]
    %vm2595 = vcmask 1045504
    %v2596 = vrot.slane %v2535, 2
    %v2597 = vrot.slane %v2011, 2
    %v2598 = vsel %vm2595, %v2596, %v2597
    %v2599 = vrot.slane %v2536, 2
    %v2600 = vrot.slane %v2012, 2
    %v2601 = vsel %vm2595, %v2599, %v2600
    %v2602 = vrot.slane %v2013, 2
    %v2603 = vsel %vm2595, %v2597, %v2602
    %v2604 = vrot.slane %v2014, 2
    %v2605 = vsel %vm2595, %v2600, %v2604
    %v2606 = vrot.slane %v2537, 2
    %v2607 = vsel %vm2595, %v2602, %v2606
    %v2608 = vrot.slane %v2538, 2
    %v2609 = vsel %vm2595, %v2604, %v2608
    %v2614 = vsel %vm2000, %v2601, 0
    %v2616 = vsel %vm2000, %v2605, 0
    %v2618 = vsel %vm2000, %v2609, 0
    %v2620 = vsel %vm2000, %v2608, 0
    %v2623 = vsel %vm1895, %v2588, 0
    %v2626 = vsel %vm1895, %v2589, 0
    %v2629 = vsel %vm1895, %v2590, 0
    %2631 = vmatprep.subr.mxu0 %v2541
    %2632 = vmatpush1.msra.mxu0 %v2540
    %2633 = vmatprep.subr.mxu0 %v2544
    %2634 = vmatpush1.msra.mxu0 %v2543
    %2635 = vmatprep.subr.mxu0 %v2547
    %2636 = vmatpush1.msra.mxu0 %v2546
    %2637 = vmatprep.subr.mxu0 %v2550
    %2638 = vmatpush1.msra.mxu0 %v2549
    %2639 = vmatprep.subr.mxu0 %v2553
    %2640 = vmatpush1.msra.mxu0 %v2552
    %2641 = vmatprep.subr.mxu0 %v2556
    %2642 = vmatpush1.msra.mxu0 %v2555
    %2643 = vmatprep.subr.mxu0 %v2559
    %2644 = vmatpush1.msra.mxu0 %v2558
    %2645 = vmatprep.subr.mxu0 %v2562
    %2646 = vmatpush1.msra.mxu0 %v2561
    %2647 = vmatprep.subr.mxu0 %v2565
    %2648 = vmatpush1.msra.mxu0 %v2564
    %2649 = vmatprep.subr.mxu0 %v2568
    %2650 = vmatpush1.msra.mxu0 %v2567
    %2651 = vmatprep.subr.mxu0 %v2571
    %2652 = vmatpush1.msra.mxu0 %v2570
    %2653 = vmatprep.subr.mxu0 %v2574
    %2654 = vmatpush1.msra.mxu0 %v2573
    %2655 = vmatprep.subr.mxu0 %v2577
    %2656 = vmatpush1.msra.mxu0 %v2576
    %2657 = vmatprep.subr.mxu0 %v2580
    %2658 = vmatpush1.msra.mxu0 %v2579
    %2659 = vmatprep.subr.mxu0 %v2583
    %2660 = vmatpush1.msra.mxu0 %v2582
    %2661 = vmatprep.subr.mxu0 %v2586
    %2662 = vmatpush1.msra.mxu0 %v2585
    %2663 = vmatprep.subr.mxu0 %v2626
    %2664 = vmatpush1.msra.mxu0 %v2623
    %2665 = vmatprep.subr.mxu0 0.0
    %2666 = vmatpush1.msra.mxu0 0.0
    %2667 = vmatprep.subr.mxu0 0.0
    %2668 = vmatpush1.msra.mxu0 0.0
    %2669 = vmatprep.subr.mxu0 0.0
    %2670 = vmatpush1.msra.mxu0 0.0
    %2671 = vmatprep.subr.mxu0 0.0
    %2672 = vmatpush1.msra.mxu0 0.0
    %2673 = vmatprep.subr.mxu0 0.0
    %2674 = vmatpush1.msra.mxu0 0.0
    %2675 = vmatprep.subr.mxu0 0.0
    %2676 = vmatpush1.msra.mxu0 0.0
    %2677 = vmatprep.subr.mxu0 0.0
    %2678 = vmatpush1.msra.mxu0 0.0
    %2679 = vmatprep.subr.mxu0 0.0
    %2680 = vmatpush1.msra.mxu0 0.0
    %2681 = vmatprep.subr.mxu0 0.0
    %2682 = vmatpush1.msra.mxu0 0.0
    %2683 = vmatprep.subr.mxu0 0.0
    %2684 = vmatpush1.msra.mxu0 0.0
    %2685 = vmatprep.subr.mxu0 0.0
    %2686 = vmatpush1.msra.mxu0 0.0
    %2687 = vmatprep.subr.mxu0 0.0
    %2688 = vmatpush1.msra.mxu0 0.0
    %2689 = vmatprep.subr.mxu0 0.0
    %2690 = vmatpush1.msra.mxu0 0.0
    %2691 = vmatprep.subr.mxu0 0.0
    %2692 = vmatpush1.msra.mxu0 0.0
    %2693 = vmatprep.subr.mxu0 0.0
    %2694 = vmatpush1.msra.mxu0 0.0
    %2695 = vmatprep.mubr.f32.mxu0 %v2614
    %2696 = vmatmul.mubr.f32.gmra.mrb[0].mxu0 %v2598
    %v2697 = vpop.f32.mrb[0].mxu0
    %v2698 = vadd.f32 0.0, %v2697
    %v2699 = vpop.f32.mrb[0].mxu0
    %v2700 = vadd.f32 0.0, %v2699
    %2701 = vmatprep.mubr.f32.mxu0 %v2616
    %2702 = vmatmul.mubr.f32.gmra.mrb[0].mxu0 %v2603
    %v2703 = vpop.f32.mrb[0].mxu0
    %v2704 = vadd.f32 0.0, %v2703
    %v2705 = vpop.f32.mrb[0].mxu0
    %v2706 = vadd.f32 0.0, %v2705
    %2707 = vmatprep.mubr.f32.mxu0 %v2618
    %2708 = vmatmul.mubr.f32.gmra.mrb[0].mxu0 %v2607
    %v2709 = vpop.f32.mrb[0].mxu0
    %v2710 = vadd.f32 0.0, %v2709
    %v2711 = vpop.f32.mrb[0].mxu0
    %v2712 = vadd.f32 0.0, %v2711
    %2713 = vmatprep.mubr.f32.mxu0 %v2620
    %2714 = vmatmul.mubr.f32.gmra.mrb[0].mxu0 %v2606
    %v2715 = vpop.f32.mrb[0].mxu0
    %v2716 = vadd.f32 0.0, %v2715
    %v2717 = vpop.f32.mrb[0].mxu0
    %v2718 = vadd.f32 0.0, %v2717
    %2719 = vdwg.mxu0
    %2720 = vmatprep.subr.mxu0 0.0
    %2721 = vmatpush1.msra.mxu0 %v2542
    %2722 = vmatprep.subr.mxu0 0.0
    %2723 = vmatpush1.msra.mxu0 %v2545
    %2724 = vmatprep.subr.mxu0 0.0
    %2725 = vmatpush1.msra.mxu0 %v2548
    %2726 = vmatprep.subr.mxu0 0.0
    %2727 = vmatpush1.msra.mxu0 %v2551
    %2728 = vmatprep.subr.mxu0 0.0
    %2729 = vmatpush1.msra.mxu0 %v2554
    %2730 = vmatprep.subr.mxu0 0.0
    %2731 = vmatpush1.msra.mxu0 %v2557
    %2732 = vmatprep.subr.mxu0 0.0
    %2733 = vmatpush1.msra.mxu0 %v2560
    %2734 = vmatprep.subr.mxu0 0.0
    %2735 = vmatpush1.msra.mxu0 %v2563
    %2736 = vmatprep.subr.mxu0 0.0
    %2737 = vmatpush1.msra.mxu0 %v2566
    %2738 = vmatprep.subr.mxu0 0.0
    %2739 = vmatpush1.msra.mxu0 %v2569
    %2740 = vmatprep.subr.mxu0 0.0
    %2741 = vmatpush1.msra.mxu0 %v2572
    %2742 = vmatprep.subr.mxu0 0.0
    %2743 = vmatpush1.msra.mxu0 %v2575
    %2744 = vmatprep.subr.mxu0 0.0
    %2745 = vmatpush1.msra.mxu0 %v2578
    %2746 = vmatprep.subr.mxu0 0.0
    %2747 = vmatpush1.msra.mxu0 %v2581
    %2748 = vmatprep.subr.mxu0 0.0
    %2749 = vmatpush1.msra.mxu0 %v2584
    %2750 = vmatprep.subr.mxu0 0.0
    %2751 = vmatpush1.msra.mxu0 %v2587
    %2752 = vmatprep.subr.mxu0 0.0
    %2753 = vmatpush1.msra.mxu0 %v2629
    %2754 = vmatprep.subr.mxu0 0.0
    %2755 = vmatpush1.msra.mxu0 0.0
    %2756 = vmatprep.subr.mxu0 0.0
    %2757 = vmatpush1.msra.mxu0 0.0
    %2758 = vmatprep.subr.mxu0 0.0
    %2759 = vmatpush1.msra.mxu0 0.0
    %2760 = vmatprep.subr.mxu0 0.0
    %2761 = vmatpush1.msra.mxu0 0.0
    %2762 = vmatprep.subr.mxu0 0.0
    %2763 = vmatpush1.msra.mxu0 0.0
    %2764 = vmatprep.subr.mxu0 0.0
    %2765 = vmatpush1.msra.mxu0 0.0
    %2766 = vmatprep.subr.mxu0 0.0
    %2767 = vmatpush1.msra.mxu0 0.0
    %2768 = vmatprep.subr.mxu0 0.0
    %2769 = vmatpush1.msra.mxu0 0.0
    %2770 = vmatprep.subr.mxu0 0.0
    %2771 = vmatpush1.msra.mxu0 0.0
    %2772 = vmatprep.subr.mxu0 0.0
    %2773 = vmatpush1.msra.mxu0 0.0
    %2774 = vmatprep.subr.mxu0 0.0
    %2775 = vmatpush1.msra.mxu0 0.0
    %2776 = vmatprep.subr.mxu0 0.0
    %2777 = vmatpush1.msra.mxu0 0.0
    %2778 = vmatprep.subr.mxu0 0.0
    %2779 = vmatpush1.msra.mxu0 0.0
    %2780 = vmatprep.subr.mxu0 0.0
    %2781 = vmatpush1.msra.mxu0 0.0
    %2782 = vmatprep.subr.mxu0 0.0
    %2783 = vmatpush1.msra.mxu0 0.0
    %2784 = vmatprep.mubr.f32.mxu0 %v2614
    %2785 = vmatmul.mubr.f32.gmra.mrb[0].mxu0 %v2598
    %v2786 = vpop.f32.mrb[0].mxu0
    %v2787 = vadd.f32 0.0, %v2786
    %v2788 = vpop.f32.mrb[0].mxu0
    %2789 = vmatprep.mubr.f32.mxu0 %v2616
    %2790 = vmatmul.mubr.f32.gmra.mrb[0].mxu0 %v2603
    %v2791 = vpop.f32.mrb[0].mxu0
    %v2792 = vadd.f32 0.0, %v2791
    %v2793 = vpop.f32.mrb[0].mxu0
    %2794 = vmatprep.mubr.f32.mxu0 %v2618
    %2795 = vmatmul.mubr.f32.gmra.mrb[0].mxu0 %v2607
    %v2796 = vpop.f32.mrb[0].mxu0
    %v2797 = vadd.f32 0.0, %v2796
    %v2798 = vpop.f32.mrb[0].mxu0
    %2799 = vmatprep.mubr.f32.mxu0 %v2620
    %2800 = vmatmul.mubr.f32.gmra.mrb[0].mxu0 %v2606
    %v2801 = vpop.f32.mrb[0].mxu0
    %v2802 = vadd.f32 0.0, %v2801
    %v2803 = vpop.f32.mrb[0].mxu0
    %2804 = vdwg.mxu0
    %v2805 = vadd.f32 %v2428, %v2698
    %v2806 = vadd.f32 %v2430, %v2700
    %v2807 = vadd.f32 %v2517, %v2787
    %v2808 = vadd.f32 %v2434, %v2704
    %v2809 = vadd.f32 %v2436, %v2706
    %v2810 = vadd.f32 %v2522, %v2792
    %v2811 = vadd.f32 %v2440, %v2710
    %v2812 = vadd.f32 %v2442, %v2712
    %v2813 = vadd.f32 %v2527, %v2797
    %v2814 = vadd.f32 %v2446, %v2716
    %v2815 = vadd.f32 %v2448, %v2718
    %v2816 = vadd.f32 %v2532, %v2802
    %v2817 = vld [vmem:[#allocation2] sm:$0xf8]
    %v2818 = vld [vmem:[#allocation2 + $0x8] sm:$0xf8]
    %v2819 = vld [vmem:[#allocation2 + $0x30] sm:$0x1f]
    %v2820 = vld [vmem:[#allocation2 + $0x38] sm:$0x1f]
    %s2821 = scalar_lea.vmem %s5, 1224
    %v2822 = vld [vmem:[%s2821] sm:$0xff]
    %v2823 = vld [vmem:[%s2821 + $0x8] sm:$0xff]
    %v2824 = vld [vmem:[%s2821 + $0x10] sm:$0xff]
    %v2825 = vld [vmem:[%s2821 + $0x18] sm:$0xff]
    %v2826 = vld [vmem:[%s2821 + $0x20] sm:$0xff]
    %v2827 = vld [vmem:[%s2821 + $0x28] sm:$0xff]
    %v2828 = vld [vmem:[%s2821 + $0x30] sm:$0xff]
    %v2829 = vld [vmem:[%s2821 + $0x38] sm:$0xff]
    %v2830 = vld [vmem:[%s2821 + $0x40] sm:$0xff]
    %v2831 = vld [vmem:[%s2821 + $0x48] sm:$0xff]
    %v2832 = vld [vmem:[%s2821 + $0x50] sm:$0xff]
    %v2833 = vld [vmem:[%s2821 + $0x58] sm:$0xff]
    %v2834 = vld [vmem:[%s2821 + $0x60] sm:$0xff]
    %v2835 = vld [vmem:[%s2821 + $0x68] sm:$0xff]
    %v2836 = vld [vmem:[%s2821 + $0x70] sm:$0xff]
    %v2837 = vld [vmem:[%s2821 + $0x78] sm:$0xff]
    %v2838 = vld [vmem:[%s2821 + $0x80] sm:$0xff]
    %v2839 = vld [vmem:[%s2821 + $0x88] sm:$0xff]
    %v2840 = vld [vmem:[%s2821 + $0x90] sm:$0xff]
    %v2841 = vld [vmem:[%s2821 + $0x98] sm:$0xff]
    %v2842 = vld [vmem:[%s2821 + $0xa0] sm:$0xff]
    %v2843 = vld [vmem:[%s2821 + $0xa8] sm:$0xff]
    %v2844 = vld [vmem:[%s2821 + $0xb0] sm:$0xff]
    %v2845 = vld [vmem:[%s2821 + $0xb8] sm:$0xff]
    %v2846 = vld [vmem:[%s2821 + $0xc0] sm:$0xff]
    %v2847 = vld [vmem:[%s2821 + $0xc8] sm:$0xff]
    %v2848 = vld [vmem:[%s2821 + $0xd0] sm:$0xff]
    %v2849 = vld [vmem:[%s2821 + $0xd8] sm:$0xff]
    %v2850 = vld [vmem:[%s2821 + $0xe0] sm:$0xff]
    %v2851 = vld [vmem:[%s2821 + $0xe8] sm:$0xff]
    %v2852 = vld [vmem:[%s2821 + $0xf0] sm:$0xff]
    %v2853 = vld [vmem:[%s2821 + $0xf8] sm:$0xff]
    %v2854 = vld [vmem:[%s2821 + $0x100] sm:$0xff]
    %v2855 = vld [vmem:[%s2821 + $0x108] sm:$0xff]
    %v2856 = vld [vmem:[%s2821 + $0x110] sm:$0xff]
    %v2857 = vld [vmem:[%s2821 + $0x118] sm:$0xff]
    %v2858 = vld [vmem:[%s2821 + $0x120] sm:$0xff]
    %v2859 = vld [vmem:[%s2821 + $0x128] sm:$0xff]
    %v2860 = vld [vmem:[%s2821 + $0x130] sm:$0xff]
    %v2861 = vld [vmem:[%s2821 + $0x138] sm:$0xff]
    %v2862 = vld [vmem:[%s2821 + $0x140] sm:$0xff]
    %v2863 = vld [vmem:[%s2821 + $0x148] sm:$0xff]
    %v2864 = vld [vmem:[%s2821 + $0x150] sm:$0xff]
    %v2865 = vld [vmem:[%s2821 + $0x158] sm:$0xff]
    %v2866 = vld [vmem:[%s2821 + $0x160] sm:$0xff]
    %v2867 = vld [vmem:[%s2821 + $0x168] sm:$0xff]
    %v2868 = vld [vmem:[%s2821 + $0x170] sm:$0xff]
    %v2869 = vld [vmem:[%s2821 + $0x178] sm:$0xff]
    %v2870 = vld [vmem:[%s2821 + $0x180] sm:$0xf]
    %v2871 = vld [vmem:[%s2821 + $0x188] sm:$0xf]
    %v2872 = vld [vmem:[%s2821 + $0x190] sm:$0xf]
    %vm2877 = vcmask 1044480
    %v2878 = vrot.slane %v2817, 3
    %v2879 = vrot.slane %v2011, 3
    %v2880 = vsel %vm2877, %v2878, %v2879
    %v2881 = vrot.slane %v2818, 3
    %v2882 = vrot.slane %v2012, 3
    %v2883 = vsel %vm2877, %v2881, %v2882
    %v2884 = vrot.slane %v2013, 3
    %v2885 = vsel %vm2877, %v2879, %v2884
    %v2886 = vrot.slane %v2014, 3
    %v2887 = vsel %vm2877, %v2882, %v2886
    %v2888 = vrot.slane %v2819, 3
    %v2889 = vsel %vm2877, %v2884, %v2888
    %v2890 = vrot.slane %v2820, 3
    %v2891 = vsel %vm2877, %v2886, %v2890
    %v2896 = vsel %vm2000, %v2883, 0
    %v2898 = vsel %vm2000, %v2887, 0
    %v2900 = vsel %vm2000, %v2891, 0
    %v2902 = vsel %vm2000, %v2890, 0
    %v2905 = vsel %vm1895, %v2870, 0
    %v2908 = vsel %vm1895, %v2871, 0
    %v2911 = vsel %vm1895, %v2872, 0
    %2913 = vmatprep.subr.mxu0 %v2823
    %2914 = vmatpush1.msra.mxu0 %v2822
    %2915 = vmatprep.subr.mxu0 %v2826
    %2916 = vmatpush1.msra.mxu0 %v2825
    %2917 = vmatprep.subr.mxu0 %v2829
    %2918 = vmatpush1.msra.mxu0 %v2828
    %2919 = vmatprep.subr.mxu0 %v2832
    %2920 = vmatpush1.msra.mxu0 %v2831
    %2921 = vmatprep.subr.mxu0 %v2835
    %2922 = vmatpush1.msra.mxu0 %v2834
    %2923 = vmatprep.subr.mxu0 %v2838
    %2924 = vmatpush1.msra.mxu0 %v2837
    %2925 = vmatprep.subr.mxu0 %v2841
    %2926 = vmatpush1.msra.mxu0 %v2840
    %2927 = vmatprep.subr.mxu0 %v2844
    %2928 = vmatpush1.msra.mxu0 %v2843
    %2929 = vmatprep.subr.mxu0 %v2847
    %2930 = vmatpush1.msra.mxu0 %v2846
    %2931 = vmatprep.subr.mxu0 %v2850
    %2932 = vmatpush1.msra.mxu0 %v2849
    %2933 = vmatprep.subr.mxu0 %v2853
    %2934 = vmatpush1.msra.mxu0 %v2852
    %2935 = vmatprep.subr.mxu0 %v2856
    %2936 = vmatpush1.msra.mxu0 %v2855
    %2937 = vmatprep.subr.mxu0 %v2859
    %2938 = vmatpush1.msra.mxu0 %v2858
    %2939 = vmatprep.subr.mxu0 %v2862
    %2940 = vmatpush1.msra.mxu0 %v2861
    %2941 = vmatprep.subr.mxu0 %v2865
    %2942 = vmatpush1.msra.mxu0 %v2864
    %2943 = vmatprep.subr.mxu0 %v2868
    %2944 = vmatpush1.msra.mxu0 %v2867
    %2945 = vmatprep.subr.mxu0 %v2908
    %2946 = vmatpush1.msra.mxu0 %v2905
    %2947 = vmatprep.subr.mxu0 0.0
    %2948 = vmatpush1.msra.mxu0 0.0
    %2949 = vmatprep.subr.mxu0 0.0
    %2950 = vmatpush1.msra.mxu0 0.0
    %2951 = vmatprep.subr.mxu0 0.0
    %2952 = vmatpush1.msra.mxu0 0.0
    %2953 = vmatprep.subr.mxu0 0.0
    %2954 = vmatpush1.msra.mxu0 0.0
    %2955 = vmatprep.subr.mxu0 0.0
    %2956 = vmatpush1.msra.mxu0 0.0
    %2957 = vmatprep.subr.mxu0 0.0
    %2958 = vmatpush1.msra.mxu0 0.0
    %2959 = vmatprep.subr.mxu0 0.0
    %2960 = vmatpush1.msra.mxu0 0.0
    %2961 = vmatprep.subr.mxu0 0.0
    %2962 = vmatpush1.msra.mxu0 0.0
    %2963 = vmatprep.subr.mxu0 0.0
    %2964 = vmatpush1.msra.mxu0 0.0
    %2965 = vmatprep.subr.mxu0 0.0
    %2966 = vmatpush1.msra.mxu0 0.0
    %2967 = vmatprep.subr.mxu0 0.0
    %2968 = vmatpush1.msra.mxu0 0.0
    %2969 = vmatprep.subr.mxu0 0.0
    %2970 = vmatpush1.msra.mxu0 0.0
    %2971 = vmatprep.subr.mxu0 0.0
    %2972 = vmatpush1.msra.mxu0 0.0
    %2973 = vmatprep.subr.mxu0 0.0
    %2974 = vmatpush1.msra.mxu0 0.0
    %2975 = vmatprep.subr.mxu0 0.0
    %2976 = vmatpush1.msra.mxu0 0.0
    %2977 = vmatprep.mubr.f32.mxu0 %v2896
    %2978 = vmatmul.mubr.f32.gmra.mrb[0].mxu0 %v2880
    %v2979 = vpop.f32.mrb[0].mxu0
    %v2980 = vadd.f32 0.0, %v2979
    %v2981 = vpop.f32.mrb[0].mxu0
    %v2982 = vadd.f32 0.0, %v2981
    %2983 = vmatprep.mubr.f32.mxu0 %v2898
    %2984 = vmatmul.mubr.f32.gmra.mrb[0].mxu0 %v2885
    %v2985 = vpop.f32.mrb[0].mxu0
    %v2986 = vadd.f32 0.0, %v2985
    %v2987 = vpop.f32.mrb[0].mxu0
    %v2988 = vadd.f32 0.0, %v2987
    %2989 = vmatprep.mubr.f32.mxu0 %v2900
    %2990 = vmatmul.mubr.f32.gmra.mrb[0].mxu0 %v2889
    %v2991 = vpop.f32.mrb[0].mxu0
    %v2992 = vadd.f32 0.0, %v2991
    %v2993 = vpop.f32.mrb[0].mxu0
    %v2994 = vadd.f32 0.0, %v2993
    %2995 = vmatprep.mubr.f32.mxu0 %v2902
    %2996 = vmatmul.mubr.f32.gmra.mrb[0].mxu0 %v2888
    %v2997 = vpop.f32.mrb[0].mxu0
    %v2998 = vadd.f32 0.0, %v2997
    %v2999 = vpop.f32.mrb[0].mxu0
    %v3000 = vadd.f32 0.0, %v2999
    %3001 = vdwg.mxu0
    %3002 = vmatprep.subr.mxu0 0.0
    %3003 = vmatpush1.msra.mxu0 %v2824
    %3004 = vmatprep.subr.mxu0 0.0
    %3005 = vmatpush1.msra.mxu0 %v2827
    %3006 = vmatprep.subr.mxu0 0.0
    %3007 = vmatpush1.msra.mxu0 %v2830
    %3008 = vmatprep.subr.mxu0 0.0
    %3009 = vmatpush1.msra.mxu0 %v2833
    %3010 = vmatprep.subr.mxu0 0.0
    %3011 = vmatpush1.msra.mxu0 %v2836
    %3012 = vmatprep.subr.mxu0 0.0
    %3013 = vmatpush1.msra.mxu0 %v2839
    %3014 = vmatprep.subr.mxu0 0.0
    %3015 = vmatpush1.msra.mxu0 %v2842
    %3016 = vmatprep.subr.mxu0 0.0
    %3017 = vmatpush1.msra.mxu0 %v2845
    %3018 = vmatprep.subr.mxu0 0.0
    %3019 = vmatpush1.msra.mxu0 %v2848
    %3020 = vmatprep.subr.mxu0 0.0
    %3021 = vmatpush1.msra.mxu0 %v2851
    %3022 = vmatprep.subr.mxu0 0.0
    %3023 = vmatpush1.msra.mxu0 %v2854
    %3024 = vmatprep.subr.mxu0 0.0
    %3025 = vmatpush1.msra.mxu0 %v2857
    %3026 = vmatprep.subr.mxu0 0.0
    %3027 = vmatpush1.msra.mxu0 %v2860
    %3028 = vmatprep.subr.mxu0 0.0
    %3029 = vmatpush1.msra.mxu0 %v2863
    %3030 = vmatprep.subr.mxu0 0.0
    %3031 = vmatpush1.msra.mxu0 %v2866
    %3032 = vmatprep.subr.mxu0 0.0
    %3033 = vmatpush1.msra.mxu0 %v2869
    %3034 = vmatprep.subr.mxu0 0.0
    %3035 = vmatpush1.msra.mxu0 %v2911
    %3036 = vmatprep.subr.mxu0 0.0
    %3037 = vmatpush1.msra.mxu0 0.0
    %3038 = vmatprep.subr.mxu0 0.0
    %3039 = vmatpush1.msra.mxu0 0.0
    %3040 = vmatprep.subr.mxu0 0.0
    %3041 = vmatpush1.msra.mxu0 0.0
    %3042 = vmatprep.subr.mxu0 0.0
    %3043 = vmatpush1.msra.mxu0 0.0
    %3044 = vmatprep.subr.mxu0 0.0
    %3045 = vmatpush1.msra.mxu0 0.0
    %3046 = vmatprep.subr.mxu0 0.0
    %3047 = vmatpush1.msra.mxu0 0.0
    %3048 = vmatprep.subr.mxu0 0.0
    %3049 = vmatpush1.msra.mxu0 0.0
    %3050 = vmatprep.subr.mxu0 0.0
    %3051 = vmatpush1.msra.mxu0 0.0
    %3052 = vmatprep.subr.mxu0 0.0
    %3053 = vmatpush1.msra.mxu0 0.0
    %3054 = vmatprep.subr.mxu0 0.0
    %3055 = vmatpush1.msra.mxu0 0.0
    %3056 = vmatprep.subr.mxu0 0.0
    %3057 = vmatpush1.msra.mxu0 0.0
    %3058 = vmatprep.subr.mxu0 0.0
    %3059 = vmatpush1.msra.mxu0 0.0
    %3060 = vmatprep.subr.mxu0 0.0
    %3061 = vmatpush1.msra.mxu0 0.0
    %3062 = vmatprep.subr.mxu0 0.0
    %3063 = vmatpush1.msra.mxu0 0.0
    %3064 = vmatprep.subr.mxu0 0.0
    %3065 = vmatpush1.msra.mxu0 0.0
    %3066 = vmatprep.mubr.f32.mxu0 %v2896
    %3067 = vmatmul.mubr.f32.gmra.mrb[0].mxu0 %v2880
    %v3068 = vpop.f32.mrb[0].mxu0
    %v3069 = vadd.f32 0.0, %v3068
    %v3070 = vpop.f32.mrb[0].mxu0
    %3071 = vmatprep.mubr.f32.mxu0 %v2898
    %3072 = vmatmul.mubr.f32.gmra.mrb[0].mxu0 %v2885
    %v3073 = vpop.f32.mrb[0].mxu0
    %v3074 = vadd.f32 0.0, %v3073
    %v3075 = vpop.f32.mrb[0].mxu0
    %3076 = vmatprep.mubr.f32.mxu0 %v2900
    %3077 = vmatmul.mubr.f32.gmra.mrb[0].mxu0 %v2889
    %v3078 = vpop.f32.mrb[0].mxu0
    %v3079 = vadd.f32 0.0, %v3078
    %v3080 = vpop.f32.mrb[0].mxu0
    %3081 = vmatprep.mubr.f32.mxu0 %v2902
    %3082 = vmatmul.mubr.f32.gmra.mrb[0].mxu0 %v2888
    %v3083 = vpop.f32.mrb[0].mxu0
    %v3084 = vadd.f32 0.0, %v3083
    %v3085 = vpop.f32.mrb[0].mxu0
    %3086 = vdwg.mxu0
    %v3087 = vadd.f32 %v2805, %v2980
    %v3088 = vadd.f32 %v2806, %v2982
    %v3089 = vadd.f32 %v2807, %v3069
    %v3090 = vadd.f32 %v2808, %v2986
    %v3091 = vadd.f32 %v2809, %v2988
    %v3092 = vadd.f32 %v2810, %v3074
    %v3093 = vadd.f32 %v2811, %v2992
    %v3094 = vadd.f32 %v2812, %v2994
    %v3095 = vadd.f32 %v2813, %v3079
    %v3096 = vadd.f32 %v2814, %v2998
    %v3097 = vadd.f32 %v2815, %v3000
    %v3098 = vadd.f32 %v2816, %v3084
    %v3099 = vld [vmem:[#allocation2] sm:$0xf0]
    %v3100 = vld [vmem:[#allocation2 + $0x8] sm:$0xf0]
    %v3101 = vld [vmem:[#allocation2 + $0x30] sm:$0x3f]
    %v3102 = vld [vmem:[#allocation2 + $0x38] sm:$0x3f]
    %s3103 = scalar_lea.vmem %s5, 1632
    %v3104 = vld [vmem:[%s3103] sm:$0xff]
    %v3105 = vld [vmem:[%s3103 + $0x8] sm:$0xff]
    %v3106 = vld [vmem:[%s3103 + $0x10] sm:$0xff]
    %v3107 = vld [vmem:[%s3103 + $0x18] sm:$0xff]
    %v3108 = vld [vmem:[%s3103 + $0x20] sm:$0xff]
    %v3109 = vld [vmem:[%s3103 + $0x28] sm:$0xff]
    %v3110 = vld [vmem:[%s3103 + $0x30] sm:$0xff]
    %v3111 = vld [vmem:[%s3103 + $0x38] sm:$0xff]
    %v3112 = vld [vmem:[%s3103 + $0x40] sm:$0xff]
    %v3113 = vld [vmem:[%s3103 + $0x48] sm:$0xff]
    %v3114 = vld [vmem:[%s3103 + $0x50] sm:$0xff]
    %v3115 = vld [vmem:[%s3103 + $0x58] sm:$0xff]
    %v3116 = vld [vmem:[%s3103 + $0x60] sm:$0xff]
    %v3117 = vld [vmem:[%s3103 + $0x68] sm:$0xff]
    %v3118 = vld [vmem:[%s3103 + $0x70] sm:$0xff]
    %v3119 = vld [vmem:[%s3103 + $0x78] sm:$0xff]
    %v3120 = vld [vmem:[%s3103 + $0x80] sm:$0xff]
    %v3121 = vld [vmem:[%s3103 + $0x88] sm:$0xff]
    %v3122 = vld [vmem:[%s3103 + $0x90] sm:$0xff]
    %v3123 = vld [vmem:[%s3103 + $0x98] sm:$0xff]
    %v3124 = vld [vmem:[%s3103 + $0xa0] sm:$0xff]
    %v3125 = vld [vmem:[%s3103 + $0xa8] sm:$0xff]
    %v3126 = vld [vmem:[%s3103 + $0xb0] sm:$0xff]
    %v3127 = vld [vmem:[%s3103 + $0xb8] sm:$0xff]
    %v3128 = vld [vmem:[%s3103 + $0xc0] sm:$0xff]
    %v3129 = vld [vmem:[%s3103 + $0xc8] sm:$0xff]
    %v3130 = vld [vmem:[%s3103 + $0xd0] sm:$0xff]
    %v3131 = vld [vmem:[%s3103 + $0xd8] sm:$0xff]
    %v3132 = vld [vmem:[%s3103 + $0xe0] sm:$0xff]
    %v3133 = vld [vmem:[%s3103 + $0xe8] sm:$0xff]
    %v3134 = vld [vmem:[%s3103 + $0xf0] sm:$0xff]
    %v3135 = vld [vmem:[%s3103 + $0xf8] sm:$0xff]
    %v3136 = vld [vmem:[%s3103 + $0x100] sm:$0xff]
    %v3137 = vld [vmem:[%s3103 + $0x108] sm:$0xff]
    %v3138 = vld [vmem:[%s3103 + $0x110] sm:$0xff]
    %v3139 = vld [vmem:[%s3103 + $0x118] sm:$0xff]
    %v3140 = vld [vmem:[%s3103 + $0x120] sm:$0xff]
    %v3141 = vld [vmem:[%s3103 + $0x128] sm:$0xff]
    %v3142 = vld [vmem:[%s3103 + $0x130] sm:$0xff]
    %v3143 = vld [vmem:[%s3103 + $0x138] sm:$0xff]
    %v3144 = vld [vmem:[%s3103 + $0x140] sm:$0xff]
    %v3145 = vld [vmem:[%s3103 + $0x148] sm:$0xff]
    %v3146 = vld [vmem:[%s3103 + $0x150] sm:$0xff]
    %v3147 = vld [vmem:[%s3103 + $0x158] sm:$0xff]
    %v3148 = vld [vmem:[%s3103 + $0x160] sm:$0xff]
    %v3149 = vld [vmem:[%s3103 + $0x168] sm:$0xff]
    %v3150 = vld [vmem:[%s3103 + $0x170] sm:$0xff]
    %v3151 = vld [vmem:[%s3103 + $0x178] sm:$0xff]
    %v3152 = vld [vmem:[%s3103 + $0x180] sm:$0xf]
    %v3153 = vld [vmem:[%s3103 + $0x188] sm:$0xf]
    %v3154 = vld [vmem:[%s3103 + $0x190] sm:$0xf]
    %v3159 = vrot.slane %v3099, 4
    %v3160 = vrot.slane %v2011, 4
    %v3161 = vsel %vm1895, %v3159, %v3160
    %v3162 = vrot.slane %v3100, 4
    %v3163 = vrot.slane %v2012, 4
    %v3164 = vsel %vm1895, %v3162, %v3163
    %v3165 = vrot.slane %v2013, 4
    %v3166 = vsel %vm1895, %v3160, %v3165
    %v3167 = vrot.slane %v2014, 4
    %v3168 = vsel %vm1895, %v3163, %v3167
    %v3169 = vrot.slane %v3101, 4
    %v3170 = vsel %vm1895, %v3165, %v3169
    %v3171 = vrot.slane %v3102, 4
    %v3172 = vsel %vm1895, %v3167, %v3171
    %v3177 = vsel %vm2000, %v3164, 0
    %v3179 = vsel %vm2000, %v3168, 0
    %v3181 = vsel %vm2000, %v3172, 0
    %v3183 = vsel %vm2000, %v3171, 0
    %v3186 = vsel %vm1895, %v3152, 0
    %v3189 = vsel %vm1895, %v3153, 0
    %v3192 = vsel %vm1895, %v3154, 0
    %3194 = vmatprep.subr.mxu0 %v3105
    %3195 = vmatpush1.msra.mxu0 %v3104
    %3196 = vmatprep.subr.mxu0 %v3108
    %3197 = vmatpush1.msra.mxu0 %v3107
    %3198 = vmatprep.subr.mxu0 %v3111
    %3199 = vmatpush1.msra.mxu0 %v3110
    %3200 = vmatprep.subr.mxu0 %v3114
    %3201 = vmatpush1.msra.mxu0 %v3113
    %3202 = vmatprep.subr.mxu0 %v3117
    %3203 = vmatpush1.msra.mxu0 %v3116
    %3204 = vmatprep.subr.mxu0 %v3120
    %3205 = vmatpush1.msra.mxu0 %v3119
    %3206 = vmatprep.subr.mxu0 %v3123
    %3207 = vmatpush1.msra.mxu0 %v3122
    %3208 = vmatprep.subr.mxu0 %v3126
    %3209 = vmatpush1.msra.mxu0 %v3125
    %3210 = vmatprep.subr.mxu0 %v3129
    %3211 = vmatpush1.msra.mxu0 %v3128
    %3212 = vmatprep.subr.mxu0 %v3132
    %3213 = vmatpush1.msra.mxu0 %v3131
    %3214 = vmatprep.subr.mxu0 %v3135
    %3215 = vmatpush1.msra.mxu0 %v3134
    %3216 = vmatprep.subr.mxu0 %v3138
    %3217 = vmatpush1.msra.mxu0 %v3137
    %3218 = vmatprep.subr.mxu0 %v3141
    %3219 = vmatpush1.msra.mxu0 %v3140
    %3220 = vmatprep.subr.mxu0 %v3144
    %3221 = vmatpush1.msra.mxu0 %v3143
    %3222 = vmatprep.subr.mxu0 %v3147
    %3223 = vmatpush1.msra.mxu0 %v3146
    %3224 = vmatprep.subr.mxu0 %v3150
    %3225 = vmatpush1.msra.mxu0 %v3149
    %3226 = vmatprep.subr.mxu0 %v3189
    %3227 = vmatpush1.msra.mxu0 %v3186
    %3228 = vmatprep.subr.mxu0 0.0
    %3229 = vmatpush1.msra.mxu0 0.0
    %3230 = vmatprep.subr.mxu0 0.0
    %3231 = vmatpush1.msra.mxu0 0.0
    %3232 = vmatprep.subr.mxu0 0.0
    %3233 = vmatpush1.msra.mxu0 0.0
    %3234 = vmatprep.subr.mxu0 0.0
    %3235 = vmatpush1.msra.mxu0 0.0
    %3236 = vmatprep.subr.mxu0 0.0
    %3237 = vmatpush1.msra.mxu0 0.0
    %3238 = vmatprep.subr.mxu0 0.0
    %3239 = vmatpush1.msra.mxu0 0.0
    %3240 = vmatprep.subr.mxu0 0.0
    %3241 = vmatpush1.msra.mxu0 0.0
    %3242 = vmatprep.subr.mxu0 0.0
    %3243 = vmatpush1.msra.mxu0 0.0
    %3244 = vmatprep.subr.mxu0 0.0
    %3245 = vmatpush1.msra.mxu0 0.0
    %3246 = vmatprep.subr.mxu0 0.0
    %3247 = vmatpush1.msra.mxu0 0.0
    %3248 = vmatprep.subr.mxu0 0.0
    %3249 = vmatpush1.msra.mxu0 0.0
    %3250 = vmatprep.subr.mxu0 0.0
    %3251 = vmatpush1.msra.mxu0 0.0
    %3252 = vmatprep.subr.mxu0 0.0
    %3253 = vmatpush1.msra.mxu0 0.0
    %3254 = vmatprep.subr.mxu0 0.0
    %3255 = vmatpush1.msra.mxu0 0.0
    %3256 = vmatprep.subr.mxu0 0.0
    %3257 = vmatpush1.msra.mxu0 0.0
    %3258 = vmatprep.mubr.f32.mxu0 %v3177
    %3259 = vmatmul.mubr.f32.gmra.mrb[0].mxu0 %v3161
    %v3260 = vpop.f32.mrb[0].mxu0
    %v3261 = vadd.f32 0.0, %v3260
    %v3262 = vpop.f32.mrb[0].mxu0
    %v3263 = vadd.f32 0.0, %v3262
    %3264 = vmatprep.mubr.f32.mxu0 %v3179
    %3265 = vmatmul.mubr.f32.gmra.mrb[0].mxu0 %v3166
    %v3266 = vpop.f32.mrb[0].mxu0
    %v3267 = vadd.f32 0.0, %v3266
    %v3268 = vpop.f32.mrb[0].mxu0
    %v3269 = vadd.f32 0.0, %v3268
    %3270 = vmatprep.mubr.f32.mxu0 %v3181
    %3271 = vmatmul.mubr.f32.gmra.mrb[0].mxu0 %v3170
    %v3272 = vpop.f32.mrb[0].mxu0
    %v3273 = vadd.f32 0.0, %v3272
    %v3274 = vpop.f32.mrb[0].mxu0
    %v3275 = vadd.f32 0.0, %v3274
    %3276 = vmatprep.mubr.f32.mxu0 %v3183
    %3277 = vmatmul.mubr.f32.gmra.mrb[0].mxu0 %v3169
    %v3278 = vpop.f32.mrb[0].mxu0
    %v3279 = vadd.f32 0.0, %v3278
    %v3280 = vpop.f32.mrb[0].mxu0
    %v3281 = vadd.f32 0.0, %v3280
    %3282 = vdwg.mxu0
    %3283 = vmatprep.subr.mxu0 0.0
    %3284 = vmatpush1.msra.mxu0 %v3106
    %3285 = vmatprep.subr.mxu0 0.0
    %3286 = vmatpush1.msra.mxu0 %v3109
    %3287 = vmatprep.subr.mxu0 0.0
    %3288 = vmatpush1.msra.mxu0 %v3112
    %3289 = vmatprep.subr.mxu0 0.0
    %3290 = vmatpush1.msra.mxu0 %v3115
    %3291 = vmatprep.subr.mxu0 0.0
    %3292 = vmatpush1.msra.mxu0 %v3118
    %3293 = vmatprep.subr.mxu0 0.0
    %3294 = vmatpush1.msra.mxu0 %v3121
    %3295 = vmatprep.subr.mxu0 0.0
    %3296 = vmatpush1.msra.mxu0 %v3124
    %3297 = vmatprep.subr.mxu0 0.0
    %3298 = vmatpush1.msra.mxu0 %v3127
    %3299 = vmatprep.subr.mxu0 0.0
    %3300 = vmatpush1.msra.mxu0 %v3130
    %3301 = vmatprep.subr.mxu0 0.0
    %3302 = vmatpush1.msra.mxu0 %v3133
    %3303 = vmatprep.subr.mxu0 0.0
    %3304 = vmatpush1.msra.mxu0 %v3136
    %3305 = vmatprep.subr.mxu0 0.0
    %3306 = vmatpush1.msra.mxu0 %v3139
    %3307 = vmatprep.subr.mxu0 0.0
    %3308 = vmatpush1.msra.mxu0 %v3142
    %3309 = vmatprep.subr.mxu0 0.0
    %3310 = vmatpush1.msra.mxu0 %v3145
    %3311 = vmatprep.subr.mxu0 0.0
    %3312 = vmatpush1.msra.mxu0 %v3148
    %3313 = vmatprep.subr.mxu0 0.0
    %3314 = vmatpush1.msra.mxu0 %v3151
    %3315 = vmatprep.subr.mxu0 0.0
    %3316 = vmatpush1.msra.mxu0 %v3192
    %3317 = vmatprep.subr.mxu0 0.0
    %3318 = vmatpush1.msra.mxu0 0.0
    %3319 = vmatprep.subr.mxu0 0.0
    %3320 = vmatpush1.msra.mxu0 0.0
    %3321 = vmatprep.subr.mxu0 0.0
    %3322 = vmatpush1.msra.mxu0 0.0
    %3323 = vmatprep.subr.mxu0 0.0
    %3324 = vmatpush1.msra.mxu0 0.0
    %3325 = vmatprep.subr.mxu0 0.0
    %3326 = vmatpush1.msra.mxu0 0.0
    %3327 = vmatprep.subr.mxu0 0.0
    %3328 = vmatpush1.msra.mxu0 0.0
    %3329 = vmatprep.subr.mxu0 0.0
    %3330 = vmatpush1.msra.mxu0 0.0
    %3331 = vmatprep.subr.mxu0 0.0
    %3332 = vmatpush1.msra.mxu0 0.0
    %3333 = vmatprep.subr.mxu0 0.0
    %3334 = vmatpush1.msra.mxu0 0.0
    %3335 = vmatprep.subr.mxu0 0.0
    %3336 = vmatpush1.msra.mxu0 0.0
    %3337 = vmatprep.subr.mxu0 0.0
    %3338 = vmatpush1.msra.mxu0 0.0
    %3339 = vmatprep.subr.mxu0 0.0
    %3340 = vmatpush1.msra.mxu0 0.0
    %3341 = vmatprep.subr.mxu0 0.0
    %3342 = vmatpush1.msra.mxu0 0.0
    %3343 = vmatprep.subr.mxu0 0.0
    %3344 = vmatpush1.msra.mxu0 0.0
    %3345 = vmatprep.subr.mxu0 0.0
    %3346 = vmatpush1.msra.mxu0 0.0
    %3347 = vmatprep.mubr.f32.mxu0 %v3177
    %3348 = vmatmul.mubr.f32.gmra.mrb[0].mxu0 %v3161
    %v3349 = vpop.f32.mrb[0].mxu0
    %v3350 = vadd.f32 0.0, %v3349
    %v3351 = vpop.f32.mrb[0].mxu0
    %3352 = vmatprep.mubr.f32.mxu0 %v3179
    %3353 = vmatmul.mubr.f32.gmra.mrb[0].mxu0 %v3166
    %v3354 = vpop.f32.mrb[0].mxu0
    %v3355 = vadd.f32 0.0, %v3354
    %v3356 = vpop.f32.mrb[0].mxu0
    %3357 = vmatprep.mubr.f32.mxu0 %v3181
    %3358 = vmatmul.mubr.f32.gmra.mrb[0].mxu0 %v3170
    %v3359 = vpop.f32.mrb[0].mxu0
    %v3360 = vadd.f32 0.0, %v3359
    %v3361 = vpop.f32.mrb[0].mxu0
    %3362 = vmatprep.mubr.f32.mxu0 %v3183
    %3363 = vmatmul.mubr.f32.gmra.mrb[0].mxu0 %v3169
    %v3364 = vpop.f32.mrb[0].mxu0
    %v3365 = vadd.f32 0.0, %v3364
    %v3366 = vpop.f32.mrb[0].mxu0
    %3367 = vdwg.mxu0
    %v3368 = vadd.f32 %v3087, %v3261
    %v3369 = vadd.f32 %v3088, %v3263
    %v3370 = vadd.f32 %v3089, %v3350
    %v3371 = vadd.f32 %v3090, %v3267
    %v3372 = vadd.f32 %v3091, %v3269
    %v3373 = vadd.f32 %v3092, %v3355
    %v3374 = vadd.f32 %v3093, %v3273
    %v3375 = vadd.f32 %v3094, %v3275
    %v3376 = vadd.f32 %v3095, %v3360
    %v3377 = vadd.f32 %v3096, %v3279
    %v3378 = vadd.f32 %v3097, %v3281
    %v3379 = vadd.f32 %v3098, %v3365
    %v3380 = vld [vmem:[%s6] sm:$0x7]
    %v3382 = vlaneseq
    %v3383 = vshrl.u32 %v3382, 7
    %v3384 = vsub.s32 0, %v3383
    %v3385 = vrot.slane %v3380, %v3384
    %v3386 = vlaneseq
    %v3387 = vshrl.u32 %v3386, 7
    %v3388 = vsub.s32 1, %v3387
    %v3389 = vrot.slane %v3380, %v3388
    %v3390 = vlaneseq
    %v3391 = vshrl.u32 %v3390, 7
    %v3392 = vsub.s32 2, %v3391
    %v3393 = vrot.slane %v3380, %v3392
    %v3397 = vadd.f32 %v3368, %v3385
    %v3398 = vadd.f32 %v3369, %v3389
    %v3399 = vadd.f32 %v3370, %v3393
    %v3400 = vadd.f32 %v3371, %v3385
    %v3401 = vadd.f32 %v3372, %v3389
    %v3402 = vadd.f32 %v3373, %v3393
    %v3403 = vadd.f32 %v3374, %v3385
    %v3404 = vadd.f32 %v3375, %v3389
    %v3405 = vadd.f32 %v3376, %v3393
    %v3406 = vadd.f32 %v3377, %v3385
    %v3407 = vadd.f32 %v3378, %v3389
    %v3408 = vadd.f32 %v3379, %v3393
    %v3409 = vtanh.pop %v3397
    %v3410 = vtanh.pop %v3398
    %v3411 = vtanh.pop %v3399
    %v3412 = vtanh.pop %v3400
    %v3413 = vtanh.pop %v3401
    %v3414 = vtanh.pop %v3402
    %v3415 = vtanh.pop %v3403
    %v3416 = vtanh.pop %v3404
    %v3417 = vtanh.pop %v3405
    %v3418 = vtanh.pop %v3406
    %v3419 = vtanh.pop %v3407
    %v3420 = vtanh.pop %v3408
    %v3421 = vld [vmem:[%s7] sm:$0xff]
    %v3422 = vld [vmem:[%s7 + $0x8] sm:$0x1f]
    %v3423 = vld [vmem:[%s8] sm:$0xff]
    %v3424 = vld [vmem:[%s8 + $0x8] sm:$0xff]
    %v3425 = vld [vmem:[%s8 + $0x10] sm:$0xff]
    %v3426 = vld [vmem:[%s8 + $0x18] sm:$0xff]
    %v3427 = vld [vmem:[%s8 + $0x20] sm:$0xff]
    %v3428 = vld [vmem:[%s8 + $0x28] sm:$0xff]
    %v3429 = vld [vmem:[%s8 + $0x30] sm:$0xff]
    %v3430 = vld [vmem:[%s8 + $0x38] sm:$0xff]
    %v3431 = vld [vmem:[%s8 + $0x40] sm:$0xff]
    %v3432 = vld [vmem:[%s8 + $0x48] sm:$0xff]
    %v3433 = vld [vmem:[%s8 + $0x50] sm:$0xff]
    %v3434 = vld [vmem:[%s8 + $0x58] sm:$0xff]
    %v3435 = vld [vmem:[%s8 + $0x60] sm:$0xff]
    %v3436 = vld [vmem:[%s8 + $0x68] sm:$0xff]
    %v3437 = vld [vmem:[%s8 + $0x70] sm:$0xff]
    %v3438 = vld [vmem:[%s8 + $0x78] sm:$0xff]
    %v3439 = vld [vmem:[%s8 + $0x80] sm:$0xff]
    %v3440 = vld [vmem:[%s8 + $0x88] sm:$0xff]
    %v3441 = vld [vmem:[%s8 + $0x90] sm:$0xff]
    %v3442 = vld [vmem:[%s8 + $0x98] sm:$0xff]
    %v3443 = vld [vmem:[%s8 + $0xa0] sm:$0xff]
    %v3444 = vld [vmem:[%s8 + $0xa8] sm:$0xff]
    %v3445 = vld [vmem:[%s8 + $0xb0] sm:$0xff]
    %v3446 = vld [vmem:[%s8 + $0xb8] sm:$0xff]
    %v3447 = vld [vmem:[%s8 + $0xc0] sm:$0xff]
    %v3448 = vld [vmem:[%s8 + $0xc8] sm:$0xff]
    %v3449 = vld [vmem:[%s8 + $0xd0] sm:$0xff]
    %v3450 = vld [vmem:[%s8 + $0xd8] sm:$0xff]
    %v3451 = vld [vmem:[%s8 + $0xe0] sm:$0xff]
    %v3452 = vld [vmem:[%s8 + $0xe8] sm:$0xff]
    %v3453 = vld [vmem:[%s8 + $0xf0] sm:$0xff]
    %v3454 = vld [vmem:[%s8 + $0xf8] sm:$0xff]
    %v3455 = vld [vmem:[%s8 + $0x100] sm:$0xff]
    %v3456 = vld [vmem:[%s8 + $0x108] sm:$0xff]
    %v3457 = vld [vmem:[%s8 + $0x110] sm:$0xff]
    %v3458 = vld [vmem:[%s8 + $0x118] sm:$0xff]
    %v3459 = vld [vmem:[%s8 + $0x120] sm:$0xff]
    %v3460 = vld [vmem:[%s8 + $0x128] sm:$0xff]
    %v3461 = vld [vmem:[%s8 + $0x130] sm:$0xff]
    %v3462 = vld [vmem:[%s8 + $0x138] sm:$0xff]
    %v3463 = vld [vmem:[%s8 + $0x140] sm:$0xff]
    %v3464 = vld [vmem:[%s8 + $0x148] sm:$0xff]
    %v3465 = vld [vmem:[%s8 + $0x150] sm:$0xff]
    %v3466 = vld [vmem:[%s8 + $0x158] sm:$0xff]
    %v3467 = vld [vmem:[%s8 + $0x160] sm:$0xff]
    %v3468 = vld [vmem:[%s8 + $0x168] sm:$0xff]
    %v3469 = vld [vmem:[%s8 + $0x170] sm:$0xff]
    %v3470 = vld [vmem:[%s8 + $0x178] sm:$0xff]
    %v3471 = vld [vmem:[%s8 + $0x180] sm:$0xff]
    %v3472 = vld [vmem:[%s8 + $0x188] sm:$0xff]
    %v3473 = vld [vmem:[%s8 + $0x190] sm:$0xff]
    %v3474 = vld [vmem:[%s8 + $0x198] sm:$0xff]
    %v3475 = vld [vmem:[%s8 + $0x1a0] sm:$0xff]
    %v3476 = vld [vmem:[%s8 + $0x1a8] sm:$0xff]
    %v3477 = vld [vmem:[%s8 + $0x1b0] sm:$0xff]
    %v3478 = vld [vmem:[%s8 + $0x1b8] sm:$0xff]
    %v3479 = vld [vmem:[%s8 + $0x1c0] sm:$0xff]
    %v3480 = vld [vmem:[%s8 + $0x1c8] sm:$0xff]
    %v3481 = vld [vmem:[%s8 + $0x1d0] sm:$0xff]
    %v3482 = vld [vmem:[%s8 + $0x1d8] sm:$0xff]
    %v3483 = vld [vmem:[%s8 + $0x1e0] sm:$0xff]
    %v3484 = vld [vmem:[%s8 + $0x1e8] sm:$0xff]
    %v3485 = vld [vmem:[%s8 + $0x1f0] sm:$0xff]
    %v3486 = vld [vmem:[%s8 + $0x1f8] sm:$0xff]
    %v3487 = vld [vmem:[%s8 + $0x200] sm:$0xff]
    %v3488 = vld [vmem:[%s8 + $0x208] sm:$0xff]
    %v3489 = vld [vmem:[%s8 + $0x210] sm:$0xff]
    %v3490 = vld [vmem:[%s8 + $0x218] sm:$0xff]
    %v3491 = vld [vmem:[%s8 + $0x220] sm:$0xff]
    %v3492 = vld [vmem:[%s8 + $0x228] sm:$0xff]
    %v3493 = vld [vmem:[%s8 + $0x230] sm:$0xff]
    %v3494 = vld [vmem:[%s8 + $0x238] sm:$0xff]
    %vm3495 = vcmask 261120
    %v3497 = vsel %vm3495, %v3411, 0
    %v3500 = vsel %vm3495, %v3414, 0
    %v3503 = vsel %vm3495, %v3417, 0
    %v3506 = vsel %vm3495, %v3420, 0
    %3508 = vmatprep.subr.mxu0 %v3424
    %3509 = vmatpush1.msra.mxu0 %v3423
    %3510 = vmatprep.subr.mxu0 %v3426
    %3511 = vmatpush1.msra.mxu0 %v3425
    %3512 = vmatprep.subr.mxu0 %v3428
    %3513 = vmatpush1.msra.mxu0 %v3427
    %3514 = vmatprep.subr.mxu0 %v3430
    %3515 = vmatpush1.msra.mxu0 %v3429
    %3516 = vmatprep.subr.mxu0 %v3432
    %3517 = vmatpush1.msra.mxu0 %v3431
    %3518 = vmatprep.subr.mxu0 %v3434
    %3519 = vmatpush1.msra.mxu0 %v3433
    %3520 = vmatprep.subr.mxu0 %v3436
    %3521 = vmatpush1.msra.mxu0 %v3435
    %3522 = vmatprep.subr.mxu0 %v3438
    %3523 = vmatpush1.msra.mxu0 %v3437
    %3524 = vmatprep.subr.mxu0 %v3440
    %3525 = vmatpush1.msra.mxu0 %v3439
    %3526 = vmatprep.subr.mxu0 %v3442
    %3527 = vmatpush1.msra.mxu0 %v3441
    %3528 = vmatprep.subr.mxu0 %v3444
    %3529 = vmatpush1.msra.mxu0 %v3443
    %3530 = vmatprep.subr.mxu0 %v3446
    %3531 = vmatpush1.msra.mxu0 %v3445
    %3532 = vmatprep.subr.mxu0 %v3448
    %3533 = vmatpush1.msra.mxu0 %v3447
    %3534 = vmatprep.subr.mxu0 %v3450
    %3535 = vmatpush1.msra.mxu0 %v3449
    %3536 = vmatprep.subr.mxu0 %v3452
    %3537 = vmatpush1.msra.mxu0 %v3451
    %3538 = vmatprep.subr.mxu0 %v3454
    %3539 = vmatpush1.msra.mxu0 %v3453
    %3540 = vmatprep.subr.mxu0 %v3456
    %3541 = vmatpush1.msra.mxu0 %v3455
    %3542 = vmatprep.subr.mxu0 %v3458
    %3543 = vmatpush1.msra.mxu0 %v3457
    %3544 = vmatprep.subr.mxu0 %v3460
    %3545 = vmatpush1.msra.mxu0 %v3459
    %3546 = vmatprep.subr.mxu0 %v3462
    %3547 = vmatpush1.msra.mxu0 %v3461
    %3548 = vmatprep.subr.mxu0 %v3464
    %3549 = vmatpush1.msra.mxu0 %v3463
    %3550 = vmatprep.subr.mxu0 %v3466
    %3551 = vmatpush1.msra.mxu0 %v3465
    %3552 = vmatprep.subr.mxu0 %v3468
    %3553 = vmatpush1.msra.mxu0 %v3467
    %3554 = vmatprep.subr.mxu0 %v3470
    %3555 = vmatpush1.msra.mxu0 %v3469
    %3556 = vmatprep.subr.mxu0 %v3472
    %3557 = vmatpush1.msra.mxu0 %v3471
    %3558 = vmatprep.subr.mxu0 %v3474
    %3559 = vmatpush1.msra.mxu0 %v3473
    %3560 = vmatprep.subr.mxu0 %v3476
    %3561 = vmatpush1.msra.mxu0 %v3475
    %3562 = vmatprep.subr.mxu0 %v3478
    %3563 = vmatpush1.msra.mxu0 %v3477
    %3564 = vmatprep.subr.mxu0 %v3480
    %3565 = vmatpush1.msra.mxu0 %v3479
    %3566 = vmatprep.subr.mxu0 %v3482
    %3567 = vmatpush1.msra.mxu0 %v3481
    %3568 = vmatprep.subr.mxu0 %v3484
    %3569 = vmatpush1.msra.mxu0 %v3483
    %3570 = vmatprep.subr.mxu0 %v3486
    %3571 = vmatpush1.msra.mxu0 %v3485
    %3572 = vmatprep.mubr.f32.mxu0 %v3410
    %3573 = vmatmul.mubr.f32.gmra.mrb[0].mxu0 %v3409
    %v3574 = vpop.f32.mrb[0].mxu0
    %v3575 = vadd.f32 0.0, %v3574
    %v3576 = vpop.f32.mrb[0].mxu0
    %v3577 = vadd.f32 0.0, %v3576
    %3578 = vmatprep.mubr.f32.mxu0 %v3413
    %3579 = vmatmul.mubr.f32.gmra.mrb[0].mxu0 %v3412
    %v3580 = vpop.f32.mrb[0].mxu0
    %v3581 = vadd.f32 0.0, %v3580
    %v3582 = vpop.f32.mrb[0].mxu0
    %v3583 = vadd.f32 0.0, %v3582
    %3584 = vmatprep.mubr.f32.mxu0 %v3416
    %3585 = vmatmul.mubr.f32.gmra.mrb[0].mxu0 %v3415
    %v3586 = vpop.f32.mrb[0].mxu0
    %v3587 = vadd.f32 0.0, %v3586
    %v3588 = vpop.f32.mrb[0].mxu0
    %v3589 = vadd.f32 0.0, %v3588
    %3590 = vmatprep.mubr.f32.mxu0 %v3419
    %3591 = vmatmul.mubr.f32.gmra.mrb[0].mxu0 %v3418
    %v3592 = vpop.f32.mrb[0].mxu0
    %v3593 = vadd.f32 0.0, %v3592
    %v3594 = vpop.f32.mrb[0].mxu0
    %v3595 = vadd.f32 0.0, %v3594
    %3596 = vdwg.mxu0
    %3597 = vmatprep.subr.mxu0 %v3488
    %3598 = vmatpush1.msra.mxu0 %v3487
    %3599 = vmatprep.subr.mxu0 %v3490
    %3600 = vmatpush1.msra.mxu0 %v3489
    %3601 = vmatprep.subr.mxu0 %v3492
    %3602 = vmatpush1.msra.mxu0 %v3491
    %3603 = vmatprep.subr.mxu0 %v3494
    %3604 = vmatpush1.msra.mxu0 %v3493
    %3605 = vmatprep.subr.mxu0 0.0
    %3606 = vmatpush1.msra.mxu0 0.0
    %3607 = vmatprep.subr.mxu0 0.0
    %3608 = vmatpush1.msra.mxu0 0.0
    %3609 = vmatprep.subr.mxu0 0.0
    %3610 = vmatpush1.msra.mxu0 0.0
    %3611 = vmatprep.subr.mxu0 0.0
    %3612 = vmatpush1.msra.mxu0 0.0
    %3613 = vmatprep.subr.mxu0 0.0
    %3614 = vmatpush1.msra.mxu0 0.0
    %3615 = vmatprep.subr.mxu0 0.0
    %3616 = vmatpush1.msra.mxu0 0.0
    %3617 = vmatprep.subr.mxu0 0.0
    %3618 = vmatpush1.msra.mxu0 0.0
    %3619 = vmatprep.subr.mxu0 0.0
    %3620 = vmatpush1.msra.mxu0 0.0
    %3621 = vmatprep.subr.mxu0 0.0
    %3622 = vmatpush1.msra.mxu0 0.0
    %3623 = vmatprep.subr.mxu0 0.0
    %3624 = vmatpush1.msra.mxu0 0.0
    %3625 = vmatprep.subr.mxu0 0.0
    %3626 = vmatpush1.msra.mxu0 0.0
    %3627 = vmatprep.subr.mxu0 0.0
    %3628 = vmatpush1.msra.mxu0 0.0
    %3629 = vmatprep.subr.mxu0 0.0
    %3630 = vmatpush1.msra.mxu0 0.0
    %3631 = vmatprep.subr.mxu0 0.0
    %3632 = vmatpush1.msra.mxu0 0.0
    %3633 = vmatprep.subr.mxu0 0.0
    %3634 = vmatpush1.msra.mxu0 0.0
    %3635 = vmatprep.subr.mxu0 0.0
    %3636 = vmatpush1.msra.mxu0 0.0
    %3637 = vmatprep.subr.mxu0 0.0
    %3638 = vmatpush1.msra.mxu0 0.0
    %3639 = vmatprep.subr.mxu0 0.0
    %3640 = vmatpush1.msra.mxu0 0.0
    %3641 = vmatprep.subr.mxu0 0.0
    %3642 = vmatpush1.msra.mxu0 0.0
    %3643 = vmatprep.subr.mxu0 0.0
    %3644 = vmatpush1.msra.mxu0 0.0
    %3645 = vmatprep.subr.mxu0 0.0
    %3646 = vmatpush1.msra.mxu0 0.0
    %3647 = vmatprep.subr.mxu0 0.0
    %3648 = vmatpush1.msra.mxu0 0.0
    %3649 = vmatprep.subr.mxu0 0.0
    %3650 = vmatpush1.msra.mxu0 0.0
    %3651 = vmatprep.subr.mxu0 0.0
    %3652 = vmatpush1.msra.mxu0 0.0
    %3653 = vmatprep.subr.mxu0 0.0
    %3654 = vmatpush1.msra.mxu0 0.0
    %3655 = vmatprep.subr.mxu0 0.0
    %3656 = vmatpush1.msra.mxu0 0.0
    %3657 = vmatprep.subr.mxu0 0.0
    %3658 = vmatpush1.msra.mxu0 0.0
    %3659 = vmatprep.subr.mxu0 0.0
    %3660 = vmatpush1.msra.mxu0 0.0
    %3661 = vmatprep.mubr.f32.mxu0 0.0
    %3662 = vmatmul.mubr.f32.gmra.mrb[0].mxu0 %v3497
    %v3663 = vpop.f32.mrb[0].mxu0
    %v3664 = vadd.f32 %v3575, %v3663
    %v3665 = vpop.f32.mrb[0].mxu0
    %v3666 = vadd.f32 %v3577, %v3665
    %3667 = vmatprep.mubr.f32.mxu0 0.0
    %3668 = vmatmul.mubr.f32.gmra.mrb[0].mxu0 %v3500
    %v3669 = vpop.f32.mrb[0].mxu0
    %v3670 = vadd.f32 %v3581, %v3669
    %v3671 = vpop.f32.mrb[0].mxu0
    %v3672 = vadd.f32 %v3583, %v3671
    %3673 = vmatprep.mubr.f32.mxu0 0.0
    %3674 = vmatmul.mubr.f32.gmra.mrb[0].mxu0 %v3503
    %v3675 = vpop.f32.mrb[0].mxu0
    %v3676 = vadd.f32 %v3587, %v3675
    %v3677 = vpop.f32.mrb[0].mxu0
    %v3678 = vadd.f32 %v3589, %v3677
    %3679 = vmatprep.mubr.f32.mxu0 0.0
    %3680 = vmatmul.mubr.f32.gmra.mrb[0].mxu0 %v3506
    %v3681 = vpop.f32.mrb[0].mxu0
    %v3682 = vadd.f32 %v3593, %v3681
    %v3683 = vpop.f32.mrb[0].mxu0
    %v3684 = vadd.f32 %v3595, %v3683
    %3685 = vdwg.mxu0
    %vm3686 = vcmask 211968
    %v3688 = vsel %vm3686, %v3421, 0
    %v3691 = vsel %vm3686, %v3422, 0
    %vm3693 = vcmask 1041408
    %v3695 = vsel %vm3693, %v3682, 0
    %v3698 = vsel %vm3693, %v3684, 0
    %3700 = vmatprep.subr.mxu0 %v3666
    %3701 = vmatpush1.msra.mxu0 %v3664
    %3702 = vmatprep.subr.mxu0 %v3672
    %3703 = vmatpush1.msra.mxu0 %v3670
    %3704 = vmatprep.subr.mxu0 %v3678
    %3705 = vmatpush1.msra.mxu0 %v3676
    %3706 = vmatprep.subr.mxu0 %v3698
    %3707 = vmatpush1.msra.mxu0 %v3695
    %3708 = vmatprep.subr.mxu0 0.0
    %3709 = vmatpush1.msra.mxu0 0.0
    %3710 = vmatprep.subr.mxu0 0.0
    %3711 = vmatpush1.msra.mxu0 0.0
    %3712 = vmatprep.subr.mxu0 0.0
    %3713 = vmatpush1.msra.mxu0 0.0
    %3714 = vmatprep.subr.mxu0 0.0
    %3715 = vmatpush1.msra.mxu0 0.0
    %3716 = vmatprep.subr.mxu0 0.0
    %3717 = vmatpush1.msra.mxu0 0.0
    %3718 = vmatprep.subr.mxu0 0.0
    %3719 = vmatpush1.msra.mxu0 0.0
    %3720 = vmatprep.subr.mxu0 0.0
    %3721 = vmatpush1.msra.mxu0 0.0
    %3722 = vmatprep.subr.mxu0 0.0
    %3723 = vmatpush1.msra.mxu0 0.0
    %3724 = vmatprep.subr.mxu0 0.0
    %3725 = vmatpush1.msra.mxu0 0.0
    %3726 = vmatprep.subr.mxu0 0.0
    %3727 = vmatpush1.msra.mxu0 0.0
    %3728 = vmatprep.subr.mxu0 0.0
    %3729 = vmatpush1.msra.mxu0 0.0
    %3730 = vmatprep.subr.mxu0 0.0
    %3731 = vmatpush1.msra.mxu0 0.0
    %3732 = vmatprep.subr.mxu0 0.0
    %3733 = vmatpush1.msra.mxu0 0.0
    %3734 = vmatprep.subr.mxu0 0.0
    %3735 = vmatpush1.msra.mxu0 0.0
    %3736 = vmatprep.subr.mxu0 0.0
    %3737 = vmatpush1.msra.mxu0 0.0
    %3738 = vmatprep.subr.mxu0 0.0
    %3739 = vmatpush1.msra.mxu0 0.0
    %3740 = vmatprep.subr.mxu0 0.0
    %3741 = vmatpush1.msra.mxu0 0.0
    %3742 = vmatprep.subr.mxu0 0.0
    %3743 = vmatpush1.msra.mxu0 0.0
    %3744 = vmatprep.subr.mxu0 0.0
    %3745 = vmatpush1.msra.mxu0 0.0
    %3746 = vmatprep.subr.mxu0 0.0
    %3747 = vmatpush1.msra.mxu0 0.0
    %3748 = vmatprep.subr.mxu0 0.0
    %3749 = vmatpush1.msra.mxu0 0.0
    %3750 = vmatprep.subr.mxu0 0.0
    %3751 = vmatpush1.msra.mxu0 0.0
    %3752 = vmatprep.subr.mxu0 0.0
    %3753 = vmatpush1.msra.mxu0 0.0
    %3754 = vmatprep.subr.mxu0 0.0
    %3755 = vmatpush1.msra.mxu0 0.0
    %3756 = vmatprep.subr.mxu0 0.0
    %3757 = vmatpush1.msra.mxu0 0.0
    %3758 = vmatprep.subr.mxu0 0.0
    %3759 = vmatpush1.msra.mxu0 0.0
    %3760 = vmatprep.subr.mxu0 0.0
    %3761 = vmatpush1.msra.mxu0 0.0
    %3762 = vmatprep.subr.mxu0 0.0
    %3763 = vmatpush1.msra.mxu0 0.0
    %3764 = vmatprep.mubr.f32.mxu0 0.0
    %3765 = vmatmul.mubr.f32.gmra.mrb[0].mxu0 %v3688
    %v3766 = vpop.f32.mrb[0].mxu0
    %v3767 = vadd.f32 0.0, %v3766
    %v3768 = vpop.f32.mrb[0].mxu0
    %v3769 = vadd.f32 0.0, %v3768
    %3770 = vmatprep.mubr.f32.mxu0 0.0
    %3771 = vmatmul.mubr.f32.gmra.mrb[0].mxu0 %v3691
    %v3772 = vpop.f32.mrb[0].mxu0
    %v3773 = vadd.f32 0.0, %v3772
    %v3774 = vpop.f32.mrb[0].mxu0
    %v3775 = vadd.f32 0.0, %v3774
    %3776 = vdwg.mxu0
    %v3777 = vmul.f32 %v3767, 0.25
    %v3778 = vmul.f32 %v3769, 0.25
    %v3779 = vmul.f32 %v3773, 0.25
    %v3780 = vmul.f32 %v3775, 0.25
    %s3781 = scalar_lea.vmem %s0, 64
    %v3782 = vld [vmem:[%s3781] sm:$0xff]
    %v3783 = vld [vmem:[%s3781 + $0x8] sm:$0xff]
    %v3784 = vld [vmem:[%s3781 + $0x10] sm:$0xff]
    %v3785 = vld [vmem:[%s3781 + $0x18] sm:$0xff]
    %v3786 = vld [vmem:[%s3781 + $0x20] sm:$0xff]
    %v3787 = vld [vmem:[%s3781 + $0x28] sm:$0xff]
    %v3788 = vld [vmem:[%s3781 + $0x30] sm:$0xff]
    %v3789 = vld [vmem:[%s3781 + $0x38] sm:$0xf]
    %v3790 = vld [vmem:[#allocation3] sm:$0xff]
    %v3791 = vld [vmem:[#allocation3 + $0x8] sm:$0xff]
    %v3792 = vld [vmem:[#allocation3 + $0x10] sm:$0xff]
    %v3793 = vld [vmem:[#allocation3 + $0x18] sm:$0xff]
    %v3794 = vld [vmem:[#allocation3 + $0x20] sm:$0xff]
    %v3795 = vld [vmem:[#allocation3 + $0x28] sm:$0xff]
    %v3796 = vld [vmem:[#allocation3 + $0x30] sm:$0xff]
    %v3797 = vld [vmem:[#allocation3 + $0x38] sm:$0xff]
    %v3798 = vld [vmem:[#allocation3 + $0x40] sm:$0xff]
    %v3799 = vld [vmem:[#allocation3 + $0x48] sm:$0xff]
    %v3800 = vld [vmem:[#allocation3 + $0x50] sm:$0xff]
    %v3801 = vld [vmem:[#allocation3 + $0x58] sm:$0xff]
    %v3802 = vld [vmem:[#allocation3 + $0x60] sm:$0xff]
    %v3803 = vld [vmem:[#allocation3 + $0x68] sm:$0xff]
    %v3804 = vld [vmem:[#allocation3 + $0x70] sm:$0xff]
    %v3805 = vld [vmem:[#allocation3 + $0x78] sm:$0xff]
    %v3806 = vld [vmem:[#allocation3 + $0x80] sm:$0xff]
    %v3807 = vld [vmem:[#allocation3 + $0x88] sm:$0xff]
    %v3808 = vld [vmem:[%s3781 + $0x1] sm:$0xff]
    %v3809 = vld [vmem:[%s3781 + $0x9] sm:$0xff]
    %v3810 = vld [vmem:[%s3781 + $0x11] sm:$0xff]
    %v3811 = vld [vmem:[%s3781 + $0x19] sm:$0xff]
    %v3812 = vld [vmem:[%s3781 + $0x21] sm:$0xff]
    %v3813 = vld [vmem:[%s3781 + $0x29] sm:$0xff]
    %v3814 = vld [vmem:[%s3781 + $0x31] sm:$0xff]
    %v3815 = vld [vmem:[%s3781 + $0x39] sm:$0xf]
    %v3816 = vld [vmem:[%s113] sm:$0xff]
    %v3817 = vld [vmem:[%s113 + $0x8] sm:$0xff]
    %v3818 = vld [vmem:[%s113 + $0x10] sm:$0xff]
    %v3819 = vld [vmem:[%s113 + $0x18] sm:$0xff]
    %v3820 = vld [vmem:[%s113 + $0x20] sm:$0xff]
    %v3821 = vld [vmem:[%s113 + $0x28] sm:$0xff]
    %v3822 = vld [vmem:[%s113 + $0x30] sm:$0xff]
    %v3823 = vld [vmem:[%s113 + $0x38] sm:$0xff]
    %v3824 = vld [vmem:[%s113 + $0x40] sm:$0xff]
    %v3825 = vld [vmem:[%s113 + $0x48] sm:$0xff]
    %v3826 = vld [vmem:[%s113 + $0x50] sm:$0xff]
    %v3827 = vld [vmem:[%s113 + $0x58] sm:$0xff]
    %v3828 = vld [vmem:[%s113 + $0x60] sm:$0xff]
    %v3829 = vld [vmem:[%s113 + $0x68] sm:$0xff]
    %v3830 = vld [vmem:[%s113 + $0x70] sm:$0xff]
    %v3831 = vld [vmem:[%s113 + $0x78] sm:$0xff]
    %v3832 = vld [vmem:[%s113 + $0x80] sm:$0xff]
    %v3833 = vld [vmem:[%s113 + $0x88] sm:$0xff]
    %v3835 = vsel %vm132, %v3808, 0
    %v3838 = vsel %vm132, %v3809, 0
    %v3841 = vsel %vm132, %v3810, 0
    %v3844 = vsel %vm132, %v3811, 0
    %v3847 = vsel %vm132, %v3812, 0
    %v3850 = vsel %vm132, %v3813, 0
    %v3853 = vsel %vm132, %v3814, 0
    %v3856 = vsel %vm132, %v3815, 0
    %3858 = vmatprep.subr.mxu0 %v3817
    %3859 = vmatpush1.msra.mxu0 %v3816
    %3860 = vmatprep.subr.mxu0 %v3820
    %3861 = vmatpush1.msra.mxu0 %v3819
    %3862 = vmatprep.subr.mxu0 %v3823
    %3863 = vmatpush1.msra.mxu0 %v3822
    %3864 = vmatprep.subr.mxu0 %v3826
    %3865 = vmatpush1.msra.mxu0 %v3825
    %3866 = vmatprep.subr.mxu0 %v3829
    %3867 = vmatpush1.msra.mxu0 %v3828
    %3868 = vmatprep.subr.mxu0 %v3832
    %3869 = vmatpush1.msra.mxu0 %v3831
    %3870 = vmatprep.subr.mxu0 0.0
    %3871 = vmatpush1.msra.mxu0 0.0
    %3872 = vmatprep.subr.mxu0 0.0
    %3873 = vmatpush1.msra.mxu0 0.0
    %3874 = vmatprep.subr.mxu0 0.0
    %3875 = vmatpush1.msra.mxu0 0.0
    %3876 = vmatprep.subr.mxu0 0.0
    %3877 = vmatpush1.msra.mxu0 0.0
    %3878 = vmatprep.subr.mxu0 0.0
    %3879 = vmatpush1.msra.mxu0 0.0
    %3880 = vmatprep.subr.mxu0 0.0
    %3881 = vmatpush1.msra.mxu0 0.0
    %3882 = vmatprep.subr.mxu0 0.0
    %3883 = vmatpush1.msra.mxu0 0.0
    %3884 = vmatprep.subr.mxu0 0.0
    %3885 = vmatpush1.msra.mxu0 0.0
    %3886 = vmatprep.subr.mxu0 0.0
    %3887 = vmatpush1.msra.mxu0 0.0
    %3888 = vmatprep.subr.mxu0 0.0
    %3889 = vmatpush1.msra.mxu0 0.0
    %3890 = vmatprep.subr.mxu0 0.0
    %3891 = vmatpush1.msra.mxu0 0.0
    %3892 = vmatprep.subr.mxu0 0.0
    %3893 = vmatpush1.msra.mxu0 0.0
    %3894 = vmatprep.subr.mxu0 0.0
    %3895 = vmatpush1.msra.mxu0 0.0
    %3896 = vmatprep.subr.mxu0 0.0
    %3897 = vmatpush1.msra.mxu0 0.0
    %3898 = vmatprep.subr.mxu0 0.0
    %3899 = vmatpush1.msra.mxu0 0.0
    %3900 = vmatprep.subr.mxu0 0.0
    %3901 = vmatpush1.msra.mxu0 0.0
    %3902 = vmatprep.subr.mxu0 0.0
    %3903 = vmatpush1.msra.mxu0 0.0
    %3904 = vmatprep.subr.mxu0 0.0
    %3905 = vmatpush1.msra.mxu0 0.0
    %3906 = vmatprep.subr.mxu0 0.0
    %3907 = vmatpush1.msra.mxu0 0.0
    %3908 = vmatprep.subr.mxu0 0.0
    %3909 = vmatpush1.msra.mxu0 0.0
    %3910 = vmatprep.subr.mxu0 0.0
    %3911 = vmatpush1.msra.mxu0 0.0
    %3912 = vmatprep.subr.mxu0 0.0
    %3913 = vmatpush1.msra.mxu0 0.0
    %3914 = vmatprep.subr.mxu0 0.0
    %3915 = vmatpush1.msra.mxu0 0.0
    %3916 = vmatprep.subr.mxu0 0.0
    %3917 = vmatpush1.msra.mxu0 0.0
    %3918 = vmatprep.subr.mxu0 0.0
    %3919 = vmatpush1.msra.mxu0 0.0
    %3920 = vmatprep.subr.mxu0 0.0
    %3921 = vmatpush1.msra.mxu0 0.0
    %3922 = vmatprep.mubr.f32.mxu0 0.0
    %3923 = vmatmul.mubr.f32.gmra.mrb[0].mxu0 %v3835
    %v3924 = vpop.f32.mrb[0].mxu0
    %v3925 = vadd.f32 0.0, %v3924
    %v3926 = vpop.f32.mrb[0].mxu0
    %v3927 = vadd.f32 0.0, %v3926
    %3928 = vmatprep.mubr.f32.mxu0 0.0
    %3929 = vmatmul.mubr.f32.gmra.mrb[0].mxu0 %v3838
    %v3930 = vpop.f32.mrb[0].mxu0
    %v3931 = vadd.f32 0.0, %v3930
    %v3932 = vpop.f32.mrb[0].mxu0
    %v3933 = vadd.f32 0.0, %v3932
    %3934 = vmatprep.mubr.f32.mxu0 0.0
    %3935 = vmatmul.mubr.f32.gmra.mrb[0].mxu0 %v3841
    %v3936 = vpop.f32.mrb[0].mxu0
    %v3937 = vadd.f32 0.0, %v3936
    %v3938 = vpop.f32.mrb[0].mxu0
    %v3939 = vadd.f32 0.0, %v3938
    %3940 = vmatprep.mubr.f32.mxu0 0.0
    %3941 = vmatmul.mubr.f32.gmra.mrb[0].mxu0 %v3844
    %v3942 = vpop.f32.mrb[0].mxu0
    %v3943 = vadd.f32 0.0, %v3942
    %v3944 = vpop.f32.mrb[0].mxu0
    %v3945 = vadd.f32 0.0, %v3944
    %3946 = vmatprep.mubr.f32.mxu0 0.0
    %3947 = vmatmul.mubr.f32.gmra.mrb[0].mxu0 %v3847
    %v3948 = vpop.f32.mrb[0].mxu0
    %v3949 = vadd.f32 0.0, %v3948
    %v3950 = vpop.f32.mrb[0].mxu0
    %v3951 = vadd.f32 0.0, %v3950
    %3952 = vmatprep.mubr.f32.mxu0 0.0
    %3953 = vmatmul.mubr.f32.gmra.mrb[0].mxu0 %v3850
    %v3954 = vpop.f32.mrb[0].mxu0
    %v3955 = vadd.f32 0.0, %v3954
    %v3956 = vpop.f32.mrb[0].mxu0
    %v3957 = vadd.f32 0.0, %v3956
    %3958 = vmatprep.mubr.f32.mxu0 0.0
    %3959 = vmatmul.mubr.f32.gmra.mrb[0].mxu0 %v3853
    %v3960 = vpop.f32.mrb[0].mxu0
    %v3961 = vadd.f32 0.0, %v3960
    %v3962 = vpop.f32.mrb[0].mxu0
    %v3963 = vadd.f32 0.0, %v3962
    %3964 = vmatprep.mubr.f32.mxu0 0.0
    %3965 = vmatmul.mubr.f32.gmra.mrb[0].mxu0 %v3856
    %v3966 = vpop.f32.mrb[0].mxu0
    %v3967 = vadd.f32 0.0, %v3966
    %v3968 = vpop.f32.mrb[0].mxu0
    %v3969 = vadd.f32 0.0, %v3968
    %3970 = vdwg.mxu0
    %3971 = vmatprep.subr.mxu0 0.0
    %3972 = vmatpush1.msra.mxu0 %v3818
    %3973 = vmatprep.subr.mxu0 0.0
    %3974 = vmatpush1.msra.mxu0 %v3821
    %3975 = vmatprep.subr.mxu0 0.0
    %3976 = vmatpush1.msra.mxu0 %v3824
    %3977 = vmatprep.subr.mxu0 0.0
    %3978 = vmatpush1.msra.mxu0 %v3827
    %3979 = vmatprep.subr.mxu0 0.0
    %3980 = vmatpush1.msra.mxu0 %v3830
    %3981 = vmatprep.subr.mxu0 0.0
    %3982 = vmatpush1.msra.mxu0 %v3833
    %3983 = vmatprep.subr.mxu0 0.0
    %3984 = vmatpush1.msra.mxu0 0.0
    %3985 = vmatprep.subr.mxu0 0.0
    %3986 = vmatpush1.msra.mxu0 0.0
    %3987 = vmatprep.subr.mxu0 0.0
    %3988 = vmatpush1.msra.mxu0 0.0
    %3989 = vmatprep.subr.mxu0 0.0
    %3990 = vmatpush1.msra.mxu0 0.0
    %3991 = vmatprep.subr.mxu0 0.0
    %3992 = vmatpush1.msra.mxu0 0.0
    %3993 = vmatprep.subr.mxu0 0.0
    %3994 = vmatpush1.msra.mxu0 0.0
    %3995 = vmatprep.subr.mxu0 0.0
    %3996 = vmatpush1.msra.mxu0 0.0
    %3997 = vmatprep.subr.mxu0 0.0
    %3998 = vmatpush1.msra.mxu0 0.0
    %3999 = vmatprep.subr.mxu0 0.0
    %4000 = vmatpush1.msra.mxu0 0.0
    %4001 = vmatprep.subr.mxu0 0.0
    %4002 = vmatpush1.msra.mxu0 0.0
    %4003 = vmatprep.subr.mxu0 0.0
    %4004 = vmatpush1.msra.mxu0 0.0
    %4005 = vmatprep.subr.mxu0 0.0
    %4006 = vmatpush1.msra.mxu0 0.0
    %4007 = vmatprep.subr.mxu0 0.0
    %4008 = vmatpush1.msra.mxu0 0.0
    %4009 = vmatprep.subr.mxu0 0.0
    %4010 = vmatpush1.msra.mxu0 0.0
    %4011 = vmatprep.subr.mxu0 0.0
    %4012 = vmatpush1.msra.mxu0 0.0
    %4013 = vmatprep.subr.mxu0 0.0
    %4014 = vmatpush1.msra.mxu0 0.0
    %4015 = vmatprep.subr.mxu0 0.0
    %4016 = vmatpush1.msra.mxu0 0.0
    %4017 = vmatprep.subr.mxu0 0.0
    %4018 = vmatpush1.msra.mxu0 0.0
    %4019 = vmatprep.subr.mxu0 0.0
    %4020 = vmatpush1.msra.mxu0 0.0
    %4021 = vmatprep.subr.mxu0 0.0
    %4022 = vmatpush1.msra.mxu0 0.0
    %4023 = vmatprep.subr.mxu0 0.0
    %4024 = vmatpush1.msra.mxu0 0.0
    %4025 = vmatprep.subr.mxu0 0.0
    %4026 = vmatpush1.msra.mxu0 0.0
    %4027 = vmatprep.subr.mxu0 0.0
    %4028 = vmatpush1.msra.mxu0 0.0
    %4029 = vmatprep.subr.mxu0 0.0
    %4030 = vmatpush1.msra.mxu0 0.0
    %4031 = vmatprep.subr.mxu0 0.0
    %4032 = vmatpush1.msra.mxu0 0.0
    %4033 = vmatprep.subr.mxu0 0.0
    %4034 = vmatpush1.msra.mxu0 0.0
    %4035 = vmatprep.mubr.f32.mxu0 0.0
    %4036 = vmatmul.mubr.f32.gmra.mrb[0].mxu0 %v3835
    %v4037 = vpop.f32.mrb[0].mxu0
    %v4038 = vadd.f32 0.0, %v4037
    %v4039 = vpop.f32.mrb[0].mxu0
    %4040 = vmatprep.mubr.f32.mxu0 0.0
    %4041 = vmatmul.mubr.f32.gmra.mrb[0].mxu0 %v3838
    %v4042 = vpop.f32.mrb[0].mxu0
    %v4043 = vadd.f32 0.0, %v4042
    %v4044 = vpop.f32.mrb[0].mxu0
    %4045 = vmatprep.mubr.f32.mxu0 0.0
    %4046 = vmatmul.mubr.f32.gmra.mrb[0].mxu0 %v3841
    %v4047 = vpop.f32.mrb[0].mxu0
    %v4048 = vadd.f32 0.0, %v4047
    %v4049 = vpop.f32.mrb[0].mxu0
    %4050 = vmatprep.mubr.f32.mxu0 0.0
    %4051 = vmatmul.mubr.f32.gmra.mrb[0].mxu0 %v3844
    %v4052 = vpop.f32.mrb[0].mxu0
    %v4053 = vadd.f32 0.0, %v4052
    %v4054 = vpop.f32.mrb[0].mxu0
    %4055 = vmatprep.mubr.f32.mxu0 0.0
    %4056 = vmatmul.mubr.f32.gmra.mrb[0].mxu0 %v3847
    %v4057 = vpop.f32.mrb[0].mxu0
    %v4058 = vadd.f32 0.0, %v4057
    %v4059 = vpop.f32.mrb[0].mxu0
    %4060 = vmatprep.mubr.f32.mxu0 0.0
    %4061 = vmatmul.mubr.f32.gmra.mrb[0].mxu0 %v3850
    %v4062 = vpop.f32.mrb[0].mxu0
    %v4063 = vadd.f32 0.0, %v4062
    %v4064 = vpop.f32.mrb[0].mxu0
    %4065 = vmatprep.mubr.f32.mxu0 0.0
    %4066 = vmatmul.mubr.f32.gmra.mrb[0].mxu0 %v3853
    %v4067 = vpop.f32.mrb[0].mxu0
    %v4068 = vadd.f32 0.0, %v4067
    %v4069 = vpop.f32.mrb[0].mxu0
    %4070 = vmatprep.mubr.f32.mxu0 0.0
    %4071 = vmatmul.mubr.f32.gmra.mrb[0].mxu0 %v3856
    %v4072 = vpop.f32.mrb[0].mxu0
    %v4073 = vadd.f32 0.0, %v4072
    %v4074 = vpop.f32.mrb[0].mxu0
    %4075 = vdwg.mxu0
    %v4077 = vsel %vm132, %v3782, 0
    %v4080 = vsel %vm132, %v3783, 0
    %v4083 = vsel %vm132, %v3784, 0
    %v4086 = vsel %vm132, %v3785, 0
    %v4089 = vsel %vm132, %v3786, 0
    %v4092 = vsel %vm132, %v3787, 0
    %v4095 = vsel %vm132, %v3788, 0
    %v4098 = vsel %vm132, %v3789, 0
    %4100 = vmatprep.subr.mxu0 %v3791
    %4101 = vmatpush1.msra.mxu0 %v3790
    %4102 = vmatprep.subr.mxu0 %v3794
    %4103 = vmatpush1.msra.mxu0 %v3793
    %4104 = vmatprep.subr.mxu0 %v3797
    %4105 = vmatpush1.msra.mxu0 %v3796
    %4106 = vmatprep.subr.mxu0 %v3800
    %4107 = vmatpush1.msra.mxu0 %v3799
    %4108 = vmatprep.subr.mxu0 %v3803
    %4109 = vmatpush1.msra.mxu0 %v3802
    %4110 = vmatprep.subr.mxu0 %v3806
    %4111 = vmatpush1.msra.mxu0 %v3805
    %4112 = vmatprep.subr.mxu0 0.0
    %4113 = vmatpush1.msra.mxu0 0.0
    %4114 = vmatprep.subr.mxu0 0.0
    %4115 = vmatpush1.msra.mxu0 0.0
    %4116 = vmatprep.subr.mxu0 0.0
    %4117 = vmatpush1.msra.mxu0 0.0
    %4118 = vmatprep.subr.mxu0 0.0
    %4119 = vmatpush1.msra.mxu0 0.0
    %4120 = vmatprep.subr.mxu0 0.0
    %4121 = vmatpush1.msra.mxu0 0.0
    %4122 = vmatprep.subr.mxu0 0.0
    %4123 = vmatpush1.msra.mxu0 0.0
    %4124 = vmatprep.subr.mxu0 0.0
    %4125 = vmatpush1.msra.mxu0 0.0
    %4126 = vmatprep.subr.mxu0 0.0
    %4127 = vmatpush1.msra.mxu0 0.0
    %4128 = vmatprep.subr.mxu0 0.0
    %4129 = vmatpush1.msra.mxu0 0.0
    %4130 = vmatprep.subr.mxu0 0.0
    %4131 = vmatpush1.msra.mxu0 0.0
    %4132 = vmatprep.subr.mxu0 0.0
    %4133 = vmatpush1.msra.mxu0 0.0
    %4134 = vmatprep.subr.mxu0 0.0
    %4135 = vmatpush1.msra.mxu0 0.0
    %4136 = vmatprep.subr.mxu0 0.0
    %4137 = vmatpush1.msra.mxu0 0.0
    %4138 = vmatprep.subr.mxu0 0.0
    %4139 = vmatpush1.msra.mxu0 0.0
    %4140 = vmatprep.subr.mxu0 0.0
    %4141 = vmatpush1.msra.mxu0 0.0
    %4142 = vmatprep.subr.mxu0 0.0
    %4143 = vmatpush1.msra.mxu0 0.0
    %4144 = vmatprep.subr.mxu0 0.0
    %4145 = vmatpush1.msra.mxu0 0.0
    %4146 = vmatprep.subr.mxu0 0.0
    %4147 = vmatpush1.msra.mxu0 0.0
    %4148 = vmatprep.subr.mxu0 0.0
    %4149 = vmatpush1.msra.mxu0 0.0
    %4150 = vmatprep.subr.mxu0 0.0
    %4151 = vmatpush1.msra.mxu0 0.0
    %4152 = vmatprep.subr.mxu0 0.0
    %4153 = vmatpush1.msra.mxu0 0.0
    %4154 = vmatprep.subr.mxu0 0.0
    %4155 = vmatpush1.msra.mxu0 0.0
    %4156 = vmatprep.subr.mxu0 0.0
    %4157 = vmatpush1.msra.mxu0 0.0
    %4158 = vmatprep.subr.mxu0 0.0
    %4159 = vmatpush1.msra.mxu0 0.0
    %4160 = vmatprep.subr.mxu0 0.0
    %4161 = vmatpush1.msra.mxu0 0.0
    %4162 = vmatprep.subr.mxu0 0.0
    %4163 = vmatpush1.msra.mxu0 0.0
    %4164 = vmatprep.mubr.f32.mxu0 0.0
    %4165 = vmatmul.mubr.f32.gmra.mrb[0].mxu0 %v4077
    %v4166 = vpop.f32.mrb[0].mxu0
    %v4167 = vadd.f32 %v3925, %v4166
    %v4168 = vpop.f32.mrb[0].mxu0
    %v4169 = vadd.f32 %v3927, %v4168
    %4170 = vmatprep.mubr.f32.mxu0 0.0
    %4171 = vmatmul.mubr.f32.gmra.mrb[0].mxu0 %v4080
    %v4172 = vpop.f32.mrb[0].mxu0
    %v4173 = vadd.f32 %v3931, %v4172
    %v4174 = vpop.f32.mrb[0].mxu0
    %v4175 = vadd.f32 %v3933, %v4174
    %4176 = vmatprep.mubr.f32.mxu0 0.0
    %4177 = vmatmul.mubr.f32.gmra.mrb[0].mxu0 %v4083
    %v4178 = vpop.f32.mrb[0].mxu0
    %v4179 = vadd.f32 %v3937, %v4178
    %v4180 = vpop.f32.mrb[0].mxu0
    %v4181 = vadd.f32 %v3939, %v4180
    %4182 = vmatprep.mubr.f32.mxu0 0.0
    %4183 = vmatmul.mubr.f32.gmra.mrb[0].mxu0 %v4086
    %v4184 = vpop.f32.mrb[0].mxu0
    %v4185 = vadd.f32 %v3943, %v4184
    %v4186 = vpop.f32.mrb[0].mxu0
    %v4187 = vadd.f32 %v3945, %v4186
    %4188 = vmatprep.mubr.f32.mxu0 0.0
    %4189 = vmatmul.mubr.f32.gmra.mrb[0].mxu0 %v4089
    %v4190 = vpop.f32.mrb[0].mxu0
    %v4191 = vadd.f32 %v3949, %v4190
    %v4192 = vpop.f32.mrb[0].mxu0
    %v4193 = vadd.f32 %v3951, %v4192
    %4194 = vmatprep.mubr.f32.mxu0 0.0
    %4195 = vmatmul.mubr.f32.gmra.mrb[0].mxu0 %v4092
    %v4196 = vpop.f32.mrb[0].mxu0
    %v4197 = vadd.f32 %v3955, %v4196
    %v4198 = vpop.f32.mrb[0].mxu0
    %v4199 = vadd.f32 %v3957, %v4198
    %4200 = vmatprep.mubr.f32.mxu0 0.0
    %4201 = vmatmul.mubr.f32.gmra.mrb[0].mxu0 %v4095
    %v4202 = vpop.f32.mrb[0].mxu0
    %v4203 = vadd.f32 %v3961, %v4202
    %v4204 = vpop.f32.mrb[0].mxu0
    %v4205 = vadd.f32 %v3963, %v4204
    %4206 = vmatprep.mubr.f32.mxu0 0.0
    %4207 = vmatmul.mubr.f32.gmra.mrb[0].mxu0 %v4098
    %v4208 = vpop.f32.mrb[0].mxu0
    %v4209 = vadd.f32 %v3967, %v4208
    %v4210 = vpop.f32.mrb[0].mxu0
    %v4211 = vadd.f32 %v3969, %v4210
    %4212 = vdwg.mxu0
    %4213 = vmatprep.subr.mxu0 0.0
    %4214 = vmatpush1.msra.mxu0 %v3792
    %4215 = vmatprep.subr.mxu0 0.0
    %4216 = vmatpush1.msra.mxu0 %v3795
    %4217 = vmatprep.subr.mxu0 0.0
    %4218 = vmatpush1.msra.mxu0 %v3798
    %4219 = vmatprep.subr.mxu0 0.0
    %4220 = vmatpush1.msra.mxu0 %v3801
    %4221 = vmatprep.subr.mxu0 0.0
    %4222 = vmatpush1.msra.mxu0 %v3804
    %4223 = vmatprep.subr.mxu0 0.0
    %4224 = vmatpush1.msra.mxu0 %v3807
    %4225 = vmatprep.subr.mxu0 0.0
    %4226 = vmatpush1.msra.mxu0 0.0
    %4227 = vmatprep.subr.mxu0 0.0
    %4228 = vmatpush1.msra.mxu0 0.0
    %4229 = vmatprep.subr.mxu0 0.0
    %4230 = vmatpush1.msra.mxu0 0.0
    %4231 = vmatprep.subr.mxu0 0.0
    %4232 = vmatpush1.msra.mxu0 0.0
    %4233 = vmatprep.subr.mxu0 0.0
    %4234 = vmatpush1.msra.mxu0 0.0
    %4235 = vmatprep.subr.mxu0 0.0
    %4236 = vmatpush1.msra.mxu0 0.0
    %4237 = vmatprep.subr.mxu0 0.0
    %4238 = vmatpush1.msra.mxu0 0.0
    %4239 = vmatprep.subr.mxu0 0.0
    %4240 = vmatpush1.msra.mxu0 0.0
    %4241 = vmatprep.subr.mxu0 0.0
    %4242 = vmatpush1.msra.mxu0 0.0
    %4243 = vmatprep.subr.mxu0 0.0
    %4244 = vmatpush1.msra.mxu0 0.0
    %4245 = vmatprep.subr.mxu0 0.0
    %4246 = vmatpush1.msra.mxu0 0.0
    %4247 = vmatprep.subr.mxu0 0.0
    %4248 = vmatpush1.msra.mxu0 0.0
    %4249 = vmatprep.subr.mxu0 0.0
    %4250 = vmatpush1.msra.mxu0 0.0
    %4251 = vmatprep.subr.mxu0 0.0
    %4252 = vmatpush1.msra.mxu0 0.0
    %4253 = vmatprep.subr.mxu0 0.0
    %4254 = vmatpush1.msra.mxu0 0.0
    %4255 = vmatprep.subr.mxu0 0.0
    %4256 = vmatpush1.msra.mxu0 0.0
    %4257 = vmatprep.subr.mxu0 0.0
    %4258 = vmatpush1.msra.mxu0 0.0
    %4259 = vmatprep.subr.mxu0 0.0
    %4260 = vmatpush1.msra.mxu0 0.0
    %4261 = vmatprep.subr.mxu0 0.0
    %4262 = vmatpush1.msra.mxu0 0.0
    %4263 = vmatprep.subr.mxu0 0.0
    %4264 = vmatpush1.msra.mxu0 0.0
    %4265 = vmatprep.subr.mxu0 0.0
    %4266 = vmatpush1.msra.mxu0 0.0
    %4267 = vmatprep.subr.mxu0 0.0
    %4268 = vmatpush1.msra.mxu0 0.0
    %4269 = vmatprep.subr.mxu0 0.0
    %4270 = vmatpush1.msra.mxu0 0.0
    %4271 = vmatprep.subr.mxu0 0.0
    %4272 = vmatpush1.msra.mxu0 0.0
    %4273 = vmatprep.subr.mxu0 0.0
    %4274 = vmatpush1.msra.mxu0 0.0
    %4275 = vmatprep.subr.mxu0 0.0
    %4276 = vmatpush1.msra.mxu0 0.0
    %4277 = vmatprep.mubr.f32.mxu0 0.0
    %4278 = vmatmul.mubr.f32.gmra.mrb[0].mxu0 %v4077
    %v4279 = vpop.f32.mrb[0].mxu0
    %v4280 = vadd.f32 %v4038, %v4279
    %v4281 = vpop.f32.mrb[0].mxu0
    %4282 = vmatprep.mubr.f32.mxu0 0.0
    %4283 = vmatmul.mubr.f32.gmra.mrb[0].mxu0 %v4080
    %v4284 = vpop.f32.mrb[0].mxu0
    %v4285 = vadd.f32 %v4043, %v4284
    %v4286 = vpop.f32.mrb[0].mxu0
    %4287 = vmatprep.mubr.f32.mxu0 0.0
    %4288 = vmatmul.mubr.f32.gmra.mrb[0].mxu0 %v4083
    %v4289 = vpop.f32.mrb[0].mxu0
    %v4290 = vadd.f32 %v4048, %v4289
    %v4291 = vpop.f32.mrb[0].mxu0
    %4292 = vmatprep.mubr.f32.mxu0 0.0
    %4293 = vmatmul.mubr.f32.gmra.mrb[0].mxu0 %v4086
    %v4294 = vpop.f32.mrb[0].mxu0
    %v4295 = vadd.f32 %v4053, %v4294
    %v4296 = vpop.f32.mrb[0].mxu0
    %4297 = vmatprep.mubr.f32.mxu0 0.0
    %4298 = vmatmul.mubr.f32.gmra.mrb[0].mxu0 %v4089
    %v4299 = vpop.f32.mrb[0].mxu0
    %v4300 = vadd.f32 %v4058, %v4299
    %v4301 = vpop.f32.mrb[0].mxu0
    %4302 = vmatprep.mubr.f32.mxu0 0.0
    %4303 = vmatmul.mubr.f32.gmra.mrb[0].mxu0 %v4092
    %v4304 = vpop.f32.mrb[0].mxu0
    %v4305 = vadd.f32 %v4063, %v4304
    %v4306 = vpop.f32.mrb[0].mxu0
    %4307 = vmatprep.mubr.f32.mxu0 0.0
    %4308 = vmatmul.mubr.f32.gmra.mrb[0].mxu0 %v4095
    %v4309 = vpop.f32.mrb[0].mxu0
    %v4310 = vadd.f32 %v4068, %v4309
    %v4311 = vpop.f32.mrb[0].mxu0
    %4312 = vmatprep.mubr.f32.mxu0 0.0
    %4313 = vmatmul.mubr.f32.gmra.mrb[0].mxu0 %v4098
    %v4314 = vpop.f32.mrb[0].mxu0
    %v4315 = vadd.f32 %v4073, %v4314
    %v4316 = vpop.f32.mrb[0].mxu0
    %4317 = vdwg.mxu0
    %v4318 = vld [vmem:[%s3781 + $0x2] sm:$0xff]
    %v4319 = vld [vmem:[%s3781 + $0xa] sm:$0xff]
    %v4320 = vld [vmem:[%s3781 + $0x12] sm:$0xff]
    %v4321 = vld [vmem:[%s3781 + $0x1a] sm:$0xff]
    %v4322 = vld [vmem:[%s3781 + $0x22] sm:$0xff]
    %v4323 = vld [vmem:[%s3781 + $0x2a] sm:$0xff]
    %v4324 = vld [vmem:[%s3781 + $0x32] sm:$0xff]
    %v4325 = vld [vmem:[%s3781 + $0x3a] sm:$0xf]
    %v4326 = vld [vmem:[%s625] sm:$0xff]
    %v4327 = vld [vmem:[%s625 + $0x8] sm:$0xff]
    %v4328 = vld [vmem:[%s625 + $0x10] sm:$0xff]
    %v4329 = vld [vmem:[%s625 + $0x18] sm:$0xff]
    %v4330 = vld [vmem:[%s625 + $0x20] sm:$0xff]
    %v4331 = vld [vmem:[%s625 + $0x28] sm:$0xff]
    %v4332 = vld [vmem:[%s625 + $0x30] sm:$0xff]
    %v4333 = vld [vmem:[%s625 + $0x38] sm:$0xff]
    %v4334 = vld [vmem:[%s625 + $0x40] sm:$0xff]
    %v4335 = vld [vmem:[%s625 + $0x48] sm:$0xff]
    %v4336 = vld [vmem:[%s625 + $0x50] sm:$0xff]
    %v4337 = vld [vmem:[%s625 + $0x58] sm:$0xff]
    %v4338 = vld [vmem:[%s625 + $0x60] sm:$0xff]
    %v4339 = vld [vmem:[%s625 + $0x68] sm:$0xff]
    %v4340 = vld [vmem:[%s625 + $0x70] sm:$0xff]
    %v4341 = vld [vmem:[%s625 + $0x78] sm:$0xff]
    %v4342 = vld [vmem:[%s625 + $0x80] sm:$0xff]
    %v4343 = vld [vmem:[%s625 + $0x88] sm:$0xff]
    %v4345 = vsel %vm132, %v4318, 0
    %v4348 = vsel %vm132, %v4319, 0
    %v4351 = vsel %vm132, %v4320, 0
    %v4354 = vsel %vm132, %v4321, 0
    %v4357 = vsel %vm132, %v4322, 0
    %v4360 = vsel %vm132, %v4323, 0
    %v4363 = vsel %vm132, %v4324, 0
    %v4366 = vsel %vm132, %v4325, 0
    %4368 = vmatprep.subr.mxu0 %v4327
    %4369 = vmatpush1.msra.mxu0 %v4326
    %4370 = vmatprep.subr.mxu0 %v4330
    %4371 = vmatpush1.msra.mxu0 %v4329
    %4372 = vmatprep.subr.mxu0 %v4333
    %4373 = vmatpush1.msra.mxu0 %v4332
    %4374 = vmatprep.subr.mxu0 %v4336
    %4375 = vmatpush1.msra.mxu0 %v4335
    %4376 = vmatprep.subr.mxu0 %v4339
    %4377 = vmatpush1.msra.mxu0 %v4338
    %4378 = vmatprep.subr.mxu0 %v4342
    %4379 = vmatpush1.msra.mxu0 %v4341
    %4380 = vmatprep.subr.mxu0 0.0
    %4381 = vmatpush1.msra.mxu0 0.0
    %4382 = vmatprep.subr.mxu0 0.0
    %4383 = vmatpush1.msra.mxu0 0.0
    %4384 = vmatprep.subr.mxu0 0.0
    %4385 = vmatpush1.msra.mxu0 0.0
    %4386 = vmatprep.subr.mxu0 0.0
    %4387 = vmatpush1.msra.mxu0 0.0
    %4388 = vmatprep.subr.mxu0 0.0
    %4389 = vmatpush1.msra.mxu0 0.0
    %4390 = vmatprep.subr.mxu0 0.0
    %4391 = vmatpush1.msra.mxu0 0.0
    %4392 = vmatprep.subr.mxu0 0.0
    %4393 = vmatpush1.msra.mxu0 0.0
    %4394 = vmatprep.subr.mxu0 0.0
    %4395 = vmatpush1.msra.mxu0 0.0
    %4396 = vmatprep.subr.mxu0 0.0
    %4397 = vmatpush1.msra.mxu0 0.0
    %4398 = vmatprep.subr.mxu0 0.0
    %4399 = vmatpush1.msra.mxu0 0.0
    %4400 = vmatprep.subr.mxu0 0.0
    %4401 = vmatpush1.msra.mxu0 0.0
    %4402 = vmatprep.subr.mxu0 0.0
    %4403 = vmatpush1.msra.mxu0 0.0
    %4404 = vmatprep.subr.mxu0 0.0
    %4405 = vmatpush1.msra.mxu0 0.0
    %4406 = vmatprep.subr.mxu0 0.0
    %4407 = vmatpush1.msra.mxu0 0.0
    %4408 = vmatprep.subr.mxu0 0.0
    %4409 = vmatpush1.msra.mxu0 0.0
    %4410 = vmatprep.subr.mxu0 0.0
    %4411 = vmatpush1.msra.mxu0 0.0
    %4412 = vmatprep.subr.mxu0 0.0
    %4413 = vmatpush1.msra.mxu0 0.0
    %4414 = vmatprep.subr.mxu0 0.0
    %4415 = vmatpush1.msra.mxu0 0.0
    %4416 = vmatprep.subr.mxu0 0.0
    %4417 = vmatpush1.msra.mxu0 0.0
    %4418 = vmatprep.subr.mxu0 0.0
    %4419 = vmatpush1.msra.mxu0 0.0
    %4420 = vmatprep.subr.mxu0 0.0
    %4421 = vmatpush1.msra.mxu0 0.0
    %4422 = vmatprep.subr.mxu0 0.0
    %4423 = vmatpush1.msra.mxu0 0.0
    %4424 = vmatprep.subr.mxu0 0.0
    %4425 = vmatpush1.msra.mxu0 0.0
    %4426 = vmatprep.subr.mxu0 0.0
    %4427 = vmatpush1.msra.mxu0 0.0
    %4428 = vmatprep.subr.mxu0 0.0
    %4429 = vmatpush1.msra.mxu0 0.0
    %4430 = vmatprep.subr.mxu0 0.0
    %4431 = vmatpush1.msra.mxu0 0.0
    %4432 = vmatprep.mubr.f32.mxu0 0.0
    %4433 = vmatmul.mubr.f32.gmra.mrb[0].mxu0 %v4345
    %v4434 = vpop.f32.mrb[0].mxu0
    %v4435 = vadd.f32 0.0, %v4434
    %v4436 = vpop.f32.mrb[0].mxu0
    %v4437 = vadd.f32 0.0, %v4436
    %4438 = vmatprep.mubr.f32.mxu0 0.0
    %4439 = vmatmul.mubr.f32.gmra.mrb[0].mxu0 %v4348
    %v4440 = vpop.f32.mrb[0].mxu0
    %v4441 = vadd.f32 0.0, %v4440
    %v4442 = vpop.f32.mrb[0].mxu0
    %v4443 = vadd.f32 0.0, %v4442
    %4444 = vmatprep.mubr.f32.mxu0 0.0
    %4445 = vmatmul.mubr.f32.gmra.mrb[0].mxu0 %v4351
    %v4446 = vpop.f32.mrb[0].mxu0
    %v4447 = vadd.f32 0.0, %v4446
    %v4448 = vpop.f32.mrb[0].mxu0
    %v4449 = vadd.f32 0.0, %v4448
    %4450 = vmatprep.mubr.f32.mxu0 0.0
    %4451 = vmatmul.mubr.f32.gmra.mrb[0].mxu0 %v4354
    %v4452 = vpop.f32.mrb[0].mxu0
    %v4453 = vadd.f32 0.0, %v4452
    %v4454 = vpop.f32.mrb[0].mxu0
    %v4455 = vadd.f32 0.0, %v4454
    %4456 = vmatprep.mubr.f32.mxu0 0.0
    %4457 = vmatmul.mubr.f32.gmra.mrb[0].mxu0 %v4357
    %v4458 = vpop.f32.mrb[0].mxu0
    %v4459 = vadd.f32 0.0, %v4458
    %v4460 = vpop.f32.mrb[0].mxu0
    %v4461 = vadd.f32 0.0, %v4460
    %4462 = vmatprep.mubr.f32.mxu0 0.0
    %4463 = vmatmul.mubr.f32.gmra.mrb[0].mxu0 %v4360
    %v4464 = vpop.f32.mrb[0].mxu0
    %v4465 = vadd.f32 0.0, %v4464
    %v4466 = vpop.f32.mrb[0].mxu0
    %v4467 = vadd.f32 0.0, %v4466
    %4468 = vmatprep.mubr.f32.mxu0 0.0
    %4469 = vmatmul.mubr.f32.gmra.mrb[0].mxu0 %v4363
    %v4470 = vpop.f32.mrb[0].mxu0
    %v4471 = vadd.f32 0.0, %v4470
    %v4472 = vpop.f32.mrb[0].mxu0
    %v4473 = vadd.f32 0.0, %v4472
    %4474 = vmatprep.mubr.f32.mxu0 0.0
    %4475 = vmatmul.mubr.f32.gmra.mrb[0].mxu0 %v4366
    %v4476 = vpop.f32.mrb[0].mxu0
    %v4477 = vadd.f32 0.0, %v4476
    %v4478 = vpop.f32.mrb[0].mxu0
    %v4479 = vadd.f32 0.0, %v4478
    %4480 = vdwg.mxu0
    %4481 = vmatprep.subr.mxu0 0.0
    %4482 = vmatpush1.msra.mxu0 %v4328
    %4483 = vmatprep.subr.mxu0 0.0
    %4484 = vmatpush1.msra.mxu0 %v4331
    %4485 = vmatprep.subr.mxu0 0.0
    %4486 = vmatpush1.msra.mxu0 %v4334
    %4487 = vmatprep.subr.mxu0 0.0
    %4488 = vmatpush1.msra.mxu0 %v4337
    %4489 = vmatprep.subr.mxu0 0.0
    %4490 = vmatpush1.msra.mxu0 %v4340
    %4491 = vmatprep.subr.mxu0 0.0
    %4492 = vmatpush1.msra.mxu0 %v4343
    %4493 = vmatprep.subr.mxu0 0.0
    %4494 = vmatpush1.msra.mxu0 0.0
    %4495 = vmatprep.subr.mxu0 0.0
    %4496 = vmatpush1.msra.mxu0 0.0
    %4497 = vmatprep.subr.mxu0 0.0
    %4498 = vmatpush1.msra.mxu0 0.0
    %4499 = vmatprep.subr.mxu0 0.0
    %4500 = vmatpush1.msra.mxu0 0.0
    %4501 = vmatprep.subr.mxu0 0.0
    %4502 = vmatpush1.msra.mxu0 0.0
    %4503 = vmatprep.subr.mxu0 0.0
    %4504 = vmatpush1.msra.mxu0 0.0
    %4505 = vmatprep.subr.mxu0 0.0
    %4506 = vmatpush1.msra.mxu0 0.0
    %4507 = vmatprep.subr.mxu0 0.0
    %4508 = vmatpush1.msra.mxu0 0.0
    %4509 = vmatprep.subr.mxu0 0.0
    %4510 = vmatpush1.msra.mxu0 0.0
    %4511 = vmatprep.subr.mxu0 0.0
    %4512 = vmatpush1.msra.mxu0 0.0
    %4513 = vmatprep.subr.mxu0 0.0
    %4514 = vmatpush1.msra.mxu0 0.0
    %4515 = vmatprep.subr.mxu0 0.0
    %4516 = vmatpush1.msra.mxu0 0.0
    %4517 = vmatprep.subr.mxu0 0.0
    %4518 = vmatpush1.msra.mxu0 0.0
    %4519 = vmatprep.subr.mxu0 0.0
    %4520 = vmatpush1.msra.mxu0 0.0
    %4521 = vmatprep.subr.mxu0 0.0
    %4522 = vmatpush1.msra.mxu0 0.0
    %4523 = vmatprep.subr.mxu0 0.0
    %4524 = vmatpush1.msra.mxu0 0.0
    %4525 = vmatprep.subr.mxu0 0.0
    %4526 = vmatpush1.msra.mxu0 0.0
    %4527 = vmatprep.subr.mxu0 0.0
    %4528 = vmatpush1.msra.mxu0 0.0
    %4529 = vmatprep.subr.mxu0 0.0
    %4530 = vmatpush1.msra.mxu0 0.0
    %4531 = vmatprep.subr.mxu0 0.0
    %4532 = vmatpush1.msra.mxu0 0.0
    %4533 = vmatprep.subr.mxu0 0.0
    %4534 = vmatpush1.msra.mxu0 0.0
    %4535 = vmatprep.subr.mxu0 0.0
    %4536 = vmatpush1.msra.mxu0 0.0
    %4537 = vmatprep.subr.mxu0 0.0
    %4538 = vmatpush1.msra.mxu0 0.0
    %4539 = vmatprep.subr.mxu0 0.0
    %4540 = vmatpush1.msra.mxu0 0.0
    %4541 = vmatprep.subr.mxu0 0.0
    %4542 = vmatpush1.msra.mxu0 0.0
    %4543 = vmatprep.subr.mxu0 0.0
    %4544 = vmatpush1.msra.mxu0 0.0
    %4545 = vmatprep.mubr.f32.mxu0 0.0
    %4546 = vmatmul.mubr.f32.gmra.mrb[0].mxu0 %v4345
    %v4547 = vpop.f32.mrb[0].mxu0
    %v4548 = vadd.f32 0.0, %v4547
    %v4549 = vpop.f32.mrb[0].mxu0
    %4550 = vmatprep.mubr.f32.mxu0 0.0
    %4551 = vmatmul.mubr.f32.gmra.mrb[0].mxu0 %v4348
    %v4552 = vpop.f32.mrb[0].mxu0
    %v4553 = vadd.f32 0.0, %v4552
    %v4554 = vpop.f32.mrb[0].mxu0
    %4555 = vmatprep.mubr.f32.mxu0 0.0
    %4556 = vmatmul.mubr.f32.gmra.mrb[0].mxu0 %v4351
    %v4557 = vpop.f32.mrb[0].mxu0
    %v4558 = vadd.f32 0.0, %v4557
    %v4559 = vpop.f32.mrb[0].mxu0
    %4560 = vmatprep.mubr.f32.mxu0 0.0
    %4561 = vmatmul.mubr.f32.gmra.mrb[0].mxu0 %v4354
    %v4562 = vpop.f32.mrb[0].mxu0
    %v4563 = vadd.f32 0.0, %v4562
    %v4564 = vpop.f32.mrb[0].mxu0
    %4565 = vmatprep.mubr.f32.mxu0 0.0
    %4566 = vmatmul.mubr.f32.gmra.mrb[0].mxu0 %v4357
    %v4567 = vpop.f32.mrb[0].mxu0
    %v4568 = vadd.f32 0.0, %v4567
    %v4569 = vpop.f32.mrb[0].mxu0
    %4570 = vmatprep.mubr.f32.mxu0 0.0
    %4571 = vmatmul.mubr.f32.gmra.mrb[0].mxu0 %v4360
    %v4572 = vpop.f32.mrb[0].mxu0
    %v4573 = vadd.f32 0.0, %v4572
    %v4574 = vpop.f32.mrb[0].mxu0
    %4575 = vmatprep.mubr.f32.mxu0 0.0
    %4576 = vmatmul.mubr.f32.gmra.mrb[0].mxu0 %v4363
    %v4577 = vpop.f32.mrb[0].mxu0
    %v4578 = vadd.f32 0.0, %v4577
    %v4579 = vpop.f32.mrb[0].mxu0
    %4580 = vmatprep.mubr.f32.mxu0 0.0
    %4581 = vmatmul.mubr.f32.gmra.mrb[0].mxu0 %v4366
    %v4582 = vpop.f32.mrb[0].mxu0
    %v4583 = vadd.f32 0.0, %v4582
    %v4584 = vpop.f32.mrb[0].mxu0
    %4585 = vdwg.mxu0
    %v4586 = vadd.f32 %v4167, %v4435
    %v4587 = vadd.f32 %v4169, %v4437
    %v4588 = vadd.f32 %v4280, %v4548
    %v4589 = vadd.f32 %v4173, %v4441
    %v4590 = vadd.f32 %v4175, %v4443
    %v4591 = vadd.f32 %v4285, %v4553
    %v4592 = vadd.f32 %v4179, %v4447
    %v4593 = vadd.f32 %v4181, %v4449
    %v4594 = vadd.f32 %v4290, %v4558
    %v4595 = vadd.f32 %v4185, %v4453
    %v4596 = vadd.f32 %v4187, %v4455
    %v4597 = vadd.f32 %v4295, %v4563
    %v4598 = vadd.f32 %v4191, %v4459
    %v4599 = vadd.f32 %v4193, %v4461
    %v4600 = vadd.f32 %v4300, %v4568
    %v4601 = vadd.f32 %v4197, %v4465
    %v4602 = vadd.f32 %v4199, %v4467
    %v4603 = vadd.f32 %v4305, %v4573
    %v4604 = vadd.f32 %v4203, %v4471
    %v4605 = vadd.f32 %v4205, %v4473
    %v4606 = vadd.f32 %v4310, %v4578
    %v4607 = vadd.f32 %v4209, %v4477
    %v4608 = vadd.f32 %v4211, %v4479
    %v4609 = vadd.f32 %v4315, %v4583
    %v4610 = vld [vmem:[%s3781 + $0x3] sm:$0xff]
    %v4611 = vld [vmem:[%s3781 + $0xb] sm:$0xff]
    %v4612 = vld [vmem:[%s3781 + $0x13] sm:$0xff]
    %v4613 = vld [vmem:[%s3781 + $0x1b] sm:$0xff]
    %v4614 = vld [vmem:[%s3781 + $0x23] sm:$0xff]
    %v4615 = vld [vmem:[%s3781 + $0x2b] sm:$0xff]
    %v4616 = vld [vmem:[%s3781 + $0x33] sm:$0xff]
    %v4617 = vld [vmem:[%s3781 + $0x3b] sm:$0xf]
    %v4618 = vld [vmem:[%s918] sm:$0xff]
    %v4619 = vld [vmem:[%s918 + $0x8] sm:$0xff]
    %v4620 = vld [vmem:[%s918 + $0x10] sm:$0xff]
    %v4621 = vld [vmem:[%s918 + $0x18] sm:$0xff]
    %v4622 = vld [vmem:[%s918 + $0x20] sm:$0xff]
    %v4623 = vld [vmem:[%s918 + $0x28] sm:$0xff]
    %v4624 = vld [vmem:[%s918 + $0x30] sm:$0xff]
    %v4625 = vld [vmem:[%s918 + $0x38] sm:$0xff]
    %v4626 = vld [vmem:[%s918 + $0x40] sm:$0xff]
    %v4627 = vld [vmem:[%s918 + $0x48] sm:$0xff]
    %v4628 = vld [vmem:[%s918 + $0x50] sm:$0xff]
    %v4629 = vld [vmem:[%s918 + $0x58] sm:$0xff]
    %v4630 = vld [vmem:[%s918 + $0x60] sm:$0xff]
    %v4631 = vld [vmem:[%s918 + $0x68] sm:$0xff]
    %v4632 = vld [vmem:[%s918 + $0x70] sm:$0xff]
    %v4633 = vld [vmem:[%s918 + $0x78] sm:$0xff]
    %v4634 = vld [vmem:[%s918 + $0x80] sm:$0xff]
    %v4635 = vld [vmem:[%s918 + $0x88] sm:$0xff]
    %v4637 = vsel %vm132, %v4610, 0
    %v4640 = vsel %vm132, %v4611, 0
    %v4643 = vsel %vm132, %v4612, 0
    %v4646 = vsel %vm132, %v4613, 0
    %v4649 = vsel %vm132, %v4614, 0
    %v4652 = vsel %vm132, %v4615, 0
    %v4655 = vsel %vm132, %v4616, 0
    %v4658 = vsel %vm132, %v4617, 0
    %4660 = vmatprep.subr.mxu0 %v4619
    %4661 = vmatpush1.msra.mxu0 %v4618
    %4662 = vmatprep.subr.mxu0 %v4622
    %4663 = vmatpush1.msra.mxu0 %v4621
    %4664 = vmatprep.subr.mxu0 %v4625
    %4665 = vmatpush1.msra.mxu0 %v4624
    %4666 = vmatprep.subr.mxu0 %v4628
    %4667 = vmatpush1.msra.mxu0 %v4627
    %4668 = vmatprep.subr.mxu0 %v4631
    %4669 = vmatpush1.msra.mxu0 %v4630
    %4670 = vmatprep.subr.mxu0 %v4634
    %4671 = vmatpush1.msra.mxu0 %v4633
    %4672 = vmatprep.subr.mxu0 0.0
    %4673 = vmatpush1.msra.mxu0 0.0
    %4674 = vmatprep.subr.mxu0 0.0
    %4675 = vmatpush1.msra.mxu0 0.0
    %4676 = vmatprep.subr.mxu0 0.0
    %4677 = vmatpush1.msra.mxu0 0.0
    %4678 = vmatprep.subr.mxu0 0.0
    %4679 = vmatpush1.msra.mxu0 0.0
    %4680 = vmatprep.subr.mxu0 0.0
    %4681 = vmatpush1.msra.mxu0 0.0
    %4682 = vmatprep.subr.mxu0 0.0
    %4683 = vmatpush1.msra.mxu0 0.0
    %4684 = vmatprep.subr.mxu0 0.0
    %4685 = vmatpush1.msra.mxu0 0.0
    %4686 = vmatprep.subr.mxu0 0.0
    %4687 = vmatpush1.msra.mxu0 0.0
    %4688 = vmatprep.subr.mxu0 0.0
    %4689 = vmatpush1.msra.mxu0 0.0
    %4690 = vmatprep.subr.mxu0 0.0
    %4691 = vmatpush1.msra.mxu0 0.0
    %4692 = vmatprep.subr.mxu0 0.0
    %4693 = vmatpush1.msra.mxu0 0.0
    %4694 = vmatprep.subr.mxu0 0.0
    %4695 = vmatpush1.msra.mxu0 0.0
    %4696 = vmatprep.subr.mxu0 0.0
    %4697 = vmatpush1.msra.mxu0 0.0
    %4698 = vmatprep.subr.mxu0 0.0
    %4699 = vmatpush1.msra.mxu0 0.0
    %4700 = vmatprep.subr.mxu0 0.0
    %4701 = vmatpush1.msra.mxu0 0.0
    %4702 = vmatprep.subr.mxu0 0.0
    %4703 = vmatpush1.msra.mxu0 0.0
    %4704 = vmatprep.subr.mxu0 0.0
    %4705 = vmatpush1.msra.mxu0 0.0
    %4706 = vmatprep.subr.mxu0 0.0
    %4707 = vmatpush1.msra.mxu0 0.0
    %4708 = vmatprep.subr.mxu0 0.0
    %4709 = vmatpush1.msra.mxu0 0.0
    %4710 = vmatprep.subr.mxu0 0.0
    %4711 = vmatpush1.msra.mxu0 0.0
    %4712 = vmatprep.subr.mxu0 0.0
    %4713 = vmatpush1.msra.mxu0 0.0
    %4714 = vmatprep.subr.mxu0 0.0
    %4715 = vmatpush1.msra.mxu0 0.0
    %4716 = vmatprep.subr.mxu0 0.0
    %4717 = vmatpush1.msra.mxu0 0.0
    %4718 = vmatprep.subr.mxu0 0.0
    %4719 = vmatpush1.msra.mxu0 0.0
    %4720 = vmatprep.subr.mxu0 0.0
    %4721 = vmatpush1.msra.mxu0 0.0
    %4722 = vmatprep.subr.mxu0 0.0
    %4723 = vmatpush1.msra.mxu0 0.0
    %4724 = vmatprep.mubr.f32.mxu0 0.0
    %4725 = vmatmul.mubr.f32.gmra.mrb[0].mxu0 %v4637
    %v4726 = vpop.f32.mrb[0].mxu0
    %v4727 = vadd.f32 0.0, %v4726
    %v4728 = vpop.f32.mrb[0].mxu0
    %v4729 = vadd.f32 0.0, %v4728
    %4730 = vmatprep.mubr.f32.mxu0 0.0
    %4731 = vmatmul.mubr.f32.gmra.mrb[0].mxu0 %v4640
    %v4732 = vpop.f32.mrb[0].mxu0
    %v4733 = vadd.f32 0.0, %v4732
    %v4734 = vpop.f32.mrb[0].mxu0
    %v4735 = vadd.f32 0.0, %v4734
    %4736 = vmatprep.mubr.f32.mxu0 0.0
    %4737 = vmatmul.mubr.f32.gmra.mrb[0].mxu0 %v4643
    %v4738 = vpop.f32.mrb[0].mxu0
    %v4739 = vadd.f32 0.0, %v4738
    %v4740 = vpop.f32.mrb[0].mxu0
    %v4741 = vadd.f32 0.0, %v4740
    %4742 = vmatprep.mubr.f32.mxu0 0.0
    %4743 = vmatmul.mubr.f32.gmra.mrb[0].mxu0 %v4646
    %v4744 = vpop.f32.mrb[0].mxu0
    %v4745 = vadd.f32 0.0, %v4744
    %v4746 = vpop.f32.mrb[0].mxu0
    %v4747 = vadd.f32 0.0, %v4746
    %4748 = vmatprep.mubr.f32.mxu0 0.0
    %4749 = vmatmul.mubr.f32.gmra.mrb[0].mxu0 %v4649
    %v4750 = vpop.f32.mrb[0].mxu0
    %v4751 = vadd.f32 0.0, %v4750
    %v4752 = vpop.f32.mrb[0].mxu0
    %v4753 = vadd.f32 0.0, %v4752
    %4754 = vmatprep.mubr.f32.mxu0 0.0
    %4755 = vmatmul.mubr.f32.gmra.mrb[0].mxu0 %v4652
    %v4756 = vpop.f32.mrb[0].mxu0
    %v4757 = vadd.f32 0.0, %v4756
    %v4758 = vpop.f32.mrb[0].mxu0
    %v4759 = vadd.f32 0.0, %v4758
    %4760 = vmatprep.mubr.f32.mxu0 0.0
    %4761 = vmatmul.mubr.f32.gmra.mrb[0].mxu0 %v4655
    %v4762 = vpop.f32.mrb[0].mxu0
    %v4763 = vadd.f32 0.0, %v4762
    %v4764 = vpop.f32.mrb[0].mxu0
    %v4765 = vadd.f32 0.0, %v4764
    %4766 = vmatprep.mubr.f32.mxu0 0.0
    %4767 = vmatmul.mubr.f32.gmra.mrb[0].mxu0 %v4658
    %v4768 = vpop.f32.mrb[0].mxu0
    %v4769 = vadd.f32 0.0, %v4768
    %v4770 = vpop.f32.mrb[0].mxu0
    %v4771 = vadd.f32 0.0, %v4770
    %4772 = vdwg.mxu0
    %4773 = vmatprep.subr.mxu0 0.0
    %4774 = vmatpush1.msra.mxu0 %v4620
    %4775 = vmatprep.subr.mxu0 0.0
    %4776 = vmatpush1.msra.mxu0 %v4623
    %4777 = vmatprep.subr.mxu0 0.0
    %4778 = vmatpush1.msra.mxu0 %v4626
    %4779 = vmatprep.subr.mxu0 0.0
    %4780 = vmatpush1.msra.mxu0 %v4629
    %4781 = vmatprep.subr.mxu0 0.0
    %4782 = vmatpush1.msra.mxu0 %v4632
    %4783 = vmatprep.subr.mxu0 0.0
    %4784 = vmatpush1.msra.mxu0 %v4635
    %4785 = vmatprep.subr.mxu0 0.0
    %4786 = vmatpush1.msra.mxu0 0.0
    %4787 = vmatprep.subr.mxu0 0.0
    %4788 = vmatpush1.msra.mxu0 0.0
    %4789 = vmatprep.subr.mxu0 0.0
    %4790 = vmatpush1.msra.mxu0 0.0
    %4791 = vmatprep.subr.mxu0 0.0
    %4792 = vmatpush1.msra.mxu0 0.0
    %4793 = vmatprep.subr.mxu0 0.0
    %4794 = vmatpush1.msra.mxu0 0.0
    %4795 = vmatprep.subr.mxu0 0.0
    %4796 = vmatpush1.msra.mxu0 0.0
    %4797 = vmatprep.subr.mxu0 0.0
    %4798 = vmatpush1.msra.mxu0 0.0
    %4799 = vmatprep.subr.mxu0 0.0
    %4800 = vmatpush1.msra.mxu0 0.0
    %4801 = vmatprep.subr.mxu0 0.0
    %4802 = vmatpush1.msra.mxu0 0.0
    %4803 = vmatprep.subr.mxu0 0.0
    %4804 = vmatpush1.msra.mxu0 0.0
    %4805 = vmatprep.subr.mxu0 0.0
    %4806 = vmatpush1.msra.mxu0 0.0
    %4807 = vmatprep.subr.mxu0 0.0
    %4808 = vmatpush1.msra.mxu0 0.0
    %4809 = vmatprep.subr.mxu0 0.0
    %4810 = vmatpush1.msra.mxu0 0.0
    %4811 = vmatprep.subr.mxu0 0.0
    %4812 = vmatpush1.msra.mxu0 0.0
    %4813 = vmatprep.subr.mxu0 0.0
    %4814 = vmatpush1.msra.mxu0 0.0
    %4815 = vmatprep.subr.mxu0 0.0
    %4816 = vmatpush1.msra.mxu0 0.0
    %4817 = vmatprep.subr.mxu0 0.0
    %4818 = vmatpush1.msra.mxu0 0.0
    %4819 = vmatprep.subr.mxu0 0.0
    %4820 = vmatpush1.msra.mxu0 0.0
    %4821 = vmatprep.subr.mxu0 0.0
    %4822 = vmatpush1.msra.mxu0 0.0
    %4823 = vmatprep.subr.mxu0 0.0
    %4824 = vmatpush1.msra.mxu0 0.0
    %4825 = vmatprep.subr.mxu0 0.0
    %4826 = vmatpush1.msra.mxu0 0.0
    %4827 = vmatprep.subr.mxu0 0.0
    %4828 = vmatpush1.msra.mxu0 0.0
    %4829 = vmatprep.subr.mxu0 0.0
    %4830 = vmatpush1.msra.mxu0 0.0
    %4831 = vmatprep.subr.mxu0 0.0
    %4832 = vmatpush1.msra.mxu0 0.0
    %4833 = vmatprep.subr.mxu0 0.0
    %4834 = vmatpush1.msra.mxu0 0.0
    %4835 = vmatprep.subr.mxu0 0.0
    %4836 = vmatpush1.msra.mxu0 0.0
    %4837 = vmatprep.mubr.f32.mxu0 0.0
    %4838 = vmatmul.mubr.f32.gmra.mrb[0].mxu0 %v4637
    %v4839 = vpop.f32.mrb[0].mxu0
    %v4840 = vadd.f32 0.0, %v4839
    %v4841 = vpop.f32.mrb[0].mxu0
    %4842 = vmatprep.mubr.f32.mxu0 0.0
    %4843 = vmatmul.mubr.f32.gmra.mrb[0].mxu0 %v4640
    %v4844 = vpop.f32.mrb[0].mxu0
    %v4845 = vadd.f32 0.0, %v4844
    %v4846 = vpop.f32.mrb[0].mxu0
    %4847 = vmatprep.mubr.f32.mxu0 0.0
    %4848 = vmatmul.mubr.f32.gmra.mrb[0].mxu0 %v4643
    %v4849 = vpop.f32.mrb[0].mxu0
    %v4850 = vadd.f32 0.0, %v4849
    %v4851 = vpop.f32.mrb[0].mxu0
    %4852 = vmatprep.mubr.f32.mxu0 0.0
    %4853 = vmatmul.mubr.f32.gmra.mrb[0].mxu0 %v4646
    %v4854 = vpop.f32.mrb[0].mxu0
    %v4855 = vadd.f32 0.0, %v4854
    %v4856 = vpop.f32.mrb[0].mxu0
    %4857 = vmatprep.mubr.f32.mxu0 0.0
    %4858 = vmatmul.mubr.f32.gmra.mrb[0].mxu0 %v4649
    %v4859 = vpop.f32.mrb[0].mxu0
    %v4860 = vadd.f32 0.0, %v4859
    %v4861 = vpop.f32.mrb[0].mxu0
    %4862 = vmatprep.mubr.f32.mxu0 0.0
    %4863 = vmatmul.mubr.f32.gmra.mrb[0].mxu0 %v4652
    %v4864 = vpop.f32.mrb[0].mxu0
    %v4865 = vadd.f32 0.0, %v4864
    %v4866 = vpop.f32.mrb[0].mxu0
    %4867 = vmatprep.mubr.f32.mxu0 0.0
    %4868 = vmatmul.mubr.f32.gmra.mrb[0].mxu0 %v4655
    %v4869 = vpop.f32.mrb[0].mxu0
    %v4870 = vadd.f32 0.0, %v4869
    %v4871 = vpop.f32.mrb[0].mxu0
    %4872 = vmatprep.mubr.f32.mxu0 0.0
    %4873 = vmatmul.mubr.f32.gmra.mrb[0].mxu0 %v4658
    %v4874 = vpop.f32.mrb[0].mxu0
    %v4875 = vadd.f32 0.0, %v4874
    %v4876 = vpop.f32.mrb[0].mxu0
    %4877 = vdwg.mxu0
    %v4878 = vadd.f32 %v4586, %v4727
    %v4879 = vadd.f32 %v4587, %v4729
    %v4880 = vadd.f32 %v4588, %v4840
    %v4881 = vadd.f32 %v4589, %v4733
    %v4882 = vadd.f32 %v4590, %v4735
    %v4883 = vadd.f32 %v4591, %v4845
    %v4884 = vadd.f32 %v4592, %v4739
    %v4885 = vadd.f32 %v4593, %v4741
    %v4886 = vadd.f32 %v4594, %v4850
    %v4887 = vadd.f32 %v4595, %v4745
    %v4888 = vadd.f32 %v4596, %v4747
    %v4889 = vadd.f32 %v4597, %v4855
    %v4890 = vadd.f32 %v4598, %v4751
    %v4891 = vadd.f32 %v4599, %v4753
    %v4892 = vadd.f32 %v4600, %v4860
    %v4893 = vadd.f32 %v4601, %v4757
    %v4894 = vadd.f32 %v4602, %v4759
    %v4895 = vadd.f32 %v4603, %v4865
    %v4896 = vadd.f32 %v4604, %v4763
    %v4897 = vadd.f32 %v4605, %v4765
    %v4898 = vadd.f32 %v4606, %v4870
    %v4899 = vadd.f32 %v4607, %v4769
    %v4900 = vadd.f32 %v4608, %v4771
    %v4901 = vadd.f32 %v4609, %v4875
    %v4902 = vld [vmem:[%s3781 + $0x4] sm:$0xff]
    %v4903 = vld [vmem:[%s3781 + $0xc] sm:$0xff]
    %v4904 = vld [vmem:[%s3781 + $0x14] sm:$0xff]
    %v4905 = vld [vmem:[%s3781 + $0x1c] sm:$0xff]
    %v4906 = vld [vmem:[%s3781 + $0x24] sm:$0xff]
    %v4907 = vld [vmem:[%s3781 + $0x2c] sm:$0xff]
    %v4908 = vld [vmem:[%s3781 + $0x34] sm:$0xff]
    %v4909 = vld [vmem:[%s3781 + $0x3c] sm:$0xf]
    %v4910 = vld [vmem:[%s1211] sm:$0xff]
    %v4911 = vld [vmem:[%s1211 + $0x8] sm:$0xff]
    %v4912 = vld [vmem:[%s1211 + $0x10] sm:$0xff]
    %v4913 = vld [vmem:[%s1211 + $0x18] sm:$0xff]
    %v4914 = vld [vmem:[%s1211 + $0x20] sm:$0xff]
    %v4915 = vld [vmem:[%s1211 + $0x28] sm:$0xff]
    %v4916 = vld [vmem:[%s1211 + $0x30] sm:$0xff]
    %v4917 = vld [vmem:[%s1211 + $0x38] sm:$0xff]
    %v4918 = vld [vmem:[%s1211 + $0x40] sm:$0xff]
    %v4919 = vld [vmem:[%s1211 + $0x48] sm:$0xff]
    %v4920 = vld [vmem:[%s1211 + $0x50] sm:$0xff]
    %v4921 = vld [vmem:[%s1211 + $0x58] sm:$0xff]
    %v4922 = vld [vmem:[%s1211 + $0x60] sm:$0xff]
    %v4923 = vld [vmem:[%s1211 + $0x68] sm:$0xff]
    %v4924 = vld [vmem:[%s1211 + $0x70] sm:$0xff]
    %v4925 = vld [vmem:[%s1211 + $0x78] sm:$0xff]
    %v4926 = vld [vmem:[%s1211 + $0x80] sm:$0xff]
    %v4927 = vld [vmem:[%s1211 + $0x88] sm:$0xff]
    %v4929 = vsel %vm132, %v4902, 0
    %v4932 = vsel %vm132, %v4903, 0
    %v4935 = vsel %vm132, %v4904, 0
    %v4938 = vsel %vm132, %v4905, 0
    %v4941 = vsel %vm132, %v4906, 0
    %v4944 = vsel %vm132, %v4907, 0
    %v4947 = vsel %vm132, %v4908, 0
    %v4950 = vsel %vm132, %v4909, 0
    %4952 = vmatprep.subr.mxu0 %v4911
    %4953 = vmatpush1.msra.mxu0 %v4910
    %4954 = vmatprep.subr.mxu0 %v4914
    %4955 = vmatpush1.msra.mxu0 %v4913
    %4956 = vmatprep.subr.mxu0 %v4917
    %4957 = vmatpush1.msra.mxu0 %v4916
    %4958 = vmatprep.subr.mxu0 %v4920
    %4959 = vmatpush1.msra.mxu0 %v4919
    %4960 = vmatprep.subr.mxu0 %v4923
    %4961 = vmatpush1.msra.mxu0 %v4922
    %4962 = vmatprep.subr.mxu0 %v4926
    %4963 = vmatpush1.msra.mxu0 %v4925
    %4964 = vmatprep.subr.mxu0 0.0
    %4965 = vmatpush1.msra.mxu0 0.0
    %4966 = vmatprep.subr.mxu0 0.0
    %4967 = vmatpush1.msra.mxu0 0.0
    %4968 = vmatprep.subr.mxu0 0.0
    %4969 = vmatpush1.msra.mxu0 0.0
    %4970 = vmatprep.subr.mxu0 0.0
    %4971 = vmatpush1.msra.mxu0 0.0
    %4972 = vmatprep.subr.mxu0 0.0
    %4973 = vmatpush1.msra.mxu0 0.0
    %4974 = vmatprep.subr.mxu0 0.0
    %4975 = vmatpush1.msra.mxu0 0.0
    %4976 = vmatprep.subr.mxu0 0.0
    %4977 = vmatpush1.msra.mxu0 0.0
    %4978 = vmatprep.subr.mxu0 0.0
    %4979 = vmatpush1.msra.mxu0 0.0
    %4980 = vmatprep.subr.mxu0 0.0
    %4981 = vmatpush1.msra.mxu0 0.0
    %4982 = vmatprep.subr.mxu0 0.0
    %4983 = vmatpush1.msra.mxu0 0.0
    %4984 = vmatprep.subr.mxu0 0.0
    %4985 = vmatpush1.msra.mxu0 0.0
    %4986 = vmatprep.subr.mxu0 0.0
    %4987 = vmatpush1.msra.mxu0 0.0
    %4988 = vmatprep.subr.mxu0 0.0
    %4989 = vmatpush1.msra.mxu0 0.0
    %4990 = vmatprep.subr.mxu0 0.0
    %4991 = vmatpush1.msra.mxu0 0.0
    %4992 = vmatprep.subr.mxu0 0.0
    %4993 = vmatpush1.msra.mxu0 0.0
    %4994 = vmatprep.subr.mxu0 0.0
    %4995 = vmatpush1.msra.mxu0 0.0
    %4996 = vmatprep.subr.mxu0 0.0
    %4997 = vmatpush1.msra.mxu0 0.0
    %4998 = vmatprep.subr.mxu0 0.0
    %4999 = vmatpush1.msra.mxu0 0.0
    %5000 = vmatprep.subr.mxu0 0.0
    %5001 = vmatpush1.msra.mxu0 0.0
    %5002 = vmatprep.subr.mxu0 0.0
    %5003 = vmatpush1.msra.mxu0 0.0
    %5004 = vmatprep.subr.mxu0 0.0
    %5005 = vmatpush1.msra.mxu0 0.0
    %5006 = vmatprep.subr.mxu0 0.0
    %5007 = vmatpush1.msra.mxu0 0.0
    %5008 = vmatprep.subr.mxu0 0.0
    %5009 = vmatpush1.msra.mxu0 0.0
    %5010 = vmatprep.subr.mxu0 0.0
    %5011 = vmatpush1.msra.mxu0 0.0
    %5012 = vmatprep.subr.mxu0 0.0
    %5013 = vmatpush1.msra.mxu0 0.0
    %5014 = vmatprep.subr.mxu0 0.0
    %5015 = vmatpush1.msra.mxu0 0.0
    %5016 = vmatprep.mubr.f32.mxu0 0.0
    %5017 = vmatmul.mubr.f32.gmra.mrb[0].mxu0 %v4929
    %v5018 = vpop.f32.mrb[0].mxu0
    %v5019 = vadd.f32 0.0, %v5018
    %v5020 = vpop.f32.mrb[0].mxu0
    %v5021 = vadd.f32 0.0, %v5020
    %5022 = vmatprep.mubr.f32.mxu0 0.0
    %5023 = vmatmul.mubr.f32.gmra.mrb[0].mxu0 %v4932
    %v5024 = vpop.f32.mrb[0].mxu0
    %v5025 = vadd.f32 0.0, %v5024
    %v5026 = vpop.f32.mrb[0].mxu0
    %v5027 = vadd.f32 0.0, %v5026
    %5028 = vmatprep.mubr.f32.mxu0 0.0
    %5029 = vmatmul.mubr.f32.gmra.mrb[0].mxu0 %v4935
    %v5030 = vpop.f32.mrb[0].mxu0
    %v5031 = vadd.f32 0.0, %v5030
    %v5032 = vpop.f32.mrb[0].mxu0
    %v5033 = vadd.f32 0.0, %v5032
    %5034 = vmatprep.mubr.f32.mxu0 0.0
    %5035 = vmatmul.mubr.f32.gmra.mrb[0].mxu0 %v4938
    %v5036 = vpop.f32.mrb[0].mxu0
    %v5037 = vadd.f32 0.0, %v5036
    %v5038 = vpop.f32.mrb[0].mxu0
    %v5039 = vadd.f32 0.0, %v5038
    %5040 = vmatprep.mubr.f32.mxu0 0.0
    %5041 = vmatmul.mubr.f32.gmra.mrb[0].mxu0 %v4941
    %v5042 = vpop.f32.mrb[0].mxu0
    %v5043 = vadd.f32 0.0, %v5042
    %v5044 = vpop.f32.mrb[0].mxu0
    %v5045 = vadd.f32 0.0, %v5044
    %5046 = vmatprep.mubr.f32.mxu0 0.0
    %5047 = vmatmul.mubr.f32.gmra.mrb[0].mxu0 %v4944
    %v5048 = vpop.f32.mrb[0].mxu0
    %v5049 = vadd.f32 0.0, %v5048
    %v5050 = vpop.f32.mrb[0].mxu0
    %v5051 = vadd.f32 0.0, %v5050
    %5052 = vmatprep.mubr.f32.mxu0 0.0
    %5053 = vmatmul.mubr.f32.gmra.mrb[0].mxu0 %v4947
    %v5054 = vpop.f32.mrb[0].mxu0
    %v5055 = vadd.f32 0.0, %v5054
    %v5056 = vpop.f32.mrb[0].mxu0
    %v5057 = vadd.f32 0.0, %v5056
    %5058 = vmatprep.mubr.f32.mxu0 0.0
    %5059 = vmatmul.mubr.f32.gmra.mrb[0].mxu0 %v4950
    %v5060 = vpop.f32.mrb[0].mxu0
    %v5061 = vadd.f32 0.0, %v5060
    %v5062 = vpop.f32.mrb[0].mxu0
    %v5063 = vadd.f32 0.0, %v5062
    %5064 = vdwg.mxu0
    %5065 = vmatprep.subr.mxu0 0.0
    %5066 = vmatpush1.msra.mxu0 %v4912
    %5067 = vmatprep.subr.mxu0 0.0
    %5068 = vmatpush1.msra.mxu0 %v4915
    %5069 = vmatprep.subr.mxu0 0.0
    %5070 = vmatpush1.msra.mxu0 %v4918
    %5071 = vmatprep.subr.mxu0 0.0
    %5072 = vmatpush1.msra.mxu0 %v4921
    %5073 = vmatprep.subr.mxu0 0.0
    %5074 = vmatpush1.msra.mxu0 %v4924
    %5075 = vmatprep.subr.mxu0 0.0
    %5076 = vmatpush1.msra.mxu0 %v4927
    %5077 = vmatprep.subr.mxu0 0.0
    %5078 = vmatpush1.msra.mxu0 0.0
    %5079 = vmatprep.subr.mxu0 0.0
    %5080 = vmatpush1.msra.mxu0 0.0
    %5081 = vmatprep.subr.mxu0 0.0
    %5082 = vmatpush1.msra.mxu0 0.0
    %5083 = vmatprep.subr.mxu0 0.0
    %5084 = vmatpush1.msra.mxu0 0.0
    %5085 = vmatprep.subr.mxu0 0.0
    %5086 = vmatpush1.msra.mxu0 0.0
    %5087 = vmatprep.subr.mxu0 0.0
    %5088 = vmatpush1.msra.mxu0 0.0
    %5089 = vmatprep.subr.mxu0 0.0
    %5090 = vmatpush1.msra.mxu0 0.0
    %5091 = vmatprep.subr.mxu0 0.0
    %5092 = vmatpush1.msra.mxu0 0.0
    %5093 = vmatprep.subr.mxu0 0.0
    %5094 = vmatpush1.msra.mxu0 0.0
    %5095 = vmatprep.subr.mxu0 0.0
    %5096 = vmatpush1.msra.mxu0 0.0
    %5097 = vmatprep.subr.mxu0 0.0
    %5098 = vmatpush1.msra.mxu0 0.0
    %5099 = vmatprep.subr.mxu0 0.0
    %5100 = vmatpush1.msra.mxu0 0.0
    %5101 = vmatprep.subr.mxu0 0.0
    %5102 = vmatpush1.msra.mxu0 0.0
    %5103 = vmatprep.subr.mxu0 0.0
    %5104 = vmatpush1.msra.mxu0 0.0
    %5105 = vmatprep.subr.mxu0 0.0
    %5106 = vmatpush1.msra.mxu0 0.0
    %5107 = vmatprep.subr.mxu0 0.0
    %5108 = vmatpush1.msra.mxu0 0.0
    %5109 = vmatprep.subr.mxu0 0.0
    %5110 = vmatpush1.msra.mxu0 0.0
    %5111 = vmatprep.subr.mxu0 0.0
    %5112 = vmatpush1.msra.mxu0 0.0
    %5113 = vmatprep.subr.mxu0 0.0
    %5114 = vmatpush1.msra.mxu0 0.0
    %5115 = vmatprep.subr.mxu0 0.0
    %5116 = vmatpush1.msra.mxu0 0.0
    %5117 = vmatprep.subr.mxu0 0.0
    %5118 = vmatpush1.msra.mxu0 0.0
    %5119 = vmatprep.subr.mxu0 0.0
    %5120 = vmatpush1.msra.mxu0 0.0
    %5121 = vmatprep.subr.mxu0 0.0
    %5122 = vmatpush1.msra.mxu0 0.0
    %5123 = vmatprep.subr.mxu0 0.0
    %5124 = vmatpush1.msra.mxu0 0.0
    %5125 = vmatprep.subr.mxu0 0.0
    %5126 = vmatpush1.msra.mxu0 0.0
    %5127 = vmatprep.subr.mxu0 0.0
    %5128 = vmatpush1.msra.mxu0 0.0
    %5129 = vmatprep.mubr.f32.mxu0 0.0
    %5130 = vmatmul.mubr.f32.gmra.mrb[0].mxu0 %v4929
    %v5131 = vpop.f32.mrb[0].mxu0
    %v5132 = vadd.f32 0.0, %v5131
    %v5133 = vpop.f32.mrb[0].mxu0
    %5134 = vmatprep.mubr.f32.mxu0 0.0
    %5135 = vmatmul.mubr.f32.gmra.mrb[0].mxu0 %v4932
    %v5136 = vpop.f32.mrb[0].mxu0
    %v5137 = vadd.f32 0.0, %v5136
    %v5138 = vpop.f32.mrb[0].mxu0
    %5139 = vmatprep.mubr.f32.mxu0 0.0
    %5140 = vmatmul.mubr.f32.gmra.mrb[0].mxu0 %v4935
    %v5141 = vpop.f32.mrb[0].mxu0
    %v5142 = vadd.f32 0.0, %v5141
    %v5143 = vpop.f32.mrb[0].mxu0
    %5144 = vmatprep.mubr.f32.mxu0 0.0
    %5145 = vmatmul.mubr.f32.gmra.mrb[0].mxu0 %v4938
    %v5146 = vpop.f32.mrb[0].mxu0
    %v5147 = vadd.f32 0.0, %v5146
    %v5148 = vpop.f32.mrb[0].mxu0
    %5149 = vmatprep.mubr.f32.mxu0 0.0
    %5150 = vmatmul.mubr.f32.gmra.mrb[0].mxu0 %v4941
    %v5151 = vpop.f32.mrb[0].mxu0
    %v5152 = vadd.f32 0.0, %v5151
    %v5153 = vpop.f32.mrb[0].mxu0
    %5154 = vmatprep.mubr.f32.mxu0 0.0
    %5155 = vmatmul.mubr.f32.gmra.mrb[0].mxu0 %v4944
    %v5156 = vpop.f32.mrb[0].mxu0
    %v5157 = vadd.f32 0.0, %v5156
    %v5158 = vpop.f32.mrb[0].mxu0
    %5159 = vmatprep.mubr.f32.mxu0 0.0
    %5160 = vmatmul.mubr.f32.gmra.mrb[0].mxu0 %v4947
    %v5161 = vpop.f32.mrb[0].mxu0
    %v5162 = vadd.f32 0.0, %v5161
    %v5163 = vpop.f32.mrb[0].mxu0
    %5164 = vmatprep.mubr.f32.mxu0 0.0
    %5165 = vmatmul.mubr.f32.gmra.mrb[0].mxu0 %v4950
    %v5166 = vpop.f32.mrb[0].mxu0
    %v5167 = vadd.f32 0.0, %v5166
    %v5168 = vpop.f32.mrb[0].mxu0
    %5169 = vdwg.mxu0
    %v5170 = vadd.f32 %v4878, %v5019
    %v5171 = vadd.f32 %v4879, %v5021
    %v5172 = vadd.f32 %v4880, %v5132
    %v5173 = vadd.f32 %v4881, %v5025
    %v5174 = vadd.f32 %v4882, %v5027
    %v5175 = vadd.f32 %v4883, %v5137
    %v5176 = vadd.f32 %v4884, %v5031
    %v5177 = vadd.f32 %v4885, %v5033
    %v5178 = vadd.f32 %v4886, %v5142
    %v5179 = vadd.f32 %v4887, %v5037
    %v5180 = vadd.f32 %v4888, %v5039
    %v5181 = vadd.f32 %v4889, %v5147
    %v5182 = vadd.f32 %v4890, %v5043
    %v5183 = vadd.f32 %v4891, %v5045
    %v5184 = vadd.f32 %v4892, %v5152
    %v5185 = vadd.f32 %v4893, %v5049
    %v5186 = vadd.f32 %v4894, %v5051
    %v5187 = vadd.f32 %v4895, %v5157
    %v5188 = vadd.f32 %v4896, %v5055
    %v5189 = vadd.f32 %v4897, %v5057
    %v5190 = vadd.f32 %v4898, %v5162
    %v5191 = vadd.f32 %v4899, %v5061
    %v5192 = vadd.f32 %v4900, %v5063
    %v5193 = vadd.f32 %v4901, %v5167
    %v5194 = vld [vmem:[%s2] sm:$0x7]
    %v5196 = vlaneseq
    %v5197 = vshrl.u32 %v5196, 7
    %v5198 = vsub.s32 0, %v5197
    %v5199 = vrot.slane %v5194, %v5198
    %v5200 = vlaneseq
    %v5201 = vshrl.u32 %v5200, 7
    %v5202 = vsub.s32 1, %v5201
    %v5203 = vrot.slane %v5194, %v5202
    %v5204 = vlaneseq
    %v5205 = vshrl.u32 %v5204, 7
    %v5206 = vsub.s32 2, %v5205
    %v5207 = vrot.slane %v5194, %v5206
    %v5211 = vadd.f32 %v5170, %v5199
    %v5212 = vadd.f32 %v5171, %v5203
    %v5213 = vadd.f32 %v5172, %v5207
    %v5214 = vadd.f32 %v5173, %v5199
    %v5215 = vadd.f32 %v5174, %v5203
    %v5216 = vadd.f32 %v5175, %v5207
    %v5217 = vadd.f32 %v5176, %v5199
    %v5218 = vadd.f32 %v5177, %v5203
    %v5219 = vadd.f32 %v5178, %v5207
    %v5220 = vadd.f32 %v5179, %v5199
    %v5221 = vadd.f32 %v5180, %v5203
    %v5222 = vadd.f32 %v5181, %v5207
    %v5223 = vadd.f32 %v5182, %v5199
    %v5224 = vadd.f32 %v5183, %v5203
    %v5225 = vadd.f32 %v5184, %v5207
    %v5226 = vadd.f32 %v5185, %v5199
    %v5227 = vadd.f32 %v5186, %v5203
    %v5228 = vadd.f32 %v5187, %v5207
    %v5229 = vadd.f32 %v5188, %v5199
    %v5230 = vadd.f32 %v5189, %v5203
    %v5231 = vadd.f32 %v5190, %v5207
    %v5232 = vadd.f32 %v5191, %v5199
    %v5233 = vadd.f32 %v5192, %v5203
    %v5234 = vadd.f32 %v5193, %v5207
    %v5235 = vtanh.pop %v5211
    %v5236 = vtanh.pop %v5212
    %v5237 = vtanh.pop %v5213
    %v5238 = vtanh.pop %v5214
    %v5239 = vtanh.pop %v5215
    %v5240 = vtanh.pop %v5216
    %v5241 = vtanh.pop %v5217
    %v5242 = vtanh.pop %v5218
    %v5243 = vtanh.pop %v5219
    %v5244 = vtanh.pop %v5220
    %v5245 = vtanh.pop %v5221
    %v5246 = vtanh.pop %v5222
    %v5247 = vtanh.pop %v5223
    %v5248 = vtanh.pop %v5224
    %v5249 = vtanh.pop %v5225
    %v5250 = vtanh.pop %v5226
    %v5251 = vtanh.pop %v5227
    %v5252 = vtanh.pop %v5228
    %v5253 = vtanh.pop %v5229
    %v5254 = vtanh.pop %v5230
    %v5255 = vtanh.pop %v5231
    %v5256 = vtanh.pop %v5232
    %v5257 = vtanh.pop %v5233
    %v5258 = vtanh.pop %v5234
    %v5259 = vld [vmem:[%s3] sm:$0xff]
    %v5260 = vld [vmem:[%s3 + $0x8] sm:$0xff]
    %v5261 = vld [vmem:[%s3 + $0x10] sm:$0xff]
    %v5262 = vld [vmem:[%s3 + $0x18] sm:$0x3f]
    %v5263 = vld [vmem:[%s4] sm:$0xff]
    %v5264 = vld [vmem:[%s4 + $0x8] sm:$0xff]
    %v5265 = vld [vmem:[%s4 + $0x10] sm:$0xff]
    %v5266 = vld [vmem:[%s4 + $0x18] sm:$0xff]
    %v5267 = vld [vmem:[%s4 + $0x20] sm:$0xff]
    %v5268 = vld [vmem:[%s4 + $0x28] sm:$0xff]
    %v5269 = vld [vmem:[%s4 + $0x30] sm:$0xff]
    %v5270 = vld [vmem:[%s4 + $0x38] sm:$0xff]
    %v5271 = vld [vmem:[%s4 + $0x40] sm:$0xff]
    %v5272 = vld [vmem:[%s4 + $0x48] sm:$0xff]
    %v5273 = vld [vmem:[%s4 + $0x50] sm:$0xff]
    %v5274 = vld [vmem:[%s4 + $0x58] sm:$0xff]
    %v5275 = vld [vmem:[%s4 + $0x60] sm:$0xff]
    %v5276 = vld [vmem:[%s4 + $0x68] sm:$0xff]
    %v5277 = vld [vmem:[%s4 + $0x70] sm:$0xff]
    %v5278 = vld [vmem:[%s4 + $0x78] sm:$0xff]
    %v5279 = vld [vmem:[%s4 + $0x80] sm:$0xff]
    %v5280 = vld [vmem:[%s4 + $0x88] sm:$0xff]
    %v5281 = vld [vmem:[%s4 + $0x90] sm:$0xff]
    %v5282 = vld [vmem:[%s4 + $0x98] sm:$0xff]
    %v5283 = vld [vmem:[%s4 + $0xa0] sm:$0xff]
    %v5284 = vld [vmem:[%s4 + $0xa8] sm:$0xff]
    %v5285 = vld [vmem:[%s4 + $0xb0] sm:$0xff]
    %v5286 = vld [vmem:[%s4 + $0xb8] sm:$0xff]
    %v5287 = vld [vmem:[%s4 + $0xc0] sm:$0xff]
    %v5288 = vld [vmem:[%s4 + $0xc8] sm:$0xff]
    %v5289 = vld [vmem:[%s4 + $0xd0] sm:$0xff]
    %v5290 = vld [vmem:[%s4 + $0xd8] sm:$0xff]
    %v5291 = vld [vmem:[%s4 + $0xe0] sm:$0xff]
    %v5292 = vld [vmem:[%s4 + $0xe8] sm:$0xff]
    %v5293 = vld [vmem:[%s4 + $0xf0] sm:$0xff]
    %v5294 = vld [vmem:[%s4 + $0xf8] sm:$0xff]
    %v5295 = vld [vmem:[%s4 + $0x100] sm:$0xff]
    %v5296 = vld [vmem:[%s4 + $0x108] sm:$0xff]
    %v5297 = vld [vmem:[%s4 + $0x110] sm:$0xff]
    %v5298 = vld [vmem:[%s4 + $0x118] sm:$0xff]
    %v5299 = vld [vmem:[%s4 + $0x120] sm:$0xff]
    %v5300 = vld [vmem:[%s4 + $0x128] sm:$0xff]
    %v5301 = vld [vmem:[%s4 + $0x130] sm:$0xff]
    %v5302 = vld [vmem:[%s4 + $0x138] sm:$0xff]
    %v5303 = vld [vmem:[%s4 + $0x140] sm:$0xff]
    %v5304 = vld [vmem:[%s4 + $0x148] sm:$0xff]
    %v5305 = vld [vmem:[%s4 + $0x150] sm:$0xff]
    %v5306 = vld [vmem:[%s4 + $0x158] sm:$0xff]
    %v5307 = vld [vmem:[%s4 + $0x160] sm:$0xff]
    %v5308 = vld [vmem:[%s4 + $0x168] sm:$0xff]
    %v5309 = vld [vmem:[%s4 + $0x170] sm:$0xff]
    %v5310 = vld [vmem:[%s4 + $0x178] sm:$0xff]
    %v5311 = vld [vmem:[%s4 + $0x180] sm:$0xff]
    %v5312 = vld [vmem:[%s4 + $0x188] sm:$0xff]
    %v5313 = vld [vmem:[%s4 + $0x190] sm:$0xff]
    %v5314 = vld [vmem:[%s4 + $0x198] sm:$0xff]
    %v5315 = vld [vmem:[%s4 + $0x1a0] sm:$0xff]
    %v5316 = vld [vmem:[%s4 + $0x1a8] sm:$0xff]
    %v5317 = vld [vmem:[%s4 + $0x1b0] sm:$0xff]
    %v5318 = vld [vmem:[%s4 + $0x1b8] sm:$0xff]
    %v5319 = vld [vmem:[%s4 + $0x1c0] sm:$0xff]
    %v5320 = vld [vmem:[%s4 + $0x1c8] sm:$0xff]
    %v5321 = vld [vmem:[%s4 + $0x1d0] sm:$0xff]
    %v5322 = vld [vmem:[%s4 + $0x1d8] sm:$0xff]
    %v5323 = vld [vmem:[%s4 + $0x1e0] sm:$0xff]
    %v5324 = vld [vmem:[%s4 + $0x1e8] sm:$0xff]
    %v5325 = vld [vmem:[%s4 + $0x1f0] sm:$0xff]
    %v5326 = vld [vmem:[%s4 + $0x1f8] sm:$0xff]
    %v5327 = vld [vmem:[%s4 + $0x200] sm:$0xff]
    %v5328 = vld [vmem:[%s4 + $0x208] sm:$0xff]
    %v5330 = vsel %vm1631, %v5237, 0
    %v5333 = vsel %vm1631, %v5240, 0
    %v5336 = vsel %vm1631, %v5243, 0
    %v5339 = vsel %vm1631, %v5246, 0
    %v5342 = vsel %vm1631, %v5249, 0
    %v5345 = vsel %vm1631, %v5252, 0
    %v5348 = vsel %vm1631, %v5255, 0
    %v5351 = vsel %vm1631, %v5258, 0
    %5353 = vmatprep.subr.mxu0 %v5264
    %5354 = vmatpush1.msra.mxu0 %v5263
    %5355 = vmatprep.subr.mxu0 %v5266
    %5356 = vmatpush1.msra.mxu0 %v5265
    %5357 = vmatprep.subr.mxu0 %v5268
    %5358 = vmatpush1.msra.mxu0 %v5267
    %5359 = vmatprep.subr.mxu0 %v5270
    %5360 = vmatpush1.msra.mxu0 %v5269
    %5361 = vmatprep.subr.mxu0 %v5272
    %5362 = vmatpush1.msra.mxu0 %v5271
    %5363 = vmatprep.subr.mxu0 %v5274
    %5364 = vmatpush1.msra.mxu0 %v5273
    %5365 = vmatprep.subr.mxu0 %v5276
    %5366 = vmatpush1.msra.mxu0 %v5275
    %5367 = vmatprep.subr.mxu0 %v5278
    %5368 = vmatpush1.msra.mxu0 %v5277
    %5369 = vmatprep.subr.mxu0 %v5280
    %5370 = vmatpush1.msra.mxu0 %v5279
    %5371 = vmatprep.subr.mxu0 %v5282
    %5372 = vmatpush1.msra.mxu0 %v5281
    %5373 = vmatprep.subr.mxu0 %v5284
    %5374 = vmatpush1.msra.mxu0 %v5283
    %5375 = vmatprep.subr.mxu0 %v5286
    %5376 = vmatpush1.msra.mxu0 %v5285
    %5377 = vmatprep.subr.mxu0 %v5288
    %5378 = vmatpush1.msra.mxu0 %v5287
    %5379 = vmatprep.subr.mxu0 %v5290
    %5380 = vmatpush1.msra.mxu0 %v5289
    %5381 = vmatprep.subr.mxu0 %v5292
    %5382 = vmatpush1.msra.mxu0 %v5291
    %5383 = vmatprep.subr.mxu0 %v5294
    %5384 = vmatpush1.msra.mxu0 %v5293
    %5385 = vmatprep.subr.mxu0 %v5296
    %5386 = vmatpush1.msra.mxu0 %v5295
    %5387 = vmatprep.subr.mxu0 %v5298
    %5388 = vmatpush1.msra.mxu0 %v5297
    %5389 = vmatprep.subr.mxu0 %v5300
    %5390 = vmatpush1.msra.mxu0 %v5299
    %5391 = vmatprep.subr.mxu0 %v5302
    %5392 = vmatpush1.msra.mxu0 %v5301
    %5393 = vmatprep.subr.mxu0 %v5304
    %5394 = vmatpush1.msra.mxu0 %v5303
    %5395 = vmatprep.subr.mxu0 %v5306
    %5396 = vmatpush1.msra.mxu0 %v5305
    %5397 = vmatprep.subr.mxu0 %v5308
    %5398 = vmatpush1.msra.mxu0 %v5307
    %5399 = vmatprep.subr.mxu0 %v5310
    %5400 = vmatpush1.msra.mxu0 %v5309
    %5401 = vmatprep.subr.mxu0 %v5312
    %5402 = vmatpush1.msra.mxu0 %v5311
    %5403 = vmatprep.subr.mxu0 %v5314
    %5404 = vmatpush1.msra.mxu0 %v5313
    %5405 = vmatprep.subr.mxu0 %v5316
    %5406 = vmatpush1.msra.mxu0 %v5315
    %5407 = vmatprep.subr.mxu0 %v5318
    %5408 = vmatpush1.msra.mxu0 %v5317
    %5409 = vmatprep.subr.mxu0 %v5320
    %5410 = vmatpush1.msra.mxu0 %v5319
    %5411 = vmatprep.subr.mxu0 %v5322
    %5412 = vmatpush1.msra.mxu0 %v5321
    %5413 = vmatprep.subr.mxu0 %v5324
    %5414 = vmatpush1.msra.mxu0 %v5323
    %5415 = vmatprep.subr.mxu0 %v5326
    %5416 = vmatpush1.msra.mxu0 %v5325
    %5417 = vmatprep.mubr.f32.mxu0 %v5236
    %5418 = vmatmul.mubr.f32.gmra.mrb[0].mxu0 %v5235
    %v5419 = vpop.f32.mrb[0].mxu0
    %v5420 = vadd.f32 0.0, %v5419
    %v5421 = vpop.f32.mrb[0].mxu0
    %v5422 = vadd.f32 0.0, %v5421
    %5423 = vmatprep.mubr.f32.mxu0 %v5239
    %5424 = vmatmul.mubr.f32.gmra.mrb[0].mxu0 %v5238
    %v5425 = vpop.f32.mrb[0].mxu0
    %v5426 = vadd.f32 0.0, %v5425
    %v5427 = vpop.f32.mrb[0].mxu0
    %v5428 = vadd.f32 0.0, %v5427
    %5429 = vmatprep.mubr.f32.mxu0 %v5242
    %5430 = vmatmul.mubr.f32.gmra.mrb[0].mxu0 %v5241
    %v5431 = vpop.f32.mrb[0].mxu0
    %v5432 = vadd.f32 0.0, %v5431
    %v5433 = vpop.f32.mrb[0].mxu0
    %v5434 = vadd.f32 0.0, %v5433
    %5435 = vmatprep.mubr.f32.mxu0 %v5245
    %5436 = vmatmul.mubr.f32.gmra.mrb[0].mxu0 %v5244
    %v5437 = vpop.f32.mrb[0].mxu0
    %v5438 = vadd.f32 0.0, %v5437
    %v5439 = vpop.f32.mrb[0].mxu0
    %v5440 = vadd.f32 0.0, %v5439
    %5441 = vmatprep.mubr.f32.mxu0 %v5248
    %5442 = vmatmul.mubr.f32.gmra.mrb[0].mxu0 %v5247
    %v5443 = vpop.f32.mrb[0].mxu0
    %v5444 = vadd.f32 0.0, %v5443
    %v5445 = vpop.f32.mrb[0].mxu0
    %v5446 = vadd.f32 0.0, %v5445
    %5447 = vmatprep.mubr.f32.mxu0 %v5251
    %5448 = vmatmul.mubr.f32.gmra.mrb[0].mxu0 %v5250
    %v5449 = vpop.f32.mrb[0].mxu0
    %v5450 = vadd.f32 0.0, %v5449
    %v5451 = vpop.f32.mrb[0].mxu0
    %v5452 = vadd.f32 0.0, %v5451
    %5453 = vmatprep.mubr.f32.mxu0 %v5254
    %5454 = vmatmul.mubr.f32.gmra.mrb[0].mxu0 %v5253
    %v5455 = vpop.f32.mrb[0].mxu0
    %v5456 = vadd.f32 0.0, %v5455
    %v5457 = vpop.f32.mrb[0].mxu0
    %v5458 = vadd.f32 0.0, %v5457
    %5459 = vmatprep.mubr.f32.mxu0 %v5257
    %5460 = vmatmul.mubr.f32.gmra.mrb[0].mxu0 %v5256
    %v5461 = vpop.f32.mrb[0].mxu0
    %v5462 = vadd.f32 0.0, %v5461
    %v5463 = vpop.f32.mrb[0].mxu0
    %v5464 = vadd.f32 0.0, %v5463
    %5465 = vdwg.mxu0
    %5466 = vmatprep.subr.mxu0 %v5328
    %5467 = vmatpush1.msra.mxu0 %v5327
    %5468 = vmatprep.subr.mxu0 0.0
    %5469 = vmatpush1.msra.mxu0 0.0
    %5470 = vmatprep.subr.mxu0 0.0
    %5471 = vmatpush1.msra.mxu0 0.0
    %5472 = vmatprep.subr.mxu0 0.0
    %5473 = vmatpush1.msra.mxu0 0.0
    %5474 = vmatprep.subr.mxu0 0.0
    %5475 = vmatpush1.msra.mxu0 0.0
    %5476 = vmatprep.subr.mxu0 0.0
    %5477 = vmatpush1.msra.mxu0 0.0
    %5478 = vmatprep.subr.mxu0 0.0
    %5479 = vmatpush1.msra.mxu0 0.0
    %5480 = vmatprep.subr.mxu0 0.0
    %5481 = vmatpush1.msra.mxu0 0.0
    %5482 = vmatprep.subr.mxu0 0.0
    %5483 = vmatpush1.msra.mxu0 0.0
    %5484 = vmatprep.subr.mxu0 0.0
    %5485 = vmatpush1.msra.mxu0 0.0
    %5486 = vmatprep.subr.mxu0 0.0
    %5487 = vmatpush1.msra.mxu0 0.0
    %5488 = vmatprep.subr.mxu0 0.0
    %5489 = vmatpush1.msra.mxu0 0.0
    %5490 = vmatprep.subr.mxu0 0.0
    %5491 = vmatpush1.msra.mxu0 0.0
    %5492 = vmatprep.subr.mxu0 0.0
    %5493 = vmatpush1.msra.mxu0 0.0
    %5494 = vmatprep.subr.mxu0 0.0
    %5495 = vmatpush1.msra.mxu0 0.0
    %5496 = vmatprep.subr.mxu0 0.0
    %5497 = vmatpush1.msra.mxu0 0.0
    %5498 = vmatprep.subr.mxu0 0.0
    %5499 = vmatpush1.msra.mxu0 0.0
    %5500 = vmatprep.subr.mxu0 0.0
    %5501 = vmatpush1.msra.mxu0 0.0
    %5502 = vmatprep.subr.mxu0 0.0
    %5503 = vmatpush1.msra.mxu0 0.0
    %5504 = vmatprep.subr.mxu0 0.0
    %5505 = vmatpush1.msra.mxu0 0.0
    %5506 = vmatprep.subr.mxu0 0.0
    %5507 = vmatpush1.msra.mxu0 0.0
    %5508 = vmatprep.subr.mxu0 0.0
    %5509 = vmatpush1.msra.mxu0 0.0
    %5510 = vmatprep.subr.mxu0 0.0
    %5511 = vmatpush1.msra.mxu0 0.0
    %5512 = vmatprep.subr.mxu0 0.0
    %5513 = vmatpush1.msra.mxu0 0.0
    %5514 = vmatprep.subr.mxu0 0.0
    %5515 = vmatpush1.msra.mxu0 0.0
    %5516 = vmatprep.subr.mxu0 0.0
    %5517 = vmatpush1.msra.mxu0 0.0
    %5518 = vmatprep.subr.mxu0 0.0
    %5519 = vmatpush1.msra.mxu0 0.0
    %5520 = vmatprep.subr.mxu0 0.0
    %5521 = vmatpush1.msra.mxu0 0.0
    %5522 = vmatprep.subr.mxu0 0.0
    %5523 = vmatpush1.msra.mxu0 0.0
    %5524 = vmatprep.subr.mxu0 0.0
    %5525 = vmatpush1.msra.mxu0 0.0
    %5526 = vmatprep.subr.mxu0 0.0
    %5527 = vmatpush1.msra.mxu0 0.0
    %5528 = vmatprep.subr.mxu0 0.0
    %5529 = vmatpush1.msra.mxu0 0.0
    %5530 = vmatprep.mubr.f32.mxu0 0.0
    %5531 = vmatmul.mubr.f32.gmra.mrb[0].mxu0 %v5330
    %v5532 = vpop.f32.mrb[0].mxu0
    %v5533 = vadd.f32 %v5420, %v5532
    %v5534 = vpop.f32.mrb[0].mxu0
    %v5535 = vadd.f32 %v5422, %v5534
    %5536 = vmatprep.mubr.f32.mxu0 0.0
    %5537 = vmatmul.mubr.f32.gmra.mrb[0].mxu0 %v5333
    %v5538 = vpop.f32.mrb[0].mxu0
    %v5539 = vadd.f32 %v5426, %v5538
    %v5540 = vpop.f32.mrb[0].mxu0
    %v5541 = vadd.f32 %v5428, %v5540
    %5542 = vmatprep.mubr.f32.mxu0 0.0
    %5543 = vmatmul.mubr.f32.gmra.mrb[0].mxu0 %v5336
    %v5544 = vpop.f32.mrb[0].mxu0
    %v5545 = vadd.f32 %v5432, %v5544
    %v5546 = vpop.f32.mrb[0].mxu0
    %v5547 = vadd.f32 %v5434, %v5546
    %5548 = vmatprep.mubr.f32.mxu0 0.0
    %5549 = vmatmul.mubr.f32.gmra.mrb[0].mxu0 %v5339
    %v5550 = vpop.f32.mrb[0].mxu0
    %v5551 = vadd.f32 %v5438, %v5550
    %v5552 = vpop.f32.mrb[0].mxu0
    %v5553 = vadd.f32 %v5440, %v5552
    %5554 = vmatprep.mubr.f32.mxu0 0.0
    %5555 = vmatmul.mubr.f32.gmra.mrb[0].mxu0 %v5342
    %v5556 = vpop.f32.mrb[0].mxu0
    %v5557 = vadd.f32 %v5444, %v5556
    %v5558 = vpop.f32.mrb[0].mxu0
    %v5559 = vadd.f32 %v5446, %v5558
    %5560 = vmatprep.mubr.f32.mxu0 0.0
    %5561 = vmatmul.mubr.f32.gmra.mrb[0].mxu0 %v5345
    %v5562 = vpop.f32.mrb[0].mxu0
    %v5563 = vadd.f32 %v5450, %v5562
    %v5564 = vpop.f32.mrb[0].mxu0
    %v5565 = vadd.f32 %v5452, %v5564
    %5566 = vmatprep.mubr.f32.mxu0 0.0
    %5567 = vmatmul.mubr.f32.gmra.mrb[0].mxu0 %v5348
    %v5568 = vpop.f32.mrb[0].mxu0
    %v5569 = vadd.f32 %v5456, %v5568
    %v5570 = vpop.f32.mrb[0].mxu0
    %v5571 = vadd.f32 %v5458, %v5570
    %5572 = vmatprep.mubr.f32.mxu0 0.0
    %5573 = vmatmul.mubr.f32.gmra.mrb[0].mxu0 %v5351
    %v5574 = vpop.f32.mrb[0].mxu0
    %v5575 = vadd.f32 %v5462, %v5574
    %v5576 = vpop.f32.mrb[0].mxu0
    %v5577 = vadd.f32 %v5464, %v5576
    %5578 = vdwg.mxu0
    %v5580 = vsel %vm1882, %v5259, 0
    %v5583 = vsel %vm1882, %v5260, 0
    %v5586 = vsel %vm1882, %v5261, 0
    %v5589 = vsel %vm1882, %v5262, 0
    %v5592 = vsel %vm1895, %v5575, 0
    %v5595 = vsel %vm1895, %v5577, 0
    %5597 = vmatprep.subr.mxu0 %v5535
    %5598 = vmatpush1.msra.mxu0 %v5533
    %5599 = vmatprep.subr.mxu0 %v5541
    %5600 = vmatpush1.msra.mxu0 %v5539
    %5601 = vmatprep.subr.mxu0 %v5547
    %5602 = vmatpush1.msra.mxu0 %v5545
    %5603 = vmatprep.subr.mxu0 %v5553
    %5604 = vmatpush1.msra.mxu0 %v5551
    %5605 = vmatprep.subr.mxu0 %v5559
    %5606 = vmatpush1.msra.mxu0 %v5557
    %5607 = vmatprep.subr.mxu0 %v5565
    %5608 = vmatpush1.msra.mxu0 %v5563
    %5609 = vmatprep.subr.mxu0 %v5571
    %5610 = vmatpush1.msra.mxu0 %v5569
    %5611 = vmatprep.subr.mxu0 %v5595
    %5612 = vmatpush1.msra.mxu0 %v5592
    %5613 = vmatprep.subr.mxu0 0.0
    %5614 = vmatpush1.msra.mxu0 0.0
    %5615 = vmatprep.subr.mxu0 0.0
    %5616 = vmatpush1.msra.mxu0 0.0
    %5617 = vmatprep.subr.mxu0 0.0
    %5618 = vmatpush1.msra.mxu0 0.0
    %5619 = vmatprep.subr.mxu0 0.0
    %5620 = vmatpush1.msra.mxu0 0.0
    %5621 = vmatprep.subr.mxu0 0.0
    %5622 = vmatpush1.msra.mxu0 0.0
    %5623 = vmatprep.subr.mxu0 0.0
    %5624 = vmatpush1.msra.mxu0 0.0
    %5625 = vmatprep.subr.mxu0 0.0
    %5626 = vmatpush1.msra.mxu0 0.0
    %5627 = vmatprep.subr.mxu0 0.0
    %5628 = vmatpush1.msra.mxu0 0.0
    %5629 = vmatprep.subr.mxu0 0.0
    %5630 = vmatpush1.msra.mxu0 0.0
    %5631 = vmatprep.subr.mxu0 0.0
    %5632 = vmatpush1.msra.mxu0 0.0
    %5633 = vmatprep.subr.mxu0 0.0
    %5634 = vmatpush1.msra.mxu0 0.0
    %5635 = vmatprep.subr.mxu0 0.0
    %5636 = vmatpush1.msra.mxu0 0.0
    %5637 = vmatprep.subr.mxu0 0.0
    %5638 = vmatpush1.msra.mxu0 0.0
    %5639 = vmatprep.subr.mxu0 0.0
    %5640 = vmatpush1.msra.mxu0 0.0
    %5641 = vmatprep.subr.mxu0 0.0
    %5642 = vmatpush1.msra.mxu0 0.0
    %5643 = vmatprep.subr.mxu0 0.0
    %5644 = vmatpush1.msra.mxu0 0.0
    %5645 = vmatprep.subr.mxu0 0.0
    %5646 = vmatpush1.msra.mxu0 0.0
    %5647 = vmatprep.subr.mxu0 0.0
    %5648 = vmatpush1.msra.mxu0 0.0
    %5649 = vmatprep.subr.mxu0 0.0
    %5650 = vmatpush1.msra.mxu0 0.0
    %5651 = vmatprep.subr.mxu0 0.0
    %5652 = vmatpush1.msra.mxu0 0.0
    %5653 = vmatprep.subr.mxu0 0.0
    %5654 = vmatpush1.msra.mxu0 0.0
    %5655 = vmatprep.subr.mxu0 0.0
    %5656 = vmatpush1.msra.mxu0 0.0
    %5657 = vmatprep.subr.mxu0 0.0
    %5658 = vmatpush1.msra.mxu0 0.0
    %5659 = vmatprep.subr.mxu0 0.0
    %5660 = vmatpush1.msra.mxu0 0.0
    %5661 = vmatprep.mubr.f32.mxu0 0.0
    %5662 = vmatmul.mubr.f32.gmra.mrb[0].mxu0 %v5580
    %v5663 = vpop.f32.mrb[0].mxu0
    %v5664 = vadd.f32 0.0, %v5663
    %v5665 = vpop.f32.mrb[0].mxu0
    %v5666 = vadd.f32 0.0, %v5665
    %5667 = vmatprep.mubr.f32.mxu0 0.0
    %5668 = vmatmul.mubr.f32.gmra.mrb[0].mxu0 %v5583
    %v5669 = vpop.f32.mrb[0].mxu0
    %v5670 = vadd.f32 0.0, %v5669
    %v5671 = vpop.f32.mrb[0].mxu0
    %v5672 = vadd.f32 0.0, %v5671
    %5673 = vmatprep.mubr.f32.mxu0 0.0
    %5674 = vmatmul.mubr.f32.gmra.mrb[0].mxu0 %v5586
    %v5675 = vpop.f32.mrb[0].mxu0
    %v5676 = vadd.f32 0.0, %v5675
    %v5677 = vpop.f32.mrb[0].mxu0
    %v5678 = vadd.f32 0.0, %v5677
    %5679 = vmatprep.mubr.f32.mxu0 0.0
    %5680 = vmatmul.mubr.f32.gmra.mrb[0].mxu0 %v5589
    %v5681 = vpop.f32.mrb[0].mxu0
    %v5682 = vadd.f32 0.0, %v5681
    %v5683 = vpop.f32.mrb[0].mxu0
    %v5684 = vadd.f32 0.0, %v5683
    %5685 = vdwg.mxu0
    %v5686 = vmul.f32 %v5664, 0.25
    %v5687 = vmul.f32 %v5666, 0.25
    %v5688 = vmul.f32 %v5670, 0.25
    %v5689 = vmul.f32 %v5672, 0.25
    %v5690 = vmul.f32 %v5676, 0.25
    %v5691 = vmul.f32 %v5678, 0.25
    %v5692 = vmul.f32 %v5682, 0.25
    %v5693 = vmul.f32 %v5684, 0.25
    %5694 = vst [vmem:[#allocation2] sm:$0xff] %v5686
    %5695 = vst.msk [vmem:[#allocation2 + $0x8] sm:$0xff] %vm2000, %v5687
    %5696 = vst [vmem:[#allocation2 + $0x10] sm:$0xff] %v5688
    %5697 = vst.msk [vmem:[#allocation2 + $0x18] sm:$0xff] %vm2000, %v5689
    %5698 = vst [vmem:[#allocation2 + $0x20] sm:$0xff] %v5690
    %5699 = vst.msk [vmem:[#allocation2 + $0x28] sm:$0xff] %vm2000, %v5691
    %5700 = vst [vmem:[#allocation2 + $0x30] sm:$0x3f] %v5692
    %5701 = vst.msk [vmem:[#allocation2 + $0x38] sm:$0x3f] %vm2007, %v5693
    %v5702 = vld [vmem:[#allocation2] sm:$0xff]
    %v5703 = vld [vmem:[#allocation2 + $0x8] sm:$0xff]
    %v5704 = vld [vmem:[#allocation2 + $0x10] sm:$0xff]
    %v5705 = vld [vmem:[#allocation2 + $0x18] sm:$0xff]
    %v5706 = vld [vmem:[#allocation2 + $0x20] sm:$0xff]
    %v5707 = vld [vmem:[#allocation2 + $0x28] sm:$0xff]
    %v5708 = vld [vmem:[#allocation2 + $0x30] sm:$0x3]
    %v5709 = vld [vmem:[#allocation2 + $0x38] sm:$0x3]
    %v5710 = vld [vmem:[%s5] sm:$0xff]
    %v5711 = vld [vmem:[%s5 + $0x8] sm:$0xff]
    %v5712 = vld [vmem:[%s5 + $0x10] sm:$0xff]
    %v5713 = vld [vmem:[%s5 + $0x18] sm:$0xff]
    %v5714 = vld [vmem:[%s5 + $0x20] sm:$0xff]
    %v5715 = vld [vmem:[%s5 + $0x28] sm:$0xff]
    %v5716 = vld [vmem:[%s5 + $0x30] sm:$0xff]
    %v5717 = vld [vmem:[%s5 + $0x38] sm:$0xff]
    %v5718 = vld [vmem:[%s5 + $0x40] sm:$0xff]
    %v5719 = vld [vmem:[%s5 + $0x48] sm:$0xff]
    %v5720 = vld [vmem:[%s5 + $0x50] sm:$0xff]
    %v5721 = vld [vmem:[%s5 + $0x58] sm:$0xff]
    %v5722 = vld [vmem:[%s5 + $0x60] sm:$0xff]
    %v5723 = vld [vmem:[%s5 + $0x68] sm:$0xff]
    %v5724 = vld [vmem:[%s5 + $0x70] sm:$0xff]
    %v5725 = vld [vmem:[%s5 + $0x78] sm:$0xff]
    %v5726 = vld [vmem:[%s5 + $0x80] sm:$0xff]
    %v5727 = vld [vmem:[%s5 + $0x88] sm:$0xff]
    %v5728 = vld [vmem:[%s5 + $0x90] sm:$0xff]
    %v5729 = vld [vmem:[%s5 + $0x98] sm:$0xff]
    %v5730 = vld [vmem:[%s5 + $0xa0] sm:$0xff]
    %v5731 = vld [vmem:[%s5 + $0xa8] sm:$0xff]
    %v5732 = vld [vmem:[%s5 + $0xb0] sm:$0xff]
    %v5733 = vld [vmem:[%s5 + $0xb8] sm:$0xff]
    %v5734 = vld [vmem:[%s5 + $0xc0] sm:$0xff]
    %v5735 = vld [vmem:[%s5 + $0xc8] sm:$0xff]
    %v5736 = vld [vmem:[%s5 + $0xd0] sm:$0xff]
    %v5737 = vld [vmem:[%s5 + $0xd8] sm:$0xff]
    %v5738 = vld [vmem:[%s5 + $0xe0] sm:$0xff]
    %v5739 = vld [vmem:[%s5 + $0xe8] sm:$0xff]
    %v5740 = vld [vmem:[%s5 + $0xf0] sm:$0xff]
    %v5741 = vld [vmem:[%s5 + $0xf8] sm:$0xff]
    %v5742 = vld [vmem:[%s5 + $0x100] sm:$0xff]
    %v5743 = vld [vmem:[%s5 + $0x108] sm:$0xff]
    %v5744 = vld [vmem:[%s5 + $0x110] sm:$0xff]
    %v5745 = vld [vmem:[%s5 + $0x118] sm:$0xff]
    %v5746 = vld [vmem:[%s5 + $0x120] sm:$0xff]
    %v5747 = vld [vmem:[%s5 + $0x128] sm:$0xff]
    %v5748 = vld [vmem:[%s5 + $0x130] sm:$0xff]
    %v5749 = vld [vmem:[%s5 + $0x138] sm:$0xff]
    %v5750 = vld [vmem:[%s5 + $0x140] sm:$0xff]
    %v5751 = vld [vmem:[%s5 + $0x148] sm:$0xff]
    %v5752 = vld [vmem:[%s5 + $0x150] sm:$0xff]
    %v5753 = vld [vmem:[%s5 + $0x158] sm:$0xff]
    %v5754 = vld [vmem:[%s5 + $0x160] sm:$0xff]
    %v5755 = vld [vmem:[%s5 + $0x168] sm:$0xff]
    %v5756 = vld [vmem:[%s5 + $0x170] sm:$0xff]
    %v5757 = vld [vmem:[%s5 + $0x178] sm:$0xff]
    %v5758 = vld [vmem:[%s5 + $0x180] sm:$0xf]
    %v5759 = vld [vmem:[%s5 + $0x188] sm:$0xf]
    %v5760 = vld [vmem:[%s5 + $0x190] sm:$0xf]
    %v5761 = vld [vmem:[#allocation2] sm:$0xfe]
    %v5762 = vld [vmem:[#allocation2 + $0x8] sm:$0xfe]
    %v5763 = vld [vmem:[#allocation2 + $0x30] sm:$0x7]
    %v5764 = vld [vmem:[#allocation2 + $0x38] sm:$0x7]
    %v5765 = vld [vmem:[%s2072] sm:$0xff]
    %v5766 = vld [vmem:[%s2072 + $0x8] sm:$0xff]
    %v5767 = vld [vmem:[%s2072 + $0x10] sm:$0xff]
    %v5768 = vld [vmem:[%s2072 + $0x18] sm:$0xff]
    %v5769 = vld [vmem:[%s2072 + $0x20] sm:$0xff]
    %v5770 = vld [vmem:[%s2072 + $0x28] sm:$0xff]
    %v5771 = vld [vmem:[%s2072 + $0x30] sm:$0xff]
    %v5772 = vld [vmem:[%s2072 + $0x38] sm:$0xff]
    %v5773 = vld [vmem:[%s2072 + $0x40] sm:$0xff]
    %v5774 = vld [vmem:[%s2072 + $0x48] sm:$0xff]
    %v5775 = vld [vmem:[%s2072 + $0x50] sm:$0xff]
    %v5776 = vld [vmem:[%s2072 + $0x58] sm:$0xff]
    %v5777 = vld [vmem:[%s2072 + $0x60] sm:$0xff]
    %v5778 = vld [vmem:[%s2072 + $0x68] sm:$0xff]
    %v5779 = vld [vmem:[%s2072 + $0x70] sm:$0xff]
    %v5780 = vld [vmem:[%s2072 + $0x78] sm:$0xff]
    %v5781 = vld [vmem:[%s2072 + $0x80] sm:$0xff]
    %v5782 = vld [vmem:[%s2072 + $0x88] sm:$0xff]
    %v5783 = vld [vmem:[%s2072 + $0x90] sm:$0xff]
    %v5784 = vld [vmem:[%s2072 + $0x98] sm:$0xff]
    %v5785 = vld [vmem:[%s2072 + $0xa0] sm:$0xff]
    %v5786 = vld [vmem:[%s2072 + $0xa8] sm:$0xff]
    %v5787 = vld [vmem:[%s2072 + $0xb0] sm:$0xff]
    %v5788 = vld [vmem:[%s2072 + $0xb8] sm:$0xff]
    %v5789 = vld [vmem:[%s2072 + $0xc0] sm:$0xff]
    %v5790 = vld [vmem:[%s2072 + $0xc8] sm:$0xff]
    %v5791 = vld [vmem:[%s2072 + $0xd0] sm:$0xff]
    %v5792 = vld [vmem:[%s2072 + $0xd8] sm:$0xff]
    %v5793 = vld [vmem:[%s2072 + $0xe0] sm:$0xff]
    %v5794 = vld [vmem:[%s2072 + $0xe8] sm:$0xff]
    %v5795 = vld [vmem:[%s2072 + $0xf0] sm:$0xff]
    %v5796 = vld [vmem:[%s2072 + $0xf8] sm:$0xff]
    %v5797 = vld [vmem:[%s2072 + $0x100] sm:$0xff]
    %v5798 = vld [vmem:[%s2072 + $0x108] sm:$0xff]
    %v5799 = vld [vmem:[%s2072 + $0x110] sm:$0xff]
    %v5800 = vld [vmem:[%s2072 + $0x118] sm:$0xff]
    %v5801 = vld [vmem:[%s2072 + $0x120] sm:$0xff]
    %v5802 = vld [vmem:[%s2072 + $0x128] sm:$0xff]
    %v5803 = vld [vmem:[%s2072 + $0x130] sm:$0xff]
    %v5804 = vld [vmem:[%s2072 + $0x138] sm:$0xff]
    %v5805 = vld [vmem:[%s2072 + $0x140] sm:$0xff]
    %v5806 = vld [vmem:[%s2072 + $0x148] sm:$0xff]
    %v5807 = vld [vmem:[%s2072 + $0x150] sm:$0xff]
    %v5808 = vld [vmem:[%s2072 + $0x158] sm:$0xff]
    %v5809 = vld [vmem:[%s2072 + $0x160] sm:$0xff]
    %v5810 = vld [vmem:[%s2072 + $0x168] sm:$0xff]
    %v5811 = vld [vmem:[%s2072 + $0x170] sm:$0xff]
    %v5812 = vld [vmem:[%s2072 + $0x178] sm:$0xff]
    %v5813 = vld [vmem:[%s2072 + $0x180] sm:$0xf]
    %v5814 = vld [vmem:[%s2072 + $0x188] sm:$0xf]
    %v5815 = vld [vmem:[%s2072 + $0x190] sm:$0xf]
    %v5824 = vrot.slane %v5761, 1
    %v5825 = vrot.slane %v5704, 1
    %v5826 = vsel %vm2132, %v5824, %v5825
    %v5827 = vrot.slane %v5762, 1
    %v5828 = vrot.slane %v5705, 1
    %v5829 = vsel %vm2132, %v5827, %v5828
    %v5830 = vrot.slane %v5706, 1
    %v5831 = vsel %vm2132, %v5825, %v5830
    %v5832 = vrot.slane %v5707, 1
    %v5833 = vsel %vm2132, %v5828, %v5832
    %v5834 = vrot.slane %v5763, 1
    %v5835 = vsel %vm2132, %v5830, %v5834
    %v5836 = vrot.slane %v5764, 1
    %v5837 = vsel %vm2132, %v5832, %v5836
    %v5842 = vsel %vm2000, %v5829, 0
    %v5844 = vsel %vm2000, %v5833, 0
    %v5846 = vsel %vm2000, %v5837, 0
    %v5848 = vsel %vm2000, %v5836, 0
    %v5851 = vsel %vm1895, %v5813, 0
    %v5854 = vsel %vm1895, %v5814, 0
    %v5857 = vsel %vm1895, %v5815, 0
    %5859 = vmatprep.subr.mxu0 %v5766
    %5860 = vmatpush1.msra.mxu0 %v5765
    %5861 = vmatprep.subr.mxu0 %v5769
    %5862 = vmatpush1.msra.mxu0 %v5768
    %5863 = vmatprep.subr.mxu0 %v5772
    %5864 = vmatpush1.msra.mxu0 %v5771
    %5865 = vmatprep.subr.mxu0 %v5775
    %5866 = vmatpush1.msra.mxu0 %v5774
    %5867 = vmatprep.subr.mxu0 %v5778
    %5868 = vmatpush1.msra.mxu0 %v5777
    %5869 = vmatprep.subr.mxu0 %v5781
    %5870 = vmatpush1.msra.mxu0 %v5780
    %5871 = vmatprep.subr.mxu0 %v5784
    %5872 = vmatpush1.msra.mxu0 %v5783
    %5873 = vmatprep.subr.mxu0 %v5787
    %5874 = vmatpush1.msra.mxu0 %v5786
    %5875 = vmatprep.subr.mxu0 %v5790
    %5876 = vmatpush1.msra.mxu0 %v5789
    %5877 = vmatprep.subr.mxu0 %v5793
    %5878 = vmatpush1.msra.mxu0 %v5792
    %5879 = vmatprep.subr.mxu0 %v5796
    %5880 = vmatpush1.msra.mxu0 %v5795
    %5881 = vmatprep.subr.mxu0 %v5799
    %5882 = vmatpush1.msra.mxu0 %v5798
    %5883 = vmatprep.subr.mxu0 %v5802
    %5884 = vmatpush1.msra.mxu0 %v5801
    %5885 = vmatprep.subr.mxu0 %v5805
    %5886 = vmatpush1.msra.mxu0 %v5804
    %5887 = vmatprep.subr.mxu0 %v5808
    %5888 = vmatpush1.msra.mxu0 %v5807
    %5889 = vmatprep.subr.mxu0 %v5811
    %5890 = vmatpush1.msra.mxu0 %v5810
    %5891 = vmatprep.subr.mxu0 %v5854
    %5892 = vmatpush1.msra.mxu0 %v5851
    %5893 = vmatprep.subr.mxu0 0.0
    %5894 = vmatpush1.msra.mxu0 0.0
    %5895 = vmatprep.subr.mxu0 0.0
    %5896 = vmatpush1.msra.mxu0 0.0
    %5897 = vmatprep.subr.mxu0 0.0
    %5898 = vmatpush1.msra.mxu0 0.0
    %5899 = vmatprep.subr.mxu0 0.0
    %5900 = vmatpush1.msra.mxu0 0.0
    %5901 = vmatprep.subr.mxu0 0.0
    %5902 = vmatpush1.msra.mxu0 0.0
    %5903 = vmatprep.subr.mxu0 0.0
    %5904 = vmatpush1.msra.mxu0 0.0
    %5905 = vmatprep.subr.mxu0 0.0
    %5906 = vmatpush1.msra.mxu0 0.0
    %5907 = vmatprep.subr.mxu0 0.0
    %5908 = vmatpush1.msra.mxu0 0.0
    %5909 = vmatprep.subr.mxu0 0.0
    %5910 = vmatpush1.msra.mxu0 0.0
    %5911 = vmatprep.subr.mxu0 0.0
    %5912 = vmatpush1.msra.mxu0 0.0
    %5913 = vmatprep.subr.mxu0 0.0
    %5914 = vmatpush1.msra.mxu0 0.0
    %5915 = vmatprep.subr.mxu0 0.0
    %5916 = vmatpush1.msra.mxu0 0.0
    %5917 = vmatprep.subr.mxu0 0.0
    %5918 = vmatpush1.msra.mxu0 0.0
    %5919 = vmatprep.subr.mxu0 0.0
    %5920 = vmatpush1.msra.mxu0 0.0
    %5921 = vmatprep.subr.mxu0 0.0
    %5922 = vmatpush1.msra.mxu0 0.0
    %5923 = vmatprep.mubr.f32.mxu0 %v5842
    %5924 = vmatmul.mubr.f32.gmra.mrb[0].mxu0 %v5826
    %v5925 = vpop.f32.mrb[0].mxu0
    %v5926 = vadd.f32 0.0, %v5925
    %v5927 = vpop.f32.mrb[0].mxu0
    %v5928 = vadd.f32 0.0, %v5927
    %5929 = vmatprep.mubr.f32.mxu0 %v5844
    %5930 = vmatmul.mubr.f32.gmra.mrb[0].mxu0 %v5831
    %v5931 = vpop.f32.mrb[0].mxu0
    %v5932 = vadd.f32 0.0, %v5931
    %v5933 = vpop.f32.mrb[0].mxu0
    %v5934 = vadd.f32 0.0, %v5933
    %5935 = vmatprep.mubr.f32.mxu0 %v5846
    %5936 = vmatmul.mubr.f32.gmra.mrb[0].mxu0 %v5835
    %v5937 = vpop.f32.mrb[0].mxu0
    %v5938 = vadd.f32 0.0, %v5937
    %v5939 = vpop.f32.mrb[0].mxu0
    %v5940 = vadd.f32 0.0, %v5939
    %5941 = vmatprep.mubr.f32.mxu0 %v5848
    %5942 = vmatmul.mubr.f32.gmra.mrb[0].mxu0 %v5834
    %v5943 = vpop.f32.mrb[0].mxu0
    %v5944 = vadd.f32 0.0, %v5943
    %v5945 = vpop.f32.mrb[0].mxu0
    %v5946 = vadd.f32 0.0, %v5945
    %5947 = vdwg.mxu0
    %5948 = vmatprep.subr.mxu0 0.0
    %5949 = vmatpush1.msra.mxu0 %v5767
    %5950 = vmatprep.subr.mxu0 0.0
    %5951 = vmatpush1.msra.mxu0 %v5770
    %5952 = vmatprep.subr.mxu0 0.0
    %5953 = vmatpush1.msra.mxu0 %v5773
    %5954 = vmatprep.subr.mxu0 0.0
    %5955 = vmatpush1.msra.mxu0 %v5776
    %5956 = vmatprep.subr.mxu0 0.0
    %5957 = vmatpush1.msra.mxu0 %v5779
    %5958 = vmatprep.subr.mxu0 0.0
    %5959 = vmatpush1.msra.mxu0 %v5782
    %5960 = vmatprep.subr.mxu0 0.0
    %5961 = vmatpush1.msra.mxu0 %v5785
    %5962 = vmatprep.subr.mxu0 0.0
    %5963 = vmatpush1.msra.mxu0 %v5788
    %5964 = vmatprep.subr.mxu0 0.0
    %5965 = vmatpush1.msra.mxu0 %v5791
    %5966 = vmatprep.subr.mxu0 0.0
    %5967 = vmatpush1.msra.mxu0 %v5794
    %5968 = vmatprep.subr.mxu0 0.0
    %5969 = vmatpush1.msra.mxu0 %v5797
    %5970 = vmatprep.subr.mxu0 0.0
    %5971 = vmatpush1.msra.mxu0 %v5800
    %5972 = vmatprep.subr.mxu0 0.0
    %5973 = vmatpush1.msra.mxu0 %v5803
    %5974 = vmatprep.subr.mxu0 0.0
    %5975 = vmatpush1.msra.mxu0 %v5806
    %5976 = vmatprep.subr.mxu0 0.0
    %5977 = vmatpush1.msra.mxu0 %v5809
    %5978 = vmatprep.subr.mxu0 0.0
    %5979 = vmatpush1.msra.mxu0 %v5812
    %5980 = vmatprep.subr.mxu0 0.0
    %5981 = vmatpush1.msra.mxu0 %v5857
    %5982 = vmatprep.subr.mxu0 0.0
    %5983 = vmatpush1.msra.mxu0 0.0
    %5984 = vmatprep.subr.mxu0 0.0
    %5985 = vmatpush1.msra.mxu0 0.0
    %5986 = vmatprep.subr.mxu0 0.0
    %5987 = vmatpush1.msra.mxu0 0.0
    %5988 = vmatprep.subr.mxu0 0.0
    %5989 = vmatpush1.msra.mxu0 0.0
    %5990 = vmatprep.subr.mxu0 0.0
    %5991 = vmatpush1.msra.mxu0 0.0
    %5992 = vmatprep.subr.mxu0 0.0
    %5993 = vmatpush1.msra.mxu0 0.0
    %5994 = vmatprep.subr.mxu0 0.0
    %5995 = vmatpush1.msra.mxu0 0.0
    %5996 = vmatprep.subr.mxu0 0.0
    %5997 = vmatpush1.msra.mxu0 0.0
    %5998 = vmatprep.subr.mxu0 0.0
    %5999 = vmatpush1.msra.mxu0 0.0
    %6000 = vmatprep.subr.mxu0 0.0
    %6001 = vmatpush1.msra.mxu0 0.0
    %6002 = vmatprep.subr.mxu0 0.0
    %6003 = vmatpush1.msra.mxu0 0.0
    %6004 = vmatprep.subr.mxu0 0.0
    %6005 = vmatpush1.msra.mxu0 0.0
    %6006 = vmatprep.subr.mxu0 0.0
    %6007 = vmatpush1.msra.mxu0 0.0
    %6008 = vmatprep.subr.mxu0 0.0
    %6009 = vmatpush1.msra.mxu0 0.0
    %6010 = vmatprep.subr.mxu0 0.0
    %6011 = vmatpush1.msra.mxu0 0.0
    %6012 = vmatprep.mubr.f32.mxu0 %v5842
    %6013 = vmatmul.mubr.f32.gmra.mrb[0].mxu0 %v5826
    %v6014 = vpop.f32.mrb[0].mxu0
    %v6015 = vadd.f32 0.0, %v6014
    %v6016 = vpop.f32.mrb[0].mxu0
    %6017 = vmatprep.mubr.f32.mxu0 %v5844
    %6018 = vmatmul.mubr.f32.gmra.mrb[0].mxu0 %v5831
    %v6019 = vpop.f32.mrb[0].mxu0
    %v6020 = vadd.f32 0.0, %v6019
    %v6021 = vpop.f32.mrb[0].mxu0
    %6022 = vmatprep.mubr.f32.mxu0 %v5846
    %6023 = vmatmul.mubr.f32.gmra.mrb[0].mxu0 %v5835
    %v6024 = vpop.f32.mrb[0].mxu0
    %v6025 = vadd.f32 0.0, %v6024
    %v6026 = vpop.f32.mrb[0].mxu0
    %6027 = vmatprep.mubr.f32.mxu0 %v5848
    %6028 = vmatmul.mubr.f32.gmra.mrb[0].mxu0 %v5834
    %v6029 = vpop.f32.mrb[0].mxu0
    %v6030 = vadd.f32 0.0, %v6029
    %v6031 = vpop.f32.mrb[0].mxu0
    %6032 = vdwg.mxu0
    %v6034 = vsel %vm2000, %v5703, 0
    %v6036 = vsel %vm2000, %v5705, 0
    %v6038 = vsel %vm2000, %v5707, 0
    %v6041 = vsel %vm2000, %v5709, 0
    %v6044 = vsel %vm1895, %v5758, 0
    %v6047 = vsel %vm1895, %v5759, 0
    %v6050 = vsel %vm1895, %v5760, 0
    %6052 = vmatprep.subr.mxu0 %v5711
    %6053 = vmatpush1.msra.mxu0 %v5710
    %6054 = vmatprep.subr.mxu0 %v5714
    %6055 = vmatpush1.msra.mxu0 %v5713
    %6056 = vmatprep.subr.mxu0 %v5717
    %6057 = vmatpush1.msra.mxu0 %v5716
    %6058 = vmatprep.subr.mxu0 %v5720
    %6059 = vmatpush1.msra.mxu0 %v5719
    %6060 = vmatprep.subr.mxu0 %v5723
    %6061 = vmatpush1.msra.mxu0 %v5722
    %6062 = vmatprep.subr.mxu0 %v5726
    %6063 = vmatpush1.msra.mxu0 %v5725
    %6064 = vmatprep.subr.mxu0 %v5729
    %6065 = vmatpush1.msra.mxu0 %v5728
    %6066 = vmatprep.subr.mxu0 %v5732
    %6067 = vmatpush1.msra.mxu0 %v5731
    %6068 = vmatprep.subr.mxu0 %v5735
    %6069 = vmatpush1.msra.mxu0 %v5734
    %6070 = vmatprep.subr.mxu0 %v5738
    %6071 = vmatpush1.msra.mxu0 %v5737
    %6072 = vmatprep.subr.mxu0 %v5741
    %6073 = vmatpush1.msra.mxu0 %v5740
    %6074 = vmatprep.subr.mxu0 %v5744
    %6075 = vmatpush1.msra.mxu0 %v5743
    %6076 = vmatprep.subr.mxu0 %v5747
    %6077 = vmatpush1.msra.mxu0 %v5746
    %6078 = vmatprep.subr.mxu0 %v5750
    %6079 = vmatpush1.msra.mxu0 %v5749
    %6080 = vmatprep.subr.mxu0 %v5753
    %6081 = vmatpush1.msra.mxu0 %v5752
    %6082 = vmatprep.subr.mxu0 %v5756
    %6083 = vmatpush1.msra.mxu0 %v5755
    %6084 = vmatprep.subr.mxu0 %v6047
    %6085 = vmatpush1.msra.mxu0 %v6044
    %6086 = vmatprep.subr.mxu0 0.0
    %6087 = vmatpush1.msra.mxu0 0.0
    %6088 = vmatprep.subr.mxu0 0.0
    %6089 = vmatpush1.msra.mxu0 0.0
    %6090 = vmatprep.subr.mxu0 0.0
    %6091 = vmatpush1.msra.mxu0 0.0
    %6092 = vmatprep.subr.mxu0 0.0
    %6093 = vmatpush1.msra.mxu0 0.0
    %6094 = vmatprep.subr.mxu0 0.0
    %6095 = vmatpush1.msra.mxu0 0.0
    %6096 = vmatprep.subr.mxu0 0.0
    %6097 = vmatpush1.msra.mxu0 0.0
    %6098 = vmatprep.subr.mxu0 0.0
    %6099 = vmatpush1.msra.mxu0 0.0
    %6100 = vmatprep.subr.mxu0 0.0
    %6101 = vmatpush1.msra.mxu0 0.0
    %6102 = vmatprep.subr.mxu0 0.0
    %6103 = vmatpush1.msra.mxu0 0.0
    %6104 = vmatprep.subr.mxu0 0.0
    %6105 = vmatpush1.msra.mxu0 0.0
    %6106 = vmatprep.subr.mxu0 0.0
    %6107 = vmatpush1.msra.mxu0 0.0
    %6108 = vmatprep.subr.mxu0 0.0
    %6109 = vmatpush1.msra.mxu0 0.0
    %6110 = vmatprep.subr.mxu0 0.0
    %6111 = vmatpush1.msra.mxu0 0.0
    %6112 = vmatprep.subr.mxu0 0.0
    %6113 = vmatpush1.msra.mxu0 0.0
    %6114 = vmatprep.subr.mxu0 0.0
    %6115 = vmatpush1.msra.mxu0 0.0
    %6116 = vmatprep.mubr.f32.mxu0 %v6034
    %6117 = vmatmul.mubr.f32.gmra.mrb[0].mxu0 %v5702
    %v6118 = vpop.f32.mrb[0].mxu0
    %v6119 = vadd.f32 %v5926, %v6118
    %v6120 = vpop.f32.mrb[0].mxu0
    %v6121 = vadd.f32 %v5928, %v6120
    %6122 = vmatprep.mubr.f32.mxu0 %v6036
    %6123 = vmatmul.mubr.f32.gmra.mrb[0].mxu0 %v5704
    %v6124 = vpop.f32.mrb[0].mxu0
    %v6125 = vadd.f32 %v5932, %v6124
    %v6126 = vpop.f32.mrb[0].mxu0
    %v6127 = vadd.f32 %v5934, %v6126
    %6128 = vmatprep.mubr.f32.mxu0 %v6038
    %6129 = vmatmul.mubr.f32.gmra.mrb[0].mxu0 %v5706
    %v6130 = vpop.f32.mrb[0].mxu0
    %v6131 = vadd.f32 %v5938, %v6130
    %v6132 = vpop.f32.mrb[0].mxu0
    %v6133 = vadd.f32 %v5940, %v6132
    %6134 = vmatprep.mubr.f32.mxu0 %v6041
    %6135 = vmatmul.mubr.f32.gmra.mrb[0].mxu0 %v5708
    %v6136 = vpop.f32.mrb[0].mxu0
    %v6137 = vadd.f32 %v5944, %v6136
    %v6138 = vpop.f32.mrb[0].mxu0
    %v6139 = vadd.f32 %v5946, %v6138
    %6140 = vdwg.mxu0
    %6141 = vmatprep.subr.mxu0 0.0
    %6142 = vmatpush1.msra.mxu0 %v5712
    %6143 = vmatprep.subr.mxu0 0.0
    %6144 = vmatpush1.msra.mxu0 %v5715
    %6145 = vmatprep.subr.mxu0 0.0
    %6146 = vmatpush1.msra.mxu0 %v5718
    %6147 = vmatprep.subr.mxu0 0.0
    %6148 = vmatpush1.msra.mxu0 %v5721
    %6149 = vmatprep.subr.mxu0 0.0
    %6150 = vmatpush1.msra.mxu0 %v5724
    %6151 = vmatprep.subr.mxu0 0.0
    %6152 = vmatpush1.msra.mxu0 %v5727
    %6153 = vmatprep.subr.mxu0 0.0
    %6154 = vmatpush1.msra.mxu0 %v5730
    %6155 = vmatprep.subr.mxu0 0.0
    %6156 = vmatpush1.msra.mxu0 %v5733
    %6157 = vmatprep.subr.mxu0 0.0
    %6158 = vmatpush1.msra.mxu0 %v5736
    %6159 = vmatprep.subr.mxu0 0.0
    %6160 = vmatpush1.msra.mxu0 %v5739
    %6161 = vmatprep.subr.mxu0 0.0
    %6162 = vmatpush1.msra.mxu0 %v5742
    %6163 = vmatprep.subr.mxu0 0.0
    %6164 = vmatpush1.msra.mxu0 %v5745
    %6165 = vmatprep.subr.mxu0 0.0
    %6166 = vmatpush1.msra.mxu0 %v5748
    %6167 = vmatprep.subr.mxu0 0.0
    %6168 = vmatpush1.msra.mxu0 %v5751
    %6169 = vmatprep.subr.mxu0 0.0
    %6170 = vmatpush1.msra.mxu0 %v5754
    %6171 = vmatprep.subr.mxu0 0.0
    %6172 = vmatpush1.msra.mxu0 %v5757
    %6173 = vmatprep.subr.mxu0 0.0
    %6174 = vmatpush1.msra.mxu0 %v6050
    %6175 = vmatprep.subr.mxu0 0.0
    %6176 = vmatpush1.msra.mxu0 0.0
    %6177 = vmatprep.subr.mxu0 0.0
    %6178 = vmatpush1.msra.mxu0 0.0
    %6179 = vmatprep.subr.mxu0 0.0
    %6180 = vmatpush1.msra.mxu0 0.0
    %6181 = vmatprep.subr.mxu0 0.0
    %6182 = vmatpush1.msra.mxu0 0.0
    %6183 = vmatprep.subr.mxu0 0.0
    %6184 = vmatpush1.msra.mxu0 0.0
    %6185 = vmatprep.subr.mxu0 0.0
    %6186 = vmatpush1.msra.mxu0 0.0
    %6187 = vmatprep.subr.mxu0 0.0
    %6188 = vmatpush1.msra.mxu0 0.0
    %6189 = vmatprep.subr.mxu0 0.0
    %6190 = vmatpush1.msra.mxu0 0.0
    %6191 = vmatprep.subr.mxu0 0.0
    %6192 = vmatpush1.msra.mxu0 0.0
    %6193 = vmatprep.subr.mxu0 0.0
    %6194 = vmatpush1.msra.mxu0 0.0
    %6195 = vmatprep.subr.mxu0 0.0
    %6196 = vmatpush1.msra.mxu0 0.0
    %6197 = vmatprep.subr.mxu0 0.0
    %6198 = vmatpush1.msra.mxu0 0.0
    %6199 = vmatprep.subr.mxu0 0.0
    %6200 = vmatpush1.msra.mxu0 0.0
    %6201 = vmatprep.subr.mxu0 0.0
    %6202 = vmatpush1.msra.mxu0 0.0
    %6203 = vmatprep.subr.mxu0 0.0
    %6204 = vmatpush1.msra.mxu0 0.0
    %6205 = vmatprep.mubr.f32.mxu0 %v6034
    %6206 = vmatmul.mubr.f32.gmra.mrb[0].mxu0 %v5702
    %v6207 = vpop.f32.mrb[0].mxu0
    %v6208 = vadd.f32 %v6015, %v6207
    %v6209 = vpop.f32.mrb[0].mxu0
    %6210 = vmatprep.mubr.f32.mxu0 %v6036
    %6211 = vmatmul.mubr.f32.gmra.mrb[0].mxu0 %v5704
    %v6212 = vpop.f32.mrb[0].mxu0
    %v6213 = vadd.f32 %v6020, %v6212
    %v6214 = vpop.f32.mrb[0].mxu0
    %6215 = vmatprep.mubr.f32.mxu0 %v6038
    %6216 = vmatmul.mubr.f32.gmra.mrb[0].mxu0 %v5706
    %v6217 = vpop.f32.mrb[0].mxu0
    %v6218 = vadd.f32 %v6025, %v6217
    %v6219 = vpop.f32.mrb[0].mxu0
    %6220 = vmatprep.mubr.f32.mxu0 %v6041
    %6221 = vmatmul.mubr.f32.gmra.mrb[0].mxu0 %v5708
    %v6222 = vpop.f32.mrb[0].mxu0
    %v6223 = vadd.f32 %v6030, %v6222
    %v6224 = vpop.f32.mrb[0].mxu0
    %6225 = vdwg.mxu0
    %v6226 = vld [vmem:[#allocation2] sm:$0xfc]
    %v6227 = vld [vmem:[#allocation2 + $0x8] sm:$0xfc]
    %v6228 = vld [vmem:[#allocation2 + $0x30] sm:$0xf]
    %v6229 = vld [vmem:[#allocation2 + $0x38] sm:$0xf]
    %v6230 = vld [vmem:[%s2539] sm:$0xff]
    %v6231 = vld [vmem:[%s2539 + $0x8] sm:$0xff]
    %v6232 = vld [vmem:[%s2539 + $0x10] sm:$0xff]
    %v6233 = vld [vmem:[%s2539 + $0x18] sm:$0xff]
    %v6234 = vld [vmem:[%s2539 + $0x20] sm:$0xff]
    %v6235 = vld [vmem:[%s2539 + $0x28] sm:$0xff]
    %v6236 = vld [vmem:[%s2539 + $0x30] sm:$0xff]
    %v6237 = vld [vmem:[%s2539 + $0x38] sm:$0xff]
    %v6238 = vld [vmem:[%s2539 + $0x40] sm:$0xff]
    %v6239 = vld [vmem:[%s2539 + $0x48] sm:$0xff]
    %v6240 = vld [vmem:[%s2539 + $0x50] sm:$0xff]
    %v6241 = vld [vmem:[%s2539 + $0x58] sm:$0xff]
    %v6242 = vld [vmem:[%s2539 + $0x60] sm:$0xff]
    %v6243 = vld [vmem:[%s2539 + $0x68] sm:$0xff]
    %v6244 = vld [vmem:[%s2539 + $0x70] sm:$0xff]
    %v6245 = vld [vmem:[%s2539 + $0x78] sm:$0xff]
    %v6246 = vld [vmem:[%s2539 + $0x80] sm:$0xff]
    %v6247 = vld [vmem:[%s2539 + $0x88] sm:$0xff]
    %v6248 = vld [vmem:[%s2539 + $0x90] sm:$0xff]
    %v6249 = vld [vmem:[%s2539 + $0x98] sm:$0xff]
    %v6250 = vld [vmem:[%s2539 + $0xa0] sm:$0xff]
    %v6251 = vld [vmem:[%s2539 + $0xa8] sm:$0xff]
    %v6252 = vld [vmem:[%s2539 + $0xb0] sm:$0xff]
    %v6253 = vld [vmem:[%s2539 + $0xb8] sm:$0xff]
    %v6254 = vld [vmem:[%s2539 + $0xc0] sm:$0xff]
    %v6255 = vld [vmem:[%s2539 + $0xc8] sm:$0xff]
    %v6256 = vld [vmem:[%s2539 + $0xd0] sm:$0xff]
    %v6257 = vld [vmem:[%s2539 + $0xd8] sm:$0xff]
    %v6258 = vld [vmem:[%s2539 + $0xe0] sm:$0xff]
    %v6259 = vld [vmem:[%s2539 + $0xe8] sm:$0xff]
    %v6260 = vld [vmem:[%s2539 + $0xf0] sm:$0xff]
    %v6261 = vld [vmem:[%s2539 + $0xf8] sm:$0xff]
    %v6262 = vld [vmem:[%s2539 + $0x100] sm:$0xff]
    %v6263 = vld [vmem:[%s2539 + $0x108] sm:$0xff]
    %v6264 = vld [vmem:[%s2539 + $0x110] sm:$0xff]
    %v6265 = vld [vmem:[%s2539 + $0x118] sm:$0xff]
    %v6266 = vld [vmem:[%s2539 + $0x120] sm:$0xff]
    %v6267 = vld [vmem:[%s2539 + $0x128] sm:$0xff]
    %v6268 = vld [vmem:[%s2539 + $0x130] sm:$0xff]
    %v6269 = vld [vmem:[%s2539 + $0x138] sm:$0xff]
    %v6270 = vld [vmem:[%s2539 + $0x140] sm:$0xff]
    %v6271 = vld [vmem:[%s2539 + $0x148] sm:$0xff]
    %v6272 = vld [vmem:[%s2539 + $0x150] sm:$0xff]
    %v6273 = vld [vmem:[%s2539 + $0x158] sm:$0xff]
    %v6274 = vld [vmem:[%s2539 + $0x160] sm:$0xff]
    %v6275 = vld [vmem:[%s2539 + $0x168] sm:$0xff]
    %v6276 = vld [vmem:[%s2539 + $0x170] sm:$0xff]
    %v6277 = vld [vmem:[%s2539 + $0x178] sm:$0xff]
    %v6278 = vld [vmem:[%s2539 + $0x180] sm:$0xf]
    %v6279 = vld [vmem:[%s2539 + $0x188] sm:$0xf]
    %v6280 = vld [vmem:[%s2539 + $0x190] sm:$0xf]
    %v6285 = vrot.slane %v6226, 2
    %v6286 = vrot.slane %v5704, 2
    %v6287 = vsel %vm2595, %v6285, %v6286
    %v6288 = vrot.slane %v6227, 2
    %v6289 = vrot.slane %v5705, 2
    %v6290 = vsel %vm2595, %v6288, %v6289
    %v6291 = vrot.slane %v5706, 2
    %v6292 = vsel %vm2595, %v6286, %v6291
    %v6293 = vrot.slane %v5707, 2
    %v6294 = vsel %vm2595, %v6289, %v6293
    %v6295 = vrot.slane %v6228, 2
    %v6296 = vsel %vm2595, %v6291, %v6295
    %v6297 = vrot.slane %v6229, 2
    %v6298 = vsel %vm2595, %v6293, %v6297
    %v6303 = vsel %vm2000, %v6290, 0
    %v6305 = vsel %vm2000, %v6294, 0
    %v6307 = vsel %vm2000, %v6298, 0
    %v6309 = vsel %vm2000, %v6297, 0
    %v6312 = vsel %vm1895, %v6278, 0
    %v6315 = vsel %vm1895, %v6279, 0
    %v6318 = vsel %vm1895, %v6280, 0
    %6320 = vmatprep.subr.mxu0 %v6231
    %6321 = vmatpush1.msra.mxu0 %v6230
    %6322 = vmatprep.subr.mxu0 %v6234
    %6323 = vmatpush1.msra.mxu0 %v6233
    %6324 = vmatprep.subr.mxu0 %v6237
    %6325 = vmatpush1.msra.mxu0 %v6236
    %6326 = vmatprep.subr.mxu0 %v6240
    %6327 = vmatpush1.msra.mxu0 %v6239
    %6328 = vmatprep.subr.mxu0 %v6243
    %6329 = vmatpush1.msra.mxu0 %v6242
    %6330 = vmatprep.subr.mxu0 %v6246
    %6331 = vmatpush1.msra.mxu0 %v6245
    %6332 = vmatprep.subr.mxu0 %v6249
    %6333 = vmatpush1.msra.mxu0 %v6248
    %6334 = vmatprep.subr.mxu0 %v6252
    %6335 = vmatpush1.msra.mxu0 %v6251
    %6336 = vmatprep.subr.mxu0 %v6255
    %6337 = vmatpush1.msra.mxu0 %v6254
    %6338 = vmatprep.subr.mxu0 %v6258
    %6339 = vmatpush1.msra.mxu0 %v6257
    %6340 = vmatprep.subr.mxu0 %v6261
    %6341 = vmatpush1.msra.mxu0 %v6260
    %6342 = vmatprep.subr.mxu0 %v6264
    %6343 = vmatpush1.msra.mxu0 %v6263
    %6344 = vmatprep.subr.mxu0 %v6267
    %6345 = vmatpush1.msra.mxu0 %v6266
    %6346 = vmatprep.subr.mxu0 %v6270
    %6347 = vmatpush1.msra.mxu0 %v6269
    %6348 = vmatprep.subr.mxu0 %v6273
    %6349 = vmatpush1.msra.mxu0 %v6272
    %6350 = vmatprep.subr.mxu0 %v6276
    %6351 = vmatpush1.msra.mxu0 %v6275
    %6352 = vmatprep.subr.mxu0 %v6315
    %6353 = vmatpush1.msra.mxu0 %v6312
    %6354 = vmatprep.subr.mxu0 0.0
    %6355 = vmatpush1.msra.mxu0 0.0
    %6356 = vmatprep.subr.mxu0 0.0
    %6357 = vmatpush1.msra.mxu0 0.0
    %6358 = vmatprep.subr.mxu0 0.0
    %6359 = vmatpush1.msra.mxu0 0.0
    %6360 = vmatprep.subr.mxu0 0.0
    %6361 = vmatpush1.msra.mxu0 0.0
    %6362 = vmatprep.subr.mxu0 0.0
    %6363 = vmatpush1.msra.mxu0 0.0
    %6364 = vmatprep.subr.mxu0 0.0
    %6365 = vmatpush1.msra.mxu0 0.0
    %6366 = vmatprep.subr.mxu0 0.0
    %6367 = vmatpush1.msra.mxu0 0.0
    %6368 = vmatprep.subr.mxu0 0.0
    %6369 = vmatpush1.msra.mxu0 0.0
    %6370 = vmatprep.subr.mxu0 0.0
    %6371 = vmatpush1.msra.mxu0 0.0
    %6372 = vmatprep.subr.mxu0 0.0
    %6373 = vmatpush1.msra.mxu0 0.0
    %6374 = vmatprep.subr.mxu0 0.0
    %6375 = vmatpush1.msra.mxu0 0.0
    %6376 = vmatprep.subr.mxu0 0.0
    %6377 = vmatpush1.msra.mxu0 0.0
    %6378 = vmatprep.subr.mxu0 0.0
    %6379 = vmatpush1.msra.mxu0 0.0
    %6380 = vmatprep.subr.mxu0 0.0
    %6381 = vmatpush1.msra.mxu0 0.0
    %6382 = vmatprep.subr.mxu0 0.0
    %6383 = vmatpush1.msra.mxu0 0.0
    %6384 = vmatprep.mubr.f32.mxu0 %v6303
    %6385 = vmatmul.mubr.f32.gmra.mrb[0].mxu0 %v6287
    %v6386 = vpop.f32.mrb[0].mxu0
    %v6387 = vadd.f32 0.0, %v6386
    %v6388 = vpop.f32.mrb[0].mxu0
    %v6389 = vadd.f32 0.0, %v6388
    %6390 = vmatprep.mubr.f32.mxu0 %v6305
    %6391 = vmatmul.mubr.f32.gmra.mrb[0].mxu0 %v6292
    %v6392 = vpop.f32.mrb[0].mxu0
    %v6393 = vadd.f32 0.0, %v6392
    %v6394 = vpop.f32.mrb[0].mxu0
    %v6395 = vadd.f32 0.0, %v6394
    %6396 = vmatprep.mubr.f32.mxu0 %v6307
    %6397 = vmatmul.mubr.f32.gmra.mrb[0].mxu0 %v6296
    %v6398 = vpop.f32.mrb[0].mxu0
    %v6399 = vadd.f32 0.0, %v6398
    %v6400 = vpop.f32.mrb[0].mxu0
    %v6401 = vadd.f32 0.0, %v6400
    %6402 = vmatprep.mubr.f32.mxu0 %v6309
    %6403 = vmatmul.mubr.f32.gmra.mrb[0].mxu0 %v6295
    %v6404 = vpop.f32.mrb[0].mxu0
    %v6405 = vadd.f32 0.0, %v6404
    %v6406 = vpop.f32.mrb[0].mxu0
    %v6407 = vadd.f32 0.0, %v6406
    %6408 = vdwg.mxu0
    %6409 = vmatprep.subr.mxu0 0.0
    %6410 = vmatpush1.msra.mxu0 %v6232
    %6411 = vmatprep.subr.mxu0 0.0
    %6412 = vmatpush1.msra.mxu0 %v6235
    %6413 = vmatprep.subr.mxu0 0.0
    %6414 = vmatpush1.msra.mxu0 %v6238
    %6415 = vmatprep.subr.mxu0 0.0
    %6416 = vmatpush1.msra.mxu0 %v6241
    %6417 = vmatprep.subr.mxu0 0.0
    %6418 = vmatpush1.msra.mxu0 %v6244
    %6419 = vmatprep.subr.mxu0 0.0
    %6420 = vmatpush1.msra.mxu0 %v6247
    %6421 = vmatprep.subr.mxu0 0.0
    %6422 = vmatpush1.msra.mxu0 %v6250
    %6423 = vmatprep.subr.mxu0 0.0
    %6424 = vmatpush1.msra.mxu0 %v6253
    %6425 = vmatprep.subr.mxu0 0.0
    %6426 = vmatpush1.msra.mxu0 %v6256
    %6427 = vmatprep.subr.mxu0 0.0
    %6428 = vmatpush1.msra.mxu0 %v6259
    %6429 = vmatprep.subr.mxu0 0.0
    %6430 = vmatpush1.msra.mxu0 %v6262
    %6431 = vmatprep.subr.mxu0 0.0
    %6432 = vmatpush1.msra.mxu0 %v6265
    %6433 = vmatprep.subr.mxu0 0.0
    %6434 = vmatpush1.msra.mxu0 %v6268
    %6435 = vmatprep.subr.mxu0 0.0
    %6436 = vmatpush1.msra.mxu0 %v6271
    %6437 = vmatprep.subr.mxu0 0.0
    %6438 = vmatpush1.msra.mxu0 %v6274
    %6439 = vmatprep.subr.mxu0 0.0
    %6440 = vmatpush1.msra.mxu0 %v6277
    %6441 = vmatprep.subr.mxu0 0.0
    %6442 = vmatpush1.msra.mxu0 %v6318
    %6443 = vmatprep.subr.mxu0 0.0
    %6444 = vmatpush1.msra.mxu0 0.0
    %6445 = vmatprep.subr.mxu0 0.0
    %6446 = vmatpush1.msra.mxu0 0.0
    %6447 = vmatprep.subr.mxu0 0.0
    %6448 = vmatpush1.msra.mxu0 0.0
    %6449 = vmatprep.subr.mxu0 0.0
    %6450 = vmatpush1.msra.mxu0 0.0
    %6451 = vmatprep.subr.mxu0 0.0
    %6452 = vmatpush1.msra.mxu0 0.0
    %6453 = vmatprep.subr.mxu0 0.0
    %6454 = vmatpush1.msra.mxu0 0.0
    %6455 = vmatprep.subr.mxu0 0.0
    %6456 = vmatpush1.msra.mxu0 0.0
    %6457 = vmatprep.subr.mxu0 0.0
    %6458 = vmatpush1.msra.mxu0 0.0
    %6459 = vmatprep.subr.mxu0 0.0
    %6460 = vmatpush1.msra.mxu0 0.0
    %6461 = vmatprep.subr.mxu0 0.0
    %6462 = vmatpush1.msra.mxu0 0.0
    %6463 = vmatprep.subr.mxu0 0.0
    %6464 = vmatpush1.msra.mxu0 0.0
    %6465 = vmatprep.subr.mxu0 0.0
    %6466 = vmatpush1.msra.mxu0 0.0
    %6467 = vmatprep.subr.mxu0 0.0
    %6468 = vmatpush1.msra.mxu0 0.0
    %6469 = vmatprep.subr.mxu0 0.0
    %6470 = vmatpush1.msra.mxu0 0.0
    %6471 = vmatprep.subr.mxu0 0.0
    %6472 = vmatpush1.msra.mxu0 0.0
    %6473 = vmatprep.mubr.f32.mxu0 %v6303
    %6474 = vmatmul.mubr.f32.gmra.mrb[0].mxu0 %v6287
    %v6475 = vpop.f32.mrb[0].mxu0
    %v6476 = vadd.f32 0.0, %v6475
    %v6477 = vpop.f32.mrb[0].mxu0
    %6478 = vmatprep.mubr.f32.mxu0 %v6305
    %6479 = vmatmul.mubr.f32.gmra.mrb[0].mxu0 %v6292
    %v6480 = vpop.f32.mrb[0].mxu0
    %v6481 = vadd.f32 0.0, %v6480
    %v6482 = vpop.f32.mrb[0].mxu0
    %6483 = vmatprep.mubr.f32.mxu0 %v6307
    %6484 = vmatmul.mubr.f32.gmra.mrb[0].mxu0 %v6296
    %v6485 = vpop.f32.mrb[0].mxu0
    %v6486 = vadd.f32 0.0, %v6485
    %v6487 = vpop.f32.mrb[0].mxu0
    %6488 = vmatprep.mubr.f32.mxu0 %v6309
    %6489 = vmatmul.mubr.f32.gmra.mrb[0].mxu0 %v6295
    %v6490 = vpop.f32.mrb[0].mxu0
    %v6491 = vadd.f32 0.0, %v6490
    %v6492 = vpop.f32.mrb[0].mxu0
    %6493 = vdwg.mxu0
    %v6494 = vadd.f32 %v6119, %v6387
    %v6495 = vadd.f32 %v6121, %v6389
    %v6496 = vadd.f32 %v6208, %v6476
    %v6497 = vadd.f32 %v6125, %v6393
    %v6498 = vadd.f32 %v6127, %v6395
    %v6499 = vadd.f32 %v6213, %v6481
    %v6500 = vadd.f32 %v6131, %v6399
    %v6501 = vadd.f32 %v6133, %v6401
    %v6502 = vadd.f32 %v6218, %v6486
    %v6503 = vadd.f32 %v6137, %v6405
    %v6504 = vadd.f32 %v6139, %v6407
    %v6505 = vadd.f32 %v6223, %v6491
    %v6506 = vld [vmem:[#allocation2] sm:$0xf8]
    %v6507 = vld [vmem:[#allocation2 + $0x8] sm:$0xf8]
    %v6508 = vld [vmem:[#allocation2 + $0x30] sm:$0x1f]
    %v6509 = vld [vmem:[#allocation2 + $0x38] sm:$0x1f]
    %v6510 = vld [vmem:[%s2821] sm:$0xff]
    %v6511 = vld [vmem:[%s2821 + $0x8] sm:$0xff]
    %v6512 = vld [vmem:[%s2821 + $0x10] sm:$0xff]
    %v6513 = vld [vmem:[%s2821 + $0x18] sm:$0xff]
    %v6514 = vld [vmem:[%s2821 + $0x20] sm:$0xff]
    %v6515 = vld [vmem:[%s2821 + $0x28] sm:$0xff]
    %v6516 = vld [vmem:[%s2821 + $0x30] sm:$0xff]
    %v6517 = vld [vmem:[%s2821 + $0x38] sm:$0xff]
    %v6518 = vld [vmem:[%s2821 + $0x40] sm:$0xff]
    %v6519 = vld [vmem:[%s2821 + $0x48] sm:$0xff]
    %v6520 = vld [vmem:[%s2821 + $0x50] sm:$0xff]
    %v6521 = vld [vmem:[%s2821 + $0x58] sm:$0xff]
    %v6522 = vld [vmem:[%s2821 + $0x60] sm:$0xff]
    %v6523 = vld [vmem:[%s2821 + $0x68] sm:$0xff]
    %v6524 = vld [vmem:[%s2821 + $0x70] sm:$0xff]
    %v6525 = vld [vmem:[%s2821 + $0x78] sm:$0xff]
    %v6526 = vld [vmem:[%s2821 + $0x80] sm:$0xff]
    %v6527 = vld [vmem:[%s2821 + $0x88] sm:$0xff]
    %v6528 = vld [vmem:[%s2821 + $0x90] sm:$0xff]
    %v6529 = vld [vmem:[%s2821 + $0x98] sm:$0xff]
    %v6530 = vld [vmem:[%s2821 + $0xa0] sm:$0xff]
    %v6531 = vld [vmem:[%s2821 + $0xa8] sm:$0xff]
    %v6532 = vld [vmem:[%s2821 + $0xb0] sm:$0xff]
    %v6533 = vld [vmem:[%s2821 + $0xb8] sm:$0xff]
    %v6534 = vld [vmem:[%s2821 + $0xc0] sm:$0xff]
    %v6535 = vld [vmem:[%s2821 + $0xc8] sm:$0xff]
    %v6536 = vld [vmem:[%s2821 + $0xd0] sm:$0xff]
    %v6537 = vld [vmem:[%s2821 + $0xd8] sm:$0xff]
    %v6538 = vld [vmem:[%s2821 + $0xe0] sm:$0xff]
    %v6539 = vld [vmem:[%s2821 + $0xe8] sm:$0xff]
    %v6540 = vld [vmem:[%s2821 + $0xf0] sm:$0xff]
    %v6541 = vld [vmem:[%s2821 + $0xf8] sm:$0xff]
    %v6542 = vld [vmem:[%s2821 + $0x100] sm:$0xff]
    %v6543 = vld [vmem:[%s2821 + $0x108] sm:$0xff]
    %v6544 = vld [vmem:[%s2821 + $0x110] sm:$0xff]
    %v6545 = vld [vmem:[%s2821 + $0x118] sm:$0xff]
    %v6546 = vld [vmem:[%s2821 + $0x120] sm:$0xff]
    %v6547 = vld [vmem:[%s2821 + $0x128] sm:$0xff]
    %v6548 = vld [vmem:[%s2821 + $0x130] sm:$0xff]
    %v6549 = vld [vmem:[%s2821 + $0x138] sm:$0xff]
    %v6550 = vld [vmem:[%s2821 + $0x140] sm:$0xff]
    %v6551 = vld [vmem:[%s2821 + $0x148] sm:$0xff]
    %v6552 = vld [vmem:[%s2821 + $0x150] sm:$0xff]
    %v6553 = vld [vmem:[%s2821 + $0x158] sm:$0xff]
    %v6554 = vld [vmem:[%s2821 + $0x160] sm:$0xff]
    %v6555 = vld [vmem:[%s2821 + $0x168] sm:$0xff]
    %v6556 = vld [vmem:[%s2821 + $0x170] sm:$0xff]
    %v6557 = vld [vmem:[%s2821 + $0x178] sm:$0xff]
    %v6558 = vld [vmem:[%s2821 + $0x180] sm:$0xf]
    %v6559 = vld [vmem:[%s2821 + $0x188] sm:$0xf]
    %v6560 = vld [vmem:[%s2821 + $0x190] sm:$0xf]
    %v6565 = vrot.slane %v6506, 3
    %v6566 = vrot.slane %v5704, 3
    %v6567 = vsel %vm2877, %v6565, %v6566
    %v6568 = vrot.slane %v6507, 3
    %v6569 = vrot.slane %v5705, 3
    %v6570 = vsel %vm2877, %v6568, %v6569
    %v6571 = vrot.slane %v5706, 3
    %v6572 = vsel %vm2877, %v6566, %v6571
    %v6573 = vrot.slane %v5707, 3
    %v6574 = vsel %vm2877, %v6569, %v6573
    %v6575 = vrot.slane %v6508, 3
    %v6576 = vsel %vm2877, %v6571, %v6575
    %v6577 = vrot.slane %v6509, 3
    %v6578 = vsel %vm2877, %v6573, %v6577
    %v6583 = vsel %vm2000, %v6570, 0
    %v6585 = vsel %vm2000, %v6574, 0
    %v6587 = vsel %vm2000, %v6578, 0
    %v6589 = vsel %vm2000, %v6577, 0
    %v6592 = vsel %vm1895, %v6558, 0
    %v6595 = vsel %vm1895, %v6559, 0
    %v6598 = vsel %vm1895, %v6560, 0
    %6600 = vmatprep.subr.mxu0 %v6511
    %6601 = vmatpush1.msra.mxu0 %v6510
    %6602 = vmatprep.subr.mxu0 %v6514
    %6603 = vmatpush1.msra.mxu0 %v6513
    %6604 = vmatprep.subr.mxu0 %v6517
    %6605 = vmatpush1.msra.mxu0 %v6516
    %6606 = vmatprep.subr.mxu0 %v6520
    %6607 = vmatpush1.msra.mxu0 %v6519
    %6608 = vmatprep.subr.mxu0 %v6523
    %6609 = vmatpush1.msra.mxu0 %v6522
    %6610 = vmatprep.subr.mxu0 %v6526
    %6611 = vmatpush1.msra.mxu0 %v6525
    %6612 = vmatprep.subr.mxu0 %v6529
    %6613 = vmatpush1.msra.mxu0 %v6528
    %6614 = vmatprep.subr.mxu0 %v6532
    %6615 = vmatpush1.msra.mxu0 %v6531
    %6616 = vmatprep.subr.mxu0 %v6535
    %6617 = vmatpush1.msra.mxu0 %v6534
    %6618 = vmatprep.subr.mxu0 %v6538
    %6619 = vmatpush1.msra.mxu0 %v6537
    %6620 = vmatprep.subr.mxu0 %v6541
    %6621 = vmatpush1.msra.mxu0 %v6540
    %6622 = vmatprep.subr.mxu0 %v6544
    %6623 = vmatpush1.msra.mxu0 %v6543
    %6624 = vmatprep.subr.mxu0 %v6547
    %6625 = vmatpush1.msra.mxu0 %v6546
    %6626 = vmatprep.subr.mxu0 %v6550
    %6627 = vmatpush1.msra.mxu0 %v6549
    %6628 = vmatprep.subr.mxu0 %v6553
    %6629 = vmatpush1.msra.mxu0 %v6552
    %6630 = vmatprep.subr.mxu0 %v6556
    %6631 = vmatpush1.msra.mxu0 %v6555
    %6632 = vmatprep.subr.mxu0 %v6595
    %6633 = vmatpush1.msra.mxu0 %v6592
    %6634 = vmatprep.subr.mxu0 0.0
    %6635 = vmatpush1.msra.mxu0 0.0
    %6636 = vmatprep.subr.mxu0 0.0
    %6637 = vmatpush1.msra.mxu0 0.0
    %6638 = vmatprep.subr.mxu0 0.0
    %6639 = vmatpush1.msra.mxu0 0.0
    %6640 = vmatprep.subr.mxu0 0.0
    %6641 = vmatpush1.msra.mxu0 0.0
    %6642 = vmatprep.subr.mxu0 0.0
    %6643 = vmatpush1.msra.mxu0 0.0
    %6644 = vmatprep.subr.mxu0 0.0
    %6645 = vmatpush1.msra.mxu0 0.0
    %6646 = vmatprep.subr.mxu0 0.0
    %6647 = vmatpush1.msra.mxu0 0.0
    %6648 = vmatprep.subr.mxu0 0.0
    %6649 = vmatpush1.msra.mxu0 0.0
    %6650 = vmatprep.subr.mxu0 0.0
    %6651 = vmatpush1.msra.mxu0 0.0
    %6652 = vmatprep.subr.mxu0 0.0
    %6653 = vmatpush1.msra.mxu0 0.0
    %6654 = vmatprep.subr.mxu0 0.0
    %6655 = vmatpush1.msra.mxu0 0.0
    %6656 = vmatprep.subr.mxu0 0.0
    %6657 = vmatpush1.msra.mxu0 0.0
    %6658 = vmatprep.subr.mxu0 0.0
    %6659 = vmatpush1.msra.mxu0 0.0
    %6660 = vmatprep.subr.mxu0 0.0
    %6661 = vmatpush1.msra.mxu0 0.0
    %6662 = vmatprep.subr.mxu0 0.0
    %6663 = vmatpush1.msra.mxu0 0.0
    %6664 = vmatprep.mubr.f32.mxu0 %v6583
    %6665 = vmatmul.mubr.f32.gmra.mrb[0].mxu0 %v6567
    %v6666 = vpop.f32.mrb[0].mxu0
    %v6667 = vadd.f32 0.0, %v6666
    %v6668 = vpop.f32.mrb[0].mxu0
    %v6669 = vadd.f32 0.0, %v6668
    %6670 = vmatprep.mubr.f32.mxu0 %v6585
    %6671 = vmatmul.mubr.f32.gmra.mrb[0].mxu0 %v6572
    %v6672 = vpop.f32.mrb[0].mxu0
    %v6673 = vadd.f32 0.0, %v6672
    %v6674 = vpop.f32.mrb[0].mxu0
    %v6675 = vadd.f32 0.0, %v6674
    %6676 = vmatprep.mubr.f32.mxu0 %v6587
    %6677 = vmatmul.mubr.f32.gmra.mrb[0].mxu0 %v6576
    %v6678 = vpop.f32.mrb[0].mxu0
    %v6679 = vadd.f32 0.0, %v6678
    %v6680 = vpop.f32.mrb[0].mxu0
    %v6681 = vadd.f32 0.0, %v6680
    %6682 = vmatprep.mubr.f32.mxu0 %v6589
    %6683 = vmatmul.mubr.f32.gmra.mrb[0].mxu0 %v6575
    %v6684 = vpop.f32.mrb[0].mxu0
    %v6685 = vadd.f32 0.0, %v6684
    %v6686 = vpop.f32.mrb[0].mxu0
    %v6687 = vadd.f32 0.0, %v6686
    %6688 = vdwg.mxu0
    %6689 = vmatprep.subr.mxu0 0.0
    %6690 = vmatpush1.msra.mxu0 %v6512
    %6691 = vmatprep.subr.mxu0 0.0
    %6692 = vmatpush1.msra.mxu0 %v6515
    %6693 = vmatprep.subr.mxu0 0.0
    %6694 = vmatpush1.msra.mxu0 %v6518
    %6695 = vmatprep.subr.mxu0 0.0
    %6696 = vmatpush1.msra.mxu0 %v6521
    %6697 = vmatprep.subr.mxu0 0.0
    %6698 = vmatpush1.msra.mxu0 %v6524
    %6699 = vmatprep.subr.mxu0 0.0
    %6700 = vmatpush1.msra.mxu0 %v6527
    %6701 = vmatprep.subr.mxu0 0.0
    %6702 = vmatpush1.msra.mxu0 %v6530
    %6703 = vmatprep.subr.mxu0 0.0
    %6704 = vmatpush1.msra.mxu0 %v6533
    %6705 = vmatprep.subr.mxu0 0.0
    %6706 = vmatpush1.msra.mxu0 %v6536
    %6707 = vmatprep.subr.mxu0 0.0
    %6708 = vmatpush1.msra.mxu0 %v6539
    %6709 = vmatprep.subr.mxu0 0.0
    %6710 = vmatpush1.msra.mxu0 %v6542
    %6711 = vmatprep.subr.mxu0 0.0
    %6712 = vmatpush1.msra.mxu0 %v6545
    %6713 = vmatprep.subr.mxu0 0.0
    %6714 = vmatpush1.msra.mxu0 %v6548
    %6715 = vmatprep.subr.mxu0 0.0
    %6716 = vmatpush1.msra.mxu0 %v6551
    %6717 = vmatprep.subr.mxu0 0.0
    %6718 = vmatpush1.msra.mxu0 %v6554
    %6719 = vmatprep.subr.mxu0 0.0
    %6720 = vmatpush1.msra.mxu0 %v6557
    %6721 = vmatprep.subr.mxu0 0.0
    %6722 = vmatpush1.msra.mxu0 %v6598
    %6723 = vmatprep.subr.mxu0 0.0
    %6724 = vmatpush1.msra.mxu0 0.0
    %6725 = vmatprep.subr.mxu0 0.0
    %6726 = vmatpush1.msra.mxu0 0.0
    %6727 = vmatprep.subr.mxu0 0.0
    %6728 = vmatpush1.msra.mxu0 0.0
    %6729 = vmatprep.subr.mxu0 0.0
    %6730 = vmatpush1.msra.mxu0 0.0
    %6731 = vmatprep.subr.mxu0 0.0
    %6732 = vmatpush1.msra.mxu0 0.0
    %6733 = vmatprep.subr.mxu0 0.0
    %6734 = vmatpush1.msra.mxu0 0.0
    %6735 = vmatprep.subr.mxu0 0.0
    %6736 = vmatpush1.msra.mxu0 0.0
    %6737 = vmatprep.subr.mxu0 0.0
    %6738 = vmatpush1.msra.mxu0 0.0
    %6739 = vmatprep.subr.mxu0 0.0
    %6740 = vmatpush1.msra.mxu0 0.0
    %6741 = vmatprep.subr.mxu0 0.0
    %6742 = vmatpush1.msra.mxu0 0.0
    %6743 = vmatprep.subr.mxu0 0.0
    %6744 = vmatpush1.msra.mxu0 0.0
    %6745 = vmatprep.subr.mxu0 0.0
    %6746 = vmatpush1.msra.mxu0 0.0
    %6747 = vmatprep.subr.mxu0 0.0
    %6748 = vmatpush1.msra.mxu0 0.0
    %6749 = vmatprep.subr.mxu0 0.0
    %6750 = vmatpush1.msra.mxu0 0.0
    %6751 = vmatprep.subr.mxu0 0.0
    %6752 = vmatpush1.msra.mxu0 0.0
    %6753 = vmatprep.mubr.f32.mxu0 %v6583
    %6754 = vmatmul.mubr.f32.gmra.mrb[0].mxu0 %v6567
    %v6755 = vpop.f32.mrb[0].mxu0
    %v6756 = vadd.f32 0.0, %v6755
    %v6757 = vpop.f32.mrb[0].mxu0
    %6758 = vmatprep.mubr.f32.mxu0 %v6585
    %6759 = vmatmul.mubr.f32.gmra.mrb[0].mxu0 %v6572
    %v6760 = vpop.f32.mrb[0].mxu0
    %v6761 = vadd.f32 0.0, %v6760
    %v6762 = vpop.f32.mrb[0].mxu0
    %6763 = vmatprep.mubr.f32.mxu0 %v6587
    %6764 = vmatmul.mubr.f32.gmra.mrb[0].mxu0 %v6576
    %v6765 = vpop.f32.mrb[0].mxu0
    %v6766 = vadd.f32 0.0, %v6765
    %v6767 = vpop.f32.mrb[0].mxu0
    %6768 = vmatprep.mubr.f32.mxu0 %v6589
    %6769 = vmatmul.mubr.f32.gmra.mrb[0].mxu0 %v6575
    %v6770 = vpop.f32.mrb[0].mxu0
    %v6771 = vadd.f32 0.0, %v6770
    %v6772 = vpop.f32.mrb[0].mxu0
    %6773 = vdwg.mxu0
    %v6774 = vadd.f32 %v6494, %v6667
    %v6775 = vadd.f32 %v6495, %v6669
    %v6776 = vadd.f32 %v6496, %v6756
    %v6777 = vadd.f32 %v6497, %v6673
    %v6778 = vadd.f32 %v6498, %v6675
    %v6779 = vadd.f32 %v6499, %v6761
    %v6780 = vadd.f32 %v6500, %v6679
    %v6781 = vadd.f32 %v6501, %v6681
    %v6782 = vadd.f32 %v6502, %v6766
    %v6783 = vadd.f32 %v6503, %v6685
    %v6784 = vadd.f32 %v6504, %v6687
    %v6785 = vadd.f32 %v6505, %v6771
    %v6786 = vld [vmem:[#allocation2] sm:$0xf0]
    %v6787 = vld [vmem:[#allocation2 + $0x8] sm:$0xf0]
    %v6788 = vld [vmem:[#allocation2 + $0x30] sm:$0x3f]
    %v6789 = vld [vmem:[#allocation2 + $0x38] sm:$0x3f]
    %v6790 = vld [vmem:[%s3103] sm:$0xff]
    %v6791 = vld [vmem:[%s3103 + $0x8] sm:$0xff]
    %v6792 = vld [vmem:[%s3103 + $0x10] sm:$0xff]
    %v6793 = vld [vmem:[%s3103 + $0x18] sm:$0xff]
    %v6794 = vld [vmem:[%s3103 + $0x20] sm:$0xff]
    %v6795 = vld [vmem:[%s3103 + $0x28] sm:$0xff]
    %v6796 = vld [vmem:[%s3103 + $0x30] sm:$0xff]
    %v6797 = vld [vmem:[%s3103 + $0x38] sm:$0xff]
    %v6798 = vld [vmem:[%s3103 + $0x40] sm:$0xff]
    %v6799 = vld [vmem:[%s3103 + $0x48] sm:$0xff]
    %v6800 = vld [vmem:[%s3103 + $0x50] sm:$0xff]
    %v6801 = vld [vmem:[%s3103 + $0x58] sm:$0xff]
    %v6802 = vld [vmem:[%s3103 + $0x60] sm:$0xff]
    %v6803 = vld [vmem:[%s3103 + $0x68] sm:$0xff]
    %v6804 = vld [vmem:[%s3103 + $0x70] sm:$0xff]
    %v6805 = vld [vmem:[%s3103 + $0x78] sm:$0xff]
    %v6806 = vld [vmem:[%s3103 + $0x80] sm:$0xff]
    %v6807 = vld [vmem:[%s3103 + $0x88] sm:$0xff]
    %v6808 = vld [vmem:[%s3103 + $0x90] sm:$0xff]
    %v6809 = vld [vmem:[%s3103 + $0x98] sm:$0xff]
    %v6810 = vld [vmem:[%s3103 + $0xa0] sm:$0xff]
    %v6811 = vld [vmem:[%s3103 + $0xa8] sm:$0xff]
    %v6812 = vld [vmem:[%s3103 + $0xb0] sm:$0xff]
    %v6813 = vld [vmem:[%s3103 + $0xb8] sm:$0xff]
    %v6814 = vld [vmem:[%s3103 + $0xc0] sm:$0xff]
    %v6815 = vld [vmem:[%s3103 + $0xc8] sm:$0xff]
    %v6816 = vld [vmem:[%s3103 + $0xd0] sm:$0xff]
    %v6817 = vld [vmem:[%s3103 + $0xd8] sm:$0xff]
    %v6818 = vld [vmem:[%s3103 + $0xe0] sm:$0xff]
    %v6819 = vld [vmem:[%s3103 + $0xe8] sm:$0xff]
    %v6820 = vld [vmem:[%s3103 + $0xf0] sm:$0xff]
    %v6821 = vld [vmem:[%s3103 + $0xf8] sm:$0xff]
    %v6822 = vld [vmem:[%s3103 + $0x100] sm:$0xff]
    %v6823 = vld [vmem:[%s3103 + $0x108] sm:$0xff]
    %v6824 = vld [vmem:[%s3103 + $0x110] sm:$0xff]
    %v6825 = vld [vmem:[%s3103 + $0x118] sm:$0xff]
    %v6826 = vld [vmem:[%s3103 + $0x120] sm:$0xff]
    %v6827 = vld [vmem:[%s3103 + $0x128] sm:$0xff]
    %v6828 = vld [vmem:[%s3103 + $0x130] sm:$0xff]
    %v6829 = vld [vmem:[%s3103 + $0x138] sm:$0xff]
    %v6830 = vld [vmem:[%s3103 + $0x140] sm:$0xff]
    %v6831 = vld [vmem:[%s3103 + $0x148] sm:$0xff]
    %v6832 = vld [vmem:[%s3103 + $0x150] sm:$0xff]
    %v6833 = vld [vmem:[%s3103 + $0x158] sm:$0xff]
    %v6834 = vld [vmem:[%s3103 + $0x160] sm:$0xff]
    %v6835 = vld [vmem:[%s3103 + $0x168] sm:$0xff]
    %v6836 = vld [vmem:[%s3103 + $0x170] sm:$0xff]
    %v6837 = vld [vmem:[%s3103 + $0x178] sm:$0xff]
    %v6838 = vld [vmem:[%s3103 + $0x180] sm:$0xf]
    %v6839 = vld [vmem:[%s3103 + $0x188] sm:$0xf]
    %v6840 = vld [vmem:[%s3103 + $0x190] sm:$0xf]
    %v6845 = vrot.slane %v6786, 4
    %v6846 = vrot.slane %v5704, 4
    %v6847 = vsel %vm1895, %v6845, %v6846
    %v6848 = vrot.slane %v6787, 4
    %v6849 = vrot.slane %v5705, 4
    %v6850 = vsel %vm1895, %v6848, %v6849
    %v6851 = vrot.slane %v5706, 4
    %v6852 = vsel %vm1895, %v6846, %v6851
    %v6853 = vrot.slane %v5707, 4
    %v6854 = vsel %vm1895, %v6849, %v6853
    %v6855 = vrot.slane %v6788, 4
    %v6856 = vsel %vm1895, %v6851, %v6855
    %v6857 = vrot.slane %v6789, 4
    %v6858 = vsel %vm1895, %v6853, %v6857
    %v6863 = vsel %vm2000, %v6850, 0
    %v6865 = vsel %vm2000, %v6854, 0
    %v6867 = vsel %vm2000, %v6858, 0
    %v6869 = vsel %vm2000, %v6857, 0
    %v6872 = vsel %vm1895, %v6838, 0
    %v6875 = vsel %vm1895, %v6839, 0
    %v6878 = vsel %vm1895, %v6840, 0
    %6880 = vmatprep.subr.mxu0 %v6791
    %6881 = vmatpush1.msra.mxu0 %v6790
    %6882 = vmatprep.subr.mxu0 %v6794
    %6883 = vmatpush1.msra.mxu0 %v6793
    %6884 = vmatprep.subr.mxu0 %v6797
    %6885 = vmatpush1.msra.mxu0 %v6796
    %6886 = vmatprep.subr.mxu0 %v6800
    %6887 = vmatpush1.msra.mxu0 %v6799
    %6888 = vmatprep.subr.mxu0 %v6803
    %6889 = vmatpush1.msra.mxu0 %v6802
    %6890 = vmatprep.subr.mxu0 %v6806
    %6891 = vmatpush1.msra.mxu0 %v6805
    %6892 = vmatprep.subr.mxu0 %v6809
    %6893 = vmatpush1.msra.mxu0 %v6808
    %6894 = vmatprep.subr.mxu0 %v6812
    %6895 = vmatpush1.msra.mxu0 %v6811
    %6896 = vmatprep.subr.mxu0 %v6815
    %6897 = vmatpush1.msra.mxu0 %v6814
    %6898 = vmatprep.subr.mxu0 %v6818
    %6899 = vmatpush1.msra.mxu0 %v6817
    %6900 = vmatprep.subr.mxu0 %v6821
    %6901 = vmatpush1.msra.mxu0 %v6820
    %6902 = vmatprep.subr.mxu0 %v6824
    %6903 = vmatpush1.msra.mxu0 %v6823
    %6904 = vmatprep.subr.mxu0 %v6827
    %6905 = vmatpush1.msra.mxu0 %v6826
    %6906 = vmatprep.subr.mxu0 %v6830
    %6907 = vmatpush1.msra.mxu0 %v6829
    %6908 = vmatprep.subr.mxu0 %v6833
    %6909 = vmatpush1.msra.mxu0 %v6832
    %6910 = vmatprep.subr.mxu0 %v6836
    %6911 = vmatpush1.msra.mxu0 %v6835
    %6912 = vmatprep.subr.mxu0 %v6875
    %6913 = vmatpush1.msra.mxu0 %v6872
    %6914 = vmatprep.subr.mxu0 0.0
    %6915 = vmatpush1.msra.mxu0 0.0
    %6916 = vmatprep.subr.mxu0 0.0
    %6917 = vmatpush1.msra.mxu0 0.0
    %6918 = vmatprep.subr.mxu0 0.0
    %6919 = vmatpush1.msra.mxu0 0.0
    %6920 = vmatprep.subr.mxu0 0.0
    %6921 = vmatpush1.msra.mxu0 0.0
    %6922 = vmatprep.subr.mxu0 0.0
    %6923 = vmatpush1.msra.mxu0 0.0
    %6924 = vmatprep.subr.mxu0 0.0
    %6925 = vmatpush1.msra.mxu0 0.0
    %6926 = vmatprep.subr.mxu0 0.0
    %6927 = vmatpush1.msra.mxu0 0.0
    %6928 = vmatprep.subr.mxu0 0.0
    %6929 = vmatpush1.msra.mxu0 0.0
    %6930 = vmatprep.subr.mxu0 0.0
    %6931 = vmatpush1.msra.mxu0 0.0
    %6932 = vmatprep.subr.mxu0 0.0
    %6933 = vmatpush1.msra.mxu0 0.0
    %6934 = vmatprep.subr.mxu0 0.0
    %6935 = vmatpush1.msra.mxu0 0.0
    %6936 = vmatprep.subr.mxu0 0.0
    %6937 = vmatpush1.msra.mxu0 0.0
    %6938 = vmatprep.subr.mxu0 0.0
    %6939 = vmatpush1.msra.mxu0 0.0
    %6940 = vmatprep.subr.mxu0 0.0
    %6941 = vmatpush1.msra.mxu0 0.0
    %6942 = vmatprep.subr.mxu0 0.0
    %6943 = vmatpush1.msra.mxu0 0.0
    %6944 = vmatprep.mubr.f32.mxu0 %v6863
    %6945 = vmatmul.mubr.f32.gmra.mrb[0].mxu0 %v6847
    %v6946 = vpop.f32.mrb[0].mxu0
    %v6947 = vadd.f32 0.0, %v6946
    %v6948 = vpop.f32.mrb[0].mxu0
    %v6949 = vadd.f32 0.0, %v6948
    %6950 = vmatprep.mubr.f32.mxu0 %v6865
    %6951 = vmatmul.mubr.f32.gmra.mrb[0].mxu0 %v6852
    %v6952 = vpop.f32.mrb[0].mxu0
    %v6953 = vadd.f32 0.0, %v6952
    %v6954 = vpop.f32.mrb[0].mxu0
    %v6955 = vadd.f32 0.0, %v6954
    %6956 = vmatprep.mubr.f32.mxu0 %v6867
    %6957 = vmatmul.mubr.f32.gmra.mrb[0].mxu0 %v6856
    %v6958 = vpop.f32.mrb[0].mxu0
    %v6959 = vadd.f32 0.0, %v6958
    %v6960 = vpop.f32.mrb[0].mxu0
    %v6961 = vadd.f32 0.0, %v6960
    %6962 = vmatprep.mubr.f32.mxu0 %v6869
    %6963 = vmatmul.mubr.f32.gmra.mrb[0].mxu0 %v6855
    %v6964 = vpop.f32.mrb[0].mxu0
    %v6965 = vadd.f32 0.0, %v6964
    %v6966 = vpop.f32.mrb[0].mxu0
    %v6967 = vadd.f32 0.0, %v6966
    %6968 = vdwg.mxu0
    %6969 = vmatprep.subr.mxu0 0.0
    %6970 = vmatpush1.msra.mxu0 %v6792
    %6971 = vmatprep.subr.mxu0 0.0
    %6972 = vmatpush1.msra.mxu0 %v6795
    %6973 = vmatprep.subr.mxu0 0.0
    %6974 = vmatpush1.msra.mxu0 %v6798
    %6975 = vmatprep.subr.mxu0 0.0
    %6976 = vmatpush1.msra.mxu0 %v6801
    %6977 = vmatprep.subr.mxu0 0.0
    %6978 = vmatpush1.msra.mxu0 %v6804
    %6979 = vmatprep.subr.mxu0 0.0
    %6980 = vmatpush1.msra.mxu0 %v6807
    %6981 = vmatprep.subr.mxu0 0.0
    %6982 = vmatpush1.msra.mxu0 %v6810
    %6983 = vmatprep.subr.mxu0 0.0
    %6984 = vmatpush1.msra.mxu0 %v6813
    %6985 = vmatprep.subr.mxu0 0.0
    %6986 = vmatpush1.msra.mxu0 %v6816
    %6987 = vmatprep.subr.mxu0 0.0
    %6988 = vmatpush1.msra.mxu0 %v6819
    %6989 = vmatprep.subr.mxu0 0.0
    %6990 = vmatpush1.msra.mxu0 %v6822
    %6991 = vmatprep.subr.mxu0 0.0
    %6992 = vmatpush1.msra.mxu0 %v6825
    %6993 = vmatprep.subr.mxu0 0.0
    %6994 = vmatpush1.msra.mxu0 %v6828
    %6995 = vmatprep.subr.mxu0 0.0
    %6996 = vmatpush1.msra.mxu0 %v6831
    %6997 = vmatprep.subr.mxu0 0.0
    %6998 = vmatpush1.msra.mxu0 %v6834
    %6999 = vmatprep.subr.mxu0 0.0
    %7000 = vmatpush1.msra.mxu0 %v6837
    %7001 = vmatprep.subr.mxu0 0.0
    %7002 = vmatpush1.msra.mxu0 %v6878
    %7003 = vmatprep.subr.mxu0 0.0
    %7004 = vmatpush1.msra.mxu0 0.0
    %7005 = vmatprep.subr.mxu0 0.0
    %7006 = vmatpush1.msra.mxu0 0.0
    %7007 = vmatprep.subr.mxu0 0.0
    %7008 = vmatpush1.msra.mxu0 0.0
    %7009 = vmatprep.subr.mxu0 0.0
    %7010 = vmatpush1.msra.mxu0 0.0
    %7011 = vmatprep.subr.mxu0 0.0
    %7012 = vmatpush1.msra.mxu0 0.0
    %7013 = vmatprep.subr.mxu0 0.0
    %7014 = vmatpush1.msra.mxu0 0.0
    %7015 = vmatprep.subr.mxu0 0.0
    %7016 = vmatpush1.msra.mxu0 0.0
    %7017 = vmatprep.subr.mxu0 0.0
    %7018 = vmatpush1.msra.mxu0 0.0
    %7019 = vmatprep.subr.mxu0 0.0
    %7020 = vmatpush1.msra.mxu0 0.0
    %7021 = vmatprep.subr.mxu0 0.0
    %7022 = vmatpush1.msra.mxu0 0.0
    %7023 = vmatprep.subr.mxu0 0.0
    %7024 = vmatpush1.msra.mxu0 0.0
    %7025 = vmatprep.subr.mxu0 0.0
    %7026 = vmatpush1.msra.mxu0 0.0
    %7027 = vmatprep.subr.mxu0 0.0
    %7028 = vmatpush1.msra.mxu0 0.0
    %7029 = vmatprep.subr.mxu0 0.0
    %7030 = vmatpush1.msra.mxu0 0.0
    %7031 = vmatprep.subr.mxu0 0.0
    %7032 = vmatpush1.msra.mxu0 0.0
    %7033 = vmatprep.mubr.f32.mxu0 %v6863
    %7034 = vmatmul.mubr.f32.gmra.mrb[0].mxu0 %v6847
    %v7035 = vpop.f32.mrb[0].mxu0
    %v7036 = vadd.f32 0.0, %v7035
    %v7037 = vpop.f32.mrb[0].mxu0
    %7038 = vmatprep.mubr.f32.mxu0 %v6865
    %7039 = vmatmul.mubr.f32.gmra.mrb[0].mxu0 %v6852
    %v7040 = vpop.f32.mrb[0].mxu0
    %v7041 = vadd.f32 0.0, %v7040
    %v7042 = vpop.f32.mrb[0].mxu0
    %7043 = vmatprep.mubr.f32.mxu0 %v6867
    %7044 = vmatmul.mubr.f32.gmra.mrb[0].mxu0 %v6856
    %v7045 = vpop.f32.mrb[0].mxu0
    %v7046 = vadd.f32 0.0, %v7045
    %v7047 = vpop.f32.mrb[0].mxu0
    %7048 = vmatprep.mubr.f32.mxu0 %v6869
    %7049 = vmatmul.mubr.f32.gmra.mrb[0].mxu0 %v6855
    %v7050 = vpop.f32.mrb[0].mxu0
    %v7051 = vadd.f32 0.0, %v7050
    %v7052 = vpop.f32.mrb[0].mxu0
    %7053 = vdwg.mxu0
    %v7054 = vadd.f32 %v6774, %v6947
    %v7055 = vadd.f32 %v6775, %v6949
    %v7056 = vadd.f32 %v6776, %v7036
    %v7057 = vadd.f32 %v6777, %v6953
    %v7058 = vadd.f32 %v6778, %v6955
    %v7059 = vadd.f32 %v6779, %v7041
    %v7060 = vadd.f32 %v6780, %v6959
    %v7061 = vadd.f32 %v6781, %v6961
    %v7062 = vadd.f32 %v6782, %v7046
    %v7063 = vadd.f32 %v6783, %v6965
    %v7064 = vadd.f32 %v6784, %v6967
    %v7065 = vadd.f32 %v6785, %v7051
    %v7066 = vld [vmem:[%s6] sm:$0x7]
    %v7068 = vlaneseq
    %v7069 = vshrl.u32 %v7068, 7
    %v7070 = vsub.s32 0, %v7069
    %v7071 = vrot.slane %v7066, %v7070
    %v7072 = vlaneseq
    %v7073 = vshrl.u32 %v7072, 7
    %v7074 = vsub.s32 1, %v7073
    %v7075 = vrot.slane %v7066, %v7074
    %v7076 = vlaneseq
    %v7077 = vshrl.u32 %v7076, 7
    %v7078 = vsub.s32 2, %v7077
    %v7079 = vrot.slane %v7066, %v7078
    %v7083 = vadd.f32 %v7054, %v7071
    %v7084 = vadd.f32 %v7055, %v7075
    %v7085 = vadd.f32 %v7056, %v7079
    %v7086 = vadd.f32 %v7057, %v7071
    %v7087 = vadd.f32 %v7058, %v7075
    %v7088 = vadd.f32 %v7059, %v7079
    %v7089 = vadd.f32 %v7060, %v7071
    %v7090 = vadd.f32 %v7061, %v7075
    %v7091 = vadd.f32 %v7062, %v7079
    %v7092 = vadd.f32 %v7063, %v7071
    %v7093 = vadd.f32 %v7064, %v7075
    %v7094 = vadd.f32 %v7065, %v7079
    %v7095 = vtanh.pop %v7083
    %v7096 = vtanh.pop %v7084
    %v7097 = vtanh.pop %v7085
    %v7098 = vtanh.pop %v7086
    %v7099 = vtanh.pop %v7087
    %v7100 = vtanh.pop %v7088
    %v7101 = vtanh.pop %v7089
    %v7102 = vtanh.pop %v7090
    %v7103 = vtanh.pop %v7091
    %v7104 = vtanh.pop %v7092
    %v7105 = vtanh.pop %v7093
    %v7106 = vtanh.pop %v7094
    %v7107 = vld [vmem:[%s7] sm:$0xff]
    %v7108 = vld [vmem:[%s7 + $0x8] sm:$0x1f]
    %v7109 = vld [vmem:[%s8] sm:$0xff]
    %v7110 = vld [vmem:[%s8 + $0x8] sm:$0xff]
    %v7111 = vld [vmem:[%s8 + $0x10] sm:$0xff]
    %v7112 = vld [vmem:[%s8 + $0x18] sm:$0xff]
    %v7113 = vld [vmem:[%s8 + $0x20] sm:$0xff]
    %v7114 = vld [vmem:[%s8 + $0x28] sm:$0xff]
    %v7115 = vld [vmem:[%s8 + $0x30] sm:$0xff]
    %v7116 = vld [vmem:[%s8 + $0x38] sm:$0xff]
    %v7117 = vld [vmem:[%s8 + $0x40] sm:$0xff]
    %v7118 = vld [vmem:[%s8 + $0x48] sm:$0xff]
    %v7119 = vld [vmem:[%s8 + $0x50] sm:$0xff]
    %v7120 = vld [vmem:[%s8 + $0x58] sm:$0xff]
    %v7121 = vld [vmem:[%s8 + $0x60] sm:$0xff]
    %v7122 = vld [vmem:[%s8 + $0x68] sm:$0xff]
    %v7123 = vld [vmem:[%s8 + $0x70] sm:$0xff]
    %v7124 = vld [vmem:[%s8 + $0x78] sm:$0xff]
    %v7125 = vld [vmem:[%s8 + $0x80] sm:$0xff]
    %v7126 = vld [vmem:[%s8 + $0x88] sm:$0xff]
    %v7127 = vld [vmem:[%s8 + $0x90] sm:$0xff]
    %v7128 = vld [vmem:[%s8 + $0x98] sm:$0xff]
    %v7129 = vld [vmem:[%s8 + $0xa0] sm:$0xff]
    %v7130 = vld [vmem:[%s8 + $0xa8] sm:$0xff]
    %v7131 = vld [vmem:[%s8 + $0xb0] sm:$0xff]
    %v7132 = vld [vmem:[%s8 + $0xb8] sm:$0xff]
    %v7133 = vld [vmem:[%s8 + $0xc0] sm:$0xff]
    %v7134 = vld [vmem:[%s8 + $0xc8] sm:$0xff]
    %v7135 = vld [vmem:[%s8 + $0xd0] sm:$0xff]
    %v7136 = vld [vmem:[%s8 + $0xd8] sm:$0xff]
    %v7137 = vld [vmem:[%s8 + $0xe0] sm:$0xff]
    %v7138 = vld [vmem:[%s8 + $0xe8] sm:$0xff]
    %v7139 = vld [vmem:[%s8 + $0xf0] sm:$0xff]
    %v7140 = vld [vmem:[%s8 + $0xf8] sm:$0xff]
    %v7141 = vld [vmem:[%s8 + $0x100] sm:$0xff]
    %v7142 = vld [vmem:[%s8 + $0x108] sm:$0xff]
    %v7143 = vld [vmem:[%s8 + $0x110] sm:$0xff]
    %v7144 = vld [vmem:[%s8 + $0x118] sm:$0xff]
    %v7145 = vld [vmem:[%s8 + $0x120] sm:$0xff]
    %v7146 = vld [vmem:[%s8 + $0x128] sm:$0xff]
    %v7147 = vld [vmem:[%s8 + $0x130] sm:$0xff]
    %v7148 = vld [vmem:[%s8 + $0x138] sm:$0xff]
    %v7149 = vld [vmem:[%s8 + $0x140] sm:$0xff]
    %v7150 = vld [vmem:[%s8 + $0x148] sm:$0xff]
    %v7151 = vld [vmem:[%s8 + $0x150] sm:$0xff]
    %v7152 = vld [vmem:[%s8 + $0x158] sm:$0xff]
    %v7153 = vld [vmem:[%s8 + $0x160] sm:$0xff]
    %v7154 = vld [vmem:[%s8 + $0x168] sm:$0xff]
    %v7155 = vld [vmem:[%s8 + $0x170] sm:$0xff]
    %v7156 = vld [vmem:[%s8 + $0x178] sm:$0xff]
    %v7157 = vld [vmem:[%s8 + $0x180] sm:$0xff]
    %v7158 = vld [vmem:[%s8 + $0x188] sm:$0xff]
    %v7159 = vld [vmem:[%s8 + $0x190] sm:$0xff]
    %v7160 = vld [vmem:[%s8 + $0x198] sm:$0xff]
    %v7161 = vld [vmem:[%s8 + $0x1a0] sm:$0xff]
    %v7162 = vld [vmem:[%s8 + $0x1a8] sm:$0xff]
    %v7163 = vld [vmem:[%s8 + $0x1b0] sm:$0xff]
    %v7164 = vld [vmem:[%s8 + $0x1b8] sm:$0xff]
    %v7165 = vld [vmem:[%s8 + $0x1c0] sm:$0xff]
    %v7166 = vld [vmem:[%s8 + $0x1c8] sm:$0xff]
    %v7167 = vld [vmem:[%s8 + $0x1d0] sm:$0xff]
    %v7168 = vld [vmem:[%s8 + $0x1d8] sm:$0xff]
    %v7169 = vld [vmem:[%s8 + $0x1e0] sm:$0xff]
    %v7170 = vld [vmem:[%s8 + $0x1e8] sm:$0xff]
    %v7171 = vld [vmem:[%s8 + $0x1f0] sm:$0xff]
    %v7172 = vld [vmem:[%s8 + $0x1f8] sm:$0xff]
    %v7173 = vld [vmem:[%s8 + $0x200] sm:$0xff]
    %v7174 = vld [vmem:[%s8 + $0x208] sm:$0xff]
    %v7175 = vld [vmem:[%s8 + $0x210] sm:$0xff]
    %v7176 = vld [vmem:[%s8 + $0x218] sm:$0xff]
    %v7177 = vld [vmem:[%s8 + $0x220] sm:$0xff]
    %v7178 = vld [vmem:[%s8 + $0x228] sm:$0xff]
    %v7179 = vld [vmem:[%s8 + $0x230] sm:$0xff]
    %v7180 = vld [vmem:[%s8 + $0x238] sm:$0xff]
    %v7182 = vsel %vm3495, %v7097, 0
    %v7185 = vsel %vm3495, %v7100, 0
    %v7188 = vsel %vm3495, %v7103, 0
    %v7191 = vsel %vm3495, %v7106, 0
    %7193 = vmatprep.subr.mxu0 %v7110
    %7194 = vmatpush1.msra.mxu0 %v7109
    %7195 = vmatprep.subr.mxu0 %v7112
    %7196 = vmatpush1.msra.mxu0 %v7111
    %7197 = vmatprep.subr.mxu0 %v7114
    %7198 = vmatpush1.msra.mxu0 %v7113
    %7199 = vmatprep.subr.mxu0 %v7116
    %7200 = vmatpush1.msra.mxu0 %v7115
    %7201 = vmatprep.subr.mxu0 %v7118
    %7202 = vmatpush1.msra.mxu0 %v7117
    %7203 = vmatprep.subr.mxu0 %v7120
    %7204 = vmatpush1.msra.mxu0 %v7119
    %7205 = vmatprep.subr.mxu0 %v7122
    %7206 = vmatpush1.msra.mxu0 %v7121
    %7207 = vmatprep.subr.mxu0 %v7124
    %7208 = vmatpush1.msra.mxu0 %v7123
    %7209 = vmatprep.subr.mxu0 %v7126
    %7210 = vmatpush1.msra.mxu0 %v7125
    %7211 = vmatprep.subr.mxu0 %v7128
    %7212 = vmatpush1.msra.mxu0 %v7127
    %7213 = vmatprep.subr.mxu0 %v7130
    %7214 = vmatpush1.msra.mxu0 %v7129
    %7215 = vmatprep.subr.mxu0 %v7132
    %7216 = vmatpush1.msra.mxu0 %v7131
    %7217 = vmatprep.subr.mxu0 %v7134
    %7218 = vmatpush1.msra.mxu0 %v7133
    %7219 = vmatprep.subr.mxu0 %v7136
    %7220 = vmatpush1.msra.mxu0 %v7135
    %7221 = vmatprep.subr.mxu0 %v7138
    %7222 = vmatpush1.msra.mxu0 %v7137
    %7223 = vmatprep.subr.mxu0 %v7140
    %7224 = vmatpush1.msra.mxu0 %v7139
    %7225 = vmatprep.subr.mxu0 %v7142
    %7226 = vmatpush1.msra.mxu0 %v7141
    %7227 = vmatprep.subr.mxu0 %v7144
    %7228 = vmatpush1.msra.mxu0 %v7143
    %7229 = vmatprep.subr.mxu0 %v7146
    %7230 = vmatpush1.msra.mxu0 %v7145
    %7231 = vmatprep.subr.mxu0 %v7148
    %7232 = vmatpush1.msra.mxu0 %v7147
    %7233 = vmatprep.subr.mxu0 %v7150
    %7234 = vmatpush1.msra.mxu0 %v7149
    %7235 = vmatprep.subr.mxu0 %v7152
    %7236 = vmatpush1.msra.mxu0 %v7151
    %7237 = vmatprep.subr.mxu0 %v7154
    %7238 = vmatpush1.msra.mxu0 %v7153
    %7239 = vmatprep.subr.mxu0 %v7156
    %7240 = vmatpush1.msra.mxu0 %v7155
    %7241 = vmatprep.subr.mxu0 %v7158
    %7242 = vmatpush1.msra.mxu0 %v7157
    %7243 = vmatprep.subr.mxu0 %v7160
    %7244 = vmatpush1.msra.mxu0 %v7159
    %7245 = vmatprep.subr.mxu0 %v7162
    %7246 = vmatpush1.msra.mxu0 %v7161
    %7247 = vmatprep.subr.mxu0 %v7164
    %7248 = vmatpush1.msra.mxu0 %v7163
    %7249 = vmatprep.subr.mxu0 %v7166
    %7250 = vmatpush1.msra.mxu0 %v7165
    %7251 = vmatprep.subr.mxu0 %v7168
    %7252 = vmatpush1.msra.mxu0 %v7167
    %7253 = vmatprep.subr.mxu0 %v7170
    %7254 = vmatpush1.msra.mxu0 %v7169
    %7255 = vmatprep.subr.mxu0 %v7172
    %7256 = vmatpush1.msra.mxu0 %v7171
    %7257 = vmatprep.mubr.f32.mxu0 %v7096
    %7258 = vmatmul.mubr.f32.gmra.mrb[0].mxu0 %v7095
    %v7259 = vpop.f32.mrb[0].mxu0
    %v7260 = vadd.f32 0.0, %v7259
    %v7261 = vpop.f32.mrb[0].mxu0
    %v7262 = vadd.f32 0.0, %v7261
    %7263 = vmatprep.mubr.f32.mxu0 %v7099
    %7264 = vmatmul.mubr.f32.gmra.mrb[0].mxu0 %v7098
    %v7265 = vpop.f32.mrb[0].mxu0
    %v7266 = vadd.f32 0.0, %v7265
    %v7267 = vpop.f32.mrb[0].mxu0
    %v7268 = vadd.f32 0.0, %v7267
    %7269 = vmatprep.mubr.f32.mxu0 %v7102
    %7270 = vmatmul.mubr.f32.gmra.mrb[0].mxu0 %v7101
    %v7271 = vpop.f32.mrb[0].mxu0
    %v7272 = vadd.f32 0.0, %v7271
    %v7273 = vpop.f32.mrb[0].mxu0
    %v7274 = vadd.f32 0.0, %v7273
    %7275 = vmatprep.mubr.f32.mxu0 %v7105
    %7276 = vmatmul.mubr.f32.gmra.mrb[0].mxu0 %v7104
    %v7277 = vpop.f32.mrb[0].mxu0
    %v7278 = vadd.f32 0.0, %v7277
    %v7279 = vpop.f32.mrb[0].mxu0
    %v7280 = vadd.f32 0.0, %v7279
    %7281 = vdwg.mxu0
    %7282 = vmatprep.subr.mxu0 %v7174
    %7283 = vmatpush1.msra.mxu0 %v7173
    %7284 = vmatprep.subr.mxu0 %v7176
    %7285 = vmatpush1.msra.mxu0 %v7175
    %7286 = vmatprep.subr.mxu0 %v7178
    %7287 = vmatpush1.msra.mxu0 %v7177
    %7288 = vmatprep.subr.mxu0 %v7180
    %7289 = vmatpush1.msra.mxu0 %v7179
    %7290 = vmatprep.subr.mxu0 0.0
    %7291 = vmatpush1.msra.mxu0 0.0
    %7292 = vmatprep.subr.mxu0 0.0
    %7293 = vmatpush1.msra.mxu0 0.0
    %7294 = vmatprep.subr.mxu0 0.0
    %7295 = vmatpush1.msra.mxu0 0.0
    %7296 = vmatprep.subr.mxu0 0.0
    %7297 = vmatpush1.msra.mxu0 0.0
    %7298 = vmatprep.subr.mxu0 0.0
    %7299 = vmatpush1.msra.mxu0 0.0
    %7300 = vmatprep.subr.mxu0 0.0
    %7301 = vmatpush1.msra.mxu0 0.0
    %7302 = vmatprep.subr.mxu0 0.0
    %7303 = vmatpush1.msra.mxu0 0.0
    %7304 = vmatprep.subr.mxu0 0.0
    %7305 = vmatpush1.msra.mxu0 0.0
    %7306 = vmatprep.subr.mxu0 0.0
    %7307 = vmatpush1.msra.mxu0 0.0
    %7308 = vmatprep.subr.mxu0 0.0
    %7309 = vmatpush1.msra.mxu0 0.0
    %7310 = vmatprep.subr.mxu0 0.0
    %7311 = vmatpush1.msra.mxu0 0.0
    %7312 = vmatprep.subr.mxu0 0.0
    %7313 = vmatpush1.msra.mxu0 0.0
    %7314 = vmatprep.subr.mxu0 0.0
    %7315 = vmatpush1.msra.mxu0 0.0
    %7316 = vmatprep.subr.mxu0 0.0
    %7317 = vmatpush1.msra.mxu0 0.0
    %7318 = vmatprep.subr.mxu0 0.0
    %7319 = vmatpush1.msra.mxu0 0.0
    %7320 = vmatprep.subr.mxu0 0.0
    %7321 = vmatpush1.msra.mxu0 0.0
    %7322 = vmatprep.subr.mxu0 0.0
    %7323 = vmatpush1.msra.mxu0 0.0
    %7324 = vmatprep.subr.mxu0 0.0
    %7325 = vmatpush1.msra.mxu0 0.0
    %7326 = vmatprep.subr.mxu0 0.0
    %7327 = vmatpush1.msra.mxu0 0.0
    %7328 = vmatprep.subr.mxu0 0.0
    %7329 = vmatpush1.msra.mxu0 0.0
    %7330 = vmatprep.subr.mxu0 0.0
    %7331 = vmatpush1.msra.mxu0 0.0
    %7332 = vmatprep.subr.mxu0 0.0
    %7333 = vmatpush1.msra.mxu0 0.0
    %7334 = vmatprep.subr.mxu0 0.0
    %7335 = vmatpush1.msra.mxu0 0.0
    %7336 = vmatprep.subr.mxu0 0.0
    %7337 = vmatpush1.msra.mxu0 0.0
    %7338 = vmatprep.subr.mxu0 0.0
    %7339 = vmatpush1.msra.mxu0 0.0
    %7340 = vmatprep.subr.mxu0 0.0
    %7341 = vmatpush1.msra.mxu0 0.0
    %7342 = vmatprep.subr.mxu0 0.0
    %7343 = vmatpush1.msra.mxu0 0.0
    %7344 = vmatprep.subr.mxu0 0.0
    %7345 = vmatpush1.msra.mxu0 0.0
    %7346 = vmatprep.mubr.f32.mxu0 0.0
    %7347 = vmatmul.mubr.f32.gmra.mrb[0].mxu0 %v7182
    %v7348 = vpop.f32.mrb[0].mxu0
    %v7349 = vadd.f32 %v7260, %v7348
    %v7350 = vpop.f32.mrb[0].mxu0
    %v7351 = vadd.f32 %v7262, %v7350
    %7352 = vmatprep.mubr.f32.mxu0 0.0
    %7353 = vmatmul.mubr.f32.gmra.mrb[0].mxu0 %v7185
    %v7354 = vpop.f32.mrb[0].mxu0
    %v7355 = vadd.f32 %v7266, %v7354
    %v7356 = vpop.f32.mrb[0].mxu0
    %v7357 = vadd.f32 %v7268, %v7356
    %7358 = vmatprep.mubr.f32.mxu0 0.0
    %7359 = vmatmul.mubr.f32.gmra.mrb[0].mxu0 %v7188
    %v7360 = vpop.f32.mrb[0].mxu0
    %v7361 = vadd.f32 %v7272, %v7360
    %v7362 = vpop.f32.mrb[0].mxu0
    %v7363 = vadd.f32 %v7274, %v7362
    %7364 = vmatprep.mubr.f32.mxu0 0.0
    %7365 = vmatmul.mubr.f32.gmra.mrb[0].mxu0 %v7191
    %v7366 = vpop.f32.mrb[0].mxu0
    %v7367 = vadd.f32 %v7278, %v7366
    %v7368 = vpop.f32.mrb[0].mxu0
    %v7369 = vadd.f32 %v7280, %v7368
    %7370 = vdwg.mxu0
    %v7372 = vsel %vm3686, %v7107, 0
    %v7375 = vsel %vm3686, %v7108, 0
    %v7378 = vsel %vm3693, %v7367, 0
    %v7381 = vsel %vm3693, %v7369, 0
    %7383 = vmatprep.subr.mxu0 %v7351
    %7384 = vmatpush1.msra.mxu0 %v7349
    %7385 = vmatprep.subr.mxu0 %v7357
    %7386 = vmatpush1.msra.mxu0 %v7355
    %7387 = vmatprep.subr.mxu0 %v7363
    %7388 = vmatpush1.msra.mxu0 %v7361
    %7389 = vmatprep.subr.mxu0 %v7381
    %7390 = vmatpush1.msra.mxu0 %v7378
    %7391 = vmatprep.subr.mxu0 0.0
    %7392 = vmatpush1.msra.mxu0 0.0
    %7393 = vmatprep.subr.mxu0 0.0
    %7394 = vmatpush1.msra.mxu0 0.0
    %7395 = vmatprep.subr.mxu0 0.0
    %7396 = vmatpush1.msra.mxu0 0.0
    %7397 = vmatprep.subr.mxu0 0.0
    %7398 = vmatpush1.msra.mxu0 0.0
    %7399 = vmatprep.subr.mxu0 0.0
    %7400 = vmatpush1.msra.mxu0 0.0
    %7401 = vmatprep.subr.mxu0 0.0
    %7402 = vmatpush1.msra.mxu0 0.0
    %7403 = vmatprep.subr.mxu0 0.0
    %7404 = vmatpush1.msra.mxu0 0.0
    %7405 = vmatprep.subr.mxu0 0.0
    %7406 = vmatpush1.msra.mxu0 0.0
    %7407 = vmatprep.subr.mxu0 0.0
    %7408 = vmatpush1.msra.mxu0 0.0
    %7409 = vmatprep.subr.mxu0 0.0
    %7410 = vmatpush1.msra.mxu0 0.0
    %7411 = vmatprep.subr.mxu0 0.0
    %7412 = vmatpush1.msra.mxu0 0.0
    %7413 = vmatprep.subr.mxu0 0.0
    %7414 = vmatpush1.msra.mxu0 0.0
    %7415 = vmatprep.subr.mxu0 0.0
    %7416 = vmatpush1.msra.mxu0 0.0
    %7417 = vmatprep.subr.mxu0 0.0
    %7418 = vmatpush1.msra.mxu0 0.0
    %7419 = vmatprep.subr.mxu0 0.0
    %7420 = vmatpush1.msra.mxu0 0.0
    %7421 = vmatprep.subr.mxu0 0.0
    %7422 = vmatpush1.msra.mxu0 0.0
    %7423 = vmatprep.subr.mxu0 0.0
    %7424 = vmatpush1.msra.mxu0 0.0
    %7425 = vmatprep.subr.mxu0 0.0
    %7426 = vmatpush1.msra.mxu0 0.0
    %7427 = vmatprep.subr.mxu0 0.0
    %7428 = vmatpush1.msra.mxu0 0.0
    %7429 = vmatprep.subr.mxu0 0.0
    %7430 = vmatpush1.msra.mxu0 0.0
    %7431 = vmatprep.subr.mxu0 0.0
    %7432 = vmatpush1.msra.mxu0 0.0
    %7433 = vmatprep.subr.mxu0 0.0
    %7434 = vmatpush1.msra.mxu0 0.0
    %7435 = vmatprep.subr.mxu0 0.0
    %7436 = vmatpush1.msra.mxu0 0.0
    %7437 = vmatprep.subr.mxu0 0.0
    %7438 = vmatpush1.msra.mxu0 0.0
    %7439 = vmatprep.subr.mxu0 0.0
    %7440 = vmatpush1.msra.mxu0 0.0
    %7441 = vmatprep.subr.mxu0 0.0
    %7442 = vmatpush1.msra.mxu0 0.0
    %7443 = vmatprep.subr.mxu0 0.0
    %7444 = vmatpush1.msra.mxu0 0.0
    %7445 = vmatprep.subr.mxu0 0.0
    %7446 = vmatpush1.msra.mxu0 0.0
    %7447 = vmatprep.mubr.f32.mxu0 0.0
    %7448 = vmatmul.mubr.f32.gmra.mrb[0].mxu0 %v7372
    %v7449 = vpop.f32.mrb[0].mxu0
    %v7450 = vadd.f32 0.0, %v7449
    %v7451 = vpop.f32.mrb[0].mxu0
    %v7452 = vadd.f32 0.0, %v7451
    %7453 = vmatprep.mubr.f32.mxu0 0.0
    %7454 = vmatmul.mubr.f32.gmra.mrb[0].mxu0 %v7375
    %v7455 = vpop.f32.mrb[0].mxu0
    %v7456 = vadd.f32 0.0, %v7455
    %v7457 = vpop.f32.mrb[0].mxu0
    %v7458 = vadd.f32 0.0, %v7457
    %7459 = vdwg.mxu0
    %v7460 = vmul.f32 %v7450, 0.25
    %v7461 = vmul.f32 %v7452, 0.25
    %v7462 = vmul.f32 %v7456, 0.25
    %v7463 = vmul.f32 %v7458, 0.25
    %v7466 = vrot.slane %v7460, 7
    %v7467 = vrot.slane %v7461, 7
    %vm7470 = vcmask 1040384
    %v7471 = vsel %vm7470, %v3777, %v7466
    %v7472 = vsel %vm7470, %v3778, %v7467
    %v7473 = vld [vmem:[#allocation6] sm:$0xff]
    %v7474 = vld [vmem:[#allocation6 + $0x8] sm:$0xff]
    %v7475 = vld [vmem:[#allocation6 + $0x10] sm:$0xff]
    %v7476 = vld [vmem:[#allocation6 + $0x18] sm:$0xff]
    %v7477 = vld [vmem:[#allocation6 + $0x20] sm:$0xff]
    %v7478 = vld [vmem:[#allocation6 + $0x28] sm:$0xff]
    %v7479 = vld [vmem:[#allocation6 + $0x30] sm:$0xff]
    %v7480 = vld [vmem:[#allocation6 + $0x38] sm:$0xff]
    %v7481 = vld [vmem:[#allocation6 + $0x40] sm:$0xff]
    %v7482 = vld [vmem:[#allocation6 + $0x48] sm:$0xff]
    %v7483 = vld [vmem:[#allocation6 + $0x50] sm:$0xff]
    %v7484 = vld [vmem:[#allocation6 + $0x58] sm:$0xff]
    %v7485 = vld [vmem:[#allocation6 + $0x60] sm:$0xff]
    %v7486 = vld [vmem:[#allocation6 + $0x68] sm:$0xff]
    %v7487 = vld [vmem:[#allocation6 + $0x70] sm:$0xff]
    %v7488 = vld [vmem:[#allocation6 + $0x78] sm:$0xff]
    %v7489 = vld [vmem:[#allocation6 + $0x80] sm:$0xff]
    %v7490 = vld [vmem:[#allocation6 + $0x88] sm:$0xff]
    %v7493 = vrot.slane %v3777, 1
    %v7494 = vrot.slane %v3778, 1
    %v7497 = vsel %vm7470, %v7493, %v7460
    %v7498 = vsel %vm7470, %v7494, %v7461
    %s7499 = scalar_lea.vmem [#allocation6], 144
    %v7500 = vld [vmem:[%s7499] sm:$0xff]
    %v7501 = vld [vmem:[%s7499 + $0x8] sm:$0xff]
    %v7502 = vld [vmem:[%s7499 + $0x10] sm:$0xff]
    %v7503 = vld [vmem:[%s7499 + $0x18] sm:$0xff]
    %v7504 = vld [vmem:[%s7499 + $0x20] sm:$0xff]
    %v7505 = vld [vmem:[%s7499 + $0x28] sm:$0xff]
    %v7506 = vld [vmem:[%s7499 + $0x30] sm:$0xff]
    %v7507 = vld [vmem:[%s7499 + $0x38] sm:$0xff]
    %v7508 = vld [vmem:[%s7499 + $0x40] sm:$0xff]
    %v7509 = vld [vmem:[%s7499 + $0x48] sm:$0xff]
    %v7510 = vld [vmem:[%s7499 + $0x50] sm:$0xff]
    %v7511 = vld [vmem:[%s7499 + $0x58] sm:$0xff]
    %v7512 = vld [vmem:[%s7499 + $0x60] sm:$0xff]
    %v7513 = vld [vmem:[%s7499 + $0x68] sm:$0xff]
    %v7514 = vld [vmem:[%s7499 + $0x70] sm:$0xff]
    %v7515 = vld [vmem:[%s7499 + $0x78] sm:$0xff]
    %v7516 = vld [vmem:[%s7499 + $0x80] sm:$0xff]
    %v7517 = vld [vmem:[%s7499 + $0x88] sm:$0xff]
    %vm7518 = vcmask 130048
    %v7520 = vsel %vm7518, %v7498, 0
    %7522 = vmatprep.subr.mxu0 0.0
    %7523 = vmatpush1.msra.mxu0 %v7500
    %7524 = vmatprep.subr.mxu0 0.0
    %7525 = vmatpush1.msra.mxu0 %v7501
    %7526 = vmatprep.subr.mxu0 0.0
    %7527 = vmatpush1.msra.mxu0 %v7502
    %7528 = vmatprep.subr.mxu0 0.0
    %7529 = vmatpush1.msra.mxu0 %v7503
    %7530 = vmatprep.subr.mxu0 0.0
    %7531 = vmatpush1.msra.mxu0 %v7504
    %7532 = vmatprep.subr.mxu0 0.0
    %7533 = vmatpush1.msra.mxu0 %v7505
    %7534 = vmatprep.subr.mxu0 0.0
    %7535 = vmatpush1.msra.mxu0 %v7506
    %7536 = vmatprep.subr.mxu0 0.0
    %7537 = vmatpush1.msra.mxu0 %v7507
    %7538 = vmatprep.subr.mxu0 0.0
    %7539 = vmatpush1.msra.mxu0 %v7508
    %7540 = vmatprep.subr.mxu0 0.0
    %7541 = vmatpush1.msra.mxu0 %v7509
    %7542 = vmatprep.subr.mxu0 0.0
    %7543 = vmatpush1.msra.mxu0 %v7510
    %7544 = vmatprep.subr.mxu0 0.0
    %7545 = vmatpush1.msra.mxu0 %v7511
    %7546 = vmatprep.subr.mxu0 0.0
    %7547 = vmatpush1.msra.mxu0 %v7512
    %7548 = vmatprep.subr.mxu0 0.0
    %7549 = vmatpush1.msra.mxu0 %v7513
    %7550 = vmatprep.subr.mxu0 0.0
    %7551 = vmatpush1.msra.mxu0 %v7514
    %7552 = vmatprep.subr.mxu0 0.0
    %7553 = vmatpush1.msra.mxu0 %v7515
    %7554 = vmatprep.subr.mxu0 0.0
    %7555 = vmatpush1.msra.mxu0 %v7516
    %7556 = vmatprep.subr.mxu0 0.0
    %7557 = vmatpush1.msra.mxu0 %v7517
    %7558 = vmatprep.subr.mxu0 0.0
    %7559 = vmatpush1.msra.mxu0 0.0
    %7560 = vmatprep.subr.mxu0 0.0
    %7561 = vmatpush1.msra.mxu0 0.0
    %7562 = vmatprep.subr.mxu0 0.0
    %7563 = vmatpush1.msra.mxu0 0.0
    %7564 = vmatprep.subr.mxu0 0.0
    %7565 = vmatpush1.msra.mxu0 0.0
    %7566 = vmatprep.subr.mxu0 0.0
    %7567 = vmatpush1.msra.mxu0 0.0
    %7568 = vmatprep.subr.mxu0 0.0
    %7569 = vmatpush1.msra.mxu0 0.0
    %7570 = vmatprep.subr.mxu0 0.0
    %7571 = vmatpush1.msra.mxu0 0.0
    %7572 = vmatprep.subr.mxu0 0.0
    %7573 = vmatpush1.msra.mxu0 0.0
    %7574 = vmatprep.subr.mxu0 0.0
    %7575 = vmatpush1.msra.mxu0 0.0
    %7576 = vmatprep.subr.mxu0 0.0
    %7577 = vmatpush1.msra.mxu0 0.0
    %7578 = vmatprep.subr.mxu0 0.0
    %7579 = vmatpush1.msra.mxu0 0.0
    %7580 = vmatprep.subr.mxu0 0.0
    %7581 = vmatpush1.msra.mxu0 0.0
    %7582 = vmatprep.subr.mxu0 0.0
    %7583 = vmatpush1.msra.mxu0 0.0
    %7584 = vmatprep.subr.mxu0 0.0
    %7585 = vmatpush1.msra.mxu0 0.0
    %7586 = vmatprep.mubr.f32.mxu0 %v7520
    %7587 = vmatmul.mubr.f32.gmra.mrb[0].mxu0 %v7497
    %v7588 = vpop.f32.mrb[0].mxu0
    %v7589 = vadd.f32 0.0, %v7588
    %v7590 = vpop.f32.mrb[0].mxu0
    %7591 = vdwg.mxu0
    %v7593 = vsel %vm7518, %v7472, 0
    %7595 = vmatprep.subr.mxu0 0.0
    %7596 = vmatpush1.msra.mxu0 %v7473
    %7597 = vmatprep.subr.mxu0 0.0
    %7598 = vmatpush1.msra.mxu0 %v7474
    %7599 = vmatprep.subr.mxu0 0.0
    %7600 = vmatpush1.msra.mxu0 %v7475
    %7601 = vmatprep.subr.mxu0 0.0
    %7602 = vmatpush1.msra.mxu0 %v7476
    %7603 = vmatprep.subr.mxu0 0.0
    %7604 = vmatpush1.msra.mxu0 %v7477
    %7605 = vmatprep.subr.mxu0 0.0
    %7606 = vmatpush1.msra.mxu0 %v7478
    %7607 = vmatprep.subr.mxu0 0.0
    %7608 = vmatpush1.msra.mxu0 %v7479
    %7609 = vmatprep.subr.mxu0 0.0
    %7610 = vmatpush1.msra.mxu0 %v7480
    %7611 = vmatprep.subr.mxu0 0.0
    %7612 = vmatpush1.msra.mxu0 %v7481
    %7613 = vmatprep.subr.mxu0 0.0
    %7614 = vmatpush1.msra.mxu0 %v7482
    %7615 = vmatprep.subr.mxu0 0.0
    %7616 = vmatpush1.msra.mxu0 %v7483
    %7617 = vmatprep.subr.mxu0 0.0
    %7618 = vmatpush1.msra.mxu0 %v7484
    %7619 = vmatprep.subr.mxu0 0.0
    %7620 = vmatpush1.msra.mxu0 %v7485
    %7621 = vmatprep.subr.mxu0 0.0
    %7622 = vmatpush1.msra.mxu0 %v7486
    %7623 = vmatprep.subr.mxu0 0.0
    %7624 = vmatpush1.msra.mxu0 %v7487
    %7625 = vmatprep.subr.mxu0 0.0
    %7626 = vmatpush1.msra.mxu0 %v7488
    %7627 = vmatprep.subr.mxu0 0.0
    %7628 = vmatpush1.msra.mxu0 %v7489
    %7629 = vmatprep.subr.mxu0 0.0
    %7630 = vmatpush1.msra.mxu0 %v7490
    %7631 = vmatprep.subr.mxu0 0.0
    %7632 = vmatpush1.msra.mxu0 0.0
    %7633 = vmatprep.subr.mxu0 0.0
    %7634 = vmatpush1.msra.mxu0 0.0
    %7635 = vmatprep.subr.mxu0 0.0
    %7636 = vmatpush1.msra.mxu0 0.0
    %7637 = vmatprep.subr.mxu0 0.0
    %7638 = vmatpush1.msra.mxu0 0.0
    %7639 = vmatprep.subr.mxu0 0.0
    %7640 = vmatpush1.msra.mxu0 0.0
    %7641 = vmatprep.subr.mxu0 0.0
    %7642 = vmatpush1.msra.mxu0 0.0
    %7643 = vmatprep.subr.mxu0 0.0
    %7644 = vmatpush1.msra.mxu0 0.0
    %7645 = vmatprep.subr.mxu0 0.0
    %7646 = vmatpush1.msra.mxu0 0.0
    %7647 = vmatprep.subr.mxu0 0.0
    %7648 = vmatpush1.msra.mxu0 0.0
    %7649 = vmatprep.subr.mxu0 0.0
    %7650 = vmatpush1.msra.mxu0 0.0
    %7651 = vmatprep.subr.mxu0 0.0
    %7652 = vmatpush1.msra.mxu0 0.0
    %7653 = vmatprep.subr.mxu0 0.0
    %7654 = vmatpush1.msra.mxu0 0.0
    %7655 = vmatprep.subr.mxu0 0.0
    %7656 = vmatpush1.msra.mxu0 0.0
    %7657 = vmatprep.subr.mxu0 0.0
    %7658 = vmatpush1.msra.mxu0 0.0
    %7659 = vmatprep.mubr.f32.mxu0 %v7593
    %7660 = vmatmul.mubr.f32.gmra.mrb[0].mxu0 %v7471
    %v7661 = vpop.f32.mrb[0].mxu0
    %v7662 = vadd.f32 %v7589, %v7661
    %v7663 = vpop.f32.mrb[0].mxu0
    %7664 = vdwg.mxu0
    %v7665 = vrot.slane %v3777, 2
    %v7666 = vrot.slane %v3778, 2
    %v7669 = vrot.slane %v7460, 1
    %v7670 = vrot.slane %v7461, 1
    %v7673 = vsel %vm7470, %v7665, %v7669
    %v7674 = vsel %vm7470, %v7666, %v7670
    %s7675 = scalar_lea.vmem [#allocation6], 288
    %v7676 = vld [vmem:[%s7675] sm:$0xff]
    %v7677 = vld [vmem:[%s7675 + $0x8] sm:$0xff]
    %v7678 = vld [vmem:[%s7675 + $0x10] sm:$0xff]
    %v7679 = vld [vmem:[%s7675 + $0x18] sm:$0xff]
    %v7680 = vld [vmem:[%s7675 + $0x20] sm:$0xff]
    %v7681 = vld [vmem:[%s7675 + $0x28] sm:$0xff]
    %v7682 = vld [vmem:[%s7675 + $0x30] sm:$0xff]
    %v7683 = vld [vmem:[%s7675 + $0x38] sm:$0xff]
    %v7684 = vld [vmem:[%s7675 + $0x40] sm:$0xff]
    %v7685 = vld [vmem:[%s7675 + $0x48] sm:$0xff]
    %v7686 = vld [vmem:[%s7675 + $0x50] sm:$0xff]
    %v7687 = vld [vmem:[%s7675 + $0x58] sm:$0xff]
    %v7688 = vld [vmem:[%s7675 + $0x60] sm:$0xff]
    %v7689 = vld [vmem:[%s7675 + $0x68] sm:$0xff]
    %v7690 = vld [vmem:[%s7675 + $0x70] sm:$0xff]
    %v7691 = vld [vmem:[%s7675 + $0x78] sm:$0xff]
    %v7692 = vld [vmem:[%s7675 + $0x80] sm:$0xff]
    %v7693 = vld [vmem:[%s7675 + $0x88] sm:$0xff]
    %v7695 = vsel %vm7518, %v7674, 0
    %7697 = vmatprep.subr.mxu0 0.0
    %7698 = vmatpush1.msra.mxu0 %v7676
    %7699 = vmatprep.subr.mxu0 0.0
    %7700 = vmatpush1.msra.mxu0 %v7677
    %7701 = vmatprep.subr.mxu0 0.0
    %7702 = vmatpush1.msra.mxu0 %v7678
    %7703 = vmatprep.subr.mxu0 0.0
    %7704 = vmatpush1.msra.mxu0 %v7679
    %7705 = vmatprep.subr.mxu0 0.0
    %7706 = vmatpush1.msra.mxu0 %v7680
    %7707 = vmatprep.subr.mxu0 0.0
    %7708 = vmatpush1.msra.mxu0 %v7681
    %7709 = vmatprep.subr.mxu0 0.0
    %7710 = vmatpush1.msra.mxu0 %v7682
    %7711 = vmatprep.subr.mxu0 0.0
    %7712 = vmatpush1.msra.mxu0 %v7683
    %7713 = vmatprep.subr.mxu0 0.0
    %7714 = vmatpush1.msra.mxu0 %v7684
    %7715 = vmatprep.subr.mxu0 0.0
    %7716 = vmatpush1.msra.mxu0 %v7685
    %7717 = vmatprep.subr.mxu0 0.0
    %7718 = vmatpush1.msra.mxu0 %v7686
    %7719 = vmatprep.subr.mxu0 0.0
    %7720 = vmatpush1.msra.mxu0 %v7687
    %7721 = vmatprep.subr.mxu0 0.0
    %7722 = vmatpush1.msra.mxu0 %v7688
    %7723 = vmatprep.subr.mxu0 0.0
    %7724 = vmatpush1.msra.mxu0 %v7689
    %7725 = vmatprep.subr.mxu0 0.0
    %7726 = vmatpush1.msra.mxu0 %v7690
    %7727 = vmatprep.subr.mxu0 0.0
    %7728 = vmatpush1.msra.mxu0 %v7691
    %7729 = vmatprep.subr.mxu0 0.0
    %7730 = vmatpush1.msra.mxu0 %v7692
    %7731 = vmatprep.subr.mxu0 0.0
    %7732 = vmatpush1.msra.mxu0 %v7693
    %7733 = vmatprep.subr.mxu0 0.0
    %7734 = vmatpush1.msra.mxu0 0.0
    %7735 = vmatprep.subr.mxu0 0.0
    %7736 = vmatpush1.msra.mxu0 0.0
    %7737 = vmatprep.subr.mxu0 0.0
    %7738 = vmatpush1.msra.mxu0 0.0
    %7739 = vmatprep.subr.mxu0 0.0
    %7740 = vmatpush1.msra.mxu0 0.0
    %7741 = vmatprep.subr.mxu0 0.0
    %7742 = vmatpush1.msra.mxu0 0.0
    %7743 = vmatprep.subr.mxu0 0.0
    %7744 = vmatpush1.msra.mxu0 0.0
    %7745 = vmatprep.subr.mxu0 0.0
    %7746 = vmatpush1.msra.mxu0 0.0
    %7747 = vmatprep.subr.mxu0 0.0
    %7748 = vmatpush1.msra.mxu0 0.0
    %7749 = vmatprep.subr.mxu0 0.0
    %7750 = vmatpush1.msra.mxu0 0.0
    %7751 = vmatprep.subr.mxu0 0.0
    %7752 = vmatpush1.msra.mxu0 0.0
    %7753 = vmatprep.subr.mxu0 0.0
    %7754 = vmatpush1.msra.mxu0 0.0
    %7755 = vmatprep.subr.mxu0 0.0
    %7756 = vmatpush1.msra.mxu0 0.0
    %7757 = vmatprep.subr.mxu0 0.0
    %7758 = vmatpush1.msra.mxu0 0.0
    %7759 = vmatprep.subr.mxu0 0.0
    %7760 = vmatpush1.msra.mxu0 0.0
    %7761 = vmatprep.mubr.f32.mxu0 %v7695
    %7762 = vmatmul.mubr.f32.gmra.mrb[0].mxu0 %v7673
    %v7763 = vpop.f32.mrb[0].mxu0
    %v7764 = vadd.f32 0.0, %v7763
    %v7765 = vpop.f32.mrb[0].mxu0
    %7766 = vdwg.mxu0
    %v7767 = vadd.f32 %v7662, %v7764
    %v7768 = vrot.slane %v3777, 3
    %v7769 = vrot.slane %v3778, 3
    %v7772 = vrot.slane %v7460, 2
    %v7773 = vrot.slane %v7461, 2
    %v7776 = vsel %vm7470, %v7768, %v7772
    %v7777 = vsel %vm7470, %v7769, %v7773
    %s7778 = scalar_lea.vmem [#allocation6], 432
    %v7779 = vld [vmem:[%s7778] sm:$0xff]
    %v7780 = vld [vmem:[%s7778 + $0x8] sm:$0xff]
    %v7781 = vld [vmem:[%s7778 + $0x10] sm:$0xff]
    %v7782 = vld [vmem:[%s7778 + $0x18] sm:$0xff]
    %v7783 = vld [vmem:[%s7778 + $0x20] sm:$0xff]
    %v7784 = vld [vmem:[%s7778 + $0x28] sm:$0xff]
    %v7785 = vld [vmem:[%s7778 + $0x30] sm:$0xff]
    %v7786 = vld [vmem:[%s7778 + $0x38] sm:$0xff]
    %v7787 = vld [vmem:[%s7778 + $0x40] sm:$0xff]
    %v7788 = vld [vmem:[%s7778 + $0x48] sm:$0xff]
    %v7789 = vld [vmem:[%s7778 + $0x50] sm:$0xff]
    %v7790 = vld [vmem:[%s7778 + $0x58] sm:$0xff]
    %v7791 = vld [vmem:[%s7778 + $0x60] sm:$0xff]
    %v7792 = vld [vmem:[%s7778 + $0x68] sm:$0xff]
    %v7793 = vld [vmem:[%s7778 + $0x70] sm:$0xff]
    %v7794 = vld [vmem:[%s7778 + $0x78] sm:$0xff]
    %v7795 = vld [vmem:[%s7778 + $0x80] sm:$0xff]
    %v7796 = vld [vmem:[%s7778 + $0x88] sm:$0xff]
    %v7798 = vsel %vm7518, %v7777, 0
    %7800 = vmatprep.subr.mxu0 0.0
    %7801 = vmatpush1.msra.mxu0 %v7779
    %7802 = vmatprep.subr.mxu0 0.0
    %7803 = vmatpush1.msra.mxu0 %v7780
    %7804 = vmatprep.subr.mxu0 0.0
    %7805 = vmatpush1.msra.mxu0 %v7781
    %7806 = vmatprep.subr.mxu0 0.0
    %7807 = vmatpush1.msra.mxu0 %v7782
    %7808 = vmatprep.subr.mxu0 0.0
    %7809 = vmatpush1.msra.mxu0 %v7783
    %7810 = vmatprep.subr.mxu0 0.0
    %7811 = vmatpush1.msra.mxu0 %v7784
    %7812 = vmatprep.subr.mxu0 0.0
    %7813 = vmatpush1.msra.mxu0 %v7785
    %7814 = vmatprep.subr.mxu0 0.0
    %7815 = vmatpush1.msra.mxu0 %v7786
    %7816 = vmatprep.subr.mxu0 0.0
    %7817 = vmatpush1.msra.mxu0 %v7787
    %7818 = vmatprep.subr.mxu0 0.0
    %7819 = vmatpush1.msra.mxu0 %v7788
    %7820 = vmatprep.subr.mxu0 0.0
    %7821 = vmatpush1.msra.mxu0 %v7789
    %7822 = vmatprep.subr.mxu0 0.0
    %7823 = vmatpush1.msra.mxu0 %v7790
    %7824 = vmatprep.subr.mxu0 0.0
    %7825 = vmatpush1.msra.mxu0 %v7791
    %7826 = vmatprep.subr.mxu0 0.0
    %7827 = vmatpush1.msra.mxu0 %v7792
    %7828 = vmatprep.subr.mxu0 0.0
    %7829 = vmatpush1.msra.mxu0 %v7793
    %7830 = vmatprep.subr.mxu0 0.0
    %7831 = vmatpush1.msra.mxu0 %v7794
    %7832 = vmatprep.subr.mxu0 0.0
    %7833 = vmatpush1.msra.mxu0 %v7795
    %7834 = vmatprep.subr.mxu0 0.0
    %7835 = vmatpush1.msra.mxu0 %v7796
    %7836 = vmatprep.subr.mxu0 0.0
    %7837 = vmatpush1.msra.mxu0 0.0
    %7838 = vmatprep.subr.mxu0 0.0
    %7839 = vmatpush1.msra.mxu0 0.0
    %7840 = vmatprep.subr.mxu0 0.0
    %7841 = vmatpush1.msra.mxu0 0.0
    %7842 = vmatprep.subr.mxu0 0.0
    %7843 = vmatpush1.msra.mxu0 0.0
    %7844 = vmatprep.subr.mxu0 0.0
    %7845 = vmatpush1.msra.mxu0 0.0
    %7846 = vmatprep.subr.mxu0 0.0
    %7847 = vmatpush1.msra.mxu0 0.0
    %7848 = vmatprep.subr.mxu0 0.0
    %7849 = vmatpush1.msra.mxu0 0.0
    %7850 = vmatprep.subr.mxu0 0.0
    %7851 = vmatpush1.msra.mxu0 0.0
    %7852 = vmatprep.subr.mxu0 0.0
    %7853 = vmatpush1.msra.mxu0 0.0
    %7854 = vmatprep.subr.mxu0 0.0
    %7855 = vmatpush1.msra.mxu0 0.0
    %7856 = vmatprep.subr.mxu0 0.0
    %7857 = vmatpush1.msra.mxu0 0.0
    %7858 = vmatprep.subr.mxu0 0.0
    %7859 = vmatpush1.msra.mxu0 0.0
    %7860 = vmatprep.subr.mxu0 0.0
    %7861 = vmatpush1.msra.mxu0 0.0
    %7862 = vmatprep.subr.mxu0 0.0
    %7863 = vmatpush1.msra.mxu0 0.0
    %7864 = vmatprep.mubr.f32.mxu0 %v7798
    %7865 = vmatmul.mubr.f32.gmra.mrb[0].mxu0 %v7776
    %v7866 = vpop.f32.mrb[0].mxu0
    %v7867 = vadd.f32 0.0, %v7866
    %v7868 = vpop.f32.mrb[0].mxu0
    %7869 = vdwg.mxu0
    %v7870 = vadd.f32 %v7767, %v7867
    %v7871 = vrot.slane %v3777, 4
    %v7872 = vrot.slane %v3778, 4
    %v7875 = vrot.slane %v7460, 3
    %v7876 = vrot.slane %v7461, 3
    %v7879 = vsel %vm7470, %v7871, %v7875
    %v7880 = vsel %vm7470, %v7872, %v7876
    %s7881 = scalar_lea.vmem [#allocation6], 576
    %v7882 = vld [vmem:[%s7881] sm:$0xff]
    %v7883 = vld [vmem:[%s7881 + $0x8] sm:$0xff]
    %v7884 = vld [vmem:[%s7881 + $0x10] sm:$0xff]
    %v7885 = vld [vmem:[%s7881 + $0x18] sm:$0xff]
    %v7886 = vld [vmem:[%s7881 + $0x20] sm:$0xff]
    %v7887 = vld [vmem:[%s7881 + $0x28] sm:$0xff]
    %v7888 = vld [vmem:[%s7881 + $0x30] sm:$0xff]
    %v7889 = vld [vmem:[%s7881 + $0x38] sm:$0xff]
    %v7890 = vld [vmem:[%s7881 + $0x40] sm:$0xff]
    %v7891 = vld [vmem:[%s7881 + $0x48] sm:$0xff]
    %v7892 = vld [vmem:[%s7881 + $0x50] sm:$0xff]
    %v7893 = vld [vmem:[%s7881 + $0x58] sm:$0xff]
    %v7894 = vld [vmem:[%s7881 + $0x60] sm:$0xff]
    %v7895 = vld [vmem:[%s7881 + $0x68] sm:$0xff]
    %v7896 = vld [vmem:[%s7881 + $0x70] sm:$0xff]
    %v7897 = vld [vmem:[%s7881 + $0x78] sm:$0xff]
    %v7898 = vld [vmem:[%s7881 + $0x80] sm:$0xff]
    %v7899 = vld [vmem:[%s7881 + $0x88] sm:$0xff]
    %v7901 = vsel %vm7518, %v7880, 0
    %7903 = vmatprep.subr.mxu0 0.0
    %7904 = vmatpush1.msra.mxu0 %v7882
    %7905 = vmatprep.subr.mxu0 0.0
    %7906 = vmatpush1.msra.mxu0 %v7883
    %7907 = vmatprep.subr.mxu0 0.0
    %7908 = vmatpush1.msra.mxu0 %v7884
    %7909 = vmatprep.subr.mxu0 0.0
    %7910 = vmatpush1.msra.mxu0 %v7885
    %7911 = vmatprep.subr.mxu0 0.0
    %7912 = vmatpush1.msra.mxu0 %v7886
    %7913 = vmatprep.subr.mxu0 0.0
    %7914 = vmatpush1.msra.mxu0 %v7887
    %7915 = vmatprep.subr.mxu0 0.0
    %7916 = vmatpush1.msra.mxu0 %v7888
    %7917 = vmatprep.subr.mxu0 0.0
    %7918 = vmatpush1.msra.mxu0 %v7889
    %7919 = vmatprep.subr.mxu0 0.0
    %7920 = vmatpush1.msra.mxu0 %v7890
    %7921 = vmatprep.subr.mxu0 0.0
    %7922 = vmatpush1.msra.mxu0 %v7891
    %7923 = vmatprep.subr.mxu0 0.0
    %7924 = vmatpush1.msra.mxu0 %v7892
    %7925 = vmatprep.subr.mxu0 0.0
    %7926 = vmatpush1.msra.mxu0 %v7893
    %7927 = vmatprep.subr.mxu0 0.0
    %7928 = vmatpush1.msra.mxu0 %v7894
    %7929 = vmatprep.subr.mxu0 0.0
    %7930 = vmatpush1.msra.mxu0 %v7895
    %7931 = vmatprep.subr.mxu0 0.0
    %7932 = vmatpush1.msra.mxu0 %v7896
    %7933 = vmatprep.subr.mxu0 0.0
    %7934 = vmatpush1.msra.mxu0 %v7897
    %7935 = vmatprep.subr.mxu0 0.0
    %7936 = vmatpush1.msra.mxu0 %v7898
    %7937 = vmatprep.subr.mxu0 0.0
    %7938 = vmatpush1.msra.mxu0 %v7899
    %7939 = vmatprep.subr.mxu0 0.0
    %7940 = vmatpush1.msra.mxu0 0.0
    %7941 = vmatprep.subr.mxu0 0.0
    %7942 = vmatpush1.msra.mxu0 0.0
    %7943 = vmatprep.subr.mxu0 0.0
    %7944 = vmatpush1.msra.mxu0 0.0
    %7945 = vmatprep.subr.mxu0 0.0
    %7946 = vmatpush1.msra.mxu0 0.0
    %7947 = vmatprep.subr.mxu0 0.0
    %7948 = vmatpush1.msra.mxu0 0.0
    %7949 = vmatprep.subr.mxu0 0.0
    %7950 = vmatpush1.msra.mxu0 0.0
    %7951 = vmatprep.subr.mxu0 0.0
    %7952 = vmatpush1.msra.mxu0 0.0
    %7953 = vmatprep.subr.mxu0 0.0
    %7954 = vmatpush1.msra.mxu0 0.0
    %7955 = vmatprep.subr.mxu0 0.0
    %7956 = vmatpush1.msra.mxu0 0.0
    %7957 = vmatprep.subr.mxu0 0.0
    %7958 = vmatpush1.msra.mxu0 0.0
    %7959 = vmatprep.subr.mxu0 0.0
    %7960 = vmatpush1.msra.mxu0 0.0
    %7961 = vmatprep.subr.mxu0 0.0
    %7962 = vmatpush1.msra.mxu0 0.0
    %7963 = vmatprep.subr.mxu0 0.0
    %7964 = vmatpush1.msra.mxu0 0.0
    %7965 = vmatprep.subr.mxu0 0.0
    %7966 = vmatpush1.msra.mxu0 0.0
    %7967 = vmatprep.mubr.f32.mxu0 %v7901
    %7968 = vmatmul.mubr.f32.gmra.mrb[0].mxu0 %v7879
    %v7969 = vpop.f32.mrb[0].mxu0
    %v7970 = vadd.f32 0.0, %v7969
    %v7971 = vpop.f32.mrb[0].mxu0
    %7972 = vdwg.mxu0
    %v7973 = vadd.f32 %v7870, %v7970
    %v7974 = vrot.slane %v3777, 5
    %v7975 = vrot.slane %v3778, 5
    %v7978 = vrot.slane %v7460, 4
    %v7979 = vrot.slane %v7461, 4
    %v7982 = vsel %vm7470, %v7974, %v7978
    %v7983 = vsel %vm7470, %v7975, %v7979
    %s7984 = scalar_lea.vmem [#allocation6], 720
    %v7985 = vld [vmem:[%s7984] sm:$0xff]
    %v7986 = vld [vmem:[%s7984 + $0x8] sm:$0xff]
    %v7987 = vld [vmem:[%s7984 + $0x10] sm:$0xff]
    %v7988 = vld [vmem:[%s7984 + $0x18] sm:$0xff]
    %v7989 = vld [vmem:[%s7984 + $0x20] sm:$0xff]
    %v7990 = vld [vmem:[%s7984 + $0x28] sm:$0xff]
    %v7991 = vld [vmem:[%s7984 + $0x30] sm:$0xff]
    %v7992 = vld [vmem:[%s7984 + $0x38] sm:$0xff]
    %v7993 = vld [vmem:[%s7984 + $0x40] sm:$0xff]
    %v7994 = vld [vmem:[%s7984 + $0x48] sm:$0xff]
    %v7995 = vld [vmem:[%s7984 + $0x50] sm:$0xff]
    %v7996 = vld [vmem:[%s7984 + $0x58] sm:$0xff]
    %v7997 = vld [vmem:[%s7984 + $0x60] sm:$0xff]
    %v7998 = vld [vmem:[%s7984 + $0x68] sm:$0xff]
    %v7999 = vld [vmem:[%s7984 + $0x70] sm:$0xff]
    %v8000 = vld [vmem:[%s7984 + $0x78] sm:$0xff]
    %v8001 = vld [vmem:[%s7984 + $0x80] sm:$0xff]
    %v8002 = vld [vmem:[%s7984 + $0x88] sm:$0xff]
    %v8004 = vsel %vm7518, %v7983, 0
    %8006 = vmatprep.subr.mxu0 0.0
    %8007 = vmatpush1.msra.mxu0 %v7985
    %8008 = vmatprep.subr.mxu0 0.0
    %8009 = vmatpush1.msra.mxu0 %v7986
    %8010 = vmatprep.subr.mxu0 0.0
    %8011 = vmatpush1.msra.mxu0 %v7987
    %8012 = vmatprep.subr.mxu0 0.0
    %8013 = vmatpush1.msra.mxu0 %v7988
    %8014 = vmatprep.subr.mxu0 0.0
    %8015 = vmatpush1.msra.mxu0 %v7989
    %8016 = vmatprep.subr.mxu0 0.0
    %8017 = vmatpush1.msra.mxu0 %v7990
    %8018 = vmatprep.subr.mxu0 0.0
    %8019 = vmatpush1.msra.mxu0 %v7991
    %8020 = vmatprep.subr.mxu0 0.0
    %8021 = vmatpush1.msra.mxu0 %v7992
    %8022 = vmatprep.subr.mxu0 0.0
    %8023 = vmatpush1.msra.mxu0 %v7993
    %8024 = vmatprep.subr.mxu0 0.0
    %8025 = vmatpush1.msra.mxu0 %v7994
    %8026 = vmatprep.subr.mxu0 0.0
    %8027 = vmatpush1.msra.mxu0 %v7995
    %8028 = vmatprep.subr.mxu0 0.0
    %8029 = vmatpush1.msra.mxu0 %v7996
    %8030 = vmatprep.subr.mxu0 0.0
    %8031 = vmatpush1.msra.mxu0 %v7997
    %8032 = vmatprep.subr.mxu0 0.0
    %8033 = vmatpush1.msra.mxu0 %v7998
    %8034 = vmatprep.subr.mxu0 0.0
    %8035 = vmatpush1.msra.mxu0 %v7999
    %8036 = vmatprep.subr.mxu0 0.0
    %8037 = vmatpush1.msra.mxu0 %v8000
    %8038 = vmatprep.subr.mxu0 0.0
    %8039 = vmatpush1.msra.mxu0 %v8001
    %8040 = vmatprep.subr.mxu0 0.0
    %8041 = vmatpush1.msra.mxu0 %v8002
    %8042 = vmatprep.subr.mxu0 0.0
    %8043 = vmatpush1.msra.mxu0 0.0
    %8044 = vmatprep.subr.mxu0 0.0
    %8045 = vmatpush1.msra.mxu0 0.0
    %8046 = vmatprep.subr.mxu0 0.0
    %8047 = vmatpush1.msra.mxu0 0.0
    %8048 = vmatprep.subr.mxu0 0.0
    %8049 = vmatpush1.msra.mxu0 0.0
    %8050 = vmatprep.subr.mxu0 0.0
    %8051 = vmatpush1.msra.mxu0 0.0
    %8052 = vmatprep.subr.mxu0 0.0
    %8053 = vmatpush1.msra.mxu0 0.0
    %8054 = vmatprep.subr.mxu0 0.0
    %8055 = vmatpush1.msra.mxu0 0.0
    %8056 = vmatprep.subr.mxu0 0.0
    %8057 = vmatpush1.msra.mxu0 0.0
    %8058 = vmatprep.subr.mxu0 0.0
    %8059 = vmatpush1.msra.mxu0 0.0
    %8060 = vmatprep.subr.mxu0 0.0
    %8061 = vmatpush1.msra.mxu0 0.0
    %8062 = vmatprep.subr.mxu0 0.0
    %8063 = vmatpush1.msra.mxu0 0.0
    %8064 = vmatprep.subr.mxu0 0.0
    %8065 = vmatpush1.msra.mxu0 0.0
    %8066 = vmatprep.subr.mxu0 0.0
    %8067 = vmatpush1.msra.mxu0 0.0
    %8068 = vmatprep.subr.mxu0 0.0
    %8069 = vmatpush1.msra.mxu0 0.0
    %8070 = vmatprep.mubr.f32.mxu0 %v8004
    %8071 = vmatmul.mubr.f32.gmra.mrb[0].mxu0 %v7982
    %v8072 = vpop.f32.mrb[0].mxu0
    %v8073 = vadd.f32 0.0, %v8072
    %v8074 = vpop.f32.mrb[0].mxu0
    %8075 = vdwg.mxu0
    %v8076 = vadd.f32 %v7973, %v8073
    %v8077 = vrot.slane %v3777, 6
    %v8078 = vrot.slane %v3778, 6
    %v8081 = vrot.slane %v7460, 5
    %v8082 = vrot.slane %v7461, 5
    %v8085 = vsel %vm7470, %v8077, %v8081
    %v8086 = vsel %vm7470, %v8078, %v8082
    %s8087 = scalar_lea.vmem [#allocation6], 864
    %v8088 = vld [vmem:[%s8087] sm:$0xff]
    %v8089 = vld [vmem:[%s8087 + $0x8] sm:$0xff]
    %v8090 = vld [vmem:[%s8087 + $0x10] sm:$0xff]
    %v8091 = vld [vmem:[%s8087 + $0x18] sm:$0xff]
    %v8092 = vld [vmem:[%s8087 + $0x20] sm:$0xff]
    %v8093 = vld [vmem:[%s8087 + $0x28] sm:$0xff]
    %v8094 = vld [vmem:[%s8087 + $0x30] sm:$0xff]
    %v8095 = vld [vmem:[%s8087 + $0x38] sm:$0xff]
    %v8096 = vld [vmem:[%s8087 + $0x40] sm:$0xff]
    %v8097 = vld [vmem:[%s8087 + $0x48] sm:$0xff]
    %v8098 = vld [vmem:[%s8087 + $0x50] sm:$0xff]
    %v8099 = vld [vmem:[%s8087 + $0x58] sm:$0xff]
    %v8100 = vld [vmem:[%s8087 + $0x60] sm:$0xff]
    %v8101 = vld [vmem:[%s8087 + $0x68] sm:$0xff]
    %v8102 = vld [vmem:[%s8087 + $0x70] sm:$0xff]
    %v8103 = vld [vmem:[%s8087 + $0x78] sm:$0xff]
    %v8104 = vld [vmem:[%s8087 + $0x80] sm:$0xff]
    %v8105 = vld [vmem:[%s8087 + $0x88] sm:$0xff]
    %v8107 = vsel %vm7518, %v8086, 0
    %8109 = vmatprep.subr.mxu0 0.0
    %8110 = vmatpush1.msra.mxu0 %v8088
    %8111 = vmatprep.subr.mxu0 0.0
    %8112 = vmatpush1.msra.mxu0 %v8089
    %8113 = vmatprep.subr.mxu0 0.0
    %8114 = vmatpush1.msra.mxu0 %v8090
    %8115 = vmatprep.subr.mxu0 0.0
    %8116 = vmatpush1.msra.mxu0 %v8091
    %8117 = vmatprep.subr.mxu0 0.0
    %8118 = vmatpush1.msra.mxu0 %v8092
    %8119 = vmatprep.subr.mxu0 0.0
    %8120 = vmatpush1.msra.mxu0 %v8093
    %8121 = vmatprep.subr.mxu0 0.0
    %8122 = vmatpush1.msra.mxu0 %v8094
    %8123 = vmatprep.subr.mxu0 0.0
    %8124 = vmatpush1.msra.mxu0 %v8095
    %8125 = vmatprep.subr.mxu0 0.0
    %8126 = vmatpush1.msra.mxu0 %v8096
    %8127 = vmatprep.subr.mxu0 0.0
    %8128 = vmatpush1.msra.mxu0 %v8097
    %8129 = vmatprep.subr.mxu0 0.0
    %8130 = vmatpush1.msra.mxu0 %v8098
    %8131 = vmatprep.subr.mxu0 0.0
    %8132 = vmatpush1.msra.mxu0 %v8099
    %8133 = vmatprep.subr.mxu0 0.0
    %8134 = vmatpush1.msra.mxu0 %v8100
    %8135 = vmatprep.subr.mxu0 0.0
    %8136 = vmatpush1.msra.mxu0 %v8101
    %8137 = vmatprep.subr.mxu0 0.0
    %8138 = vmatpush1.msra.mxu0 %v8102
    %8139 = vmatprep.subr.mxu0 0.0
    %8140 = vmatpush1.msra.mxu0 %v8103
    %8141 = vmatprep.subr.mxu0 0.0
    %8142 = vmatpush1.msra.mxu0 %v8104
    %8143 = vmatprep.subr.mxu0 0.0
    %8144 = vmatpush1.msra.mxu0 %v8105
    %8145 = vmatprep.subr.mxu0 0.0
    %8146 = vmatpush1.msra.mxu0 0.0
    %8147 = vmatprep.subr.mxu0 0.0
    %8148 = vmatpush1.msra.mxu0 0.0
    %8149 = vmatprep.subr.mxu0 0.0
    %8150 = vmatpush1.msra.mxu0 0.0
    %8151 = vmatprep.subr.mxu0 0.0
    %8152 = vmatpush1.msra.mxu0 0.0
    %8153 = vmatprep.subr.mxu0 0.0
    %8154 = vmatpush1.msra.mxu0 0.0
    %8155 = vmatprep.subr.mxu0 0.0
    %8156 = vmatpush1.msra.mxu0 0.0
    %8157 = vmatprep.subr.mxu0 0.0
    %8158 = vmatpush1.msra.mxu0 0.0
    %8159 = vmatprep.subr.mxu0 0.0
    %8160 = vmatpush1.msra.mxu0 0.0
    %8161 = vmatprep.subr.mxu0 0.0
    %8162 = vmatpush1.msra.mxu0 0.0
    %8163 = vmatprep.subr.mxu0 0.0
    %8164 = vmatpush1.msra.mxu0 0.0
    %8165 = vmatprep.subr.mxu0 0.0
    %8166 = vmatpush1.msra.mxu0 0.0
    %8167 = vmatprep.subr.mxu0 0.0
    %8168 = vmatpush1.msra.mxu0 0.0
    %8169 = vmatprep.subr.mxu0 0.0
    %8170 = vmatpush1.msra.mxu0 0.0
    %8171 = vmatprep.subr.mxu0 0.0
    %8172 = vmatpush1.msra.mxu0 0.0
    %8173 = vmatprep.mubr.f32.mxu0 %v8107
    %8174 = vmatmul.mubr.f32.gmra.mrb[0].mxu0 %v8085
    %v8175 = vpop.f32.mrb[0].mxu0
    %v8176 = vadd.f32 0.0, %v8175
    %v8177 = vpop.f32.mrb[0].mxu0
    %8178 = vdwg.mxu0
    %v8179 = vadd.f32 %v8076, %v8176
    %v8180 = vrot.slane %v3777, 7
    %v8181 = vrot.slane %v3778, 7
    %v8184 = vrot.slane %v7460, 6
    %v8185 = vrot.slane %v7461, 6
    %v8188 = vsel %vm7470, %v8180, %v8184
    %v8189 = vsel %vm7470, %v8181, %v8185
    %s8190 = scalar_lea.vmem [#allocation6], 1008
    %v8191 = vld [vmem:[%s8190] sm:$0xff]
    %v8192 = vld [vmem:[%s8190 + $0x8] sm:$0xff]
    %v8193 = vld [vmem:[%s8190 + $0x10] sm:$0xff]
    %v8194 = vld [vmem:[%s8190 + $0x18] sm:$0xff]
    %v8195 = vld [vmem:[%s8190 + $0x20] sm:$0xff]
    %v8196 = vld [vmem:[%s8190 + $0x28] sm:$0xff]
    %v8197 = vld [vmem:[%s8190 + $0x30] sm:$0xff]
    %v8198 = vld [vmem:[%s8190 + $0x38] sm:$0xff]
    %v8199 = vld [vmem:[%s8190 + $0x40] sm:$0xff]
    %v8200 = vld [vmem:[%s8190 + $0x48] sm:$0xff]
    %v8201 = vld [vmem:[%s8190 + $0x50] sm:$0xff]
    %v8202 = vld [vmem:[%s8190 + $0x58] sm:$0xff]
    %v8203 = vld [vmem:[%s8190 + $0x60] sm:$0xff]
    %v8204 = vld [vmem:[%s8190 + $0x68] sm:$0xff]
    %v8205 = vld [vmem:[%s8190 + $0x70] sm:$0xff]
    %v8206 = vld [vmem:[%s8190 + $0x78] sm:$0xff]
    %v8207 = vld [vmem:[%s8190 + $0x80] sm:$0xff]
    %v8208 = vld [vmem:[%s8190 + $0x88] sm:$0xff]
    %v8210 = vsel %vm7518, %v8189, 0
    %8212 = vmatprep.subr.mxu0 0.0
    %8213 = vmatpush1.msra.mxu0 %v8191
    %8214 = vmatprep.subr.mxu0 0.0
    %8215 = vmatpush1.msra.mxu0 %v8192
    %8216 = vmatprep.subr.mxu0 0.0
    %8217 = vmatpush1.msra.mxu0 %v8193
    %8218 = vmatprep.subr.mxu0 0.0
    %8219 = vmatpush1.msra.mxu0 %v8194
    %8220 = vmatprep.subr.mxu0 0.0
    %8221 = vmatpush1.msra.mxu0 %v8195
    %8222 = vmatprep.subr.mxu0 0.0
    %8223 = vmatpush1.msra.mxu0 %v8196
    %8224 = vmatprep.subr.mxu0 0.0
    %8225 = vmatpush1.msra.mxu0 %v8197
    %8226 = vmatprep.subr.mxu0 0.0
    %8227 = vmatpush1.msra.mxu0 %v8198
    %8228 = vmatprep.subr.mxu0 0.0
    %8229 = vmatpush1.msra.mxu0 %v8199
    %8230 = vmatprep.subr.mxu0 0.0
    %8231 = vmatpush1.msra.mxu0 %v8200
    %8232 = vmatprep.subr.mxu0 0.0
    %8233 = vmatpush1.msra.mxu0 %v8201
    %8234 = vmatprep.subr.mxu0 0.0
    %8235 = vmatpush1.msra.mxu0 %v8202
    %8236 = vmatprep.subr.mxu0 0.0
    %8237 = vmatpush1.msra.mxu0 %v8203
    %8238 = vmatprep.subr.mxu0 0.0
    %8239 = vmatpush1.msra.mxu0 %v8204
    %8240 = vmatprep.subr.mxu0 0.0
    %8241 = vmatpush1.msra.mxu0 %v8205
    %8242 = vmatprep.subr.mxu0 0.0
    %8243 = vmatpush1.msra.mxu0 %v8206
    %8244 = vmatprep.subr.mxu0 0.0
    %8245 = vmatpush1.msra.mxu0 %v8207
    %8246 = vmatprep.subr.mxu0 0.0
    %8247 = vmatpush1.msra.mxu0 %v8208
    %8248 = vmatprep.subr.mxu0 0.0
    %8249 = vmatpush1.msra.mxu0 0.0
    %8250 = vmatprep.subr.mxu0 0.0
    %8251 = vmatpush1.msra.mxu0 0.0
    %8252 = vmatprep.subr.mxu0 0.0
    %8253 = vmatpush1.msra.mxu0 0.0
    %8254 = vmatprep.subr.mxu0 0.0
    %8255 = vmatpush1.msra.mxu0 0.0
    %8256 = vmatprep.subr.mxu0 0.0
    %8257 = vmatpush1.msra.mxu0 0.0
    %8258 = vmatprep.subr.mxu0 0.0
    %8259 = vmatpush1.msra.mxu0 0.0
    %8260 = vmatprep.subr.mxu0 0.0
    %8261 = vmatpush1.msra.mxu0 0.0
    %8262 = vmatprep.subr.mxu0 0.0
    %8263 = vmatpush1.msra.mxu0 0.0
    %8264 = vmatprep.subr.mxu0 0.0
    %8265 = vmatpush1.msra.mxu0 0.0
    %8266 = vmatprep.subr.mxu0 0.0
    %8267 = vmatpush1.msra.mxu0 0.0
    %8268 = vmatprep.subr.mxu0 0.0
    %8269 = vmatpush1.msra.mxu0 0.0
    %8270 = vmatprep.subr.mxu0 0.0
    %8271 = vmatpush1.msra.mxu0 0.0
    %8272 = vmatprep.subr.mxu0 0.0
    %8273 = vmatpush1.msra.mxu0 0.0
    %8274 = vmatprep.subr.mxu0 0.0
    %8275 = vmatpush1.msra.mxu0 0.0
    %8276 = vmatprep.mubr.f32.mxu0 %v8210
    %8277 = vmatmul.mubr.f32.gmra.mrb[0].mxu0 %v8188
    %v8278 = vpop.f32.mrb[0].mxu0
    %v8279 = vadd.f32 0.0, %v8278
    %v8280 = vpop.f32.mrb[0].mxu0
    %8281 = vdwg.mxu0
    %v8282 = vadd.f32 %v8179, %v8279
    %v8285 = vrot.slane %v7462, 7
    %v8286 = vrot.slane %v7463, 7
    %v8289 = vsel %vm7470, %v3779, %v8285
    %v8290 = vsel %vm7470, %v3780, %v8286
    %s8291 = scalar_lea.vmem [#allocation6], 1152
    %v8292 = vld [vmem:[%s8291] sm:$0xff]
    %v8293 = vld [vmem:[%s8291 + $0x8] sm:$0xff]
    %v8294 = vld [vmem:[%s8291 + $0x10] sm:$0xff]
    %v8295 = vld [vmem:[%s8291 + $0x18] sm:$0xff]
    %v8296 = vld [vmem:[%s8291 + $0x20] sm:$0xff]
    %v8297 = vld [vmem:[%s8291 + $0x28] sm:$0xff]
    %v8298 = vld [vmem:[%s8291 + $0x30] sm:$0xff]
    %v8299 = vld [vmem:[%s8291 + $0x38] sm:$0xff]
    %v8300 = vld [vmem:[%s8291 + $0x40] sm:$0xff]
    %v8301 = vld [vmem:[%s8291 + $0x48] sm:$0xff]
    %v8302 = vld [vmem:[%s8291 + $0x50] sm:$0xff]
    %v8303 = vld [vmem:[%s8291 + $0x58] sm:$0xff]
    %v8304 = vld [vmem:[%s8291 + $0x60] sm:$0xff]
    %v8305 = vld [vmem:[%s8291 + $0x68] sm:$0xff]
    %v8306 = vld [vmem:[%s8291 + $0x70] sm:$0xff]
    %v8307 = vld [vmem:[%s8291 + $0x78] sm:$0xff]
    %v8308 = vld [vmem:[%s8291 + $0x80] sm:$0xff]
    %v8309 = vld [vmem:[%s8291 + $0x88] sm:$0xff]
    %v8311 = vsel %vm7518, %v8290, 0
    %8313 = vmatprep.subr.mxu0 0.0
    %8314 = vmatpush1.msra.mxu0 %v8292
    %8315 = vmatprep.subr.mxu0 0.0
    %8316 = vmatpush1.msra.mxu0 %v8293
    %8317 = vmatprep.subr.mxu0 0.0
    %8318 = vmatpush1.msra.mxu0 %v8294
    %8319 = vmatprep.subr.mxu0 0.0
    %8320 = vmatpush1.msra.mxu0 %v8295
    %8321 = vmatprep.subr.mxu0 0.0
    %8322 = vmatpush1.msra.mxu0 %v8296
    %8323 = vmatprep.subr.mxu0 0.0
    %8324 = vmatpush1.msra.mxu0 %v8297
    %8325 = vmatprep.subr.mxu0 0.0
    %8326 = vmatpush1.msra.mxu0 %v8298
    %8327 = vmatprep.subr.mxu0 0.0
    %8328 = vmatpush1.msra.mxu0 %v8299
    %8329 = vmatprep.subr.mxu0 0.0
    %8330 = vmatpush1.msra.mxu0 %v8300
    %8331 = vmatprep.subr.mxu0 0.0
    %8332 = vmatpush1.msra.mxu0 %v8301
    %8333 = vmatprep.subr.mxu0 0.0
    %8334 = vmatpush1.msra.mxu0 %v8302
    %8335 = vmatprep.subr.mxu0 0.0
    %8336 = vmatpush1.msra.mxu0 %v8303
    %8337 = vmatprep.subr.mxu0 0.0
    %8338 = vmatpush1.msra.mxu0 %v8304
    %8339 = vmatprep.subr.mxu0 0.0
    %8340 = vmatpush1.msra.mxu0 %v8305
    %8341 = vmatprep.subr.mxu0 0.0
    %8342 = vmatpush1.msra.mxu0 %v8306
    %8343 = vmatprep.subr.mxu0 0.0
    %8344 = vmatpush1.msra.mxu0 %v8307
    %8345 = vmatprep.subr.mxu0 0.0
    %8346 = vmatpush1.msra.mxu0 %v8308
    %8347 = vmatprep.subr.mxu0 0.0
    %8348 = vmatpush1.msra.mxu0 %v8309
    %8349 = vmatprep.subr.mxu0 0.0
    %8350 = vmatpush1.msra.mxu0 0.0
    %8351 = vmatprep.subr.mxu0 0.0
    %8352 = vmatpush1.msra.mxu0 0.0
    %8353 = vmatprep.subr.mxu0 0.0
    %8354 = vmatpush1.msra.mxu0 0.0
    %8355 = vmatprep.subr.mxu0 0.0
    %8356 = vmatpush1.msra.mxu0 0.0
    %8357 = vmatprep.subr.mxu0 0.0
    %8358 = vmatpush1.msra.mxu0 0.0
    %8359 = vmatprep.subr.mxu0 0.0
    %8360 = vmatpush1.msra.mxu0 0.0
    %8361 = vmatprep.subr.mxu0 0.0
    %8362 = vmatpush1.msra.mxu0 0.0
    %8363 = vmatprep.subr.mxu0 0.0
    %8364 = vmatpush1.msra.mxu0 0.0
    %8365 = vmatprep.subr.mxu0 0.0
    %8366 = vmatpush1.msra.mxu0 0.0
    %8367 = vmatprep.subr.mxu0 0.0
    %8368 = vmatpush1.msra.mxu0 0.0
    %8369 = vmatprep.subr.mxu0 0.0
    %8370 = vmatpush1.msra.mxu0 0.0
    %8371 = vmatprep.subr.mxu0 0.0
    %8372 = vmatpush1.msra.mxu0 0.0
    %8373 = vmatprep.subr.mxu0 0.0
    %8374 = vmatpush1.msra.mxu0 0.0
    %8375 = vmatprep.subr.mxu0 0.0
    %8376 = vmatpush1.msra.mxu0 0.0
    %8377 = vmatprep.mubr.f32.mxu0 %v8311
    %8378 = vmatmul.mubr.f32.gmra.mrb[0].mxu0 %v8289
    %v8379 = vpop.f32.mrb[0].mxu0
    %v8380 = vadd.f32 0.0, %v8379
    %v8381 = vpop.f32.mrb[0].mxu0
    %8382 = vdwg.mxu0
    %v8383 = vadd.f32 %v8282, %v8380
    %v8386 = vrot.slane %v3779, 1
    %v8387 = vrot.slane %v3780, 1
    %v8390 = vsel %vm7470, %v8386, %v7462
    %v8391 = vsel %vm7470, %v8387, %v7463
    %s8392 = scalar_lea.vmem [#allocation6], 1296
    %v8393 = vld [vmem:[%s8392] sm:$0xff]
    %v8394 = vld [vmem:[%s8392 + $0x8] sm:$0xff]
    %v8395 = vld [vmem:[%s8392 + $0x10] sm:$0xff]
    %v8396 = vld [vmem:[%s8392 + $0x18] sm:$0xff]
    %v8397 = vld [vmem:[%s8392 + $0x20] sm:$0xff]
    %v8398 = vld [vmem:[%s8392 + $0x28] sm:$0xff]
    %v8399 = vld [vmem:[%s8392 + $0x30] sm:$0xff]
    %v8400 = vld [vmem:[%s8392 + $0x38] sm:$0xff]
    %v8401 = vld [vmem:[%s8392 + $0x40] sm:$0xff]
    %v8402 = vld [vmem:[%s8392 + $0x48] sm:$0xff]
    %v8403 = vld [vmem:[%s8392 + $0x50] sm:$0xff]
    %v8404 = vld [vmem:[%s8392 + $0x58] sm:$0xff]
    %v8405 = vld [vmem:[%s8392 + $0x60] sm:$0xff]
    %v8406 = vld [vmem:[%s8392 + $0x68] sm:$0xff]
    %v8407 = vld [vmem:[%s8392 + $0x70] sm:$0xff]
    %v8408 = vld [vmem:[%s8392 + $0x78] sm:$0xff]
    %v8409 = vld [vmem:[%s8392 + $0x80] sm:$0xff]
    %v8410 = vld [vmem:[%s8392 + $0x88] sm:$0xff]
    %v8412 = vsel %vm7518, %v8391, 0
    %8414 = vmatprep.subr.mxu0 0.0
    %8415 = vmatpush1.msra.mxu0 %v8393
    %8416 = vmatprep.subr.mxu0 0.0
    %8417 = vmatpush1.msra.mxu0 %v8394
    %8418 = vmatprep.subr.mxu0 0.0
    %8419 = vmatpush1.msra.mxu0 %v8395
    %8420 = vmatprep.subr.mxu0 0.0
    %8421 = vmatpush1.msra.mxu0 %v8396
    %8422 = vmatprep.subr.mxu0 0.0
    %8423 = vmatpush1.msra.mxu0 %v8397
    %8424 = vmatprep.subr.mxu0 0.0
    %8425 = vmatpush1.msra.mxu0 %v8398
    %8426 = vmatprep.subr.mxu0 0.0
    %8427 = vmatpush1.msra.mxu0 %v8399
    %8428 = vmatprep.subr.mxu0 0.0
    %8429 = vmatpush1.msra.mxu0 %v8400
    %8430 = vmatprep.subr.mxu0 0.0
    %8431 = vmatpush1.msra.mxu0 %v8401
    %8432 = vmatprep.subr.mxu0 0.0
    %8433 = vmatpush1.msra.mxu0 %v8402
    %8434 = vmatprep.subr.mxu0 0.0
    %8435 = vmatpush1.msra.mxu0 %v8403
    %8436 = vmatprep.subr.mxu0 0.0
    %8437 = vmatpush1.msra.mxu0 %v8404
    %8438 = vmatprep.subr.mxu0 0.0
    %8439 = vmatpush1.msra.mxu0 %v8405
    %8440 = vmatprep.subr.mxu0 0.0
    %8441 = vmatpush1.msra.mxu0 %v8406
    %8442 = vmatprep.subr.mxu0 0.0
    %8443 = vmatpush1.msra.mxu0 %v8407
    %8444 = vmatprep.subr.mxu0 0.0
    %8445 = vmatpush1.msra.mxu0 %v8408
    %8446 = vmatprep.subr.mxu0 0.0
    %8447 = vmatpush1.msra.mxu0 %v8409
    %8448 = vmatprep.subr.mxu0 0.0
    %8449 = vmatpush1.msra.mxu0 %v8410
    %8450 = vmatprep.subr.mxu0 0.0
    %8451 = vmatpush1.msra.mxu0 0.0
    %8452 = vmatprep.subr.mxu0 0.0
    %8453 = vmatpush1.msra.mxu0 0.0
    %8454 = vmatprep.subr.mxu0 0.0
    %8455 = vmatpush1.msra.mxu0 0.0
    %8456 = vmatprep.subr.mxu0 0.0
    %8457 = vmatpush1.msra.mxu0 0.0
    %8458 = vmatprep.subr.mxu0 0.0
    %8459 = vmatpush1.msra.mxu0 0.0
    %8460 = vmatprep.subr.mxu0 0.0
    %8461 = vmatpush1.msra.mxu0 0.0
    %8462 = vmatprep.subr.mxu0 0.0
    %8463 = vmatpush1.msra.mxu0 0.0
    %8464 = vmatprep.subr.mxu0 0.0
    %8465 = vmatpush1.msra.mxu0 0.0
    %8466 = vmatprep.subr.mxu0 0.0
    %8467 = vmatpush1.msra.mxu0 0.0
    %8468 = vmatprep.subr.mxu0 0.0
    %8469 = vmatpush1.msra.mxu0 0.0
    %8470 = vmatprep.subr.mxu0 0.0
    %8471 = vmatpush1.msra.mxu0 0.0
    %8472 = vmatprep.subr.mxu0 0.0
    %8473 = vmatpush1.msra.mxu0 0.0
    %8474 = vmatprep.subr.mxu0 0.0
    %8475 = vmatpush1.msra.mxu0 0.0
    %8476 = vmatprep.subr.mxu0 0.0
    %8477 = vmatpush1.msra.mxu0 0.0
    %8478 = vmatprep.mubr.f32.mxu0 %v8412
    %8479 = vmatmul.mubr.f32.gmra.mrb[0].mxu0 %v8390
    %v8480 = vpop.f32.mrb[0].mxu0
    %v8481 = vadd.f32 0.0, %v8480
    %v8482 = vpop.f32.mrb[0].mxu0
    %8483 = vdwg.mxu0
    %v8484 = vadd.f32 %v8383, %v8481
    %v8485 = vrot.slane %v3779, 2
    %v8486 = vrot.slane %v3780, 2
    %v8489 = vrot.slane %v7462, 1
    %v8490 = vrot.slane %v7463, 1
    %v8493 = vsel %vm7470, %v8485, %v8489
    %v8494 = vsel %vm7470, %v8486, %v8490
    %s8495 = scalar_lea.vmem [#allocation6], 1440
    %v8496 = vld [vmem:[%s8495] sm:$0xff]
    %v8497 = vld [vmem:[%s8495 + $0x8] sm:$0xff]
    %v8498 = vld [vmem:[%s8495 + $0x10] sm:$0xff]
    %v8499 = vld [vmem:[%s8495 + $0x18] sm:$0xff]
    %v8500 = vld [vmem:[%s8495 + $0x20] sm:$0xff]
    %v8501 = vld [vmem:[%s8495 + $0x28] sm:$0xff]
    %v8502 = vld [vmem:[%s8495 + $0x30] sm:$0xff]
    %v8503 = vld [vmem:[%s8495 + $0x38] sm:$0xff]
    %v8504 = vld [vmem:[%s8495 + $0x40] sm:$0xff]
    %v8505 = vld [vmem:[%s8495 + $0x48] sm:$0xff]
    %v8506 = vld [vmem:[%s8495 + $0x50] sm:$0xff]
    %v8507 = vld [vmem:[%s8495 + $0x58] sm:$0xff]
    %v8508 = vld [vmem:[%s8495 + $0x60] sm:$0xff]
    %v8509 = vld [vmem:[%s8495 + $0x68] sm:$0xff]
    %v8510 = vld [vmem:[%s8495 + $0x70] sm:$0xff]
    %v8511 = vld [vmem:[%s8495 + $0x78] sm:$0xff]
    %v8512 = vld [vmem:[%s8495 + $0x80] sm:$0xff]
    %v8513 = vld [vmem:[%s8495 + $0x88] sm:$0xff]
    %v8515 = vsel %vm7518, %v8494, 0
    %8517 = vmatprep.subr.mxu0 0.0
    %8518 = vmatpush1.msra.mxu0 %v8496
    %8519 = vmatprep.subr.mxu0 0.0
    %8520 = vmatpush1.msra.mxu0 %v8497
    %8521 = vmatprep.subr.mxu0 0.0
    %8522 = vmatpush1.msra.mxu0 %v8498
    %8523 = vmatprep.subr.mxu0 0.0
    %8524 = vmatpush1.msra.mxu0 %v8499
    %8525 = vmatprep.subr.mxu0 0.0
    %8526 = vmatpush1.msra.mxu0 %v8500
    %8527 = vmatprep.subr.mxu0 0.0
    %8528 = vmatpush1.msra.mxu0 %v8501
    %8529 = vmatprep.subr.mxu0 0.0
    %8530 = vmatpush1.msra.mxu0 %v8502
    %8531 = vmatprep.subr.mxu0 0.0
    %8532 = vmatpush1.msra.mxu0 %v8503
    %8533 = vmatprep.subr.mxu0 0.0
    %8534 = vmatpush1.msra.mxu0 %v8504
    %8535 = vmatprep.subr.mxu0 0.0
    %8536 = vmatpush1.msra.mxu0 %v8505
    %8537 = vmatprep.subr.mxu0 0.0
    %8538 = vmatpush1.msra.mxu0 %v8506
    %8539 = vmatprep.subr.mxu0 0.0
    %8540 = vmatpush1.msra.mxu0 %v8507
    %8541 = vmatprep.subr.mxu0 0.0
    %8542 = vmatpush1.msra.mxu0 %v8508
    %8543 = vmatprep.subr.mxu0 0.0
    %8544 = vmatpush1.msra.mxu0 %v8509
    %8545 = vmatprep.subr.mxu0 0.0
    %8546 = vmatpush1.msra.mxu0 %v8510
    %8547 = vmatprep.subr.mxu0 0.0
    %8548 = vmatpush1.msra.mxu0 %v8511
    %8549 = vmatprep.subr.mxu0 0.0
    %8550 = vmatpush1.msra.mxu0 %v8512
    %8551 = vmatprep.subr.mxu0 0.0
    %8552 = vmatpush1.msra.mxu0 %v8513
    %8553 = vmatprep.subr.mxu0 0.0
    %8554 = vmatpush1.msra.mxu0 0.0
    %8555 = vmatprep.subr.mxu0 0.0
    %8556 = vmatpush1.msra.mxu0 0.0
    %8557 = vmatprep.subr.mxu0 0.0
    %8558 = vmatpush1.msra.mxu0 0.0
    %8559 = vmatprep.subr.mxu0 0.0
    %8560 = vmatpush1.msra.mxu0 0.0
    %8561 = vmatprep.subr.mxu0 0.0
    %8562 = vmatpush1.msra.mxu0 0.0
    %8563 = vmatprep.subr.mxu0 0.0
    %8564 = vmatpush1.msra.mxu0 0.0
    %8565 = vmatprep.subr.mxu0 0.0
    %8566 = vmatpush1.msra.mxu0 0.0
    %8567 = vmatprep.subr.mxu0 0.0
    %8568 = vmatpush1.msra.mxu0 0.0
    %8569 = vmatprep.subr.mxu0 0.0
    %8570 = vmatpush1.msra.mxu0 0.0
    %8571 = vmatprep.subr.mxu0 0.0
    %8572 = vmatpush1.msra.mxu0 0.0
    %8573 = vmatprep.subr.mxu0 0.0
    %8574 = vmatpush1.msra.mxu0 0.0
    %8575 = vmatprep.subr.mxu0 0.0
    %8576 = vmatpush1.msra.mxu0 0.0
    %8577 = vmatprep.subr.mxu0 0.0
    %8578 = vmatpush1.msra.mxu0 0.0
    %8579 = vmatprep.subr.mxu0 0.0
    %8580 = vmatpush1.msra.mxu0 0.0
    %8581 = vmatprep.mubr.f32.mxu0 %v8515
    %8582 = vmatmul.mubr.f32.gmra.mrb[0].mxu0 %v8493
    %v8583 = vpop.f32.mrb[0].mxu0
    %v8584 = vadd.f32 0.0, %v8583
    %v8585 = vpop.f32.mrb[0].mxu0
    %8586 = vdwg.mxu0
    %v8587 = vadd.f32 %v8484, %v8584
    %v8588 = vrot.slane %v3779, 3
    %v8589 = vrot.slane %v3780, 3
    %v8592 = vrot.slane %v7462, 2
    %v8593 = vrot.slane %v7463, 2
    %v8596 = vsel %vm7470, %v8588, %v8592
    %v8597 = vsel %vm7470, %v8589, %v8593
    %s8598 = scalar_lea.vmem [#allocation6], 1584
    %v8599 = vld [vmem:[%s8598] sm:$0xff]
    %v8600 = vld [vmem:[%s8598 + $0x8] sm:$0xff]
    %v8601 = vld [vmem:[%s8598 + $0x10] sm:$0xff]
    %v8602 = vld [vmem:[%s8598 + $0x18] sm:$0xff]
    %v8603 = vld [vmem:[%s8598 + $0x20] sm:$0xff]
    %v8604 = vld [vmem:[%s8598 + $0x28] sm:$0xff]
    %v8605 = vld [vmem:[%s8598 + $0x30] sm:$0xff]
    %v8606 = vld [vmem:[%s8598 + $0x38] sm:$0xff]
    %v8607 = vld [vmem:[%s8598 + $0x40] sm:$0xff]
    %v8608 = vld [vmem:[%s8598 + $0x48] sm:$0xff]
    %v8609 = vld [vmem:[%s8598 + $0x50] sm:$0xff]
    %v8610 = vld [vmem:[%s8598 + $0x58] sm:$0xff]
    %v8611 = vld [vmem:[%s8598 + $0x60] sm:$0xff]
    %v8612 = vld [vmem:[%s8598 + $0x68] sm:$0xff]
    %v8613 = vld [vmem:[%s8598 + $0x70] sm:$0xff]
    %v8614 = vld [vmem:[%s8598 + $0x78] sm:$0xff]
    %v8615 = vld [vmem:[%s8598 + $0x80] sm:$0xff]
    %v8616 = vld [vmem:[%s8598 + $0x88] sm:$0xff]
    %v8618 = vsel %vm7518, %v8597, 0
    %8620 = vmatprep.subr.mxu0 0.0
    %8621 = vmatpush1.msra.mxu0 %v8599
    %8622 = vmatprep.subr.mxu0 0.0
    %8623 = vmatpush1.msra.mxu0 %v8600
    %8624 = vmatprep.subr.mxu0 0.0
    %8625 = vmatpush1.msra.mxu0 %v8601
    %8626 = vmatprep.subr.mxu0 0.0
    %8627 = vmatpush1.msra.mxu0 %v8602
    %8628 = vmatprep.subr.mxu0 0.0
    %8629 = vmatpush1.msra.mxu0 %v8603
    %8630 = vmatprep.subr.mxu0 0.0
    %8631 = vmatpush1.msra.mxu0 %v8604
    %8632 = vmatprep.subr.mxu0 0.0
    %8633 = vmatpush1.msra.mxu0 %v8605
    %8634 = vmatprep.subr.mxu0 0.0
    %8635 = vmatpush1.msra.mxu0 %v8606
    %8636 = vmatprep.subr.mxu0 0.0
    %8637 = vmatpush1.msra.mxu0 %v8607
    %8638 = vmatprep.subr.mxu0 0.0
    %8639 = vmatpush1.msra.mxu0 %v8608
    %8640 = vmatprep.subr.mxu0 0.0
    %8641 = vmatpush1.msra.mxu0 %v8609
    %8642 = vmatprep.subr.mxu0 0.0
    %8643 = vmatpush1.msra.mxu0 %v8610
    %8644 = vmatprep.subr.mxu0 0.0
    %8645 = vmatpush1.msra.mxu0 %v8611
    %8646 = vmatprep.subr.mxu0 0.0
    %8647 = vmatpush1.msra.mxu0 %v8612
    %8648 = vmatprep.subr.mxu0 0.0
    %8649 = vmatpush1.msra.mxu0 %v8613
    %8650 = vmatprep.subr.mxu0 0.0
    %8651 = vmatpush1.msra.mxu0 %v8614
    %8652 = vmatprep.subr.mxu0 0.0
    %8653 = vmatpush1.msra.mxu0 %v8615
    %8654 = vmatprep.subr.mxu0 0.0
    %8655 = vmatpush1.msra.mxu0 %v8616
    %8656 = vmatprep.subr.mxu0 0.0
    %8657 = vmatpush1.msra.mxu0 0.0
    %8658 = vmatprep.subr.mxu0 0.0
    %8659 = vmatpush1.msra.mxu0 0.0
    %8660 = vmatprep.subr.mxu0 0.0
    %8661 = vmatpush1.msra.mxu0 0.0
    %8662 = vmatprep.subr.mxu0 0.0
    %8663 = vmatpush1.msra.mxu0 0.0
    %8664 = vmatprep.subr.mxu0 0.0
    %8665 = vmatpush1.msra.mxu0 0.0
    %8666 = vmatprep.subr.mxu0 0.0
    %8667 = vmatpush1.msra.mxu0 0.0
    %8668 = vmatprep.subr.mxu0 0.0
    %8669 = vmatpush1.msra.mxu0 0.0
    %8670 = vmatprep.subr.mxu0 0.0
    %8671 = vmatpush1.msra.mxu0 0.0
    %8672 = vmatprep.subr.mxu0 0.0
    %8673 = vmatpush1.msra.mxu0 0.0
    %8674 = vmatprep.subr.mxu0 0.0
    %8675 = vmatpush1.msra.mxu0 0.0
    %8676 = vmatprep.subr.mxu0 0.0
    %8677 = vmatpush1.msra.mxu0 0.0
    %8678 = vmatprep.subr.mxu0 0.0
    %8679 = vmatpush1.msra.mxu0 0.0
    %8680 = vmatprep.subr.mxu0 0.0
    %8681 = vmatpush1.msra.mxu0 0.0
    %8682 = vmatprep.subr.mxu0 0.0
    %8683 = vmatpush1.msra.mxu0 0.0
    %8684 = vmatprep.mubr.f32.mxu0 %v8618
    %8685 = vmatmul.mubr.f32.gmra.mrb[0].mxu0 %v8596
    %v8686 = vpop.f32.mrb[0].mxu0
    %v8687 = vadd.f32 0.0, %v8686
    %v8688 = vpop.f32.mrb[0].mxu0
    %8689 = vdwg.mxu0
    %v8690 = vadd.f32 %v8587, %v8687
    %v8691 = vrot.slane %v3779, 4
    %v8692 = vrot.slane %v3780, 4
    %v8695 = vrot.slane %v7462, 3
    %v8696 = vrot.slane %v7463, 3
    %v8699 = vsel %vm7470, %v8691, %v8695
    %v8700 = vsel %vm7470, %v8692, %v8696
    %s8701 = scalar_lea.vmem [#allocation6], 1728
    %v8702 = vld [vmem:[%s8701] sm:$0xff]
    %v8703 = vld [vmem:[%s8701 + $0x8] sm:$0xff]
    %v8704 = vld [vmem:[%s8701 + $0x10] sm:$0xff]
    %v8705 = vld [vmem:[%s8701 + $0x18] sm:$0xff]
    %v8706 = vld [vmem:[%s8701 + $0x20] sm:$0xff]
    %v8707 = vld [vmem:[%s8701 + $0x28] sm:$0xff]
    %v8708 = vld [vmem:[%s8701 + $0x30] sm:$0xff]
    %v8709 = vld [vmem:[%s8701 + $0x38] sm:$0xff]
    %v8710 = vld [vmem:[%s8701 + $0x40] sm:$0xff]
    %v8711 = vld [vmem:[%s8701 + $0x48] sm:$0xff]
    %v8712 = vld [vmem:[%s8701 + $0x50] sm:$0xff]
    %v8713 = vld [vmem:[%s8701 + $0x58] sm:$0xff]
    %v8714 = vld [vmem:[%s8701 + $0x60] sm:$0xff]
    %v8715 = vld [vmem:[%s8701 + $0x68] sm:$0xff]
    %v8716 = vld [vmem:[%s8701 + $0x70] sm:$0xff]
    %v8717 = vld [vmem:[%s8701 + $0x78] sm:$0xff]
    %v8718 = vld [vmem:[%s8701 + $0x80] sm:$0xff]
    %v8719 = vld [vmem:[%s8701 + $0x88] sm:$0xff]
    %v8721 = vsel %vm7518, %v8700, 0
    %8723 = vmatprep.subr.mxu0 0.0
    %8724 = vmatpush1.msra.mxu0 %v8702
    %8725 = vmatprep.subr.mxu0 0.0
    %8726 = vmatpush1.msra.mxu0 %v8703
    %8727 = vmatprep.subr.mxu0 0.0
    %8728 = vmatpush1.msra.mxu0 %v8704
    %8729 = vmatprep.subr.mxu0 0.0
    %8730 = vmatpush1.msra.mxu0 %v8705
    %8731 = vmatprep.subr.mxu0 0.0
    %8732 = vmatpush1.msra.mxu0 %v8706
    %8733 = vmatprep.subr.mxu0 0.0
    %8734 = vmatpush1.msra.mxu0 %v8707
    %8735 = vmatprep.subr.mxu0 0.0
    %8736 = vmatpush1.msra.mxu0 %v8708
    %8737 = vmatprep.subr.mxu0 0.0
    %8738 = vmatpush1.msra.mxu0 %v8709
    %8739 = vmatprep.subr.mxu0 0.0
    %8740 = vmatpush1.msra.mxu0 %v8710
    %8741 = vmatprep.subr.mxu0 0.0
    %8742 = vmatpush1.msra.mxu0 %v8711
    %8743 = vmatprep.subr.mxu0 0.0
    %8744 = vmatpush1.msra.mxu0 %v8712
    %8745 = vmatprep.subr.mxu0 0.0
    %8746 = vmatpush1.msra.mxu0 %v8713
    %8747 = vmatprep.subr.mxu0 0.0
    %8748 = vmatpush1.msra.mxu0 %v8714
    %8749 = vmatprep.subr.mxu0 0.0
    %8750 = vmatpush1.msra.mxu0 %v8715
    %8751 = vmatprep.subr.mxu0 0.0
    %8752 = vmatpush1.msra.mxu0 %v8716
    %8753 = vmatprep.subr.mxu0 0.0
    %8754 = vmatpush1.msra.mxu0 %v8717
    %8755 = vmatprep.subr.mxu0 0.0
    %8756 = vmatpush1.msra.mxu0 %v8718
    %8757 = vmatprep.subr.mxu0 0.0
    %8758 = vmatpush1.msra.mxu0 %v8719
    %8759 = vmatprep.subr.mxu0 0.0
    %8760 = vmatpush1.msra.mxu0 0.0
    %8761 = vmatprep.subr.mxu0 0.0
    %8762 = vmatpush1.msra.mxu0 0.0
    %8763 = vmatprep.subr.mxu0 0.0
    %8764 = vmatpush1.msra.mxu0 0.0
    %8765 = vmatprep.subr.mxu0 0.0
    %8766 = vmatpush1.msra.mxu0 0.0
    %8767 = vmatprep.subr.mxu0 0.0
    %8768 = vmatpush1.msra.mxu0 0.0
    %8769 = vmatprep.subr.mxu0 0.0
    %8770 = vmatpush1.msra.mxu0 0.0
    %8771 = vmatprep.subr.mxu0 0.0
    %8772 = vmatpush1.msra.mxu0 0.0
    %8773 = vmatprep.subr.mxu0 0.0
    %8774 = vmatpush1.msra.mxu0 0.0
    %8775 = vmatprep.subr.mxu0 0.0
    %8776 = vmatpush1.msra.mxu0 0.0
    %8777 = vmatprep.subr.mxu0 0.0
    %8778 = vmatpush1.msra.mxu0 0.0
    %8779 = vmatprep.subr.mxu0 0.0
    %8780 = vmatpush1.msra.mxu0 0.0
    %8781 = vmatprep.subr.mxu0 0.0
    %8782 = vmatpush1.msra.mxu0 0.0
    %8783 = vmatprep.subr.mxu0 0.0
    %8784 = vmatpush1.msra.mxu0 0.0
    %8785 = vmatprep.subr.mxu0 0.0
    %8786 = vmatpush1.msra.mxu0 0.0
    %8787 = vmatprep.mubr.f32.mxu0 %v8721
    %8788 = vmatmul.mubr.f32.gmra.mrb[0].mxu0 %v8699
    %v8789 = vpop.f32.mrb[0].mxu0
    %v8790 = vadd.f32 0.0, %v8789
    %v8791 = vpop.f32.mrb[0].mxu0
    %8792 = vdwg.mxu0
    %v8793 = vadd.f32 %v8690, %v8790
    %v8794 = vld [vmem:[%s10] sm:$0x1]
    %v8796 = vlaneseq
    %v8797 = vshrl.u32 %v8796, 7
    %v8798 = vsub.s32 0, %v8797
    %v8799 = vrot.slane %v8794, %v8798
    %v8801 = vadd.f32 %v8793, %v8799
    %v8802 = vtanh.pop %v8801
    %v8803 = vld [vmem:[%s11] sm:$0xff]
    %v8804 = vld [vmem:[%s11 + $0x8] sm:$0xff]
    %v8805 = vld [vmem:[%s11 + $0x10] sm:$0xff]
    %v8806 = vld [vmem:[%s11 + $0x18] sm:$0xff]
    %v8807 = vld [vmem:[%s11 + $0x20] sm:$0xff]
    %v8808 = vld [vmem:[%s11 + $0x28] sm:$0xff]
    %v8809 = vld [vmem:[%s11 + $0x30] sm:$0xff]
    %v8810 = vld [vmem:[%s11 + $0x38] sm:$0xff]
    %v8811 = vld [vmem:[%s11 + $0x40] sm:$0xff]
    %v8812 = vld [vmem:[%s11 + $0x48] sm:$0xff]
    %v8813 = vld [vmem:[%s11 + $0x50] sm:$0xff]
    %v8814 = vld [vmem:[%s11 + $0x58] sm:$0xff]
    %v8815 = vld [vmem:[%s11 + $0x60] sm:$0xff]
    %v8816 = vld [vmem:[%s11 + $0x68] sm:$0xff]
    %v8817 = vld [vmem:[%s11 + $0x70] sm:$0xff]
    %v8818 = vld [vmem:[%s11 + $0x78] sm:$0xff]
    %v8819 = vld [vmem:[%s12] sm:$0x1]
    %v8821 = vlaneseq
    %v8822 = vshrl.u32 %v8821, 7
    %v8823 = vsub.s32 0, %v8822
    %v8824 = vrot.slane %v8819, %v8823
    %8826 = vmatprep.subr.mxu0 0.0
    %8827 = vmatpush1.msra.mxu0 %v8803
    %8828 = vmatprep.subr.mxu0 0.0
    %8829 = vmatpush1.msra.mxu0 %v8804
    %8830 = vmatprep.subr.mxu0 0.0
    %8831 = vmatpush1.msra.mxu0 %v8805
    %8832 = vmatprep.subr.mxu0 0.0
    %8833 = vmatpush1.msra.mxu0 %v8806
    %8834 = vmatprep.subr.mxu0 0.0
    %8835 = vmatpush1.msra.mxu0 %v8807
    %8836 = vmatprep.subr.mxu0 0.0
    %8837 = vmatpush1.msra.mxu0 %v8808
    %8838 = vmatprep.subr.mxu0 0.0
    %8839 = vmatpush1.msra.mxu0 %v8809
    %8840 = vmatprep.subr.mxu0 0.0
    %8841 = vmatpush1.msra.mxu0 %v8810
    %8842 = vmatprep.subr.mxu0 0.0
    %8843 = vmatpush1.msra.mxu0 %v8811
    %8844 = vmatprep.subr.mxu0 0.0
    %8845 = vmatpush1.msra.mxu0 %v8812
    %8846 = vmatprep.subr.mxu0 0.0
    %8847 = vmatpush1.msra.mxu0 %v8813
    %8848 = vmatprep.subr.mxu0 0.0
    %8849 = vmatpush1.msra.mxu0 %v8814
    %8850 = vmatprep.subr.mxu0 0.0
    %8851 = vmatpush1.msra.mxu0 %v8815
    %8852 = vmatprep.subr.mxu0 0.0
    %8853 = vmatpush1.msra.mxu0 %v8816
    %8854 = vmatprep.subr.mxu0 0.0
    %8855 = vmatpush1.msra.mxu0 %v8817
    %8856 = vmatprep.subr.mxu0 0.0
    %8857 = vmatpush1.msra.mxu0 %v8818
    %8858 = vmatprep.subr.mxu0 0.0
    %8859 = vmatpush1.msra.mxu0 0.0
    %8860 = vmatprep.subr.mxu0 0.0
    %8861 = vmatpush1.msra.mxu0 0.0
    %8862 = vmatprep.subr.mxu0 0.0
    %8863 = vmatpush1.msra.mxu0 0.0
    %8864 = vmatprep.subr.mxu0 0.0
    %8865 = vmatpush1.msra.mxu0 0.0
    %8866 = vmatprep.subr.mxu0 0.0
    %8867 = vmatpush1.msra.mxu0 0.0
    %8868 = vmatprep.subr.mxu0 0.0
    %8869 = vmatpush1.msra.mxu0 0.0
    %8870 = vmatprep.subr.mxu0 0.0
    %8871 = vmatpush1.msra.mxu0 0.0
    %8872 = vmatprep.subr.mxu0 0.0
    %8873 = vmatpush1.msra.mxu0 0.0
    %8874 = vmatprep.subr.mxu0 0.0
    %8875 = vmatpush1.msra.mxu0 0.0
    %8876 = vmatprep.subr.mxu0 0.0
    %8877 = vmatpush1.msra.mxu0 0.0
    %8878 = vmatprep.subr.mxu0 0.0
    %8879 = vmatpush1.msra.mxu0 0.0
    %8880 = vmatprep.subr.mxu0 0.0
    %8881 = vmatpush1.msra.mxu0 0.0
    %8882 = vmatprep.subr.mxu0 0.0
    %8883 = vmatpush1.msra.mxu0 0.0
    %8884 = vmatprep.subr.mxu0 0.0
    %8885 = vmatpush1.msra.mxu0 0.0
    %8886 = vmatprep.subr.mxu0 0.0
    %8887 = vmatpush1.msra.mxu0 0.0
    %8888 = vmatprep.subr.mxu0 0.0
    %8889 = vmatpush1.msra.mxu0 0.0
    %8890 = vmatprep.mubr.f32.mxu0 0.0
    %8891 = vmatmul.mubr.f32.gmra.mrb[0].mxu0 %v8802
    %v8892 = vpop.f32.mrb[0].mxu0
    %v8893 = vadd.f32 %v8824, %v8892
    %v8894 = vpop.f32.mrb[0].mxu0
    %8895 = vdwg.mxu0
    %v8896 = vtanh.pop %v8893
    %v8897 = vld [vmem:[%s13] sm:$0xff]
    %v8898 = vld [vmem:[%s13 + $0x8] sm:$0xff]
    %v8899 = vld [vmem:[%s13 + $0x10] sm:$0xff]
    %v8900 = vld [vmem:[%s13 + $0x18] sm:$0xff]
    %v8901 = vld [vmem:[%s13 + $0x20] sm:$0xff]
    %v8902 = vld [vmem:[%s13 + $0x28] sm:$0xff]
    %v8903 = vld [vmem:[%s13 + $0x30] sm:$0xff]
    %v8904 = vld [vmem:[%s13 + $0x38] sm:$0xff]
    %v8905 = vld [vmem:[%s13 + $0x40] sm:$0xff]
    %v8906 = vld [vmem:[%s13 + $0x48] sm:$0xff]
    %v8907 = vld [vmem:[%s13 + $0x50] sm:$0xff]
    %v8908 = vld [vmem:[%s13 + $0x58] sm:$0xff]
    %v8909 = vld [vmem:[%s13 + $0x60] sm:$0xff]
    %v8910 = vld [vmem:[%s13 + $0x68] sm:$0xff]
    %v8911 = vld [vmem:[%s13 + $0x70] sm:$0xff]
    %v8912 = vld [vmem:[%s13 + $0x78] sm:$0xff]
    %v8913 = vld [vmem:[%s14] sm:$0x1]
    %v8915 = vlaneseq
    %v8916 = vshrl.u32 %v8915, 7
    %v8917 = vsub.s32 0, %v8916
    %v8918 = vrot.slane %v8913, %v8917
    %8920 = vmatprep.subr.mxu0 0.0
    %8921 = vmatpush1.msra.mxu0 %v8897
    %8922 = vmatprep.subr.mxu0 0.0
    %8923 = vmatpush1.msra.mxu0 %v8898
    %8924 = vmatprep.subr.mxu0 0.0
    %8925 = vmatpush1.msra.mxu0 %v8899
    %8926 = vmatprep.subr.mxu0 0.0
    %8927 = vmatpush1.msra.mxu0 %v8900
    %8928 = vmatprep.subr.mxu0 0.0
    %8929 = vmatpush1.msra.mxu0 %v8901
    %8930 = vmatprep.subr.mxu0 0.0
    %8931 = vmatpush1.msra.mxu0 %v8902
    %8932 = vmatprep.subr.mxu0 0.0
    %8933 = vmatpush1.msra.mxu0 %v8903
    %8934 = vmatprep.subr.mxu0 0.0
    %8935 = vmatpush1.msra.mxu0 %v8904
    %8936 = vmatprep.subr.mxu0 0.0
    %8937 = vmatpush1.msra.mxu0 %v8905
    %8938 = vmatprep.subr.mxu0 0.0
    %8939 = vmatpush1.msra.mxu0 %v8906
    %8940 = vmatprep.subr.mxu0 0.0
    %8941 = vmatpush1.msra.mxu0 %v8907
    %8942 = vmatprep.subr.mxu0 0.0
    %8943 = vmatpush1.msra.mxu0 %v8908
    %8944 = vmatprep.subr.mxu0 0.0
    %8945 = vmatpush1.msra.mxu0 %v8909
    %8946 = vmatprep.subr.mxu0 0.0
    %8947 = vmatpush1.msra.mxu0 %v8910
    %8948 = vmatprep.subr.mxu0 0.0
    %8949 = vmatpush1.msra.mxu0 %v8911
    %8950 = vmatprep.subr.mxu0 0.0
    %8951 = vmatpush1.msra.mxu0 %v8912
    %8952 = vmatprep.subr.mxu0 0.0
    %8953 = vmatpush1.msra.mxu0 0.0
    %8954 = vmatprep.subr.mxu0 0.0
    %8955 = vmatpush1.msra.mxu0 0.0
    %8956 = vmatprep.subr.mxu0 0.0
    %8957 = vmatpush1.msra.mxu0 0.0
    %8958 = vmatprep.subr.mxu0 0.0
    %8959 = vmatpush1.msra.mxu0 0.0
    %8960 = vmatprep.subr.mxu0 0.0
    %8961 = vmatpush1.msra.mxu0 0.0
    %8962 = vmatprep.subr.mxu0 0.0
    %8963 = vmatpush1.msra.mxu0 0.0
    %8964 = vmatprep.subr.mxu0 0.0
    %8965 = vmatpush1.msra.mxu0 0.0
    %8966 = vmatprep.subr.mxu0 0.0
    %8967 = vmatpush1.msra.mxu0 0.0
    %8968 = vmatprep.subr.mxu0 0.0
    %8969 = vmatpush1.msra.mxu0 0.0
    %8970 = vmatprep.subr.mxu0 0.0
    %8971 = vmatpush1.msra.mxu0 0.0
    %8972 = vmatprep.subr.mxu0 0.0
    %8973 = vmatpush1.msra.mxu0 0.0
    %8974 = vmatprep.subr.mxu0 0.0
    %8975 = vmatpush1.msra.mxu0 0.0
    %8976 = vmatprep.subr.mxu0 0.0
    %8977 = vmatpush1.msra.mxu0 0.0
    %8978 = vmatprep.subr.mxu0 0.0
    %8979 = vmatpush1.msra.mxu0 0.0
    %8980 = vmatprep.subr.mxu0 0.0
    %8981 = vmatpush1.msra.mxu0 0.0
    %8982 = vmatprep.subr.mxu0 0.0
    %8983 = vmatpush1.msra.mxu0 0.0
    %8984 = vmatprep.mubr.f32.mxu0 0.0
    %8985 = vmatmul.mubr.f32.gmra.mrb[0].mxu0 %v8896
    %v8986 = vpop.f32.mrb[0].mxu0
    %v8987 = vadd.f32 %v8918, %v8986
    %v8988 = vpop.f32.mrb[0].mxu0
    %8989 = vdwg.mxu0
    %vm8990 = vcmask 287744
    %8991 = vst.msk [vmem:[#allocation8] sm:$0x3] %vm8990, %v8987
    // Predicated region
    $region70: #{lenet5_forward.1} parent=1 // pred_check
      _
    $region71: #{lenet5_forward.1} parent=1 // pred_check_branch
      %8993 = sbr.rel (0) target = $region73
    $region72: #{lenet5_forward.1} parent=1 // pred_region
      %s8995 = ssub.s32 32, 32
      %8996 = vsyncadd [#allocation5], %s8995
      %s8998 = sshll.u32 [#allocation8], 4
      %s8999 = int_to_ptr.vmem [resolvable:$true] %s8998
      %9001 = dma.vmem_to_hbm [thread:$0]  %s8999, 32, %s15, [#allocation5]
    $region73: #{lenet5_forward.1} parent=1 // pred_fallthru
      _
    // Predicated region
    $region74: #{lenet5_forward.1} parent=1 // pred_check
      _
    $region75: #{lenet5_forward.1} parent=1 // pred_check_branch
      %9003 = sbr.rel (0) target = $region77
    $region76: #{lenet5_forward.1} parent=1 // pred_region
      %9004 = dma.done [#allocation5], 32
    $region77: #{lenet5_forward.1} parent=1 // pred_fallthru
      _
    %9005 = vsyncpa [#allocation4], 1
    %9006 = vsyncpa [#allocation7], 1
    %9007 = vsyncpa [#allocation5], 1

</llo_original>
